<compile_context>
chip_gen: v7x
topology: tpu7x:2x2x1
jax: 0.10.0
libtpu: 0.0.40
codegen_flags: <defaults>
</compile_context>

<pallas_src>
import functools
import math

import jax
import jax.numpy as jnp
from jax.experimental import pallas as pl
from jax.experimental.pallas import tpu as pltpu

# ---------------- tiny CamemBERT-like config (synthetic) ----------------
VOCAB = 100
MAX_POS = 32
TYPE_VOCAB = 1
HIDDEN = 32
N_HEADS = 4
HEAD_DIM = HIDDEN // N_HEADS
N_LAYERS = 2
INTERMEDIATE = 64
N_LABELS = 3
LOGIT_PAD = 128          # lane-dense logits store; wrapper slices back to N_LABELS
PAD_ID = 1               # camembert / roberta padding_idx
LN_EPS = 1e-5
# HF extended-attention-mask constant.  Correct for the f32 score path used here;
# switch to a bf16-safe value (e.g. -1e9) before narrowing scores to bf16.
MASK_NEG = float(jnp.finfo(jnp.float32).min)


# ---------------------------- kernel helpers ----------------------------
def _ln(x, g, b):
    mu = jnp.mean(x, axis=-1, keepdims=True)
    xc = x - mu
    var = jnp.mean(xc * xc, axis=-1, keepdims=True)
    return xc * jax.lax.rsqrt(var + LN_EPS) * g + b


# --------------------------- fused forward kernel ------------------------
def _fused_forward_kernel(
    emb_ref, mask_ref,
    eg_ref, eb_ref,
    wq_ref, bq_ref, wk_ref, bk_ref, wv_ref, bv_ref,
    wo_ref, bo_ref, ln1g_ref, ln1b_ref,
    w1_ref, b1_ref, w2_ref, b2_ref, ln2g_ref, ln2b_ref,
    clsw_ref, clsb_ref,
    out_ref,
    ctx_ref,                       # VMEM scratch [bt*S, H] for the head merge
    *, bt, seq,
):
    S = seq
    # Fused batch-block activation: [bt*S, H].
    x = _ln(emb_ref[...], eg_ref[...], eb_ref[...])

    # Per-sequence additive mask bias, hoisted out of all layer/head loops.
    biases = [(1.0 - mask_ref[b]) * MASK_NEG for b in range(bt)]       # each [1, S]

    for l in range(N_LAYERS):                                          # static unroll (L=2)
        # ---- self-attention ----
        # Per-head Q/K/V projections from per-head weight slabs (leading-axis ref
        # indexing only, no lane slicing).  1/sqrt(dh) is pre-folded into wq/bq.
        q_h, k_h, v_h = [], [], []
        for h in range(N_HEADS):
            idx = l * N_HEADS + h
            q_h.append(jnp.dot(x, wq_ref[idx], preferred_element_type=jnp.float32)
                       + bq_ref[idx])                                   # [bt*S, dh]
            k_h.append(jnp.dot(x, wk_ref[idx], preferred_element_type=jnp.float32)
                       + bk_ref[idx])
            v_h.append(jnp.dot(x, wv_ref[idx], preferred_element_type=jnp.float32)
                       + bv_ref[idx])

        # [S, S] softmax blocks per (sequence, head).  Contexts are written into one
        # [bt*S, H] VMEM buffer so the head merge + output projection is a single
        # full-depth matmul per layer.
        for b in range(bt):
            r0 = b * S
            for h in range(N_HEADS):
                q_bh = q_h[h][r0:r0 + S, :]               # sublane-aligned row slices
                k_bh = k_h[h][r0:r0 + S, :]
                v_bh = v_h[h][r0:r0 + S, :]
                # explicit dot_general, contraction on last dim of both operands:
                # K-transpose handled inside the MXU (no materialized transpose).
                s = jax.lax.dot_general(
                    q_bh, k_bh, (((1,), (1,)), ((), ())),
                    preferred_element_type=jnp.float32) + biases[b]     # [S, S]
                m = jnp.max(s, axis=-1, keepdims=True)
                p = jnp.exp(s - m)
                p = p * pl.reciprocal(jnp.sum(p, axis=-1, keepdims=True), approx=True)
                ctx_bh = jnp.dot(p, v_bh, preferred_element_type=jnp.float32)   # [S, dh]
                ctx_ref[pl.ds(r0, S), pl.ds(h * HEAD_DIM, HEAD_DIM)] = ctx_bh

        attn = (jnp.dot(ctx_ref[...], wo_ref[l], preferred_element_type=jnp.float32)
                + bo_ref[l])                                            # [bt*S, H]
        x = _ln(x + attn, ln1g_ref[l], ln1b_ref[l])

        # ---- feed-forward (fused over the whole batch block) ----
        hmid = jnp.dot(x, w1_ref[l], preferred_element_type=jnp.float32) + b1_ref[l]
        # TODO(synk): CamemBERT uses exact erf-GELU; tanh approx kept for robust Mosaic lowering.
        hmid = jax.nn.gelu(hmid, approximate=True)
        ffn = jnp.dot(hmid, w2_ref[l], preferred_element_type=jnp.float32) + b2_ref[l]
        x = _ln(x + ffn, ln2g_ref[l], ln2b_ref[l])

    # classifier(drop(hidden.mean(dim=1))): dropout identity at eval; mean over ALL S
    # positions (incl. PAD) matches `embedding.mean(dim=1)` in the reference.
    for b in range(bt):
        pooled = jnp.mean(x[b * S:(b + 1) * S, :], axis=0, keepdims=True)   # [1, H]
        logits = (jnp.dot(pooled, clsw_ref[...], preferred_element_type=jnp.float32)
                  + clsb_ref[...])                                      # [1, 128] lane-dense
        out_ref[b] = logits


# --------------------------- parameter init -----------------------------
def init_params(key):
    keys = iter(jax.random.split(key, 40))

    def nrm(shape):
        return (0.02 * jax.random.normal(next(keys), shape)).astype(jnp.float32)

    L, H, I, NH, DH = N_LAYERS, HIDDEN, INTERMEDIATE, N_HEADS, HEAD_DIM
    scale = 1.0 / math.sqrt(DH)
    params = {
        "word_emb": nrm((VOCAB, H)),
        "pos_emb": nrm((MAX_POS, H)),
        "type_emb": nrm((TYPE_VOCAB, H)),
        "emb_ln_g": jnp.ones((1, H), jnp.float32),
        "emb_ln_b": jnp.zeros((1, H), jnp.float32),
        # Per-head projection slabs stacked as [L*NH, H, dh]: the kernel indexes whole
        # heads on the leading ref axis (no in-kernel lane slicing).  The 1/sqrt(dh)
        # attention scale is folded into wq / bq offline.
        "wq": nrm((L * NH, H, DH)) * scale,
        "bq": jnp.zeros((L * NH, 1, DH), jnp.float32),
        "wk": nrm((L * NH, H, DH)),
        "bk": jnp.zeros((L * NH, 1, DH), jnp.float32),
        "wv": nrm((L * NH, H, DH)),
        "bv": jnp.zeros((L * NH, 1, DH), jnp.float32),
        # Output projection: rows [h*dh, (h+1)*dh) belong to head h (head-major).
        "wo": nrm((L, H, H)),
        "bo": jnp.zeros((L, 1, H), jnp.float32),
        "ln1_g": jnp.ones((L, 1, H), jnp.float32),
        "ln1_b": jnp.zeros((L, 1, H), jnp.float32),
        "w1": nrm((L, H, I)),
        "b1": jnp.zeros((L, 1, I), jnp.float32),
        "w2": nrm((L, I, H)),
        "b2": jnp.zeros((L, 1, H), jnp.float32),
        "ln2_g": jnp.ones((L, 1, H), jnp.float32),
        "ln2_b": jnp.zeros((L, 1, H), jnp.float32),
        "cls_w": nrm((H, N_LABELS)),
        "cls_b": jnp.zeros((1, N_LABELS), jnp.float32),
    }
    return params


# ----------------------------- forward pass ------------------------------
def single_bert_forward(params, ids, attention_mask, token_type_ids):
    B, S = ids.shape
    H, L, I = HIDDEN, N_LAYERS, INTERMEDIATE
    assert S + PAD_ID < MAX_POS, "position-id formula only valid while S + PAD_ID < MAX_POS"

    # RoBERTa/CamemBERT position ids: cumsum of non-pad mask, offset by pad id.
    pad_mask = (ids != PAD_ID).astype(jnp.int32)
    pos_ids = jnp.cumsum(pad_mask, axis=1) * pad_mask + PAD_ID

    # Embedding gathers are data-dependent -> stay in plain JAX (XLA fuses the adds).
    emb = (jnp.take(params["word_emb"], ids, axis=0)
           + jnp.take(params["pos_emb"], pos_ids, axis=0)
           + jnp.take(params["type_emb"], token_type_ids, axis=0))      # [B, S, H]
    emb2 = emb.reshape(B * S, H)                                        # fused batch rows
    maskf = attention_mask.astype(jnp.float32).reshape(B, 1, S)

    # Lane-dense classifier: pad to 128 output lanes (layout plumbing only; the real
    # labels are sliced back out below).
    clsw = jnp.pad(params["cls_w"], ((0, 0), (0, LOGIT_PAD - N_LABELS)))
    clsb = jnp.pad(params["cls_b"], ((0, 0), (0, LOGIT_PAD - N_LABELS)))

    # One grid step processes `bt` whole sequences as a fused [bt*S, H] activation.
    # For B >= 4 split into two "parallel" grid blocks so v7x's 2 TensorCores both work;
    # on v5e/v6e (single TC) a single fused step is best.
    n_blk = 2 if (B % 2 == 0 and B >= 4) else 1
    bt = B // n_blk

    def full(shape):
        n = len(shape)
        return pl.BlockSpec(shape, lambda i, _n=n: (0,) * _n)

    in_specs = [
        pl.BlockSpec((bt * S, H), lambda i: (i, 0)),                    # fused embeddings
        pl.BlockSpec((bt, 1, S), lambda i: (i, 0, 0)),                  # attention mask
        full((1, H)), full((1, H)),                                     # emb LN g / b
        full((L * N_HEADS, H, HEAD_DIM)), full((L * N_HEADS, 1, HEAD_DIM)),   # wq, bq
        full((L * N_HEADS, H, HEAD_DIM)), full((L * N_HEADS, 1, HEAD_DIM)),   # wk, bk
        full((L * N_HEADS, H, HEAD_DIM)), full((L * N_HEADS, 1, HEAD_DIM)),   # wv, bv
        full((L, H, H)), full((L, 1, H)),                               # wo, bo
        full((L, 1, H)), full((L, 1, H)),                               # ln1 g / b
        full((L, H, I)), full((L, 1, I)),                               # w1, b1
        full((L, I, H)), full((L, 1, H)),                               # w2, b2
        full((L, 1, H)), full((L, 1, H)),                               # ln2 g / b
        full((H, LOGIT_PAD)), full((1, LOGIT_PAD)),                     # classifier (padded)
    ]
    out_spec = pl.BlockSpec((bt, 1, LOGIT_PAD), lambda i: (i, 0, 0))

    kernel = functools.partial(_fused_forward_kernel, bt=bt, seq=S)

    # TODO(synk): at real CamemBERT scale (H=768, I=3072, L=12) the weights must stream
    # HBM->VMEM via a layer grid axis / pltpu.emit_pipeline (they exceed VMEM, esp. v7x's
    # 64 MiB), the layer loop should become a grid axis / fori_loop, and MXU operands
    # should be cast to bf16 on v6e/v7x (keep LN/softmax math in f32).
    logits3 = pl.pallas_call(
        kernel,
        out_shape=jax.ShapeDtypeStruct((B, 1, LOGIT_PAD), jnp.float32),
        grid_spec=pltpu.PrefetchScalarGridSpec(
            num_scalar_prefetch=0,
            grid=(n_blk,),
            in_specs=in_specs,
            out_specs=out_spec,
            scratch_shapes=[pltpu.VMEM((bt * S, H), jnp.float32)],
        ),
        compiler_params=pltpu.CompilerParams(
            dimension_semantics=("parallel",)),
    )(emb2, maskf, params["emb_ln_g"], params["emb_ln_b"],
      params["wq"], params["bq"], params["wk"], params["bk"],
      params["wv"], params["bv"],
      params["wo"], params["bo"],
      params["ln1_g"], params["ln1_b"],
      params["w1"], params["b1"], params["w2"], params["b2"],
      params["ln2_g"], params["ln2_b"],
      clsw, clsb)

    return logits3.reshape(B, LOGIT_PAD)[:, :N_LABELS]


# --------------------------------- main ----------------------------------
if __name__ == "__main__":
    key = jax.random.PRNGKey(0)
    k_param, k_ids = jax.random.split(key)

    params = init_params(k_param)

    B, S = 2, 8
    ids = jax.random.randint(k_ids, (B, S), 5, VOCAB, dtype=jnp.int32)
    ids = ids.at[1, 6:].set(PAD_ID)                       # pad last two of batch 1
    attention_mask = jnp.ones((B, S), jnp.int32).at[1, 6:].set(0)
    token_type_ids = jnp.zeros((B, S), jnp.int32)

    logits = jax.jit(single_bert_forward)(params, ids, attention_mask, token_type_ids)
    logits = jax.block_until_ready(logits)

    assert logits.shape == (B, N_LABELS), logits.shape
    assert bool(jnp.all(jnp.isfinite(logits)))
    print("KERNEL_OK")
</pallas_src>

<mosaic_0001>
module attributes {stable_mosaic.version = 11 : i64} {
  func.func @_fused_forward_kernel(%arg0: i32, %arg1: memref<16x32xf32, #tpu.memory_space<vmem>>, %arg2: memref<2x1x8xf32, #tpu.memory_space<vmem>>, %arg3: memref<1x32xf32, #tpu.memory_space<vmem>>, %arg4: memref<1x32xf32, #tpu.memory_space<vmem>>, %arg5: memref<8x32x8xf32, #tpu.memory_space<vmem>>, %arg6: memref<8x1x8xf32, #tpu.memory_space<vmem>>, %arg7: memref<8x32x8xf32, #tpu.memory_space<vmem>>, %arg8: memref<8x1x8xf32, #tpu.memory_space<vmem>>, %arg9: memref<8x32x8xf32, #tpu.memory_space<vmem>>, %arg10: memref<8x1x8xf32, #tpu.memory_space<vmem>>, %arg11: memref<2x32x32xf32, #tpu.memory_space<vmem>>, %arg12: memref<2x1x32xf32, #tpu.memory_space<vmem>>, %arg13: memref<2x1x32xf32, #tpu.memory_space<vmem>>, %arg14: memref<2x1x32xf32, #tpu.memory_space<vmem>>, %arg15: memref<2x32x64xf32, #tpu.memory_space<vmem>>, %arg16: memref<2x1x64xf32, #tpu.memory_space<vmem>>, %arg17: memref<2x64x32xf32, #tpu.memory_space<vmem>>, %arg18: memref<2x1x32xf32, #tpu.memory_space<vmem>>, %arg19: memref<2x1x32xf32, #tpu.memory_space<vmem>>, %arg20: memref<2x1x32xf32, #tpu.memory_space<vmem>>, %arg21: memref<32x128xf32, #tpu.memory_space<vmem>>, %arg22: memref<1x128xf32, #tpu.memory_space<vmem>>, %arg23: memref<2x1x128xf32, #tpu.memory_space<vmem>>, %arg24: memref<16x32xf32, #tpu.memory_space<vmem>>) attributes {dimension_semantics = [#tpu.dimension_semantics<parallel>], iteration_bounds = array<i64: 1>, scalar_prefetch = 0 : i64, scratch_operands = 1 : i64, tpu.core_type = #tpu.core_type<tc>, window_params = [{transform_indices = @transform_0, window_bounds = array<i64: 16, 32>}, {transform_indices = @transform_1, window_bounds = array<i64: 2, 1, 8>}, {pipeline_mode = #tpu.pipeline_mode<synchronous>, transform_indices = @transform_2, window_bounds = array<i64: 1, 32>}, {pipeline_mode = #tpu.pipeline_mode<synchronous>, transform_indices = @transform_3, window_bounds = array<i64: 1, 32>}, {pipeline_mode = #tpu.pipeline_mode<synchronous>, transform_indices = @transform_4, window_bounds = array<i64: 8, 32, 8>}, {pipeline_mode = #tpu.pipeline_mode<synchronous>, transform_indices = @transform_5, window_bounds = array<i64: 8, 1, 8>}, {pipeline_mode = #tpu.pipeline_mode<synchronous>, transform_indices = @transform_6, window_bounds = array<i64: 8, 32, 8>}, {pipeline_mode = #tpu.pipeline_mode<synchronous>, transform_indices = @transform_7, window_bounds = array<i64: 8, 1, 8>}, {pipeline_mode = #tpu.pipeline_mode<synchronous>, transform_indices = @transform_8, window_bounds = array<i64: 8, 32, 8>}, {pipeline_mode = #tpu.pipeline_mode<synchronous>, transform_indices = @transform_9, window_bounds = array<i64: 8, 1, 8>}, {pipeline_mode = #tpu.pipeline_mode<synchronous>, transform_indices = @transform_10, window_bounds = array<i64: 2, 32, 32>}, {pipeline_mode = #tpu.pipeline_mode<synchronous>, transform_indices = @transform_11, window_bounds = array<i64: 2, 1, 32>}, {pipeline_mode = #tpu.pipeline_mode<synchronous>, transform_indices = @transform_12, window_bounds = array<i64: 2, 1, 32>}, {pipeline_mode = #tpu.pipeline_mode<synchronous>, transform_indices = @transform_13, window_bounds = array<i64: 2, 1, 32>}, {pipeline_mode = #tpu.pipeline_mode<synchronous>, transform_indices = @transform_14, window_bounds = array<i64: 2, 32, 64>}, {pipeline_mode = #tpu.pipeline_mode<synchronous>, transform_indices = @transform_15, window_bounds = array<i64: 2, 1, 64>}, {pipeline_mode = #tpu.pipeline_mode<synchronous>, transform_indices = @transform_16, window_bounds = array<i64: 2, 64, 32>}, {pipeline_mode = #tpu.pipeline_mode<synchronous>, transform_indices = @transform_17, window_bounds = array<i64: 2, 1, 32>}, {pipeline_mode = #tpu.pipeline_mode<synchronous>, transform_indices = @transform_18, window_bounds = array<i64: 2, 1, 32>}, {pipeline_mode = #tpu.pipeline_mode<synchronous>, transform_indices = @transform_19, window_bounds = array<i64: 2, 1, 32>}, {pipeline_mode = #tpu.pipeline_mode<synchronous>, transform_indices = @transform_20, window_bounds = array<i64: 32, 128>}, {pipeline_mode = #tpu.pipeline_mode<synchronous>, transform_indices = @transform_21, window_bounds = array<i64: 1, 128>}, {transform_indices = @transform_22, window_bounds = array<i64: 2, 1, 128>}]} {
    %c0 = arith.constant 0 : index
    %c0_0 = arith.constant 0 : index
    %0 = vector.load %arg1[%c0, %c0_0] : memref<16x32xf32, #tpu.memory_space<vmem>>, vector<16x32xf32>
    %c0_1 = arith.constant 0 : index
    %c0_2 = arith.constant 0 : index
    %1 = vector.load %arg3[%c0_1, %c0_2] : memref<1x32xf32, #tpu.memory_space<vmem>>, vector<1x32xf32>
    %c0_3 = arith.constant 0 : index
    %c0_4 = arith.constant 0 : index
    %2 = vector.load %arg4[%c0_3, %c0_4] : memref<1x32xf32, #tpu.memory_space<vmem>>, vector<1x32xf32>
    %cst = arith.constant dense<0.000000e+00> : vector<16xf32>
    %3 = vector.multi_reduction <add>, %0, %cst [1] : vector<16x32xf32> to vector<16xf32>
    %4 = vector.shape_cast %3 : vector<16xf32> to vector<16x1xf32>
    %cst_5 = arith.constant 3.200000e+01 : f32
    %5 = vector.broadcast %cst_5 : f32 to vector<16x1xf32>
    %6 = arith.divf %4, %5 : vector<16x1xf32>
    %7 = vector.broadcast %6 : vector<16x1xf32> to vector<16x32xf32>
    %8 = arith.subf %0, %7 : vector<16x32xf32>
    %9 = arith.mulf %8, %8 : vector<16x32xf32>
    %cst_6 = arith.constant dense<0.000000e+00> : vector<16xf32>
    %10 = vector.multi_reduction <add>, %9, %cst_6 [1] : vector<16x32xf32> to vector<16xf32>
    %11 = vector.shape_cast %10 : vector<16xf32> to vector<16x1xf32>
    %cst_7 = arith.constant 3.200000e+01 : f32
    %12 = vector.broadcast %cst_7 : f32 to vector<16x1xf32>
    %13 = arith.divf %11, %12 : vector<16x1xf32>
    %cst_8 = arith.constant 9.99999974E-6 : f32
    %14 = vector.broadcast %cst_8 : f32 to vector<16x1xf32>
    %15 = arith.addf %13, %14 : vector<16x1xf32>
    %16 = math.rsqrt %15 : vector<16x1xf32>
    %17 = vector.broadcast %16 : vector<16x1xf32> to vector<16x32xf32>
    %18 = arith.mulf %8, %17 : vector<16x32xf32>
    %19 = vector.broadcast %1 : vector<1x32xf32> to vector<16x32xf32>
    %20 = arith.mulf %18, %19 : vector<16x32xf32>
    %21 = vector.broadcast %2 : vector<1x32xf32> to vector<16x32xf32>
    %22 = arith.addf %20, %21 : vector<16x32xf32>
    %c0_9 = arith.constant 0 : index
    %c0_10 = arith.constant 0 : index
    %c0_11 = arith.constant 0 : index
    %23 = vector.load %arg2[%c0_9, %c0_10, %c0_11] : memref<2x1x8xf32, #tpu.memory_space<vmem>>, vector<1x1x8xf32>
    %24 = vector.shape_cast %23 : vector<1x1x8xf32> to vector<1x8xf32>
    %cst_12 = arith.constant 1.000000e+00 : f32
    %25 = vector.broadcast %cst_12 : f32 to vector<1x8xf32>
    %26 = arith.subf %25, %24 : vector<1x8xf32>
    %cst_13 = arith.constant -3.40282347E+38 : f32
    %27 = vector.broadcast %cst_13 : f32 to vector<1x8xf32>
    %28 = arith.mulf %26, %27 : vector<1x8xf32>
    %c1 = arith.constant 1 : index
    %c0_14 = arith.constant 0 : index
    %c0_15 = arith.constant 0 : index
    %29 = vector.load %arg2[%c1, %c0_14, %c0_15] : memref<2x1x8xf32, #tpu.memory_space<vmem>>, vector<1x1x8xf32>
    %30 = vector.shape_cast %29 : vector<1x1x8xf32> to vector<1x8xf32>
    %cst_16 = arith.constant 1.000000e+00 : f32
    %31 = vector.broadcast %cst_16 : f32 to vector<1x8xf32>
    %32 = arith.subf %31, %30 : vector<1x8xf32>
    %cst_17 = arith.constant -3.40282347E+38 : f32
    %33 = vector.broadcast %cst_17 : f32 to vector<1x8xf32>
    %34 = arith.mulf %32, %33 : vector<1x8xf32>
    %c0_18 = arith.constant 0 : index
    %c0_19 = arith.constant 0 : index
    %c0_20 = arith.constant 0 : index
    %35 = vector.load %arg5[%c0_18, %c0_19, %c0_20] : memref<8x32x8xf32, #tpu.memory_space<vmem>>, vector<1x32x8xf32>
    %36 = vector.shape_cast %35 : vector<1x32x8xf32> to vector<32x8xf32>
    %cst_21 = arith.constant dense<0.000000e+00> : vector<16x8xf32>
    %37 = tpu.matmul %22, %36, %cst_21 {dimension_numbers = #tpu.dot_dimension_numbers<[1], [0], [0], [1], [0, 0, 1, 1], [], []>} : vector<16x32xf32>, vector<32x8xf32>, vector<16x8xf32> -> vector<16x8xf32>
    %c0_22 = arith.constant 0 : index
    %c0_23 = arith.constant 0 : index
    %c0_24 = arith.constant 0 : index
    %38 = vector.load %arg6[%c0_22, %c0_23, %c0_24] : memref<8x1x8xf32, #tpu.memory_space<vmem>>, vector<1x1x8xf32>
    %39 = vector.shape_cast %38 : vector<1x1x8xf32> to vector<1x8xf32>
    %40 = vector.broadcast %39 : vector<1x8xf32> to vector<16x8xf32>
    %41 = arith.addf %37, %40 : vector<16x8xf32>
    %c0_25 = arith.constant 0 : index
    %c0_26 = arith.constant 0 : index
    %c0_27 = arith.constant 0 : index
    %42 = vector.load %arg7[%c0_25, %c0_26, %c0_27] : memref<8x32x8xf32, #tpu.memory_space<vmem>>, vector<1x32x8xf32>
    %43 = vector.shape_cast %42 : vector<1x32x8xf32> to vector<32x8xf32>
    %cst_28 = arith.constant dense<0.000000e+00> : vector<16x8xf32>
    %44 = tpu.matmul %22, %43, %cst_28 {dimension_numbers = #tpu.dot_dimension_numbers<[1], [0], [0], [1], [0, 0, 1, 1], [], []>} : vector<16x32xf32>, vector<32x8xf32>, vector<16x8xf32> -> vector<16x8xf32>
    %c0_29 = arith.constant 0 : index
    %c0_30 = arith.constant 0 : index
    %c0_31 = arith.constant 0 : index
    %45 = vector.load %arg8[%c0_29, %c0_30, %c0_31] : memref<8x1x8xf32, #tpu.memory_space<vmem>>, vector<1x1x8xf32>
    %46 = vector.shape_cast %45 : vector<1x1x8xf32> to vector<1x8xf32>
    %47 = vector.broadcast %46 : vector<1x8xf32> to vector<16x8xf32>
    %48 = arith.addf %44, %47 : vector<16x8xf32>
    %c0_32 = arith.constant 0 : index
    %c0_33 = arith.constant 0 : index
    %c0_34 = arith.constant 0 : index
    %49 = vector.load %arg9[%c0_32, %c0_33, %c0_34] : memref<8x32x8xf32, #tpu.memory_space<vmem>>, vector<1x32x8xf32>
    %50 = vector.shape_cast %49 : vector<1x32x8xf32> to vector<32x8xf32>
    %cst_35 = arith.constant dense<0.000000e+00> : vector<16x8xf32>
    %51 = tpu.matmul %22, %50, %cst_35 {dimension_numbers = #tpu.dot_dimension_numbers<[1], [0], [0], [1], [0, 0, 1, 1], [], []>} : vector<16x32xf32>, vector<32x8xf32>, vector<16x8xf32> -> vector<16x8xf32>
    %c0_36 = arith.constant 0 : index
    %c0_37 = arith.constant 0 : index
    %c0_38 = arith.constant 0 : index
    %52 = vector.load %arg10[%c0_36, %c0_37, %c0_38] : memref<8x1x8xf32, #tpu.memory_space<vmem>>, vector<1x1x8xf32>
    %53 = vector.shape_cast %52 : vector<1x1x8xf32> to vector<1x8xf32>
    %54 = vector.broadcast %53 : vector<1x8xf32> to vector<16x8xf32>
    %55 = arith.addf %51, %54 : vector<16x8xf32>
    %c1_39 = arith.constant 1 : index
    %c0_40 = arith.constant 0 : index
    %c0_41 = arith.constant 0 : index
    %56 = vector.load %arg5[%c1_39, %c0_40, %c0_41] : memref<8x32x8xf32, #tpu.memory_space<vmem>>, vector<1x32x8xf32>
    %57 = vector.shape_cast %56 : vector<1x32x8xf32> to vector<32x8xf32>
    %cst_42 = arith.constant dense<0.000000e+00> : vector<16x8xf32>
    %58 = tpu.matmul %22, %57, %cst_42 {dimension_numbers = #tpu.dot_dimension_numbers<[1], [0], [0], [1], [0, 0, 1, 1], [], []>} : vector<16x32xf32>, vector<32x8xf32>, vector<16x8xf32> -> vector<16x8xf32>
    %c1_43 = arith.constant 1 : index
    %c0_44 = arith.constant 0 : index
    %c0_45 = arith.constant 0 : index
    %59 = vector.load %arg6[%c1_43, %c0_44, %c0_45] : memref<8x1x8xf32, #tpu.memory_space<vmem>>, vector<1x1x8xf32>
    %60 = vector.shape_cast %59 : vector<1x1x8xf32> to vector<1x8xf32>
    %61 = vector.broadcast %60 : vector<1x8xf32> to vector<16x8xf32>
    %62 = arith.addf %58, %61 : vector<16x8xf32>
    %c1_46 = arith.constant 1 : index
    %c0_47 = arith.constant 0 : index
    %c0_48 = arith.constant 0 : index
    %63 = vector.load %arg7[%c1_46, %c0_47, %c0_48] : memref<8x32x8xf32, #tpu.memory_space<vmem>>, vector<1x32x8xf32>
    %64 = vector.shape_cast %63 : vector<1x32x8xf32> to vector<32x8xf32>
    %cst_49 = arith.constant dense<0.000000e+00> : vector<16x8xf32>
    %65 = tpu.matmul %22, %64, %cst_49 {dimension_numbers = #tpu.dot_dimension_numbers<[1], [0], [0], [1], [0, 0, 1, 1], [], []>} : vector<16x32xf32>, vector<32x8xf32>, vector<16x8xf32> -> vector<16x8xf32>
    %c1_50 = arith.constant 1 : index
    %c0_51 = arith.constant 0 : index
    %c0_52 = arith.constant 0 : index
    %66 = vector.load %arg8[%c1_50, %c0_51, %c0_52] : memref<8x1x8xf32, #tpu.memory_space<vmem>>, vector<1x1x8xf32>
    %67 = vector.shape_cast %66 : vector<1x1x8xf32> to vector<1x8xf32>
    %68 = vector.broadcast %67 : vector<1x8xf32> to vector<16x8xf32>
    %69 = arith.addf %65, %68 : vector<16x8xf32>
    %c1_53 = arith.constant 1 : index
    %c0_54 = arith.constant 0 : index
    %c0_55 = arith.constant 0 : index
    %70 = vector.load %arg9[%c1_53, %c0_54, %c0_55] : memref<8x32x8xf32, #tpu.memory_space<vmem>>, vector<1x32x8xf32>
    %71 = vector.shape_cast %70 : vector<1x32x8xf32> to vector<32x8xf32>
    %cst_56 = arith.constant dense<0.000000e+00> : vector<16x8xf32>
    %72 = tpu.matmul %22, %71, %cst_56 {dimension_numbers = #tpu.dot_dimension_numbers<[1], [0], [0], [1], [0, 0, 1, 1], [], []>} : vector<16x32xf32>, vector<32x8xf32>, vector<16x8xf32> -> vector<16x8xf32>
    %c1_57 = arith.constant 1 : index
    %c0_58 = arith.constant 0 : index
    %c0_59 = arith.constant 0 : index
    %73 = vector.load %arg10[%c1_57, %c0_58, %c0_59] : memref<8x1x8xf32, #tpu.memory_space<vmem>>, vector<1x1x8xf32>
    %74 = vector.shape_cast %73 : vector<1x1x8xf32> to vector<1x8xf32>
    %75 = vector.broadcast %74 : vector<1x8xf32> to vector<16x8xf32>
    %76 = arith.addf %72, %75 : vector<16x8xf32>
    %c2 = arith.constant 2 : index
    %c0_60 = arith.constant 0 : index
    %c0_61 = arith.constant 0 : index
    %77 = vector.load %arg5[%c2, %c0_60, %c0_61] : memref<8x32x8xf32, #tpu.memory_space<vmem>>, vector<1x32x8xf32>
    %78 = vector.shape_cast %77 : vector<1x32x8xf32> to vector<32x8xf32>
    %cst_62 = arith.constant dense<0.000000e+00> : vector<16x8xf32>
    %79 = tpu.matmul %22, %78, %cst_62 {dimension_numbers = #tpu.dot_dimension_numbers<[1], [0], [0], [1], [0, 0, 1, 1], [], []>} : vector<16x32xf32>, vector<32x8xf32>, vector<16x8xf32> -> vector<16x8xf32>
    %c2_63 = arith.constant 2 : index
    %c0_64 = arith.constant 0 : index
    %c0_65 = arith.constant 0 : index
    %80 = vector.load %arg6[%c2_63, %c0_64, %c0_65] : memref<8x1x8xf32, #tpu.memory_space<vmem>>, vector<1x1x8xf32>
    %81 = vector.shape_cast %80 : vector<1x1x8xf32> to vector<1x8xf32>
    %82 = vector.broadcast %81 : vector<1x8xf32> to vector<16x8xf32>
    %83 = arith.addf %79, %82 : vector<16x8xf32>
    %c2_66 = arith.constant 2 : index
    %c0_67 = arith.constant 0 : index
    %c0_68 = arith.constant 0 : index
    %84 = vector.load %arg7[%c2_66, %c0_67, %c0_68] : memref<8x32x8xf32, #tpu.memory_space<vmem>>, vector<1x32x8xf32>
    %85 = vector.shape_cast %84 : vector<1x32x8xf32> to vector<32x8xf32>
    %cst_69 = arith.constant dense<0.000000e+00> : vector<16x8xf32>
    %86 = tpu.matmul %22, %85, %cst_69 {dimension_numbers = #tpu.dot_dimension_numbers<[1], [0], [0], [1], [0, 0, 1, 1], [], []>} : vector<16x32xf32>, vector<32x8xf32>, vector<16x8xf32> -> vector<16x8xf32>
    %c2_70 = arith.constant 2 : index
    %c0_71 = arith.constant 0 : index
    %c0_72 = arith.constant 0 : index
    %87 = vector.load %arg8[%c2_70, %c0_71, %c0_72] : memref<8x1x8xf32, #tpu.memory_space<vmem>>, vector<1x1x8xf32>
    %88 = vector.shape_cast %87 : vector<1x1x8xf32> to vector<1x8xf32>
    %89 = vector.broadcast %88 : vector<1x8xf32> to vector<16x8xf32>
    %90 = arith.addf %86, %89 : vector<16x8xf32>
    %c2_73 = arith.constant 2 : index
    %c0_74 = arith.constant 0 : index
    %c0_75 = arith.constant 0 : index
    %91 = vector.load %arg9[%c2_73, %c0_74, %c0_75] : memref<8x32x8xf32, #tpu.memory_space<vmem>>, vector<1x32x8xf32>
    %92 = vector.shape_cast %91 : vector<1x32x8xf32> to vector<32x8xf32>
    %cst_76 = arith.constant dense<0.000000e+00> : vector<16x8xf32>
    %93 = tpu.matmul %22, %92, %cst_76 {dimension_numbers = #tpu.dot_dimension_numbers<[1], [0], [0], [1], [0, 0, 1, 1], [], []>} : vector<16x32xf32>, vector<32x8xf32>, vector<16x8xf32> -> vector<16x8xf32>
    %c2_77 = arith.constant 2 : index
    %c0_78 = arith.constant 0 : index
    %c0_79 = arith.constant 0 : index
    %94 = vector.load %arg10[%c2_77, %c0_78, %c0_79] : memref<8x1x8xf32, #tpu.memory_space<vmem>>, vector<1x1x8xf32>
    %95 = vector.shape_cast %94 : vector<1x1x8xf32> to vector<1x8xf32>
    %96 = vector.broadcast %95 : vector<1x8xf32> to vector<16x8xf32>
    %97 = arith.addf %93, %96 : vector<16x8xf32>
    %c3 = arith.constant 3 : index
    %c0_80 = arith.constant 0 : index
    %c0_81 = arith.constant 0 : index
    %98 = vector.load %arg5[%c3, %c0_80, %c0_81] : memref<8x32x8xf32, #tpu.memory_space<vmem>>, vector<1x32x8xf32>
    %99 = vector.shape_cast %98 : vector<1x32x8xf32> to vector<32x8xf32>
    %cst_82 = arith.constant dense<0.000000e+00> : vector<16x8xf32>
    %100 = tpu.matmul %22, %99, %cst_82 {dimension_numbers = #tpu.dot_dimension_numbers<[1], [0], [0], [1], [0, 0, 1, 1], [], []>} : vector<16x32xf32>, vector<32x8xf32>, vector<16x8xf32> -> vector<16x8xf32>
    %c3_83 = arith.constant 3 : index
    %c0_84 = arith.constant 0 : index
    %c0_85 = arith.constant 0 : index
    %101 = vector.load %arg6[%c3_83, %c0_84, %c0_85] : memref<8x1x8xf32, #tpu.memory_space<vmem>>, vector<1x1x8xf32>
    %102 = vector.shape_cast %101 : vector<1x1x8xf32> to vector<1x8xf32>
    %103 = vector.broadcast %102 : vector<1x8xf32> to vector<16x8xf32>
    %104 = arith.addf %100, %103 : vector<16x8xf32>
    %c3_86 = arith.constant 3 : index
    %c0_87 = arith.constant 0 : index
    %c0_88 = arith.constant 0 : index
    %105 = vector.load %arg7[%c3_86, %c0_87, %c0_88] : memref<8x32x8xf32, #tpu.memory_space<vmem>>, vector<1x32x8xf32>
    %106 = vector.shape_cast %105 : vector<1x32x8xf32> to vector<32x8xf32>
    %cst_89 = arith.constant dense<0.000000e+00> : vector<16x8xf32>
    %107 = tpu.matmul %22, %106, %cst_89 {dimension_numbers = #tpu.dot_dimension_numbers<[1], [0], [0], [1], [0, 0, 1, 1], [], []>} : vector<16x32xf32>, vector<32x8xf32>, vector<16x8xf32> -> vector<16x8xf32>
    %c3_90 = arith.constant 3 : index
    %c0_91 = arith.constant 0 : index
    %c0_92 = arith.constant 0 : index
    %108 = vector.load %arg8[%c3_90, %c0_91, %c0_92] : memref<8x1x8xf32, #tpu.memory_space<vmem>>, vector<1x1x8xf32>
    %109 = vector.shape_cast %108 : vector<1x1x8xf32> to vector<1x8xf32>
    %110 = vector.broadcast %109 : vector<1x8xf32> to vector<16x8xf32>
    %111 = arith.addf %107, %110 : vector<16x8xf32>
    %c3_93 = arith.constant 3 : index
    %c0_94 = arith.constant 0 : index
    %c0_95 = arith.constant 0 : index
    %112 = vector.load %arg9[%c3_93, %c0_94, %c0_95] : memref<8x32x8xf32, #tpu.memory_space<vmem>>, vector<1x32x8xf32>
    %113 = vector.shape_cast %112 : vector<1x32x8xf32> to vector<32x8xf32>
    %cst_96 = arith.constant dense<0.000000e+00> : vector<16x8xf32>
    %114 = tpu.matmul %22, %113, %cst_96 {dimension_numbers = #tpu.dot_dimension_numbers<[1], [0], [0], [1], [0, 0, 1, 1], [], []>} : vector<16x32xf32>, vector<32x8xf32>, vector<16x8xf32> -> vector<16x8xf32>
    %c3_97 = arith.constant 3 : index
    %c0_98 = arith.constant 0 : index
    %c0_99 = arith.constant 0 : index
    %115 = vector.load %arg10[%c3_97, %c0_98, %c0_99] : memref<8x1x8xf32, #tpu.memory_space<vmem>>, vector<1x1x8xf32>
    %116 = vector.shape_cast %115 : vector<1x1x8xf32> to vector<1x8xf32>
    %117 = vector.broadcast %116 : vector<1x8xf32> to vector<16x8xf32>
    %118 = arith.addf %114, %117 : vector<16x8xf32>
    %119 = vector.extract_strided_slice %41 {offsets = [0, 0], sizes = [8, 8], strides = [1, 1]} : vector<16x8xf32> to vector<8x8xf32>
    %120 = vector.extract_strided_slice %48 {offsets = [0, 0], sizes = [8, 8], strides = [1, 1]} : vector<16x8xf32> to vector<8x8xf32>
    %121 = vector.extract_strided_slice %55 {offsets = [0, 0], sizes = [8, 8], strides = [1, 1]} : vector<16x8xf32> to vector<8x8xf32>
    %cst_100 = arith.constant dense<0.000000e+00> : vector<8x8xf32>
    %122 = tpu.matmul %119, %120, %cst_100 {dimension_numbers = #tpu.dot_dimension_numbers<[1], [1], [0], [0], [0, 0, 1, 0], [], []>} : vector<8x8xf32>, vector<8x8xf32>, vector<8x8xf32> -> vector<8x8xf32>
    %123 = vector.broadcast %28 : vector<1x8xf32> to vector<8x8xf32>
    %124 = arith.addf %122, %123 : vector<8x8xf32>
    %cst_101 = arith.constant dense<0xFF800000> : vector<8xf32>
    %125 = vector.multi_reduction <maximumf>, %124, %cst_101 [1] : vector<8x8xf32> to vector<8xf32>
    %126 = vector.shape_cast %125 : vector<8xf32> to vector<8x1xf32>
    %127 = vector.broadcast %126 : vector<8x1xf32> to vector<8x8xf32>
    %128 = arith.subf %124, %127 : vector<8x8xf32>
    %129 = math.exp %128 : vector<8x8xf32>
    %cst_102 = arith.constant dense<0.000000e+00> : vector<8xf32>
    %130 = vector.multi_reduction <add>, %129, %cst_102 [1] : vector<8x8xf32> to vector<8xf32>
    %131 = vector.shape_cast %130 : vector<8xf32> to vector<8x1xf32>
    %132 = tpu.reciprocal %131 {approx = true} : vector<8x1xf32> -> vector<8x1xf32>
    %133 = vector.broadcast %132 : vector<8x1xf32> to vector<8x8xf32>
    %134 = arith.mulf %129, %133 : vector<8x8xf32>
    %cst_103 = arith.constant dense<0.000000e+00> : vector<8x8xf32>
    %135 = tpu.matmul %134, %121, %cst_103 {dimension_numbers = #tpu.dot_dimension_numbers<[1], [0], [0], [1], [0, 0, 1, 1], [], []>} : vector<8x8xf32>, vector<8x8xf32>, vector<8x8xf32> -> vector<8x8xf32>
    %c0_104 = arith.constant 0 : index
    %c0_105 = arith.constant 0 : index
    %136 = vector.load %arg24[%c0_104, %c0_105] : memref<16x32xf32, #tpu.memory_space<vmem>>, vector<8x8xf32>
    tpu.vector_store %arg24[%c0_104, %c0_105], %135 {strides = array<i32>} : memref<16x32xf32, #tpu.memory_space<vmem>>, vector<8x8xf32>,
    %137 = vector.extract_strided_slice %62 {offsets = [0, 0], sizes = [8, 8], strides = [1, 1]} : vector<16x8xf32> to vector<8x8xf32>
    %138 = vector.extract_strided_slice %69 {offsets = [0, 0], sizes = [8, 8], strides = [1, 1]} : vector<16x8xf32> to vector<8x8xf32>
    %139 = vector.extract_strided_slice %76 {offsets = [0, 0], sizes = [8, 8], strides = [1, 1]} : vector<16x8xf32> to vector<8x8xf32>
    %cst_106 = arith.constant dense<0.000000e+00> : vector<8x8xf32>
    %140 = tpu.matmul %137, %138, %cst_106 {dimension_numbers = #tpu.dot_dimension_numbers<[1], [1], [0], [0], [0, 0, 1, 0], [], []>} : vector<8x8xf32>, vector<8x8xf32>, vector<8x8xf32> -> vector<8x8xf32>
    %141 = vector.broadcast %28 : vector<1x8xf32> to vector<8x8xf32>
    %142 = arith.addf %140, %141 : vector<8x8xf32>
    %cst_107 = arith.constant dense<0xFF800000> : vector<8xf32>
    %143 = vector.multi_reduction <maximumf>, %142, %cst_107 [1] : vector<8x8xf32> to vector<8xf32>
    %144 = vector.shape_cast %143 : vector<8xf32> to vector<8x1xf32>
    %145 = vector.broadcast %144 : vector<8x1xf32> to vector<8x8xf32>
    %146 = arith.subf %142, %145 : vector<8x8xf32>
    %147 = math.exp %146 : vector<8x8xf32>
    %cst_108 = arith.constant dense<0.000000e+00> : vector<8xf32>
    %148 = vector.multi_reduction <add>, %147, %cst_108 [1] : vector<8x8xf32> to vector<8xf32>
    %149 = vector.shape_cast %148 : vector<8xf32> to vector<8x1xf32>
    %150 = tpu.reciprocal %149 {approx = true} : vector<8x1xf32> -> vector<8x1xf32>
    %151 = vector.broadcast %150 : vector<8x1xf32> to vector<8x8xf32>
    %152 = arith.mulf %147, %151 : vector<8x8xf32>
    %cst_109 = arith.constant dense<0.000000e+00> : vector<8x8xf32>
    %153 = tpu.matmul %152, %139, %cst_109 {dimension_numbers = #tpu.dot_dimension_numbers<[1], [0], [0], [1], [0, 0, 1, 1], [], []>} : vector<8x8xf32>, vector<8x8xf32>, vector<8x8xf32> -> vector<8x8xf32>
    %c0_110 = arith.constant 0 : index
    %c8 = arith.constant 8 : index
    %154 = vector.load %arg24[%c0_110, %c8] : memref<16x32xf32, #tpu.memory_space<vmem>>, vector<8x8xf32>
    tpu.vector_store %arg24[%c0_110, %c8], %153 {strides = array<i32>} : memref<16x32xf32, #tpu.memory_space<vmem>>, vector<8x8xf32>,
    %155 = vector.extract_strided_slice %83 {offsets = [0, 0], sizes = [8, 8], strides = [1, 1]} : vector<16x8xf32> to vector<8x8xf32>
    %156 = vector.extract_strided_slice %90 {offsets = [0, 0], sizes = [8, 8], strides = [1, 1]} : vector<16x8xf32> to vector<8x8xf32>
    %157 = vector.extract_strided_slice %97 {offsets = [0, 0], sizes = [8, 8], strides = [1, 1]} : vector<16x8xf32> to vector<8x8xf32>
    %cst_111 = arith.constant dense<0.000000e+00> : vector<8x8xf32>
    %158 = tpu.matmul %155, %156, %cst_111 {dimension_numbers = #tpu.dot_dimension_numbers<[1], [1], [0], [0], [0, 0, 1, 0], [], []>} : vector<8x8xf32>, vector<8x8xf32>, vector<8x8xf32> -> vector<8x8xf32>
    %159 = vector.broadcast %28 : vector<1x8xf32> to vector<8x8xf32>
    %160 = arith.addf %158, %159 : vector<8x8xf32>
    %cst_112 = arith.constant dense<0xFF800000> : vector<8xf32>
    %161 = vector.multi_reduction <maximumf>, %160, %cst_112 [1] : vector<8x8xf32> to vector<8xf32>
    %162 = vector.shape_cast %161 : vector<8xf32> to vector<8x1xf32>
    %163 = vector.broadcast %162 : vector<8x1xf32> to vector<8x8xf32>
    %164 = arith.subf %160, %163 : vector<8x8xf32>
    %165 = math.exp %164 : vector<8x8xf32>
    %cst_113 = arith.constant dense<0.000000e+00> : vector<8xf32>
    %166 = vector.multi_reduction <add>, %165, %cst_113 [1] : vector<8x8xf32> to vector<8xf32>
    %167 = vector.shape_cast %166 : vector<8xf32> to vector<8x1xf32>
    %168 = tpu.reciprocal %167 {approx = true} : vector<8x1xf32> -> vector<8x1xf32>
    %169 = vector.broadcast %168 : vector<8x1xf32> to vector<8x8xf32>
    %170 = arith.mulf %165, %169 : vector<8x8xf32>
    %cst_114 = arith.constant dense<0.000000e+00> : vector<8x8xf32>
    %171 = tpu.matmul %170, %157, %cst_114 {dimension_numbers = #tpu.dot_dimension_numbers<[1], [0], [0], [1], [0, 0, 1, 1], [], []>} : vector<8x8xf32>, vector<8x8xf32>, vector<8x8xf32> -> vector<8x8xf32>
    %c0_115 = arith.constant 0 : index
    %c16 = arith.constant 16 : index
    %172 = vector.load %arg24[%c0_115, %c16] : memref<16x32xf32, #tpu.memory_space<vmem>>, vector<8x8xf32>
    tpu.vector_store %arg24[%c0_115, %c16], %171 {strides = array<i32>} : memref<16x32xf32, #tpu.memory_space<vmem>>, vector<8x8xf32>,
    %173 = vector.extract_strided_slice %104 {offsets = [0, 0], sizes = [8, 8], strides = [1, 1]} : vector<16x8xf32> to vector<8x8xf32>
    %174 = vector.extract_strided_slice %111 {offsets = [0, 0], sizes = [8, 8], strides = [1, 1]} : vector<16x8xf32> to vector<8x8xf32>
    %175 = vector.extract_strided_slice %118 {offsets = [0, 0], sizes = [8, 8], strides = [1, 1]} : vector<16x8xf32> to vector<8x8xf32>
    %cst_116 = arith.constant dense<0.000000e+00> : vector<8x8xf32>
    %176 = tpu.matmul %173, %174, %cst_116 {dimension_numbers = #tpu.dot_dimension_numbers<[1], [1], [0], [0], [0, 0, 1, 0], [], []>} : vector<8x8xf32>, vector<8x8xf32>, vector<8x8xf32> -> vector<8x8xf32>
    %177 = vector.broadcast %28 : vector<1x8xf32> to vector<8x8xf32>
    %178 = arith.addf %176, %177 : vector<8x8xf32>
    %cst_117 = arith.constant dense<0xFF800000> : vector<8xf32>
    %179 = vector.multi_reduction <maximumf>, %178, %cst_117 [1] : vector<8x8xf32> to vector<8xf32>
    %180 = vector.shape_cast %179 : vector<8xf32> to vector<8x1xf32>
    %181 = vector.broadcast %180 : vector<8x1xf32> to vector<8x8xf32>
    %182 = arith.subf %178, %181 : vector<8x8xf32>
    %183 = math.exp %182 : vector<8x8xf32>
    %cst_118 = arith.constant dense<0.000000e+00> : vector<8xf32>
    %184 = vector.multi_reduction <add>, %183, %cst_118 [1] : vector<8x8xf32> to vector<8xf32>
    %185 = vector.shape_cast %184 : vector<8xf32> to vector<8x1xf32>
    %186 = tpu.reciprocal %185 {approx = true} : vector<8x1xf32> -> vector<8x1xf32>
    %187 = vector.broadcast %186 : vector<8x1xf32> to vector<8x8xf32>
    %188 = arith.mulf %183, %187 : vector<8x8xf32>
    %cst_119 = arith.constant dense<0.000000e+00> : vector<8x8xf32>
    %189 = tpu.matmul %188, %175, %cst_119 {dimension_numbers = #tpu.dot_dimension_numbers<[1], [0], [0], [1], [0, 0, 1, 1], [], []>} : vector<8x8xf32>, vector<8x8xf32>, vector<8x8xf32> -> vector<8x8xf32>
    %c0_120 = arith.constant 0 : index
    %c24 = arith.constant 24 : index
    %190 = vector.load %arg24[%c0_120, %c24] : memref<16x32xf32, #tpu.memory_space<vmem>>, vector<8x8xf32>
    tpu.vector_store %arg24[%c0_120, %c24], %189 {strides = array<i32>} : memref<16x32xf32, #tpu.memory_space<vmem>>, vector<8x8xf32>,
    %191 = vector.extract_strided_slice %41 {offsets = [8, 0], sizes = [8, 8], strides = [1, 1]} : vector<16x8xf32> to vector<8x8xf32>
    %192 = vector.extract_strided_slice %48 {offsets = [8, 0], sizes = [8, 8], strides = [1, 1]} : vector<16x8xf32> to vector<8x8xf32>
    %193 = vector.extract_strided_slice %55 {offsets = [8, 0], sizes = [8, 8], strides = [1, 1]} : vector<16x8xf32> to vector<8x8xf32>
    %cst_121 = arith.constant dense<0.000000e+00> : vector<8x8xf32>
    %194 = tpu.matmul %191, %192, %cst_121 {dimension_numbers = #tpu.dot_dimension_numbers<[1], [1], [0], [0], [0, 0, 1, 0], [], []>} : vector<8x8xf32>, vector<8x8xf32>, vector<8x8xf32> -> vector<8x8xf32>
    %195 = vector.broadcast %34 : vector<1x8xf32> to vector<8x8xf32>
    %196 = arith.addf %194, %195 : vector<8x8xf32>
    %cst_122 = arith.constant dense<0xFF800000> : vector<8xf32>
    %197 = vector.multi_reduction <maximumf>, %196, %cst_122 [1] : vector<8x8xf32> to vector<8xf32>
    %198 = vector.shape_cast %197 : vector<8xf32> to vector<8x1xf32>
    %199 = vector.broadcast %198 : vector<8x1xf32> to vector<8x8xf32>
    %200 = arith.subf %196, %199 : vector<8x8xf32>
    %201 = math.exp %200 : vector<8x8xf32>
    %cst_123 = arith.constant dense<0.000000e+00> : vector<8xf32>
    %202 = vector.multi_reduction <add>, %201, %cst_123 [1] : vector<8x8xf32> to vector<8xf32>
    %203 = vector.shape_cast %202 : vector<8xf32> to vector<8x1xf32>
    %204 = tpu.reciprocal %203 {approx = true} : vector<8x1xf32> -> vector<8x1xf32>
    %205 = vector.broadcast %204 : vector<8x1xf32> to vector<8x8xf32>
    %206 = arith.mulf %201, %205 : vector<8x8xf32>
    %cst_124 = arith.constant dense<0.000000e+00> : vector<8x8xf32>
    %207 = tpu.matmul %206, %193, %cst_124 {dimension_numbers = #tpu.dot_dimension_numbers<[1], [0], [0], [1], [0, 0, 1, 1], [], []>} : vector<8x8xf32>, vector<8x8xf32>, vector<8x8xf32> -> vector<8x8xf32>
    %c8_125 = arith.constant 8 : index
    %c0_126 = arith.constant 0 : index
    %208 = vector.load %arg24[%c8_125, %c0_126] : memref<16x32xf32, #tpu.memory_space<vmem>>, vector<8x8xf32>
    tpu.vector_store %arg24[%c8_125, %c0_126], %207 {strides = array<i32>} : memref<16x32xf32, #tpu.memory_space<vmem>>, vector<8x8xf32>,
    %209 = vector.extract_strided_slice %62 {offsets = [8, 0], sizes = [8, 8], strides = [1, 1]} : vector<16x8xf32> to vector<8x8xf32>
    %210 = vector.extract_strided_slice %69 {offsets = [8, 0], sizes = [8, 8], strides = [1, 1]} : vector<16x8xf32> to vector<8x8xf32>
    %211 = vector.extract_strided_slice %76 {offsets = [8, 0], sizes = [8, 8], strides = [1, 1]} : vector<16x8xf32> to vector<8x8xf32>
    %cst_127 = arith.constant dense<0.000000e+00> : vector<8x8xf32>
    %212 = tpu.matmul %209, %210, %cst_127 {dimension_numbers = #tpu.dot_dimension_numbers<[1], [1], [0], [0], [0, 0, 1, 0], [], []>} : vector<8x8xf32>, vector<8x8xf32>, vector<8x8xf32> -> vector<8x8xf32>
    %213 = vector.broadcast %34 : vector<1x8xf32> to vector<8x8xf32>
    %214 = arith.addf %212, %213 : vector<8x8xf32>
    %cst_128 = arith.constant dense<0xFF800000> : vector<8xf32>
    %215 = vector.multi_reduction <maximumf>, %214, %cst_128 [1] : vector<8x8xf32> to vector<8xf32>
    %216 = vector.shape_cast %215 : vector<8xf32> to vector<8x1xf32>
    %217 = vector.broadcast %216 : vector<8x1xf32> to vector<8x8xf32>
    %218 = arith.subf %214, %217 : vector<8x8xf32>
    %219 = math.exp %218 : vector<8x8xf32>
    %cst_129 = arith.constant dense<0.000000e+00> : vector<8xf32>
    %220 = vector.multi_reduction <add>, %219, %cst_129 [1] : vector<8x8xf32> to vector<8xf32>
    %221 = vector.shape_cast %220 : vector<8xf32> to vector<8x1xf32>
    %222 = tpu.reciprocal %221 {approx = true} : vector<8x1xf32> -> vector<8x1xf32>
    %223 = vector.broadcast %222 : vector<8x1xf32> to vector<8x8xf32>
    %224 = arith.mulf %219, %223 : vector<8x8xf32>
    %cst_130 = arith.constant dense<0.000000e+00> : vector<8x8xf32>
    %225 = tpu.matmul %224, %211, %cst_130 {dimension_numbers = #tpu.dot_dimension_numbers<[1], [0], [0], [1], [0, 0, 1, 1], [], []>} : vector<8x8xf32>, vector<8x8xf32>, vector<8x8xf32> -> vector<8x8xf32>
    %c8_131 = arith.constant 8 : index
    %c8_132 = arith.constant 8 : index
    %226 = vector.load %arg24[%c8_131, %c8_132] : memref<16x32xf32, #tpu.memory_space<vmem>>, vector<8x8xf32>
    tpu.vector_store %arg24[%c8_131, %c8_132], %225 {strides = array<i32>} : memref<16x32xf32, #tpu.memory_space<vmem>>, vector<8x8xf32>,
    %227 = vector.extract_strided_slice %83 {offsets = [8, 0], sizes = [8, 8], strides = [1, 1]} : vector<16x8xf32> to vector<8x8xf32>
    %228 = vector.extract_strided_slice %90 {offsets = [8, 0], sizes = [8, 8], strides = [1, 1]} : vector<16x8xf32> to vector<8x8xf32>
    %229 = vector.extract_strided_slice %97 {offsets = [8, 0], sizes = [8, 8], strides = [1, 1]} : vector<16x8xf32> to vector<8x8xf32>
    %cst_133 = arith.constant dense<0.000000e+00> : vector<8x8xf32>
    %230 = tpu.matmul %227, %228, %cst_133 {dimension_numbers = #tpu.dot_dimension_numbers<[1], [1], [0], [0], [0, 0, 1, 0], [], []>} : vector<8x8xf32>, vector<8x8xf32>, vector<8x8xf32> -> vector<8x8xf32>
    %231 = vector.broadcast %34 : vector<1x8xf32> to vector<8x8xf32>
    %232 = arith.addf %230, %231 : vector<8x8xf32>
    %cst_134 = arith.constant dense<0xFF800000> : vector<8xf32>
    %233 = vector.multi_reduction <maximumf>, %232, %cst_134 [1] : vector<8x8xf32> to vector<8xf32>
    %234 = vector.shape_cast %233 : vector<8xf32> to vector<8x1xf32>
    %235 = vector.broadcast %234 : vector<8x1xf32> to vector<8x8xf32>
    %236 = arith.subf %232, %235 : vector<8x8xf32>
    %237 = math.exp %236 : vector<8x8xf32>
    %cst_135 = arith.constant dense<0.000000e+00> : vector<8xf32>
    %238 = vector.multi_reduction <add>, %237, %cst_135 [1] : vector<8x8xf32> to vector<8xf32>
    %239 = vector.shape_cast %238 : vector<8xf32> to vector<8x1xf32>
    %240 = tpu.reciprocal %239 {approx = true} : vector<8x1xf32> -> vector<8x1xf32>
    %241 = vector.broadcast %240 : vector<8x1xf32> to vector<8x8xf32>
    %242 = arith.mulf %237, %241 : vector<8x8xf32>
    %cst_136 = arith.constant dense<0.000000e+00> : vector<8x8xf32>
    %243 = tpu.matmul %242, %229, %cst_136 {dimension_numbers = #tpu.dot_dimension_numbers<[1], [0], [0], [1], [0, 0, 1, 1], [], []>} : vector<8x8xf32>, vector<8x8xf32>, vector<8x8xf32> -> vector<8x8xf32>
    %c8_137 = arith.constant 8 : index
    %c16_138 = arith.constant 16 : index
    %244 = vector.load %arg24[%c8_137, %c16_138] : memref<16x32xf32, #tpu.memory_space<vmem>>, vector<8x8xf32>
    tpu.vector_store %arg24[%c8_137, %c16_138], %243 {strides = array<i32>} : memref<16x32xf32, #tpu.memory_space<vmem>>, vector<8x8xf32>,
    %245 = vector.extract_strided_slice %104 {offsets = [8, 0], sizes = [8, 8], strides = [1, 1]} : vector<16x8xf32> to vector<8x8xf32>
    %246 = vector.extract_strided_slice %111 {offsets = [8, 0], sizes = [8, 8], strides = [1, 1]} : vector<16x8xf32> to vector<8x8xf32>
    %247 = vector.extract_strided_slice %118 {offsets = [8, 0], sizes = [8, 8], strides = [1, 1]} : vector<16x8xf32> to vector<8x8xf32>
    %cst_139 = arith.constant dense<0.000000e+00> : vector<8x8xf32>
    %248 = tpu.matmul %245, %246, %cst_139 {dimension_numbers = #tpu.dot_dimension_numbers<[1], [1], [0], [0], [0, 0, 1, 0], [], []>} : vector<8x8xf32>, vector<8x8xf32>, vector<8x8xf32> -> vector<8x8xf32>
    %249 = vector.broadcast %34 : vector<1x8xf32> to vector<8x8xf32>
    %250 = arith.addf %248, %249 : vector<8x8xf32>
    %cst_140 = arith.constant dense<0xFF800000> : vector<8xf32>
    %251 = vector.multi_reduction <maximumf>, %250, %cst_140 [1] : vector<8x8xf32> to vector<8xf32>
    %252 = vector.shape_cast %251 : vector<8xf32> to vector<8x1xf32>
    %253 = vector.broadcast %252 : vector<8x1xf32> to vector<8x8xf32>
    %254 = arith.subf %250, %253 : vector<8x8xf32>
    %255 = math.exp %254 : vector<8x8xf32>
    %cst_141 = arith.constant dense<0.000000e+00> : vector<8xf32>
    %256 = vector.multi_reduction <add>, %255, %cst_141 [1] : vector<8x8xf32> to vector<8xf32>
    %257 = vector.shape_cast %256 : vector<8xf32> to vector<8x1xf32>
    %258 = tpu.reciprocal %257 {approx = true} : vector<8x1xf32> -> vector<8x1xf32>
    %259 = vector.broadcast %258 : vector<8x1xf32> to vector<8x8xf32>
    %260 = arith.mulf %255, %259 : vector<8x8xf32>
    %cst_142 = arith.constant dense<0.000000e+00> : vector<8x8xf32>
    %261 = tpu.matmul %260, %247, %cst_142 {dimension_numbers = #tpu.dot_dimension_numbers<[1], [0], [0], [1], [0, 0, 1, 1], [], []>} : vector<8x8xf32>, vector<8x8xf32>, vector<8x8xf32> -> vector<8x8xf32>
    %c8_143 = arith.constant 8 : index
    %c24_144 = arith.constant 24 : index
    %262 = vector.load %arg24[%c8_143, %c24_144] : memref<16x32xf32, #tpu.memory_space<vmem>>, vector<8x8xf32>
    tpu.vector_store %arg24[%c8_143, %c24_144], %261 {strides = array<i32>} : memref<16x32xf32, #tpu.memory_space<vmem>>, vector<8x8xf32>,
    %c0_145 = arith.constant 0 : index
    %c0_146 = arith.constant 0 : index
    %263 = vector.load %arg24[%c0_145, %c0_146] : memref<16x32xf32, #tpu.memory_space<vmem>>, vector<16x32xf32>
    %c0_147 = arith.constant 0 : index
    %c0_148 = arith.constant 0 : index
    %c0_149 = arith.constant 0 : index
    %264 = vector.load %arg11[%c0_147, %c0_148, %c0_149] : memref<2x32x32xf32, #tpu.memory_space<vmem>>, vector<1x32x32xf32>
    %265 = vector.shape_cast %264 : vector<1x32x32xf32> to vector<32x32xf32>
    %cst_150 = arith.constant dense<0.000000e+00> : vector<16x32xf32>
    %266 = tpu.matmul %263, %265, %cst_150 {dimension_numbers = #tpu.dot_dimension_numbers<[1], [0], [0], [1], [0, 0, 1, 1], [], []>} : vector<16x32xf32>, vector<32x32xf32>, vector<16x32xf32> -> vector<16x32xf32>
    %c0_151 = arith.constant 0 : index
    %c0_152 = arith.constant 0 : index
    %c0_153 = arith.constant 0 : index
    %267 = vector.load %arg12[%c0_151, %c0_152, %c0_153] : memref<2x1x32xf32, #tpu.memory_space<vmem>>, vector<1x1x32xf32>
    %268 = vector.shape_cast %267 : vector<1x1x32xf32> to vector<1x32xf32>
    %269 = vector.broadcast %268 : vector<1x32xf32> to vector<16x32xf32>
    %270 = arith.addf %266, %269 : vector<16x32xf32>
    %271 = arith.addf %22, %270 : vector<16x32xf32>
    %c0_154 = arith.constant 0 : index
    %c0_155 = arith.constant 0 : index
    %c0_156 = arith.constant 0 : index
    %272 = vector.load %arg13[%c0_154, %c0_155, %c0_156] : memref<2x1x32xf32, #tpu.memory_space<vmem>>, vector<1x1x32xf32>
    %273 = vector.shape_cast %272 : vector<1x1x32xf32> to vector<1x32xf32>
    %c0_157 = arith.constant 0 : index
    %c0_158 = arith.constant 0 : index
    %c0_159 = arith.constant 0 : index
    %274 = vector.load %arg14[%c0_157, %c0_158, %c0_159] : memref<2x1x32xf32, #tpu.memory_space<vmem>>, vector<1x1x32xf32>
    %275 = vector.shape_cast %274 : vector<1x1x32xf32> to vector<1x32xf32>
    %cst_160 = arith.constant dense<0.000000e+00> : vector<16xf32>
    %276 = vector.multi_reduction <add>, %271, %cst_160 [1] : vector<16x32xf32> to vector<16xf32>
    %277 = vector.shape_cast %276 : vector<16xf32> to vector<16x1xf32>
    %cst_161 = arith.constant 3.200000e+01 : f32
    %278 = vector.broadcast %cst_161 : f32 to vector<16x1xf32>
    %279 = arith.divf %277, %278 : vector<16x1xf32>
    %280 = vector.broadcast %279 : vector<16x1xf32> to vector<16x32xf32>
    %281 = arith.subf %271, %280 : vector<16x32xf32>
    %282 = arith.mulf %281, %281 : vector<16x32xf32>
    %cst_162 = arith.constant dense<0.000000e+00> : vector<16xf32>
    %283 = vector.multi_reduction <add>, %282, %cst_162 [1] : vector<16x32xf32> to vector<16xf32>
    %284 = vector.shape_cast %283 : vector<16xf32> to vector<16x1xf32>
    %cst_163 = arith.constant 3.200000e+01 : f32
    %285 = vector.broadcast %cst_163 : f32 to vector<16x1xf32>
    %286 = arith.divf %284, %285 : vector<16x1xf32>
    %cst_164 = arith.constant 9.99999974E-6 : f32
    %287 = vector.broadcast %cst_164 : f32 to vector<16x1xf32>
    %288 = arith.addf %286, %287 : vector<16x1xf32>
    %289 = math.rsqrt %288 : vector<16x1xf32>
    %290 = vector.broadcast %289 : vector<16x1xf32> to vector<16x32xf32>
    %291 = arith.mulf %281, %290 : vector<16x32xf32>
    %292 = vector.broadcast %273 : vector<1x32xf32> to vector<16x32xf32>
    %293 = arith.mulf %291, %292 : vector<16x32xf32>
    %294 = vector.broadcast %275 : vector<1x32xf32> to vector<16x32xf32>
    %295 = arith.addf %293, %294 : vector<16x32xf32>
    %c0_165 = arith.constant 0 : index
    %c0_166 = arith.constant 0 : index
    %c0_167 = arith.constant 0 : index
    %296 = vector.load %arg15[%c0_165, %c0_166, %c0_167] : memref<2x32x64xf32, #tpu.memory_space<vmem>>, vector<1x32x64xf32>
    %297 = vector.shape_cast %296 : vector<1x32x64xf32> to vector<32x64xf32>
    %cst_168 = arith.constant dense<0.000000e+00> : vector<16x64xf32>
    %298 = tpu.matmul %295, %297, %cst_168 {dimension_numbers = #tpu.dot_dimension_numbers<[1], [0], [0], [1], [0, 0, 1, 1], [], []>} : vector<16x32xf32>, vector<32x64xf32>, vector<16x64xf32> -> vector<16x64xf32>
    %c0_169 = arith.constant 0 : index
    %c0_170 = arith.constant 0 : index
    %c0_171 = arith.constant 0 : index
    %299 = vector.load %arg16[%c0_169, %c0_170, %c0_171] : memref<2x1x64xf32, #tpu.memory_space<vmem>>, vector<1x1x64xf32>
    %300 = vector.shape_cast %299 : vector<1x1x64xf32> to vector<1x64xf32>
    %301 = vector.broadcast %300 : vector<1x64xf32> to vector<16x64xf32>
    %302 = arith.addf %298, %301 : vector<16x64xf32>
    %303 = arith.mulf %302, %302 : vector<16x64xf32>
    %304 = arith.mulf %302, %303 : vector<16x64xf32>
    %cst_172 = arith.constant 4.471500e-02 : f32
    %305 = vector.broadcast %cst_172 : f32 to vector<16x64xf32>
    %306 = arith.mulf %305, %304 : vector<16x64xf32>
    %307 = arith.addf %302, %306 : vector<16x64xf32>
    %cst_173 = arith.constant 0.797884583 : f32
    %308 = vector.broadcast %cst_173 : f32 to vector<16x64xf32>
    %309 = arith.mulf %308, %307 : vector<16x64xf32>
    %310 = math.tanh %309 : vector<16x64xf32>
    %cst_174 = arith.constant 1.000000e+00 : f32
    %311 = vector.broadcast %cst_174 : f32 to vector<16x64xf32>
    %312 = arith.addf %311, %310 : vector<16x64xf32>
    %cst_175 = arith.constant 5.000000e-01 : f32
    %313 = vector.broadcast %cst_175 : f32 to vector<16x64xf32>
    %314 = arith.mulf %313, %312 : vector<16x64xf32>
    %315 = arith.mulf %302, %314 : vector<16x64xf32>
    %c0_176 = arith.constant 0 : index
    %c0_177 = arith.constant 0 : index
    %c0_178 = arith.constant 0 : index
    %316 = vector.load %arg17[%c0_176, %c0_177, %c0_178] : memref<2x64x32xf32, #tpu.memory_space<vmem>>, vector<1x64x32xf32>
    %317 = vector.shape_cast %316 : vector<1x64x32xf32> to vector<64x32xf32>
    %cst_179 = arith.constant dense<0.000000e+00> : vector<16x32xf32>
    %318 = tpu.matmul %315, %317, %cst_179 {dimension_numbers = #tpu.dot_dimension_numbers<[1], [0], [0], [1], [0, 0, 1, 1], [], []>} : vector<16x64xf32>, vector<64x32xf32>, vector<16x32xf32> -> vector<16x32xf32>
    %c0_180 = arith.constant 0 : index
    %c0_181 = arith.constant 0 : index
    %c0_182 = arith.constant 0 : index
    %319 = vector.load %arg18[%c0_180, %c0_181, %c0_182] : memref<2x1x32xf32, #tpu.memory_space<vmem>>, vector<1x1x32xf32>
    %320 = vector.shape_cast %319 : vector<1x1x32xf32> to vector<1x32xf32>
    %321 = vector.broadcast %320 : vector<1x32xf32> to vector<16x32xf32>
    %322 = arith.addf %318, %321 : vector<16x32xf32>
    %323 = arith.addf %295, %322 : vector<16x32xf32>
    %c0_183 = arith.constant 0 : index
    %c0_184 = arith.constant 0 : index
    %c0_185 = arith.constant 0 : index
    %324 = vector.load %arg19[%c0_183, %c0_184, %c0_185] : memref<2x1x32xf32, #tpu.memory_space<vmem>>, vector<1x1x32xf32>
    %325 = vector.shape_cast %324 : vector<1x1x32xf32> to vector<1x32xf32>
    %c0_186 = arith.constant 0 : index
    %c0_187 = arith.constant 0 : index
    %c0_188 = arith.constant 0 : index
    %326 = vector.load %arg20[%c0_186, %c0_187, %c0_188] : memref<2x1x32xf32, #tpu.memory_space<vmem>>, vector<1x1x32xf32>
    %327 = vector.shape_cast %326 : vector<1x1x32xf32> to vector<1x32xf32>
    %cst_189 = arith.constant dense<0.000000e+00> : vector<16xf32>
    %328 = vector.multi_reduction <add>, %323, %cst_189 [1] : vector<16x32xf32> to vector<16xf32>
    %329 = vector.shape_cast %328 : vector<16xf32> to vector<16x1xf32>
    %cst_190 = arith.constant 3.200000e+01 : f32
    %330 = vector.broadcast %cst_190 : f32 to vector<16x1xf32>
    %331 = arith.divf %329, %330 : vector<16x1xf32>
    %332 = vector.broadcast %331 : vector<16x1xf32> to vector<16x32xf32>
    %333 = arith.subf %323, %332 : vector<16x32xf32>
    %334 = arith.mulf %333, %333 : vector<16x32xf32>
    %cst_191 = arith.constant dense<0.000000e+00> : vector<16xf32>
    %335 = vector.multi_reduction <add>, %334, %cst_191 [1] : vector<16x32xf32> to vector<16xf32>
    %336 = vector.shape_cast %335 : vector<16xf32> to vector<16x1xf32>
    %cst_192 = arith.constant 3.200000e+01 : f32
    %337 = vector.broadcast %cst_192 : f32 to vector<16x1xf32>
    %338 = arith.divf %336, %337 : vector<16x1xf32>
    %cst_193 = arith.constant 9.99999974E-6 : f32
    %339 = vector.broadcast %cst_193 : f32 to vector<16x1xf32>
    %340 = arith.addf %338, %339 : vector<16x1xf32>
    %341 = math.rsqrt %340 : vector<16x1xf32>
    %342 = vector.broadcast %341 : vector<16x1xf32> to vector<16x32xf32>
    %343 = arith.mulf %333, %342 : vector<16x32xf32>
    %344 = vector.broadcast %325 : vector<1x32xf32> to vector<16x32xf32>
    %345 = arith.mulf %343, %344 : vector<16x32xf32>
    %346 = vector.broadcast %327 : vector<1x32xf32> to vector<16x32xf32>
    %347 = arith.addf %345, %346 : vector<16x32xf32>
    %c4 = arith.constant 4 : index
    %c0_194 = arith.constant 0 : index
    %c0_195 = arith.constant 0 : index
    %348 = vector.load %arg5[%c4, %c0_194, %c0_195] : memref<8x32x8xf32, #tpu.memory_space<vmem>>, vector<1x32x8xf32>
    %349 = vector.shape_cast %348 : vector<1x32x8xf32> to vector<32x8xf32>
    %cst_196 = arith.constant dense<0.000000e+00> : vector<16x8xf32>
    %350 = tpu.matmul %347, %349, %cst_196 {dimension_numbers = #tpu.dot_dimension_numbers<[1], [0], [0], [1], [0, 0, 1, 1], [], []>} : vector<16x32xf32>, vector<32x8xf32>, vector<16x8xf32> -> vector<16x8xf32>
    %c4_197 = arith.constant 4 : index
    %c0_198 = arith.constant 0 : index
    %c0_199 = arith.constant 0 : index
    %351 = vector.load %arg6[%c4_197, %c0_198, %c0_199] : memref<8x1x8xf32, #tpu.memory_space<vmem>>, vector<1x1x8xf32>
    %352 = vector.shape_cast %351 : vector<1x1x8xf32> to vector<1x8xf32>
    %353 = vector.broadcast %352 : vector<1x8xf32> to vector<16x8xf32>
    %354 = arith.addf %350, %353 : vector<16x8xf32>
    %c4_200 = arith.constant 4 : index
    %c0_201 = arith.constant 0 : index
    %c0_202 = arith.constant 0 : index
    %355 = vector.load %arg7[%c4_200, %c0_201, %c0_202] : memref<8x32x8xf32, #tpu.memory_space<vmem>>, vector<1x32x8xf32>
    %356 = vector.shape_cast %355 : vector<1x32x8xf32> to vector<32x8xf32>
    %cst_203 = arith.constant dense<0.000000e+00> : vector<16x8xf32>
    %357 = tpu.matmul %347, %356, %cst_203 {dimension_numbers = #tpu.dot_dimension_numbers<[1], [0], [0], [1], [0, 0, 1, 1], [], []>} : vector<16x32xf32>, vector<32x8xf32>, vector<16x8xf32> -> vector<16x8xf32>
    %c4_204 = arith.constant 4 : index
    %c0_205 = arith.constant 0 : index
    %c0_206 = arith.constant 0 : index
    %358 = vector.load %arg8[%c4_204, %c0_205, %c0_206] : memref<8x1x8xf32, #tpu.memory_space<vmem>>, vector<1x1x8xf32>
    %359 = vector.shape_cast %358 : vector<1x1x8xf32> to vector<1x8xf32>
    %360 = vector.broadcast %359 : vector<1x8xf32> to vector<16x8xf32>
    %361 = arith.addf %357, %360 : vector<16x8xf32>
    %c4_207 = arith.constant 4 : index
    %c0_208 = arith.constant 0 : index
    %c0_209 = arith.constant 0 : index
    %362 = vector.load %arg9[%c4_207, %c0_208, %c0_209] : memref<8x32x8xf32, #tpu.memory_space<vmem>>, vector<1x32x8xf32>
    %363 = vector.shape_cast %362 : vector<1x32x8xf32> to vector<32x8xf32>
    %cst_210 = arith.constant dense<0.000000e+00> : vector<16x8xf32>
    %364 = tpu.matmul %347, %363, %cst_210 {dimension_numbers = #tpu.dot_dimension_numbers<[1], [0], [0], [1], [0, 0, 1, 1], [], []>} : vector<16x32xf32>, vector<32x8xf32>, vector<16x8xf32> -> vector<16x8xf32>
    %c4_211 = arith.constant 4 : index
    %c0_212 = arith.constant 0 : index
    %c0_213 = arith.constant 0 : index
    %365 = vector.load %arg10[%c4_211, %c0_212, %c0_213] : memref<8x1x8xf32, #tpu.memory_space<vmem>>, vector<1x1x8xf32>
    %366 = vector.shape_cast %365 : vector<1x1x8xf32> to vector<1x8xf32>
    %367 = vector.broadcast %366 : vector<1x8xf32> to vector<16x8xf32>
    %368 = arith.addf %364, %367 : vector<16x8xf32>
    %c5 = arith.constant 5 : index
    %c0_214 = arith.constant 0 : index
    %c0_215 = arith.constant 0 : index
    %369 = vector.load %arg5[%c5, %c0_214, %c0_215] : memref<8x32x8xf32, #tpu.memory_space<vmem>>, vector<1x32x8xf32>
    %370 = vector.shape_cast %369 : vector<1x32x8xf32> to vector<32x8xf32>
    %cst_216 = arith.constant dense<0.000000e+00> : vector<16x8xf32>
    %371 = tpu.matmul %347, %370, %cst_216 {dimension_numbers = #tpu.dot_dimension_numbers<[1], [0], [0], [1], [0, 0, 1, 1], [], []>} : vector<16x32xf32>, vector<32x8xf32>, vector<16x8xf32> -> vector<16x8xf32>
    %c5_217 = arith.constant 5 : index
    %c0_218 = arith.constant 0 : index
    %c0_219 = arith.constant 0 : index
    %372 = vector.load %arg6[%c5_217, %c0_218, %c0_219] : memref<8x1x8xf32, #tpu.memory_space<vmem>>, vector<1x1x8xf32>
    %373 = vector.shape_cast %372 : vector<1x1x8xf32> to vector<1x8xf32>
    %374 = vector.broadcast %373 : vector<1x8xf32> to vector<16x8xf32>
    %375 = arith.addf %371, %374 : vector<16x8xf32>
    %c5_220 = arith.constant 5 : index
    %c0_221 = arith.constant 0 : index
    %c0_222 = arith.constant 0 : index
    %376 = vector.load %arg7[%c5_220, %c0_221, %c0_222] : memref<8x32x8xf32, #tpu.memory_space<vmem>>, vector<1x32x8xf32>
    %377 = vector.shape_cast %376 : vector<1x32x8xf32> to vector<32x8xf32>
    %cst_223 = arith.constant dense<0.000000e+00> : vector<16x8xf32>
    %378 = tpu.matmul %347, %377, %cst_223 {dimension_numbers = #tpu.dot_dimension_numbers<[1], [0], [0], [1], [0, 0, 1, 1], [], []>} : vector<16x32xf32>, vector<32x8xf32>, vector<16x8xf32> -> vector<16x8xf32>
    %c5_224 = arith.constant 5 : index
    %c0_225 = arith.constant 0 : index
    %c0_226 = arith.constant 0 : index
    %379 = vector.load %arg8[%c5_224, %c0_225, %c0_226] : memref<8x1x8xf32, #tpu.memory_space<vmem>>, vector<1x1x8xf32>
    %380 = vector.shape_cast %379 : vector<1x1x8xf32> to vector<1x8xf32>
    %381 = vector.broadcast %380 : vector<1x8xf32> to vector<16x8xf32>
    %382 = arith.addf %378, %381 : vector<16x8xf32>
    %c5_227 = arith.constant 5 : index
    %c0_228 = arith.constant 0 : index
    %c0_229 = arith.constant 0 : index
    %383 = vector.load %arg9[%c5_227, %c0_228, %c0_229] : memref<8x32x8xf32, #tpu.memory_space<vmem>>, vector<1x32x8xf32>
    %384 = vector.shape_cast %383 : vector<1x32x8xf32> to vector<32x8xf32>
    %cst_230 = arith.constant dense<0.000000e+00> : vector<16x8xf32>
    %385 = tpu.matmul %347, %384, %cst_230 {dimension_numbers = #tpu.dot_dimension_numbers<[1], [0], [0], [1], [0, 0, 1, 1], [], []>} : vector<16x32xf32>, vector<32x8xf32>, vector<16x8xf32> -> vector<16x8xf32>
    %c5_231 = arith.constant 5 : index
    %c0_232 = arith.constant 0 : index
    %c0_233 = arith.constant 0 : index
    %386 = vector.load %arg10[%c5_231, %c0_232, %c0_233] : memref<8x1x8xf32, #tpu.memory_space<vmem>>, vector<1x1x8xf32>
    %387 = vector.shape_cast %386 : vector<1x1x8xf32> to vector<1x8xf32>
    %388 = vector.broadcast %387 : vector<1x8xf32> to vector<16x8xf32>
    %389 = arith.addf %385, %388 : vector<16x8xf32>
    %c6 = arith.constant 6 : index
    %c0_234 = arith.constant 0 : index
    %c0_235 = arith.constant 0 : index
    %390 = vector.load %arg5[%c6, %c0_234, %c0_235] : memref<8x32x8xf32, #tpu.memory_space<vmem>>, vector<1x32x8xf32>
    %391 = vector.shape_cast %390 : vector<1x32x8xf32> to vector<32x8xf32>
    %cst_236 = arith.constant dense<0.000000e+00> : vector<16x8xf32>
    %392 = tpu.matmul %347, %391, %cst_236 {dimension_numbers = #tpu.dot_dimension_numbers<[1], [0], [0], [1], [0, 0, 1, 1], [], []>} : vector<16x32xf32>, vector<32x8xf32>, vector<16x8xf32> -> vector<16x8xf32>
    %c6_237 = arith.constant 6 : index
    %c0_238 = arith.constant 0 : index
    %c0_239 = arith.constant 0 : index
    %393 = vector.load %arg6[%c6_237, %c0_238, %c0_239] : memref<8x1x8xf32, #tpu.memory_space<vmem>>, vector<1x1x8xf32>
    %394 = vector.shape_cast %393 : vector<1x1x8xf32> to vector<1x8xf32>
    %395 = vector.broadcast %394 : vector<1x8xf32> to vector<16x8xf32>
    %396 = arith.addf %392, %395 : vector<16x8xf32>
    %c6_240 = arith.constant 6 : index
    %c0_241 = arith.constant 0 : index
    %c0_242 = arith.constant 0 : index
    %397 = vector.load %arg7[%c6_240, %c0_241, %c0_242] : memref<8x32x8xf32, #tpu.memory_space<vmem>>, vector<1x32x8xf32>
    %398 = vector.shape_cast %397 : vector<1x32x8xf32> to vector<32x8xf32>
    %cst_243 = arith.constant dense<0.000000e+00> : vector<16x8xf32>
    %399 = tpu.matmul %347, %398, %cst_243 {dimension_numbers = #tpu.dot_dimension_numbers<[1], [0], [0], [1], [0, 0, 1, 1], [], []>} : vector<16x32xf32>, vector<32x8xf32>, vector<16x8xf32> -> vector<16x8xf32>
    %c6_244 = arith.constant 6 : index
    %c0_245 = arith.constant 0 : index
    %c0_246 = arith.constant 0 : index
    %400 = vector.load %arg8[%c6_244, %c0_245, %c0_246] : memref<8x1x8xf32, #tpu.memory_space<vmem>>, vector<1x1x8xf32>
    %401 = vector.shape_cast %400 : vector<1x1x8xf32> to vector<1x8xf32>
    %402 = vector.broadcast %401 : vector<1x8xf32> to vector<16x8xf32>
    %403 = arith.addf %399, %402 : vector<16x8xf32>
    %c6_247 = arith.constant 6 : index
    %c0_248 = arith.constant 0 : index
    %c0_249 = arith.constant 0 : index
    %404 = vector.load %arg9[%c6_247, %c0_248, %c0_249] : memref<8x32x8xf32, #tpu.memory_space<vmem>>, vector<1x32x8xf32>
    %405 = vector.shape_cast %404 : vector<1x32x8xf32> to vector<32x8xf32>
    %cst_250 = arith.constant dense<0.000000e+00> : vector<16x8xf32>
    %406 = tpu.matmul %347, %405, %cst_250 {dimension_numbers = #tpu.dot_dimension_numbers<[1], [0], [0], [1], [0, 0, 1, 1], [], []>} : vector<16x32xf32>, vector<32x8xf32>, vector<16x8xf32> -> vector<16x8xf32>
    %c6_251 = arith.constant 6 : index
    %c0_252 = arith.constant 0 : index
    %c0_253 = arith.constant 0 : index
    %407 = vector.load %arg10[%c6_251, %c0_252, %c0_253] : memref<8x1x8xf32, #tpu.memory_space<vmem>>, vector<1x1x8xf32>
    %408 = vector.shape_cast %407 : vector<1x1x8xf32> to vector<1x8xf32>
    %409 = vector.broadcast %408 : vector<1x8xf32> to vector<16x8xf32>
    %410 = arith.addf %406, %409 : vector<16x8xf32>
    %c7 = arith.constant 7 : index
    %c0_254 = arith.constant 0 : index
    %c0_255 = arith.constant 0 : index
    %411 = vector.load %arg5[%c7, %c0_254, %c0_255] : memref<8x32x8xf32, #tpu.memory_space<vmem>>, vector<1x32x8xf32>
    %412 = vector.shape_cast %411 : vector<1x32x8xf32> to vector<32x8xf32>
    %cst_256 = arith.constant dense<0.000000e+00> : vector<16x8xf32>
    %413 = tpu.matmul %347, %412, %cst_256 {dimension_numbers = #tpu.dot_dimension_numbers<[1], [0], [0], [1], [0, 0, 1, 1], [], []>} : vector<16x32xf32>, vector<32x8xf32>, vector<16x8xf32> -> vector<16x8xf32>
    %c7_257 = arith.constant 7 : index
    %c0_258 = arith.constant 0 : index
    %c0_259 = arith.constant 0 : index
    %414 = vector.load %arg6[%c7_257, %c0_258, %c0_259] : memref<8x1x8xf32, #tpu.memory_space<vmem>>, vector<1x1x8xf32>
    %415 = vector.shape_cast %414 : vector<1x1x8xf32> to vector<1x8xf32>
    %416 = vector.broadcast %415 : vector<1x8xf32> to vector<16x8xf32>
    %417 = arith.addf %413, %416 : vector<16x8xf32>
    %c7_260 = arith.constant 7 : index
    %c0_261 = arith.constant 0 : index
    %c0_262 = arith.constant 0 : index
    %418 = vector.load %arg7[%c7_260, %c0_261, %c0_262] : memref<8x32x8xf32, #tpu.memory_space<vmem>>, vector<1x32x8xf32>
    %419 = vector.shape_cast %418 : vector<1x32x8xf32> to vector<32x8xf32>
    %cst_263 = arith.constant dense<0.000000e+00> : vector<16x8xf32>
    %420 = tpu.matmul %347, %419, %cst_263 {dimension_numbers = #tpu.dot_dimension_numbers<[1], [0], [0], [1], [0, 0, 1, 1], [], []>} : vector<16x32xf32>, vector<32x8xf32>, vector<16x8xf32> -> vector<16x8xf32>
    %c7_264 = arith.constant 7 : index
    %c0_265 = arith.constant 0 : index
    %c0_266 = arith.constant 0 : index
    %421 = vector.load %arg8[%c7_264, %c0_265, %c0_266] : memref<8x1x8xf32, #tpu.memory_space<vmem>>, vector<1x1x8xf32>
    %422 = vector.shape_cast %421 : vector<1x1x8xf32> to vector<1x8xf32>
    %423 = vector.broadcast %422 : vector<1x8xf32> to vector<16x8xf32>
    %424 = arith.addf %420, %423 : vector<16x8xf32>
    %c7_267 = arith.constant 7 : index
    %c0_268 = arith.constant 0 : index
    %c0_269 = arith.constant 0 : index
    %425 = vector.load %arg9[%c7_267, %c0_268, %c0_269] : memref<8x32x8xf32, #tpu.memory_space<vmem>>, vector<1x32x8xf32>
    %426 = vector.shape_cast %425 : vector<1x32x8xf32> to vector<32x8xf32>
    %cst_270 = arith.constant dense<0.000000e+00> : vector<16x8xf32>
    %427 = tpu.matmul %347, %426, %cst_270 {dimension_numbers = #tpu.dot_dimension_numbers<[1], [0], [0], [1], [0, 0, 1, 1], [], []>} : vector<16x32xf32>, vector<32x8xf32>, vector<16x8xf32> -> vector<16x8xf32>
    %c7_271 = arith.constant 7 : index
    %c0_272 = arith.constant 0 : index
    %c0_273 = arith.constant 0 : index
    %428 = vector.load %arg10[%c7_271, %c0_272, %c0_273] : memref<8x1x8xf32, #tpu.memory_space<vmem>>, vector<1x1x8xf32>
    %429 = vector.shape_cast %428 : vector<1x1x8xf32> to vector<1x8xf32>
    %430 = vector.broadcast %429 : vector<1x8xf32> to vector<16x8xf32>
    %431 = arith.addf %427, %430 : vector<16x8xf32>
    %432 = vector.extract_strided_slice %354 {offsets = [0, 0], sizes = [8, 8], strides = [1, 1]} : vector<16x8xf32> to vector<8x8xf32>
    %433 = vector.extract_strided_slice %361 {offsets = [0, 0], sizes = [8, 8], strides = [1, 1]} : vector<16x8xf32> to vector<8x8xf32>
    %434 = vector.extract_strided_slice %368 {offsets = [0, 0], sizes = [8, 8], strides = [1, 1]} : vector<16x8xf32> to vector<8x8xf32>
    %cst_274 = arith.constant dense<0.000000e+00> : vector<8x8xf32>
    %435 = tpu.matmul %432, %433, %cst_274 {dimension_numbers = #tpu.dot_dimension_numbers<[1], [1], [0], [0], [0, 0, 1, 0], [], []>} : vector<8x8xf32>, vector<8x8xf32>, vector<8x8xf32> -> vector<8x8xf32>
    %436 = vector.broadcast %28 : vector<1x8xf32> to vector<8x8xf32>
    %437 = arith.addf %435, %436 : vector<8x8xf32>
    %cst_275 = arith.constant dense<0xFF800000> : vector<8xf32>
    %438 = vector.multi_reduction <maximumf>, %437, %cst_275 [1] : vector<8x8xf32> to vector<8xf32>
    %439 = vector.shape_cast %438 : vector<8xf32> to vector<8x1xf32>
    %440 = vector.broadcast %439 : vector<8x1xf32> to vector<8x8xf32>
    %441 = arith.subf %437, %440 : vector<8x8xf32>
    %442 = math.exp %441 : vector<8x8xf32>
    %cst_276 = arith.constant dense<0.000000e+00> : vector<8xf32>
    %443 = vector.multi_reduction <add>, %442, %cst_276 [1] : vector<8x8xf32> to vector<8xf32>
    %444 = vector.shape_cast %443 : vector<8xf32> to vector<8x1xf32>
    %445 = tpu.reciprocal %444 {approx = true} : vector<8x1xf32> -> vector<8x1xf32>
    %446 = vector.broadcast %445 : vector<8x1xf32> to vector<8x8xf32>
    %447 = arith.mulf %442, %446 : vector<8x8xf32>
    %cst_277 = arith.constant dense<0.000000e+00> : vector<8x8xf32>
    %448 = tpu.matmul %447, %434, %cst_277 {dimension_numbers = #tpu.dot_dimension_numbers<[1], [0], [0], [1], [0, 0, 1, 1], [], []>} : vector<8x8xf32>, vector<8x8xf32>, vector<8x8xf32> -> vector<8x8xf32>
    %c0_278 = arith.constant 0 : index
    %c0_279 = arith.constant 0 : index
    %449 = vector.load %arg24[%c0_278, %c0_279] : memref<16x32xf32, #tpu.memory_space<vmem>>, vector<8x8xf32>
    tpu.vector_store %arg24[%c0_278, %c0_279], %448 {strides = array<i32>} : memref<16x32xf32, #tpu.memory_space<vmem>>, vector<8x8xf32>,
    %450 = vector.extract_strided_slice %375 {offsets = [0, 0], sizes = [8, 8], strides = [1, 1]} : vector<16x8xf32> to vector<8x8xf32>
    %451 = vector.extract_strided_slice %382 {offsets = [0, 0], sizes = [8, 8], strides = [1, 1]} : vector<16x8xf32> to vector<8x8xf32>
    %452 = vector.extract_strided_slice %389 {offsets = [0, 0], sizes = [8, 8], strides = [1, 1]} : vector<16x8xf32> to vector<8x8xf32>
    %cst_280 = arith.constant dense<0.000000e+00> : vector<8x8xf32>
    %453 = tpu.matmul %450, %451, %cst_280 {dimension_numbers = #tpu.dot_dimension_numbers<[1], [1], [0], [0], [0, 0, 1, 0], [], []>} : vector<8x8xf32>, vector<8x8xf32>, vector<8x8xf32> -> vector<8x8xf32>
    %454 = vector.broadcast %28 : vector<1x8xf32> to vector<8x8xf32>
    %455 = arith.addf %453, %454 : vector<8x8xf32>
    %cst_281 = arith.constant dense<0xFF800000> : vector<8xf32>
    %456 = vector.multi_reduction <maximumf>, %455, %cst_281 [1] : vector<8x8xf32> to vector<8xf32>
    %457 = vector.shape_cast %456 : vector<8xf32> to vector<8x1xf32>
    %458 = vector.broadcast %457 : vector<8x1xf32> to vector<8x8xf32>
    %459 = arith.subf %455, %458 : vector<8x8xf32>
    %460 = math.exp %459 : vector<8x8xf32>
    %cst_282 = arith.constant dense<0.000000e+00> : vector<8xf32>
    %461 = vector.multi_reduction <add>, %460, %cst_282 [1] : vector<8x8xf32> to vector<8xf32>
    %462 = vector.shape_cast %461 : vector<8xf32> to vector<8x1xf32>
    %463 = tpu.reciprocal %462 {approx = true} : vector<8x1xf32> -> vector<8x1xf32>
    %464 = vector.broadcast %463 : vector<8x1xf32> to vector<8x8xf32>
    %465 = arith.mulf %460, %464 : vector<8x8xf32>
    %cst_283 = arith.constant dense<0.000000e+00> : vector<8x8xf32>
    %466 = tpu.matmul %465, %452, %cst_283 {dimension_numbers = #tpu.dot_dimension_numbers<[1], [0], [0], [1], [0, 0, 1, 1], [], []>} : vector<8x8xf32>, vector<8x8xf32>, vector<8x8xf32> -> vector<8x8xf32>
    %c0_284 = arith.constant 0 : index
    %c8_285 = arith.constant 8 : index
    %467 = vector.load %arg24[%c0_284, %c8_285] : memref<16x32xf32, #tpu.memory_space<vmem>>, vector<8x8xf32>
    tpu.vector_store %arg24[%c0_284, %c8_285], %466 {strides = array<i32>} : memref<16x32xf32, #tpu.memory_space<vmem>>, vector<8x8xf32>,
    %468 = vector.extract_strided_slice %396 {offsets = [0, 0], sizes = [8, 8], strides = [1, 1]} : vector<16x8xf32> to vector<8x8xf32>
    %469 = vector.extract_strided_slice %403 {offsets = [0, 0], sizes = [8, 8], strides = [1, 1]} : vector<16x8xf32> to vector<8x8xf32>
    %470 = vector.extract_strided_slice %410 {offsets = [0, 0], sizes = [8, 8], strides = [1, 1]} : vector<16x8xf32> to vector<8x8xf32>
    %cst_286 = arith.constant dense<0.000000e+00> : vector<8x8xf32>
    %471 = tpu.matmul %468, %469, %cst_286 {dimension_numbers = #tpu.dot_dimension_numbers<[1], [1], [0], [0], [0, 0, 1, 0], [], []>} : vector<8x8xf32>, vector<8x8xf32>, vector<8x8xf32> -> vector<8x8xf32>
    %472 = vector.broadcast %28 : vector<1x8xf32> to vector<8x8xf32>
    %473 = arith.addf %471, %472 : vector<8x8xf32>
    %cst_287 = arith.constant dense<0xFF800000> : vector<8xf32>
    %474 = vector.multi_reduction <maximumf>, %473, %cst_287 [1] : vector<8x8xf32> to vector<8xf32>
    %475 = vector.shape_cast %474 : vector<8xf32> to vector<8x1xf32>
    %476 = vector.broadcast %475 : vector<8x1xf32> to vector<8x8xf32>
    %477 = arith.subf %473, %476 : vector<8x8xf32>
    %478 = math.exp %477 : vector<8x8xf32>
    %cst_288 = arith.constant dense<0.000000e+00> : vector<8xf32>
    %479 = vector.multi_reduction <add>, %478, %cst_288 [1] : vector<8x8xf32> to vector<8xf32>
    %480 = vector.shape_cast %479 : vector<8xf32> to vector<8x1xf32>
    %481 = tpu.reciprocal %480 {approx = true} : vector<8x1xf32> -> vector<8x1xf32>
    %482 = vector.broadcast %481 : vector<8x1xf32> to vector<8x8xf32>
    %483 = arith.mulf %478, %482 : vector<8x8xf32>
    %cst_289 = arith.constant dense<0.000000e+00> : vector<8x8xf32>
    %484 = tpu.matmul %483, %470, %cst_289 {dimension_numbers = #tpu.dot_dimension_numbers<[1], [0], [0], [1], [0, 0, 1, 1], [], []>} : vector<8x8xf32>, vector<8x8xf32>, vector<8x8xf32> -> vector<8x8xf32>
    %c0_290 = arith.constant 0 : index
    %c16_291 = arith.constant 16 : index
    %485 = vector.load %arg24[%c0_290, %c16_291] : memref<16x32xf32, #tpu.memory_space<vmem>>, vector<8x8xf32>
    tpu.vector_store %arg24[%c0_290, %c16_291], %484 {strides = array<i32>} : memref<16x32xf32, #tpu.memory_space<vmem>>, vector<8x8xf32>,
    %486 = vector.extract_strided_slice %417 {offsets = [0, 0], sizes = [8, 8], strides = [1, 1]} : vector<16x8xf32> to vector<8x8xf32>
    %487 = vector.extract_strided_slice %424 {offsets = [0, 0], sizes = [8, 8], strides = [1, 1]} : vector<16x8xf32> to vector<8x8xf32>
    %488 = vector.extract_strided_slice %431 {offsets = [0, 0], sizes = [8, 8], strides = [1, 1]} : vector<16x8xf32> to vector<8x8xf32>
    %cst_292 = arith.constant dense<0.000000e+00> : vector<8x8xf32>
    %489 = tpu.matmul %486, %487, %cst_292 {dimension_numbers = #tpu.dot_dimension_numbers<[1], [1], [0], [0], [0, 0, 1, 0], [], []>} : vector<8x8xf32>, vector<8x8xf32>, vector<8x8xf32> -> vector<8x8xf32>
    %490 = vector.broadcast %28 : vector<1x8xf32> to vector<8x8xf32>
    %491 = arith.addf %489, %490 : vector<8x8xf32>
    %cst_293 = arith.constant dense<0xFF800000> : vector<8xf32>
    %492 = vector.multi_reduction <maximumf>, %491, %cst_293 [1] : vector<8x8xf32> to vector<8xf32>
    %493 = vector.shape_cast %492 : vector<8xf32> to vector<8x1xf32>
    %494 = vector.broadcast %493 : vector<8x1xf32> to vector<8x8xf32>
    %495 = arith.subf %491, %494 : vector<8x8xf32>
    %496 = math.exp %495 : vector<8x8xf32>
    %cst_294 = arith.constant dense<0.000000e+00> : vector<8xf32>
    %497 = vector.multi_reduction <add>, %496, %cst_294 [1] : vector<8x8xf32> to vector<8xf32>
    %498 = vector.shape_cast %497 : vector<8xf32> to vector<8x1xf32>
    %499 = tpu.reciprocal %498 {approx = true} : vector<8x1xf32> -> vector<8x1xf32>
    %500 = vector.broadcast %499 : vector<8x1xf32> to vector<8x8xf32>
    %501 = arith.mulf %496, %500 : vector<8x8xf32>
    %cst_295 = arith.constant dense<0.000000e+00> : vector<8x8xf32>
    %502 = tpu.matmul %501, %488, %cst_295 {dimension_numbers = #tpu.dot_dimension_numbers<[1], [0], [0], [1], [0, 0, 1, 1], [], []>} : vector<8x8xf32>, vector<8x8xf32>, vector<8x8xf32> -> vector<8x8xf32>
    %c0_296 = arith.constant 0 : index
    %c24_297 = arith.constant 24 : index
    %503 = vector.load %arg24[%c0_296, %c24_297] : memref<16x32xf32, #tpu.memory_space<vmem>>, vector<8x8xf32>
    tpu.vector_store %arg24[%c0_296, %c24_297], %502 {strides = array<i32>} : memref<16x32xf32, #tpu.memory_space<vmem>>, vector<8x8xf32>,
    %504 = vector.extract_strided_slice %354 {offsets = [8, 0], sizes = [8, 8], strides = [1, 1]} : vector<16x8xf32> to vector<8x8xf32>
    %505 = vector.extract_strided_slice %361 {offsets = [8, 0], sizes = [8, 8], strides = [1, 1]} : vector<16x8xf32> to vector<8x8xf32>
    %506 = vector.extract_strided_slice %368 {offsets = [8, 0], sizes = [8, 8], strides = [1, 1]} : vector<16x8xf32> to vector<8x8xf32>
    %cst_298 = arith.constant dense<0.000000e+00> : vector<8x8xf32>
    %507 = tpu.matmul %504, %505, %cst_298 {dimension_numbers = #tpu.dot_dimension_numbers<[1], [1], [0], [0], [0, 0, 1, 0], [], []>} : vector<8x8xf32>, vector<8x8xf32>, vector<8x8xf32> -> vector<8x8xf32>
    %508 = vector.broadcast %34 : vector<1x8xf32> to vector<8x8xf32>
    %509 = arith.addf %507, %508 : vector<8x8xf32>
    %cst_299 = arith.constant dense<0xFF800000> : vector<8xf32>
    %510 = vector.multi_reduction <maximumf>, %509, %cst_299 [1] : vector<8x8xf32> to vector<8xf32>
    %511 = vector.shape_cast %510 : vector<8xf32> to vector<8x1xf32>
    %512 = vector.broadcast %511 : vector<8x1xf32> to vector<8x8xf32>
    %513 = arith.subf %509, %512 : vector<8x8xf32>
    %514 = math.exp %513 : vector<8x8xf32>
    %cst_300 = arith.constant dense<0.000000e+00> : vector<8xf32>
    %515 = vector.multi_reduction <add>, %514, %cst_300 [1] : vector<8x8xf32> to vector<8xf32>
    %516 = vector.shape_cast %515 : vector<8xf32> to vector<8x1xf32>
    %517 = tpu.reciprocal %516 {approx = true} : vector<8x1xf32> -> vector<8x1xf32>
    %518 = vector.broadcast %517 : vector<8x1xf32> to vector<8x8xf32>
    %519 = arith.mulf %514, %518 : vector<8x8xf32>
    %cst_301 = arith.constant dense<0.000000e+00> : vector<8x8xf32>
    %520 = tpu.matmul %519, %506, %cst_301 {dimension_numbers = #tpu.dot_dimension_numbers<[1], [0], [0], [1], [0, 0, 1, 1], [], []>} : vector<8x8xf32>, vector<8x8xf32>, vector<8x8xf32> -> vector<8x8xf32>
    %c8_302 = arith.constant 8 : index
    %c0_303 = arith.constant 0 : index
    %521 = vector.load %arg24[%c8_302, %c0_303] : memref<16x32xf32, #tpu.memory_space<vmem>>, vector<8x8xf32>
    tpu.vector_store %arg24[%c8_302, %c0_303], %520 {strides = array<i32>} : memref<16x32xf32, #tpu.memory_space<vmem>>, vector<8x8xf32>,
    %522 = vector.extract_strided_slice %375 {offsets = [8, 0], sizes = [8, 8], strides = [1, 1]} : vector<16x8xf32> to vector<8x8xf32>
    %523 = vector.extract_strided_slice %382 {offsets = [8, 0], sizes = [8, 8], strides = [1, 1]} : vector<16x8xf32> to vector<8x8xf32>
    %524 = vector.extract_strided_slice %389 {offsets = [8, 0], sizes = [8, 8], strides = [1, 1]} : vector<16x8xf32> to vector<8x8xf32>
    %cst_304 = arith.constant dense<0.000000e+00> : vector<8x8xf32>
    %525 = tpu.matmul %522, %523, %cst_304 {dimension_numbers = #tpu.dot_dimension_numbers<[1], [1], [0], [0], [0, 0, 1, 0], [], []>} : vector<8x8xf32>, vector<8x8xf32>, vector<8x8xf32> -> vector<8x8xf32>
    %526 = vector.broadcast %34 : vector<1x8xf32> to vector<8x8xf32>
    %527 = arith.addf %525, %526 : vector<8x8xf32>
    %cst_305 = arith.constant dense<0xFF800000> : vector<8xf32>
    %528 = vector.multi_reduction <maximumf>, %527, %cst_305 [1] : vector<8x8xf32> to vector<8xf32>
    %529 = vector.shape_cast %528 : vector<8xf32> to vector<8x1xf32>
    %530 = vector.broadcast %529 : vector<8x1xf32> to vector<8x8xf32>
    %531 = arith.subf %527, %530 : vector<8x8xf32>
    %532 = math.exp %531 : vector<8x8xf32>
    %cst_306 = arith.constant dense<0.000000e+00> : vector<8xf32>
    %533 = vector.multi_reduction <add>, %532, %cst_306 [1] : vector<8x8xf32> to vector<8xf32>
    %534 = vector.shape_cast %533 : vector<8xf32> to vector<8x1xf32>
    %535 = tpu.reciprocal %534 {approx = true} : vector<8x1xf32> -> vector<8x1xf32>
    %536 = vector.broadcast %535 : vector<8x1xf32> to vector<8x8xf32>
    %537 = arith.mulf %532, %536 : vector<8x8xf32>
    %cst_307 = arith.constant dense<0.000000e+00> : vector<8x8xf32>
    %538 = tpu.matmul %537, %524, %cst_307 {dimension_numbers = #tpu.dot_dimension_numbers<[1], [0], [0], [1], [0, 0, 1, 1], [], []>} : vector<8x8xf32>, vector<8x8xf32>, vector<8x8xf32> -> vector<8x8xf32>
    %c8_308 = arith.constant 8 : index
    %c8_309 = arith.constant 8 : index
    %539 = vector.load %arg24[%c8_308, %c8_309] : memref<16x32xf32, #tpu.memory_space<vmem>>, vector<8x8xf32>
    tpu.vector_store %arg24[%c8_308, %c8_309], %538 {strides = array<i32>} : memref<16x32xf32, #tpu.memory_space<vmem>>, vector<8x8xf32>,
    %540 = vector.extract_strided_slice %396 {offsets = [8, 0], sizes = [8, 8], strides = [1, 1]} : vector<16x8xf32> to vector<8x8xf32>
    %541 = vector.extract_strided_slice %403 {offsets = [8, 0], sizes = [8, 8], strides = [1, 1]} : vector<16x8xf32> to vector<8x8xf32>
    %542 = vector.extract_strided_slice %410 {offsets = [8, 0], sizes = [8, 8], strides = [1, 1]} : vector<16x8xf32> to vector<8x8xf32>
    %cst_310 = arith.constant dense<0.000000e+00> : vector<8x8xf32>
    %543 = tpu.matmul %540, %541, %cst_310 {dimension_numbers = #tpu.dot_dimension_numbers<[1], [1], [0], [0], [0, 0, 1, 0], [], []>} : vector<8x8xf32>, vector<8x8xf32>, vector<8x8xf32> -> vector<8x8xf32>
    %544 = vector.broadcast %34 : vector<1x8xf32> to vector<8x8xf32>
    %545 = arith.addf %543, %544 : vector<8x8xf32>
    %cst_311 = arith.constant dense<0xFF800000> : vector<8xf32>
    %546 = vector.multi_reduction <maximumf>, %545, %cst_311 [1] : vector<8x8xf32> to vector<8xf32>
    %547 = vector.shape_cast %546 : vector<8xf32> to vector<8x1xf32>
    %548 = vector.broadcast %547 : vector<8x1xf32> to vector<8x8xf32>
    %549 = arith.subf %545, %548 : vector<8x8xf32>
    %550 = math.exp %549 : vector<8x8xf32>
    %cst_312 = arith.constant dense<0.000000e+00> : vector<8xf32>
    %551 = vector.multi_reduction <add>, %550, %cst_312 [1] : vector<8x8xf32> to vector<8xf32>
    %552 = vector.shape_cast %551 : vector<8xf32> to vector<8x1xf32>
    %553 = tpu.reciprocal %552 {approx = true} : vector<8x1xf32> -> vector<8x1xf32>
    %554 = vector.broadcast %553 : vector<8x1xf32> to vector<8x8xf32>
    %555 = arith.mulf %550, %554 : vector<8x8xf32>
    %cst_313 = arith.constant dense<0.000000e+00> : vector<8x8xf32>
    %556 = tpu.matmul %555, %542, %cst_313 {dimension_numbers = #tpu.dot_dimension_numbers<[1], [0], [0], [1], [0, 0, 1, 1], [], []>} : vector<8x8xf32>, vector<8x8xf32>, vector<8x8xf32> -> vector<8x8xf32>
    %c8_314 = arith.constant 8 : index
    %c16_315 = arith.constant 16 : index
    %557 = vector.load %arg24[%c8_314, %c16_315] : memref<16x32xf32, #tpu.memory_space<vmem>>, vector<8x8xf32>
    tpu.vector_store %arg24[%c8_314, %c16_315], %556 {strides = array<i32>} : memref<16x32xf32, #tpu.memory_space<vmem>>, vector<8x8xf32>,
    %558 = vector.extract_strided_slice %417 {offsets = [8, 0], sizes = [8, 8], strides = [1, 1]} : vector<16x8xf32> to vector<8x8xf32>
    %559 = vector.extract_strided_slice %424 {offsets = [8, 0], sizes = [8, 8], strides = [1, 1]} : vector<16x8xf32> to vector<8x8xf32>
    %560 = vector.extract_strided_slice %431 {offsets = [8, 0], sizes = [8, 8], strides = [1, 1]} : vector<16x8xf32> to vector<8x8xf32>
    %cst_316 = arith.constant dense<0.000000e+00> : vector<8x8xf32>
    %561 = tpu.matmul %558, %559, %cst_316 {dimension_numbers = #tpu.dot_dimension_numbers<[1], [1], [0], [0], [0, 0, 1, 0], [], []>} : vector<8x8xf32>, vector<8x8xf32>, vector<8x8xf32> -> vector<8x8xf32>
    %562 = vector.broadcast %34 : vector<1x8xf32> to vector<8x8xf32>
    %563 = arith.addf %561, %562 : vector<8x8xf32>
    %cst_317 = arith.constant dense<0xFF800000> : vector<8xf32>
    %564 = vector.multi_reduction <maximumf>, %563, %cst_317 [1] : vector<8x8xf32> to vector<8xf32>
    %565 = vector.shape_cast %564 : vector<8xf32> to vector<8x1xf32>
    %566 = vector.broadcast %565 : vector<8x1xf32> to vector<8x8xf32>
    %567 = arith.subf %563, %566 : vector<8x8xf32>
    %568 = math.exp %567 : vector<8x8xf32>
    %cst_318 = arith.constant dense<0.000000e+00> : vector<8xf32>
    %569 = vector.multi_reduction <add>, %568, %cst_318 [1] : vector<8x8xf32> to vector<8xf32>
    %570 = vector.shape_cast %569 : vector<8xf32> to vector<8x1xf32>
    %571 = tpu.reciprocal %570 {approx = true} : vector<8x1xf32> -> vector<8x1xf32>
    %572 = vector.broadcast %571 : vector<8x1xf32> to vector<8x8xf32>
    %573 = arith.mulf %568, %572 : vector<8x8xf32>
    %cst_319 = arith.constant dense<0.000000e+00> : vector<8x8xf32>
    %574 = tpu.matmul %573, %560, %cst_319 {dimension_numbers = #tpu.dot_dimension_numbers<[1], [0], [0], [1], [0, 0, 1, 1], [], []>} : vector<8x8xf32>, vector<8x8xf32>, vector<8x8xf32> -> vector<8x8xf32>
    %c8_320 = arith.constant 8 : index
    %c24_321 = arith.constant 24 : index
    %575 = vector.load %arg24[%c8_320, %c24_321] : memref<16x32xf32, #tpu.memory_space<vmem>>, vector<8x8xf32>
    tpu.vector_store %arg24[%c8_320, %c24_321], %574 {strides = array<i32>} : memref<16x32xf32, #tpu.memory_space<vmem>>, vector<8x8xf32>,
    %c0_322 = arith.constant 0 : index
    %c0_323 = arith.constant 0 : index
    %576 = vector.load %arg24[%c0_322, %c0_323] : memref<16x32xf32, #tpu.memory_space<vmem>>, vector<16x32xf32>
    %c1_324 = arith.constant 1 : index
    %c0_325 = arith.constant 0 : index
    %c0_326 = arith.constant 0 : index
    %577 = vector.load %arg11[%c1_324, %c0_325, %c0_326] : memref<2x32x32xf32, #tpu.memory_space<vmem>>, vector<1x32x32xf32>
    %578 = vector.shape_cast %577 : vector<1x32x32xf32> to vector<32x32xf32>
    %cst_327 = arith.constant dense<0.000000e+00> : vector<16x32xf32>
    %579 = tpu.matmul %576, %578, %cst_327 {dimension_numbers = #tpu.dot_dimension_numbers<[1], [0], [0], [1], [0, 0, 1, 1], [], []>} : vector<16x32xf32>, vector<32x32xf32>, vector<16x32xf32> -> vector<16x32xf32>
    %c1_328 = arith.constant 1 : index
    %c0_329 = arith.constant 0 : index
    %c0_330 = arith.constant 0 : index
    %580 = vector.load %arg12[%c1_328, %c0_329, %c0_330] : memref<2x1x32xf32, #tpu.memory_space<vmem>>, vector<1x1x32xf32>
    %581 = vector.shape_cast %580 : vector<1x1x32xf32> to vector<1x32xf32>
    %582 = vector.broadcast %581 : vector<1x32xf32> to vector<16x32xf32>
    %583 = arith.addf %579, %582 : vector<16x32xf32>
    %584 = arith.addf %347, %583 : vector<16x32xf32>
    %c1_331 = arith.constant 1 : index
    %c0_332 = arith.constant 0 : index
    %c0_333 = arith.constant 0 : index
    %585 = vector.load %arg13[%c1_331, %c0_332, %c0_333] : memref<2x1x32xf32, #tpu.memory_space<vmem>>, vector<1x1x32xf32>
    %586 = vector.shape_cast %585 : vector<1x1x32xf32> to vector<1x32xf32>
    %c1_334 = arith.constant 1 : index
    %c0_335 = arith.constant 0 : index
    %c0_336 = arith.constant 0 : index
    %587 = vector.load %arg14[%c1_334, %c0_335, %c0_336] : memref<2x1x32xf32, #tpu.memory_space<vmem>>, vector<1x1x32xf32>
    %588 = vector.shape_cast %587 : vector<1x1x32xf32> to vector<1x32xf32>
    %cst_337 = arith.constant dense<0.000000e+00> : vector<16xf32>
    %589 = vector.multi_reduction <add>, %584, %cst_337 [1] : vector<16x32xf32> to vector<16xf32>
    %590 = vector.shape_cast %589 : vector<16xf32> to vector<16x1xf32>
    %cst_338 = arith.constant 3.200000e+01 : f32
    %591 = vector.broadcast %cst_338 : f32 to vector<16x1xf32>
    %592 = arith.divf %590, %591 : vector<16x1xf32>
    %593 = vector.broadcast %592 : vector<16x1xf32> to vector<16x32xf32>
    %594 = arith.subf %584, %593 : vector<16x32xf32>
    %595 = arith.mulf %594, %594 : vector<16x32xf32>
    %cst_339 = arith.constant dense<0.000000e+00> : vector<16xf32>
    %596 = vector.multi_reduction <add>, %595, %cst_339 [1] : vector<16x32xf32> to vector<16xf32>
    %597 = vector.shape_cast %596 : vector<16xf32> to vector<16x1xf32>
    %cst_340 = arith.constant 3.200000e+01 : f32
    %598 = vector.broadcast %cst_340 : f32 to vector<16x1xf32>
    %599 = arith.divf %597, %598 : vector<16x1xf32>
    %cst_341 = arith.constant 9.99999974E-6 : f32
    %600 = vector.broadcast %cst_341 : f32 to vector<16x1xf32>
    %601 = arith.addf %599, %600 : vector<16x1xf32>
    %602 = math.rsqrt %601 : vector<16x1xf32>
    %603 = vector.broadcast %602 : vector<16x1xf32> to vector<16x32xf32>
    %604 = arith.mulf %594, %603 : vector<16x32xf32>
    %605 = vector.broadcast %586 : vector<1x32xf32> to vector<16x32xf32>
    %606 = arith.mulf %604, %605 : vector<16x32xf32>
    %607 = vector.broadcast %588 : vector<1x32xf32> to vector<16x32xf32>
    %608 = arith.addf %606, %607 : vector<16x32xf32>
    %c1_342 = arith.constant 1 : index
    %c0_343 = arith.constant 0 : index
    %c0_344 = arith.constant 0 : index
    %609 = vector.load %arg15[%c1_342, %c0_343, %c0_344] : memref<2x32x64xf32, #tpu.memory_space<vmem>>, vector<1x32x64xf32>
    %610 = vector.shape_cast %609 : vector<1x32x64xf32> to vector<32x64xf32>
    %cst_345 = arith.constant dense<0.000000e+00> : vector<16x64xf32>
    %611 = tpu.matmul %608, %610, %cst_345 {dimension_numbers = #tpu.dot_dimension_numbers<[1], [0], [0], [1], [0, 0, 1, 1], [], []>} : vector<16x32xf32>, vector<32x64xf32>, vector<16x64xf32> -> vector<16x64xf32>
    %c1_346 = arith.constant 1 : index
    %c0_347 = arith.constant 0 : index
    %c0_348 = arith.constant 0 : index
    %612 = vector.load %arg16[%c1_346, %c0_347, %c0_348] : memref<2x1x64xf32, #tpu.memory_space<vmem>>, vector<1x1x64xf32>
    %613 = vector.shape_cast %612 : vector<1x1x64xf32> to vector<1x64xf32>
    %614 = vector.broadcast %613 : vector<1x64xf32> to vector<16x64xf32>
    %615 = arith.addf %611, %614 : vector<16x64xf32>
    %616 = arith.mulf %615, %615 : vector<16x64xf32>
    %617 = arith.mulf %615, %616 : vector<16x64xf32>
    %cst_349 = arith.constant 4.471500e-02 : f32
    %618 = vector.broadcast %cst_349 : f32 to vector<16x64xf32>
    %619 = arith.mulf %618, %617 : vector<16x64xf32>
    %620 = arith.addf %615, %619 : vector<16x64xf32>
    %cst_350 = arith.constant 0.797884583 : f32
    %621 = vector.broadcast %cst_350 : f32 to vector<16x64xf32>
    %622 = arith.mulf %621, %620 : vector<16x64xf32>
    %623 = math.tanh %622 : vector<16x64xf32>
    %cst_351 = arith.constant 1.000000e+00 : f32
    %624 = vector.broadcast %cst_351 : f32 to vector<16x64xf32>
    %625 = arith.addf %624, %623 : vector<16x64xf32>
    %cst_352 = arith.constant 5.000000e-01 : f32
    %626 = vector.broadcast %cst_352 : f32 to vector<16x64xf32>
    %627 = arith.mulf %626, %625 : vector<16x64xf32>
    %628 = arith.mulf %615, %627 : vector<16x64xf32>
    %c1_353 = arith.constant 1 : index
    %c0_354 = arith.constant 0 : index
    %c0_355 = arith.constant 0 : index
    %629 = vector.load %arg17[%c1_353, %c0_354, %c0_355] : memref<2x64x32xf32, #tpu.memory_space<vmem>>, vector<1x64x32xf32>
    %630 = vector.shape_cast %629 : vector<1x64x32xf32> to vector<64x32xf32>
    %cst_356 = arith.constant dense<0.000000e+00> : vector<16x32xf32>
    %631 = tpu.matmul %628, %630, %cst_356 {dimension_numbers = #tpu.dot_dimension_numbers<[1], [0], [0], [1], [0, 0, 1, 1], [], []>} : vector<16x64xf32>, vector<64x32xf32>, vector<16x32xf32> -> vector<16x32xf32>
    %c1_357 = arith.constant 1 : index
    %c0_358 = arith.constant 0 : index
    %c0_359 = arith.constant 0 : index
    %632 = vector.load %arg18[%c1_357, %c0_358, %c0_359] : memref<2x1x32xf32, #tpu.memory_space<vmem>>, vector<1x1x32xf32>
    %633 = vector.shape_cast %632 : vector<1x1x32xf32> to vector<1x32xf32>
    %634 = vector.broadcast %633 : vector<1x32xf32> to vector<16x32xf32>
    %635 = arith.addf %631, %634 : vector<16x32xf32>
    %636 = arith.addf %608, %635 : vector<16x32xf32>
    %c1_360 = arith.constant 1 : index
    %c0_361 = arith.constant 0 : index
    %c0_362 = arith.constant 0 : index
    %637 = vector.load %arg19[%c1_360, %c0_361, %c0_362] : memref<2x1x32xf32, #tpu.memory_space<vmem>>, vector<1x1x32xf32>
    %638 = vector.shape_cast %637 : vector<1x1x32xf32> to vector<1x32xf32>
    %c1_363 = arith.constant 1 : index
    %c0_364 = arith.constant 0 : index
    %c0_365 = arith.constant 0 : index
    %639 = vector.load %arg20[%c1_363, %c0_364, %c0_365] : memref<2x1x32xf32, #tpu.memory_space<vmem>>, vector<1x1x32xf32>
    %640 = vector.shape_cast %639 : vector<1x1x32xf32> to vector<1x32xf32>
    %cst_366 = arith.constant dense<0.000000e+00> : vector<16xf32>
    %641 = vector.multi_reduction <add>, %636, %cst_366 [1] : vector<16x32xf32> to vector<16xf32>
    %642 = vector.shape_cast %641 : vector<16xf32> to vector<16x1xf32>
    %cst_367 = arith.constant 3.200000e+01 : f32
    %643 = vector.broadcast %cst_367 : f32 to vector<16x1xf32>
    %644 = arith.divf %642, %643 : vector<16x1xf32>
    %645 = vector.broadcast %644 : vector<16x1xf32> to vector<16x32xf32>
    %646 = arith.subf %636, %645 : vector<16x32xf32>
    %647 = arith.mulf %646, %646 : vector<16x32xf32>
    %cst_368 = arith.constant dense<0.000000e+00> : vector<16xf32>
    %648 = vector.multi_reduction <add>, %647, %cst_368 [1] : vector<16x32xf32> to vector<16xf32>
    %649 = vector.shape_cast %648 : vector<16xf32> to vector<16x1xf32>
    %cst_369 = arith.constant 3.200000e+01 : f32
    %650 = vector.broadcast %cst_369 : f32 to vector<16x1xf32>
    %651 = arith.divf %649, %650 : vector<16x1xf32>
    %cst_370 = arith.constant 9.99999974E-6 : f32
    %652 = vector.broadcast %cst_370 : f32 to vector<16x1xf32>
    %653 = arith.addf %651, %652 : vector<16x1xf32>
    %654 = math.rsqrt %653 : vector<16x1xf32>
    %655 = vector.broadcast %654 : vector<16x1xf32> to vector<16x32xf32>
    %656 = arith.mulf %646, %655 : vector<16x32xf32>
    %657 = vector.broadcast %638 : vector<1x32xf32> to vector<16x32xf32>
    %658 = arith.mulf %656, %657 : vector<16x32xf32>
    %659 = vector.broadcast %640 : vector<1x32xf32> to vector<16x32xf32>
    %660 = arith.addf %658, %659 : vector<16x32xf32>
    %661 = vector.extract_strided_slice %660 {offsets = [0, 0], sizes = [8, 32], strides = [1, 1]} : vector<16x32xf32> to vector<8x32xf32>
    %cst_371 = arith.constant dense<0.000000e+00> : vector<32xf32>
    %662 = vector.multi_reduction <add>, %661, %cst_371 [0] : vector<8x32xf32> to vector<32xf32>
    %663 = vector.shape_cast %662 : vector<32xf32> to vector<1x32xf32>
    %cst_372 = arith.constant 8.000000e+00 : f32
    %664 = vector.broadcast %cst_372 : f32 to vector<1x32xf32>
    %665 = arith.divf %663, %664 : vector<1x32xf32>
    %c0_373 = arith.constant 0 : index
    %c0_374 = arith.constant 0 : index
    %666 = vector.load %arg21[%c0_373, %c0_374] : memref<32x128xf32, #tpu.memory_space<vmem>>, vector<32x128xf32>
    %cst_375 = arith.constant dense<0.000000e+00> : vector<1x128xf32>
    %667 = tpu.matmul %665, %666, %cst_375 {dimension_numbers = #tpu.dot_dimension_numbers<[1], [0], [0], [1], [0, 0, 1, 1], [], []>} : vector<1x32xf32>, vector<32x128xf32>, vector<1x128xf32> -> vector<1x128xf32>
    %c0_376 = arith.constant 0 : index
    %c0_377 = arith.constant 0 : index
    %668 = vector.load %arg22[%c0_376, %c0_377] : memref<1x128xf32, #tpu.memory_space<vmem>>, vector<1x128xf32>
    %669 = arith.addf %667, %668 : vector<1x128xf32>
    %c0_378 = arith.constant 0 : index
    %c0_379 = arith.constant 0 : index
    %c0_380 = arith.constant 0 : index
    %670 = vector.load %arg23[%c0_378, %c0_379, %c0_380] : memref<2x1x128xf32, #tpu.memory_space<vmem>>, vector<1x1x128xf32>
    %671 = vector.shape_cast %670 : vector<1x1x128xf32> to vector<1x128xf32>
    %672 = vector.shape_cast %669 : vector<1x128xf32> to vector<1x1x128xf32>
    tpu.vector_store %arg23[%c0_378, %c0_379, %c0_380], %672 {strides = array<i32>} : memref<2x1x128xf32, #tpu.memory_space<vmem>>, vector<1x1x128xf32>,
    %673 = vector.extract_strided_slice %660 {offsets = [8, 0], sizes = [8, 32], strides = [1, 1]} : vector<16x32xf32> to vector<8x32xf32>
    %cst_381 = arith.constant dense<0.000000e+00> : vector<32xf32>
    %674 = vector.multi_reduction <add>, %673, %cst_381 [0] : vector<8x32xf32> to vector<32xf32>
    %675 = vector.shape_cast %674 : vector<32xf32> to vector<1x32xf32>
    %cst_382 = arith.constant 8.000000e+00 : f32
    %676 = vector.broadcast %cst_382 : f32 to vector<1x32xf32>
    %677 = arith.divf %675, %676 : vector<1x32xf32>
    %c0_383 = arith.constant 0 : index
    %c0_384 = arith.constant 0 : index
    %678 = vector.load %arg21[%c0_383, %c0_384] : memref<32x128xf32, #tpu.memory_space<vmem>>, vector<32x128xf32>
    %cst_385 = arith.constant dense<0.000000e+00> : vector<1x128xf32>
    %679 = tpu.matmul %677, %678, %cst_385 {dimension_numbers = #tpu.dot_dimension_numbers<[1], [0], [0], [1], [0, 0, 1, 1], [], []>} : vector<1x32xf32>, vector<32x128xf32>, vector<1x128xf32> -> vector<1x128xf32>
    %c0_386 = arith.constant 0 : index
    %c0_387 = arith.constant 0 : index
    %680 = vector.load %arg22[%c0_386, %c0_387] : memref<1x128xf32, #tpu.memory_space<vmem>>, vector<1x128xf32>
    %681 = arith.addf %679, %680 : vector<1x128xf32>
    %c1_388 = arith.constant 1 : index
    %c0_389 = arith.constant 0 : index
    %c0_390 = arith.constant 0 : index
    %682 = vector.load %arg23[%c1_388, %c0_389, %c0_390] : memref<2x1x128xf32, #tpu.memory_space<vmem>>, vector<1x1x128xf32>
    %683 = vector.shape_cast %682 : vector<1x1x128xf32> to vector<1x128xf32>
    %684 = vector.shape_cast %681 : vector<1x128xf32> to vector<1x1x128xf32>
    tpu.vector_store %arg23[%c1_388, %c0_389, %c0_390], %684 {strides = array<i32>} : memref<2x1x128xf32, #tpu.memory_space<vmem>>, vector<1x1x128xf32>,
    return
  }
  func.func @transform_0(%arg0: i32) -> (i32, i32) {
    %c0_i32 = arith.constant 0 : i32
    %c0_i32_0 = arith.constant 0 : i32
    return %arg0, %c0_i32 : i32, i32
  }
  func.func @transform_1(%arg0: i32) -> (i32, i32, i32) {
    %c0_i32 = arith.constant 0 : i32
    %c0_i32_0 = arith.constant 0 : i32
    %c0_i32_1 = arith.constant 0 : i32
    return %arg0, %c0_i32, %c0_i32_0 : i32, i32, i32
  }
  func.func @transform_2(%arg0: i32) -> (i32, i32) {
    %c0_i32 = arith.constant 0 : i32
    %c0_i32_0 = arith.constant 0 : i32
    %c0_i32_1 = arith.constant 0 : i32
    return %c0_i32, %c0_i32_0 : i32, i32
  }
  func.func @transform_3(%arg0: i32) -> (i32, i32) {
    %c0_i32 = arith.constant 0 : i32
    %c0_i32_0 = arith.constant 0 : i32
    %c0_i32_1 = arith.constant 0 : i32
    return %c0_i32, %c0_i32_0 : i32, i32
  }
  func.func @transform_4(%arg0: i32) -> (i32, i32, i32) {
    %c0_i32 = arith.constant 0 : i32
    %c0_i32_0 = arith.constant 0 : i32
    %c0_i32_1 = arith.constant 0 : i32
    %c0_i32_2 = arith.constant 0 : i32
    return %c0_i32, %c0_i32_0, %c0_i32_1 : i32, i32, i32
  }
  func.func @transform_5(%arg0: i32) -> (i32, i32, i32) {
    %c0_i32 = arith.constant 0 : i32
    %c0_i32_0 = arith.constant 0 : i32
    %c0_i32_1 = arith.constant 0 : i32
    %c0_i32_2 = arith.constant 0 : i32
    return %c0_i32, %c0_i32_0, %c0_i32_1 : i32, i32, i32
  }
  func.func @transform_6(%arg0: i32) -> (i32, i32, i32) {
    %c0_i32 = arith.constant 0 : i32
    %c0_i32_0 = arith.constant 0 : i32
    %c0_i32_1 = arith.constant 0 : i32
    %c0_i32_2 = arith.constant 0 : i32
    return %c0_i32, %c0_i32_0, %c0_i32_1 : i32, i32, i32
  }
  func.func @transform_7(%arg0: i32) -> (i32, i32, i32) {
    %c0_i32 = arith.constant 0 : i32
    %c0_i32_0 = arith.constant 0 : i32
    %c0_i32_1 = arith.constant 0 : i32
    %c0_i32_2 = arith.constant 0 : i32
    return %c0_i32, %c0_i32_0, %c0_i32_1 : i32, i32, i32
  }
  func.func @transform_8(%arg0: i32) -> (i32, i32, i32) {
    %c0_i32 = arith.constant 0 : i32
    %c0_i32_0 = arith.constant 0 : i32
    %c0_i32_1 = arith.constant 0 : i32
    %c0_i32_2 = arith.constant 0 : i32
    return %c0_i32, %c0_i32_0, %c0_i32_1 : i32, i32, i32
  }
  func.func @transform_9(%arg0: i32) -> (i32, i32, i32) {
    %c0_i32 = arith.constant 0 : i32
    %c0_i32_0 = arith.constant 0 : i32
    %c0_i32_1 = arith.constant 0 : i32
    %c0_i32_2 = arith.constant 0 : i32
    return %c0_i32, %c0_i32_0, %c0_i32_1 : i32, i32, i32
  }
  func.func @transform_10(%arg0: i32) -> (i32, i32, i32) {
    %c0_i32 = arith.constant 0 : i32
    %c0_i32_0 = arith.constant 0 : i32
    %c0_i32_1 = arith.constant 0 : i32
    %c0_i32_2 = arith.constant 0 : i32
    return %c0_i32, %c0_i32_0, %c0_i32_1 : i32, i32, i32
  }
  func.func @transform_11(%arg0: i32) -> (i32, i32, i32) {
    %c0_i32 = arith.constant 0 : i32
    %c0_i32_0 = arith.constant 0 : i32
    %c0_i32_1 = arith.constant 0 : i32
    %c0_i32_2 = arith.constant 0 : i32
    return %c0_i32, %c0_i32_0, %c0_i32_1 : i32, i32, i32
  }
  func.func @transform_12(%arg0: i32) -> (i32, i32, i32) {
    %c0_i32 = arith.constant 0 : i32
    %c0_i32_0 = arith.constant 0 : i32
    %c0_i32_1 = arith.constant 0 : i32
    %c0_i32_2 = arith.constant 0 : i32
    return %c0_i32, %c0_i32_0, %c0_i32_1 : i32, i32, i32
  }
  func.func @transform_13(%arg0: i32) -> (i32, i32, i32) {
    %c0_i32 = arith.constant 0 : i32
    %c0_i32_0 = arith.constant 0 : i32
    %c0_i32_1 = arith.constant 0 : i32
    %c0_i32_2 = arith.constant 0 : i32
    return %c0_i32, %c0_i32_0, %c0_i32_1 : i32, i32, i32
  }
  func.func @transform_14(%arg0: i32) -> (i32, i32, i32) {
    %c0_i32 = arith.constant 0 : i32
    %c0_i32_0 = arith.constant 0 : i32
    %c0_i32_1 = arith.constant 0 : i32
    %c0_i32_2 = arith.constant 0 : i32
    return %c0_i32, %c0_i32_0, %c0_i32_1 : i32, i32, i32
  }
  func.func @transform_15(%arg0: i32) -> (i32, i32, i32) {
    %c0_i32 = arith.constant 0 : i32
    %c0_i32_0 = arith.constant 0 : i32
    %c0_i32_1 = arith.constant 0 : i32
    %c0_i32_2 = arith.constant 0 : i32
    return %c0_i32, %c0_i32_0, %c0_i32_1 : i32, i32, i32
  }
  func.func @transform_16(%arg0: i32) -> (i32, i32, i32) {
    %c0_i32 = arith.constant 0 : i32
    %c0_i32_0 = arith.constant 0 : i32
    %c0_i32_1 = arith.constant 0 : i32
    %c0_i32_2 = arith.constant 0 : i32
    return %c0_i32, %c0_i32_0, %c0_i32_1 : i32, i32, i32
  }
  func.func @transform_17(%arg0: i32) -> (i32, i32, i32) {
    %c0_i32 = arith.constant 0 : i32
    %c0_i32_0 = arith.constant 0 : i32
    %c0_i32_1 = arith.constant 0 : i32
    %c0_i32_2 = arith.constant 0 : i32
    return %c0_i32, %c0_i32_0, %c0_i32_1 : i32, i32, i32
  }
  func.func @transform_18(%arg0: i32) -> (i32, i32, i32) {
    %c0_i32 = arith.constant 0 : i32
    %c0_i32_0 = arith.constant 0 : i32
    %c0_i32_1 = arith.constant 0 : i32
    %c0_i32_2 = arith.constant 0 : i32
    return %c0_i32, %c0_i32_0, %c0_i32_1 : i32, i32, i32
  }
  func.func @transform_19(%arg0: i32) -> (i32, i32, i32) {
    %c0_i32 = arith.constant 0 : i32
    %c0_i32_0 = arith.constant 0 : i32
    %c0_i32_1 = arith.constant 0 : i32
    %c0_i32_2 = arith.constant 0 : i32
    return %c0_i32, %c0_i32_0, %c0_i32_1 : i32, i32, i32
  }
  func.func @transform_20(%arg0: i32) -> (i32, i32) {
    %c0_i32 = arith.constant 0 : i32
    %c0_i32_0 = arith.constant 0 : i32
    %c0_i32_1 = arith.constant 0 : i32
    return %c0_i32, %c0_i32_0 : i32, i32
  }
  func.func @transform_21(%arg0: i32) -> (i32, i32) {
    %c0_i32 = arith.constant 0 : i32
    %c0_i32_0 = arith.constant 0 : i32
    %c0_i32_1 = arith.constant 0 : i32
    return %c0_i32, %c0_i32_0 : i32, i32
  }
  func.func @transform_22(%arg0: i32) -> (i32, i32, i32) {
    %c0_i32 = arith.constant 0 : i32
    %c0_i32_0 = arith.constant 0 : i32
    %c0_i32_1 = arith.constant 0 : i32
    return %arg0, %c0_i32, %c0_i32_0 : i32, i32, i32
  }
}

</mosaic_0001>

<llo_original>
// kernel: single_bert_forward.1
$region0: #{single_bert_forward.1}
  #allocation0 [shape = 'u32[]', space=smem, size = 0x4, offset = 0x4, fixed_abs, tag = 'smem constant byte address 0x4 - core index']
  #allocation1 [shape = 'u32[144,128]{1,0:T(1,128)}', space=vmem, size = 0x12000, scoped, tag = 'internal scratch']
  #allocation2 [shape = 'f32[16,32]{1,0:T(8,128)}', space=vmem, size = 0x2000, scoped, tag = 'scratch operand']
  %s0 = inlined_call_operand.vmem [shape: f32[16,32], index: 0, kind: input, shape index: {}]
  %s1 = inlined_call_operand.vmem [shape: f32[2,1,8], index: 1, kind: input, shape index: {}]
  %s2 = inlined_call_operand.vmem [shape: f32[1,32], index: 2, kind: input, shape index: {}]
  %s3 = inlined_call_operand.vmem [shape: f32[1,32], index: 3, kind: input, shape index: {}]
  %s4 = inlined_call_operand.vmem [shape: f32[8,32,8], index: 4, kind: input, shape index: {}]
  %s5 = inlined_call_operand.vmem [shape: f32[8,1,8], index: 5, kind: input, shape index: {}]
  %s6 = inlined_call_operand.vmem [shape: f32[8,32,8], index: 6, kind: input, shape index: {}]
  %s7 = inlined_call_operand.vmem [shape: f32[8,1,8], index: 7, kind: input, shape index: {}]
  %s8 = inlined_call_operand.vmem [shape: f32[8,32,8], index: 8, kind: input, shape index: {}]
  %s9 = inlined_call_operand.vmem [shape: f32[8,1,8], index: 9, kind: input, shape index: {}]
  %s10 = inlined_call_operand.vmem [shape: f32[2,32,32], index: 10, kind: input, shape index: {}]
  %s11 = inlined_call_operand.vmem [shape: f32[2,1,32], index: 11, kind: input, shape index: {}]
  %s12 = inlined_call_operand.vmem [shape: f32[2,1,32], index: 12, kind: input, shape index: {}]
  %s13 = inlined_call_operand.vmem [shape: f32[2,1,32], index: 13, kind: input, shape index: {}]
  %s14 = inlined_call_operand.vmem [shape: f32[2,32,64], index: 14, kind: input, shape index: {}]
  %s15 = inlined_call_operand.vmem [shape: f32[2,1,64], index: 15, kind: input, shape index: {}]
  %s16 = inlined_call_operand.vmem [shape: f32[2,64,32], index: 16, kind: input, shape index: {}]
  %s17 = inlined_call_operand.vmem [shape: f32[2,1,32], index: 17, kind: input, shape index: {}]
  %s18 = inlined_call_operand.vmem [shape: f32[2,1,32], index: 18, kind: input, shape index: {}]
  %s19 = inlined_call_operand.vmem [shape: f32[2,1,32], index: 19, kind: input, shape index: {}]
  %s20 = inlined_call_operand.vmem [shape: f32[32,128], index: 20, kind: input, shape index: {}]
  %s21 = inlined_call_operand.vmem [shape: f32[1,128], index: 21, kind: input, shape index: {}]
  %s22 = inlined_call_operand.hbm [shape: f32[2,1,128], index: 22, kind: output, shape index: {}]
  %s23 = sld [smem:[#allocation0]]
  $region98: #{single_bert_forward.1} parent=0
    _
  %s25 = ssub.s32 1, %s23
  %s26 = scalar_select 0, %s25, %s23
  $region1: #{single_bert_forward.1} parent=0
    #allocation3 [shape = 'u8[1024]{0}', space=vmem, size = 0x400, scoped, tag = 'output window, operand 0, single buffered']
    #allocation4 [shape = 's32[1]{0}', space=sflag, size = 0x4, scoped, tag = 'scoped memory for single_bert_forward.1']
    %27 = vsyncpa [#allocation4], 0
    // Predicated region
    $region2: #{single_bert_forward.1} parent=1 // pred_check
      _
    $region3: #{single_bert_forward.1} parent=1 // pred_check_branch
      %29 = sbr.rel (0) target = $region5
    $region4: #{single_bert_forward.1} parent=1 // pred_region
      _
    $region5: #{single_bert_forward.1} parent=1 // pred_fallthru
      _
    // Predicated region
    $region6: #{single_bert_forward.1} parent=1 // pred_check
      _
    $region7: #{single_bert_forward.1} parent=1 // pred_check_branch
      %31 = sbr.rel (0) target = $region9
    $region8: #{single_bert_forward.1} parent=1 // pred_region
      _
    $region9: #{single_bert_forward.1} parent=1 // pred_fallthru
      _
    // Predicated region
    $region10: #{single_bert_forward.1} parent=1 // pred_check
      _
    $region11: #{single_bert_forward.1} parent=1 // pred_check_branch
      %33 = sbr.rel (0) target = $region13
    $region12: #{single_bert_forward.1} parent=1 // pred_region
      _
    $region13: #{single_bert_forward.1} parent=1 // pred_fallthru
      _
    // Predicated region
    $region14: #{single_bert_forward.1} parent=1 // pred_check
      _
    $region15: #{single_bert_forward.1} parent=1 // pred_check_branch
      %35 = sbr.rel (0) target = $region17
    $region16: #{single_bert_forward.1} parent=1 // pred_region
      _
    $region17: #{single_bert_forward.1} parent=1 // pred_fallthru
      _
    // Predicated region
    $region18: #{single_bert_forward.1} parent=1 // pred_check
      _
    $region19: #{single_bert_forward.1} parent=1 // pred_check_branch
      %37 = sbr.rel (0) target = $region21
    $region20: #{single_bert_forward.1} parent=1 // pred_region
      _
    $region21: #{single_bert_forward.1} parent=1 // pred_fallthru
      _
    // Predicated region
    $region22: #{single_bert_forward.1} parent=1 // pred_check
      _
    $region23: #{single_bert_forward.1} parent=1 // pred_check_branch
      %39 = sbr.rel (0) target = $region25
    $region24: #{single_bert_forward.1} parent=1 // pred_region
      _
    $region25: #{single_bert_forward.1} parent=1 // pred_fallthru
      _
    // Predicated region
    $region26: #{single_bert_forward.1} parent=1 // pred_check
      _
    $region27: #{single_bert_forward.1} parent=1 // pred_check_branch
      %41 = sbr.rel (0) target = $region29
    $region28: #{single_bert_forward.1} parent=1 // pred_region
      _
    $region29: #{single_bert_forward.1} parent=1 // pred_fallthru
      _
    // Predicated region
    $region30: #{single_bert_forward.1} parent=1 // pred_check
      _
    $region31: #{single_bert_forward.1} parent=1 // pred_check_branch
      %43 = sbr.rel (0) target = $region33
    $region32: #{single_bert_forward.1} parent=1 // pred_region
      _
    $region33: #{single_bert_forward.1} parent=1 // pred_fallthru
      _
    // Predicated region
    $region34: #{single_bert_forward.1} parent=1 // pred_check
      _
    $region35: #{single_bert_forward.1} parent=1 // pred_check_branch
      %45 = sbr.rel (0) target = $region37
    $region36: #{single_bert_forward.1} parent=1 // pred_region
      _
    $region37: #{single_bert_forward.1} parent=1 // pred_fallthru
      _
    // Predicated region
    $region38: #{single_bert_forward.1} parent=1 // pred_check
      _
    $region39: #{single_bert_forward.1} parent=1 // pred_check_branch
      %47 = sbr.rel (0) target = $region41
    $region40: #{single_bert_forward.1} parent=1 // pred_region
      _
    $region41: #{single_bert_forward.1} parent=1 // pred_fallthru
      _
    // Predicated region
    $region42: #{single_bert_forward.1} parent=1 // pred_check
      _
    $region43: #{single_bert_forward.1} parent=1 // pred_check_branch
      %49 = sbr.rel (0) target = $region45
    $region44: #{single_bert_forward.1} parent=1 // pred_region
      _
    $region45: #{single_bert_forward.1} parent=1 // pred_fallthru
      _
    // Predicated region
    $region46: #{single_bert_forward.1} parent=1 // pred_check
      _
    $region47: #{single_bert_forward.1} parent=1 // pred_check_branch
      %51 = sbr.rel (0) target = $region49
    $region48: #{single_bert_forward.1} parent=1 // pred_region
      _
    $region49: #{single_bert_forward.1} parent=1 // pred_fallthru
      _
    // Predicated region
    $region50: #{single_bert_forward.1} parent=1 // pred_check
      _
    $region51: #{single_bert_forward.1} parent=1 // pred_check_branch
      %53 = sbr.rel (0) target = $region53
    $region52: #{single_bert_forward.1} parent=1 // pred_region
      _
    $region53: #{single_bert_forward.1} parent=1 // pred_fallthru
      _
    // Predicated region
    $region54: #{single_bert_forward.1} parent=1 // pred_check
      _
    $region55: #{single_bert_forward.1} parent=1 // pred_check_branch
      %55 = sbr.rel (0) target = $region57
    $region56: #{single_bert_forward.1} parent=1 // pred_region
      _
    $region57: #{single_bert_forward.1} parent=1 // pred_fallthru
      _
    // Predicated region
    $region58: #{single_bert_forward.1} parent=1 // pred_check
      _
    $region59: #{single_bert_forward.1} parent=1 // pred_check_branch
      %57 = sbr.rel (0) target = $region61
    $region60: #{single_bert_forward.1} parent=1 // pred_region
      _
    $region61: #{single_bert_forward.1} parent=1 // pred_fallthru
      _
    // Predicated region
    $region62: #{single_bert_forward.1} parent=1 // pred_check
      _
    $region63: #{single_bert_forward.1} parent=1 // pred_check_branch
      %59 = sbr.rel (0) target = $region65
    $region64: #{single_bert_forward.1} parent=1 // pred_region
      _
    $region65: #{single_bert_forward.1} parent=1 // pred_fallthru
      _
    // Predicated region
    $region66: #{single_bert_forward.1} parent=1 // pred_check
      _
    $region67: #{single_bert_forward.1} parent=1 // pred_check_branch
      %61 = sbr.rel (0) target = $region69
    $region68: #{single_bert_forward.1} parent=1 // pred_region
      _
    $region69: #{single_bert_forward.1} parent=1 // pred_fallthru
      _
    // Predicated region
    $region70: #{single_bert_forward.1} parent=1 // pred_check
      _
    $region71: #{single_bert_forward.1} parent=1 // pred_check_branch
      %63 = sbr.rel (0) target = $region73
    $region72: #{single_bert_forward.1} parent=1 // pred_region
      _
    $region73: #{single_bert_forward.1} parent=1 // pred_fallthru
      _
    // Predicated region
    $region74: #{single_bert_forward.1} parent=1 // pred_check
      _
    $region75: #{single_bert_forward.1} parent=1 // pred_check_branch
      %65 = sbr.rel (0) target = $region77
    $region76: #{single_bert_forward.1} parent=1 // pred_region
      _
    $region77: #{single_bert_forward.1} parent=1 // pred_fallthru
      _
    // Predicated region
    $region78: #{single_bert_forward.1} parent=1 // pred_check
      _
    $region79: #{single_bert_forward.1} parent=1 // pred_check_branch
      %67 = sbr.rel (0) target = $region81
    $region80: #{single_bert_forward.1} parent=1 // pred_region
      _
    $region81: #{single_bert_forward.1} parent=1 // pred_fallthru
      _
    // Predicated region
    $region82: #{single_bert_forward.1} parent=1 // pred_check
      _
    $region83: #{single_bert_forward.1} parent=1 // pred_check_branch
      %69 = sbr.rel (0) target = $region85
    $region84: #{single_bert_forward.1} parent=1 // pred_region
      _
    $region85: #{single_bert_forward.1} parent=1 // pred_fallthru
      _
    // Predicated region
    $region86: #{single_bert_forward.1} parent=1 // pred_check
      _
    $region87: #{single_bert_forward.1} parent=1 // pred_check_branch
      %71 = sbr.rel (0) target = $region89
    $region88: #{single_bert_forward.1} parent=1 // pred_region
      _
    $region89: #{single_bert_forward.1} parent=1 // pred_fallthru
      _
    %v72 = vld [vmem:[%s0] sm:$0xff]
    %v73 = vld [vmem:[%s0 + $0x8] sm:$0xff]
    %v74 = vld [vmem:[%s2] sm:$0x1]
    %v75 = vld [vmem:[%s3] sm:$0x1]
    %vm76 = vcmask 261120
    %v77 = vsel %vm76, %v72, 0.0
    %78 = vadd.xlane.f32.xlu0 %v77
    %v79 = vpop.xlane.xlu0 %78
    %v80 = vsel %vm76, %v73, 0.0
    %81 = vadd.xlane.f32.xlu0 %v80
    %v82 = vpop.xlane.xlu0 %81
    %v83 = vrcp.pop 32.0
    %v84 = vmul.f32 %v79, %v83
    %v85 = vmul.f32 %v82, %v83
    %v86 = vsub.f32 %v72, %v84
    %v87 = vsub.f32 %v73, %v85
    %v88 = vmul.f32 %v86, %v86
    %v89 = vmul.f32 %v87, %v87
    %v90 = vsel %vm76, %v88, 0.0
    %91 = vadd.xlane.f32.xlu0 %v90
    %v92 = vpop.xlane.xlu0 %91
    %v93 = vsel %vm76, %v89, 0.0
    %94 = vadd.xlane.f32.xlu0 %v93
    %v95 = vpop.xlane.xlu0 %94
    %v96 = vmul.f32 %v92, %v83
    %v97 = vmul.f32 %v95, %v83
    %v98 = vadd.f32 %v96, 1e-05
    %v99 = vadd.f32 %v97, 1e-05
    %v100 = vrsqrt.pop %v98
    %v101 = vrsqrt.pop %v99
    %v102 = vmul.f32 %v86, %v100
    %v103 = vmul.f32 %v87, %v101
    %v105 = vlaneseq
    %v106 = vshrl.u32 %v105, 7
    %v107 = vsub.s32 0, %v106
    %v108 = vrot.slane %v74, %v107
    %v110 = vmul.f32 %v102, %v108
    %v111 = vmul.f32 %v103, %v108
    %v113 = vlaneseq
    %v114 = vshrl.u32 %v113, 7
    %v115 = vsub.s32 0, %v114
    %v116 = vrot.slane %v75, %v115
    %v118 = vadd.f32 %v110, %v116
    %v119 = vadd.f32 %v111, %v116
    %v120 = vld [vmem:[%s1] sm:$0x1]
    %v121 = vsub.f32 1.0, %v120
    %v122 = vmul.f32 %v121, -3.4028235e+38
    %s123 = scalar_lea.vmem %s1, 1
    %v124 = vld [vmem:[%s123] sm:$0x1]
    %v125 = vsub.f32 1.0, %v124
    %v126 = vmul.f32 %v125, -3.4028235e+38
    %v127 = vld [vmem:[%s4] sm:$0xff]
    %v128 = vld [vmem:[%s4 + $0x8] sm:$0xff]
    %v129 = vld [vmem:[%s4 + $0x10] sm:$0xff]
    %v130 = vld [vmem:[%s4 + $0x18] sm:$0xff]
    %v131 = vld [vmem:[%s5] sm:$0x1]
    %v133 = vlaneseq
    %v134 = vshrl.u32 %v133, 7
    %v135 = vsub.s32 0, %v134
    %v136 = vrot.slane %v131, %v135
    %v139 = vsel %vm76, %v118, 0
    %v142 = vsel %vm76, %v119, 0
    %144 = vmatprep.subr.mxu0 0.0
    %145 = vmatpush1.msra.mxu0 %v127
    %146 = vmatprep.subr.mxu0 0.0
    %147 = vmatpush1.msra.mxu0 %v128
    %148 = vmatprep.subr.mxu0 0.0
    %149 = vmatpush1.msra.mxu0 %v129
    %150 = vmatprep.subr.mxu0 0.0
    %151 = vmatpush1.msra.mxu0 %v130
    %152 = vmatprep.subr.mxu0 0.0
    %153 = vmatpush1.msra.mxu0 0.0
    %154 = vmatprep.subr.mxu0 0.0
    %155 = vmatpush1.msra.mxu0 0.0
    %156 = vmatprep.subr.mxu0 0.0
    %157 = vmatpush1.msra.mxu0 0.0
    %158 = vmatprep.subr.mxu0 0.0
    %159 = vmatpush1.msra.mxu0 0.0
    %160 = vmatprep.subr.mxu0 0.0
    %161 = vmatpush1.msra.mxu0 0.0
    %162 = vmatprep.subr.mxu0 0.0
    %163 = vmatpush1.msra.mxu0 0.0
    %164 = vmatprep.subr.mxu0 0.0
    %165 = vmatpush1.msra.mxu0 0.0
    %166 = vmatprep.subr.mxu0 0.0
    %167 = vmatpush1.msra.mxu0 0.0
    %168 = vmatprep.subr.mxu0 0.0
    %169 = vmatpush1.msra.mxu0 0.0
    %170 = vmatprep.subr.mxu0 0.0
    %171 = vmatpush1.msra.mxu0 0.0
    %172 = vmatprep.subr.mxu0 0.0
    %173 = vmatpush1.msra.mxu0 0.0
    %174 = vmatprep.subr.mxu0 0.0
    %175 = vmatpush1.msra.mxu0 0.0
    %176 = vmatprep.subr.mxu0 0.0
    %177 = vmatpush1.msra.mxu0 0.0
    %178 = vmatprep.subr.mxu0 0.0
    %179 = vmatpush1.msra.mxu0 0.0
    %180 = vmatprep.subr.mxu0 0.0
    %181 = vmatpush1.msra.mxu0 0.0
    %182 = vmatprep.subr.mxu0 0.0
    %183 = vmatpush1.msra.mxu0 0.0
    %184 = vmatprep.subr.mxu0 0.0
    %185 = vmatpush1.msra.mxu0 0.0
    %186 = vmatprep.subr.mxu0 0.0
    %187 = vmatpush1.msra.mxu0 0.0
    %188 = vmatprep.subr.mxu0 0.0
    %189 = vmatpush1.msra.mxu0 0.0
    %190 = vmatprep.subr.mxu0 0.0
    %191 = vmatpush1.msra.mxu0 0.0
    %192 = vmatprep.subr.mxu0 0.0
    %193 = vmatpush1.msra.mxu0 0.0
    %194 = vmatprep.subr.mxu0 0.0
    %195 = vmatpush1.msra.mxu0 0.0
    %196 = vmatprep.subr.mxu0 0.0
    %197 = vmatpush1.msra.mxu0 0.0
    %198 = vmatprep.subr.mxu0 0.0
    %199 = vmatpush1.msra.mxu0 0.0
    %200 = vmatprep.subr.mxu0 0.0
    %201 = vmatpush1.msra.mxu0 0.0
    %202 = vmatprep.subr.mxu0 0.0
    %203 = vmatpush1.msra.mxu0 0.0
    %204 = vmatprep.subr.mxu0 0.0
    %205 = vmatpush1.msra.mxu0 0.0
    %206 = vmatprep.subr.mxu0 0.0
    %207 = vmatpush1.msra.mxu0 0.0
    %208 = vmatprep.mubr.f32.mxu0 0.0
    %209 = vmatmul.mubr.f32.gmra.mrb[0].mxu0 %v139
    %v210 = vpop.f32.mrb[0].mxu0
    %v211 = vadd.f32 %v136, %v210
    %v212 = vpop.f32.mrb[0].mxu0
    %213 = vmatprep.mubr.f32.mxu0 0.0
    %214 = vmatmul.mubr.f32.gmra.mrb[0].mxu0 %v142
    %v215 = vpop.f32.mrb[0].mxu0
    %v216 = vadd.f32 %v136, %v215
    %v217 = vpop.f32.mrb[0].mxu0
    %218 = vdwg.mxu0
    %v219 = vld [vmem:[%s6] sm:$0xff]
    %v220 = vld [vmem:[%s6 + $0x8] sm:$0xff]
    %v221 = vld [vmem:[%s6 + $0x10] sm:$0xff]
    %v222 = vld [vmem:[%s6 + $0x18] sm:$0xff]
    %v223 = vld [vmem:[%s7] sm:$0x1]
    %v225 = vlaneseq
    %v226 = vshrl.u32 %v225, 7
    %v227 = vsub.s32 0, %v226
    %v228 = vrot.slane %v223, %v227
    %230 = vmatprep.subr.mxu0 0.0
    %231 = vmatpush1.msra.mxu0 %v219
    %232 = vmatprep.subr.mxu0 0.0
    %233 = vmatpush1.msra.mxu0 %v220
    %234 = vmatprep.subr.mxu0 0.0
    %235 = vmatpush1.msra.mxu0 %v221
    %236 = vmatprep.subr.mxu0 0.0
    %237 = vmatpush1.msra.mxu0 %v222
    %238 = vmatprep.subr.mxu0 0.0
    %239 = vmatpush1.msra.mxu0 0.0
    %240 = vmatprep.subr.mxu0 0.0
    %241 = vmatpush1.msra.mxu0 0.0
    %242 = vmatprep.subr.mxu0 0.0
    %243 = vmatpush1.msra.mxu0 0.0
    %244 = vmatprep.subr.mxu0 0.0
    %245 = vmatpush1.msra.mxu0 0.0
    %246 = vmatprep.subr.mxu0 0.0
    %247 = vmatpush1.msra.mxu0 0.0
    %248 = vmatprep.subr.mxu0 0.0
    %249 = vmatpush1.msra.mxu0 0.0
    %250 = vmatprep.subr.mxu0 0.0
    %251 = vmatpush1.msra.mxu0 0.0
    %252 = vmatprep.subr.mxu0 0.0
    %253 = vmatpush1.msra.mxu0 0.0
    %254 = vmatprep.subr.mxu0 0.0
    %255 = vmatpush1.msra.mxu0 0.0
    %256 = vmatprep.subr.mxu0 0.0
    %257 = vmatpush1.msra.mxu0 0.0
    %258 = vmatprep.subr.mxu0 0.0
    %259 = vmatpush1.msra.mxu0 0.0
    %260 = vmatprep.subr.mxu0 0.0
    %261 = vmatpush1.msra.mxu0 0.0
    %262 = vmatprep.subr.mxu0 0.0
    %263 = vmatpush1.msra.mxu0 0.0
    %264 = vmatprep.subr.mxu0 0.0
    %265 = vmatpush1.msra.mxu0 0.0
    %266 = vmatprep.subr.mxu0 0.0
    %267 = vmatpush1.msra.mxu0 0.0
    %268 = vmatprep.subr.mxu0 0.0
    %269 = vmatpush1.msra.mxu0 0.0
    %270 = vmatprep.subr.mxu0 0.0
    %271 = vmatpush1.msra.mxu0 0.0
    %272 = vmatprep.subr.mxu0 0.0
    %273 = vmatpush1.msra.mxu0 0.0
    %274 = vmatprep.subr.mxu0 0.0
    %275 = vmatpush1.msra.mxu0 0.0
    %276 = vmatprep.subr.mxu0 0.0
    %277 = vmatpush1.msra.mxu0 0.0
    %278 = vmatprep.subr.mxu0 0.0
    %279 = vmatpush1.msra.mxu0 0.0
    %280 = vmatprep.subr.mxu0 0.0
    %281 = vmatpush1.msra.mxu0 0.0
    %282 = vmatprep.subr.mxu0 0.0
    %283 = vmatpush1.msra.mxu0 0.0
    %284 = vmatprep.subr.mxu0 0.0
    %285 = vmatpush1.msra.mxu0 0.0
    %286 = vmatprep.subr.mxu0 0.0
    %287 = vmatpush1.msra.mxu0 0.0
    %288 = vmatprep.subr.mxu0 0.0
    %289 = vmatpush1.msra.mxu0 0.0
    %290 = vmatprep.subr.mxu0 0.0
    %291 = vmatpush1.msra.mxu0 0.0
    %292 = vmatprep.subr.mxu0 0.0
    %293 = vmatpush1.msra.mxu0 0.0
    %294 = vmatprep.mubr.f32.mxu0 0.0
    %295 = vmatmul.mubr.f32.gmra.mrb[0].mxu0 %v139
    %v296 = vpop.f32.mrb[0].mxu0
    %v297 = vadd.f32 %v228, %v296
    %v298 = vpop.f32.mrb[0].mxu0
    %299 = vmatprep.mubr.f32.mxu0 0.0
    %300 = vmatmul.mubr.f32.gmra.mrb[0].mxu0 %v142
    %v301 = vpop.f32.mrb[0].mxu0
    %v302 = vadd.f32 %v228, %v301
    %v303 = vpop.f32.mrb[0].mxu0
    %304 = vdwg.mxu0
    %v305 = vld [vmem:[%s8] sm:$0xff]
    %v306 = vld [vmem:[%s8 + $0x8] sm:$0xff]
    %v307 = vld [vmem:[%s8 + $0x10] sm:$0xff]
    %v308 = vld [vmem:[%s8 + $0x18] sm:$0xff]
    %v309 = vld [vmem:[%s9] sm:$0x1]
    %v311 = vlaneseq
    %v312 = vshrl.u32 %v311, 7
    %v313 = vsub.s32 0, %v312
    %v314 = vrot.slane %v309, %v313
    %316 = vmatprep.subr.mxu0 0.0
    %317 = vmatpush1.msra.mxu0 %v305
    %318 = vmatprep.subr.mxu0 0.0
    %319 = vmatpush1.msra.mxu0 %v306
    %320 = vmatprep.subr.mxu0 0.0
    %321 = vmatpush1.msra.mxu0 %v307
    %322 = vmatprep.subr.mxu0 0.0
    %323 = vmatpush1.msra.mxu0 %v308
    %324 = vmatprep.subr.mxu0 0.0
    %325 = vmatpush1.msra.mxu0 0.0
    %326 = vmatprep.subr.mxu0 0.0
    %327 = vmatpush1.msra.mxu0 0.0
    %328 = vmatprep.subr.mxu0 0.0
    %329 = vmatpush1.msra.mxu0 0.0
    %330 = vmatprep.subr.mxu0 0.0
    %331 = vmatpush1.msra.mxu0 0.0
    %332 = vmatprep.subr.mxu0 0.0
    %333 = vmatpush1.msra.mxu0 0.0
    %334 = vmatprep.subr.mxu0 0.0
    %335 = vmatpush1.msra.mxu0 0.0
    %336 = vmatprep.subr.mxu0 0.0
    %337 = vmatpush1.msra.mxu0 0.0
    %338 = vmatprep.subr.mxu0 0.0
    %339 = vmatpush1.msra.mxu0 0.0
    %340 = vmatprep.subr.mxu0 0.0
    %341 = vmatpush1.msra.mxu0 0.0
    %342 = vmatprep.subr.mxu0 0.0
    %343 = vmatpush1.msra.mxu0 0.0
    %344 = vmatprep.subr.mxu0 0.0
    %345 = vmatpush1.msra.mxu0 0.0
    %346 = vmatprep.subr.mxu0 0.0
    %347 = vmatpush1.msra.mxu0 0.0
    %348 = vmatprep.subr.mxu0 0.0
    %349 = vmatpush1.msra.mxu0 0.0
    %350 = vmatprep.subr.mxu0 0.0
    %351 = vmatpush1.msra.mxu0 0.0
    %352 = vmatprep.subr.mxu0 0.0
    %353 = vmatpush1.msra.mxu0 0.0
    %354 = vmatprep.subr.mxu0 0.0
    %355 = vmatpush1.msra.mxu0 0.0
    %356 = vmatprep.subr.mxu0 0.0
    %357 = vmatpush1.msra.mxu0 0.0
    %358 = vmatprep.subr.mxu0 0.0
    %359 = vmatpush1.msra.mxu0 0.0
    %360 = vmatprep.subr.mxu0 0.0
    %361 = vmatpush1.msra.mxu0 0.0
    %362 = vmatprep.subr.mxu0 0.0
    %363 = vmatpush1.msra.mxu0 0.0
    %364 = vmatprep.subr.mxu0 0.0
    %365 = vmatpush1.msra.mxu0 0.0
    %366 = vmatprep.subr.mxu0 0.0
    %367 = vmatpush1.msra.mxu0 0.0
    %368 = vmatprep.subr.mxu0 0.0
    %369 = vmatpush1.msra.mxu0 0.0
    %370 = vmatprep.subr.mxu0 0.0
    %371 = vmatpush1.msra.mxu0 0.0
    %372 = vmatprep.subr.mxu0 0.0
    %373 = vmatpush1.msra.mxu0 0.0
    %374 = vmatprep.subr.mxu0 0.0
    %375 = vmatpush1.msra.mxu0 0.0
    %376 = vmatprep.subr.mxu0 0.0
    %377 = vmatpush1.msra.mxu0 0.0
    %378 = vmatprep.subr.mxu0 0.0
    %379 = vmatpush1.msra.mxu0 0.0
    %380 = vmatprep.mubr.f32.mxu0 0.0
    %381 = vmatmul.mubr.f32.gmra.mrb[0].mxu0 %v139
    %v382 = vpop.f32.mrb[0].mxu0
    %v383 = vadd.f32 %v314, %v382
    %v384 = vpop.f32.mrb[0].mxu0
    %385 = vmatprep.mubr.f32.mxu0 0.0
    %386 = vmatmul.mubr.f32.gmra.mrb[0].mxu0 %v142
    %v387 = vpop.f32.mrb[0].mxu0
    %v388 = vadd.f32 %v314, %v387
    %v389 = vpop.f32.mrb[0].mxu0
    %390 = vdwg.mxu0
    %s391 = scalar_lea.vmem %s4, 32
    %v392 = vld [vmem:[%s391] sm:$0xff]
    %v393 = vld [vmem:[%s391 + $0x8] sm:$0xff]
    %v394 = vld [vmem:[%s391 + $0x10] sm:$0xff]
    %v395 = vld [vmem:[%s391 + $0x18] sm:$0xff]
    %s396 = scalar_lea.vmem %s5, 1
    %v397 = vld [vmem:[%s396] sm:$0x1]
    %v399 = vlaneseq
    %v400 = vshrl.u32 %v399, 7
    %v401 = vsub.s32 0, %v400
    %v402 = vrot.slane %v397, %v401
    %404 = vmatprep.subr.mxu0 0.0
    %405 = vmatpush1.msra.mxu0 %v392
    %406 = vmatprep.subr.mxu0 0.0
    %407 = vmatpush1.msra.mxu0 %v393
    %408 = vmatprep.subr.mxu0 0.0
    %409 = vmatpush1.msra.mxu0 %v394
    %410 = vmatprep.subr.mxu0 0.0
    %411 = vmatpush1.msra.mxu0 %v395
    %412 = vmatprep.subr.mxu0 0.0
    %413 = vmatpush1.msra.mxu0 0.0
    %414 = vmatprep.subr.mxu0 0.0
    %415 = vmatpush1.msra.mxu0 0.0
    %416 = vmatprep.subr.mxu0 0.0
    %417 = vmatpush1.msra.mxu0 0.0
    %418 = vmatprep.subr.mxu0 0.0
    %419 = vmatpush1.msra.mxu0 0.0
    %420 = vmatprep.subr.mxu0 0.0
    %421 = vmatpush1.msra.mxu0 0.0
    %422 = vmatprep.subr.mxu0 0.0
    %423 = vmatpush1.msra.mxu0 0.0
    %424 = vmatprep.subr.mxu0 0.0
    %425 = vmatpush1.msra.mxu0 0.0
    %426 = vmatprep.subr.mxu0 0.0
    %427 = vmatpush1.msra.mxu0 0.0
    %428 = vmatprep.subr.mxu0 0.0
    %429 = vmatpush1.msra.mxu0 0.0
    %430 = vmatprep.subr.mxu0 0.0
    %431 = vmatpush1.msra.mxu0 0.0
    %432 = vmatprep.subr.mxu0 0.0
    %433 = vmatpush1.msra.mxu0 0.0
    %434 = vmatprep.subr.mxu0 0.0
    %435 = vmatpush1.msra.mxu0 0.0
    %436 = vmatprep.subr.mxu0 0.0
    %437 = vmatpush1.msra.mxu0 0.0
    %438 = vmatprep.subr.mxu0 0.0
    %439 = vmatpush1.msra.mxu0 0.0
    %440 = vmatprep.subr.mxu0 0.0
    %441 = vmatpush1.msra.mxu0 0.0
    %442 = vmatprep.subr.mxu0 0.0
    %443 = vmatpush1.msra.mxu0 0.0
    %444 = vmatprep.subr.mxu0 0.0
    %445 = vmatpush1.msra.mxu0 0.0
    %446 = vmatprep.subr.mxu0 0.0
    %447 = vmatpush1.msra.mxu0 0.0
    %448 = vmatprep.subr.mxu0 0.0
    %449 = vmatpush1.msra.mxu0 0.0
    %450 = vmatprep.subr.mxu0 0.0
    %451 = vmatpush1.msra.mxu0 0.0
    %452 = vmatprep.subr.mxu0 0.0
    %453 = vmatpush1.msra.mxu0 0.0
    %454 = vmatprep.subr.mxu0 0.0
    %455 = vmatpush1.msra.mxu0 0.0
    %456 = vmatprep.subr.mxu0 0.0
    %457 = vmatpush1.msra.mxu0 0.0
    %458 = vmatprep.subr.mxu0 0.0
    %459 = vmatpush1.msra.mxu0 0.0
    %460 = vmatprep.subr.mxu0 0.0
    %461 = vmatpush1.msra.mxu0 0.0
    %462 = vmatprep.subr.mxu0 0.0
    %463 = vmatpush1.msra.mxu0 0.0
    %464 = vmatprep.subr.mxu0 0.0
    %465 = vmatpush1.msra.mxu0 0.0
    %466 = vmatprep.subr.mxu0 0.0
    %467 = vmatpush1.msra.mxu0 0.0
    %468 = vmatprep.mubr.f32.mxu0 0.0
    %469 = vmatmul.mubr.f32.gmra.mrb[0].mxu0 %v139
    %v470 = vpop.f32.mrb[0].mxu0
    %v471 = vadd.f32 %v402, %v470
    %v472 = vpop.f32.mrb[0].mxu0
    %473 = vmatprep.mubr.f32.mxu0 0.0
    %474 = vmatmul.mubr.f32.gmra.mrb[0].mxu0 %v142
    %v475 = vpop.f32.mrb[0].mxu0
    %v476 = vadd.f32 %v402, %v475
    %v477 = vpop.f32.mrb[0].mxu0
    %478 = vdwg.mxu0
    %s479 = scalar_lea.vmem %s6, 32
    %v480 = vld [vmem:[%s479] sm:$0xff]
    %v481 = vld [vmem:[%s479 + $0x8] sm:$0xff]
    %v482 = vld [vmem:[%s479 + $0x10] sm:$0xff]
    %v483 = vld [vmem:[%s479 + $0x18] sm:$0xff]
    %s484 = scalar_lea.vmem %s7, 1
    %v485 = vld [vmem:[%s484] sm:$0x1]
    %v487 = vlaneseq
    %v488 = vshrl.u32 %v487, 7
    %v489 = vsub.s32 0, %v488
    %v490 = vrot.slane %v485, %v489
    %492 = vmatprep.subr.mxu0 0.0
    %493 = vmatpush1.msra.mxu0 %v480
    %494 = vmatprep.subr.mxu0 0.0
    %495 = vmatpush1.msra.mxu0 %v481
    %496 = vmatprep.subr.mxu0 0.0
    %497 = vmatpush1.msra.mxu0 %v482
    %498 = vmatprep.subr.mxu0 0.0
    %499 = vmatpush1.msra.mxu0 %v483
    %500 = vmatprep.subr.mxu0 0.0
    %501 = vmatpush1.msra.mxu0 0.0
    %502 = vmatprep.subr.mxu0 0.0
    %503 = vmatpush1.msra.mxu0 0.0
    %504 = vmatprep.subr.mxu0 0.0
    %505 = vmatpush1.msra.mxu0 0.0
    %506 = vmatprep.subr.mxu0 0.0
    %507 = vmatpush1.msra.mxu0 0.0
    %508 = vmatprep.subr.mxu0 0.0
    %509 = vmatpush1.msra.mxu0 0.0
    %510 = vmatprep.subr.mxu0 0.0
    %511 = vmatpush1.msra.mxu0 0.0
    %512 = vmatprep.subr.mxu0 0.0
    %513 = vmatpush1.msra.mxu0 0.0
    %514 = vmatprep.subr.mxu0 0.0
    %515 = vmatpush1.msra.mxu0 0.0
    %516 = vmatprep.subr.mxu0 0.0
    %517 = vmatpush1.msra.mxu0 0.0
    %518 = vmatprep.subr.mxu0 0.0
    %519 = vmatpush1.msra.mxu0 0.0
    %520 = vmatprep.subr.mxu0 0.0
    %521 = vmatpush1.msra.mxu0 0.0
    %522 = vmatprep.subr.mxu0 0.0
    %523 = vmatpush1.msra.mxu0 0.0
    %524 = vmatprep.subr.mxu0 0.0
    %525 = vmatpush1.msra.mxu0 0.0
    %526 = vmatprep.subr.mxu0 0.0
    %527 = vmatpush1.msra.mxu0 0.0
    %528 = vmatprep.subr.mxu0 0.0
    %529 = vmatpush1.msra.mxu0 0.0
    %530 = vmatprep.subr.mxu0 0.0
    %531 = vmatpush1.msra.mxu0 0.0
    %532 = vmatprep.subr.mxu0 0.0
    %533 = vmatpush1.msra.mxu0 0.0
    %534 = vmatprep.subr.mxu0 0.0
    %535 = vmatpush1.msra.mxu0 0.0
    %536 = vmatprep.subr.mxu0 0.0
    %537 = vmatpush1.msra.mxu0 0.0
    %538 = vmatprep.subr.mxu0 0.0
    %539 = vmatpush1.msra.mxu0 0.0
    %540 = vmatprep.subr.mxu0 0.0
    %541 = vmatpush1.msra.mxu0 0.0
    %542 = vmatprep.subr.mxu0 0.0
    %543 = vmatpush1.msra.mxu0 0.0
    %544 = vmatprep.subr.mxu0 0.0
    %545 = vmatpush1.msra.mxu0 0.0
    %546 = vmatprep.subr.mxu0 0.0
    %547 = vmatpush1.msra.mxu0 0.0
    %548 = vmatprep.subr.mxu0 0.0
    %549 = vmatpush1.msra.mxu0 0.0
    %550 = vmatprep.subr.mxu0 0.0
    %551 = vmatpush1.msra.mxu0 0.0
    %552 = vmatprep.subr.mxu0 0.0
    %553 = vmatpush1.msra.mxu0 0.0
    %554 = vmatprep.subr.mxu0 0.0
    %555 = vmatpush1.msra.mxu0 0.0
    %556 = vmatprep.mubr.f32.mxu0 0.0
    %557 = vmatmul.mubr.f32.gmra.mrb[0].mxu0 %v139
    %v558 = vpop.f32.mrb[0].mxu0
    %v559 = vadd.f32 %v490, %v558
    %v560 = vpop.f32.mrb[0].mxu0
    %561 = vmatprep.mubr.f32.mxu0 0.0
    %562 = vmatmul.mubr.f32.gmra.mrb[0].mxu0 %v142
    %v563 = vpop.f32.mrb[0].mxu0
    %v564 = vadd.f32 %v490, %v563
    %v565 = vpop.f32.mrb[0].mxu0
    %566 = vdwg.mxu0
    %s567 = scalar_lea.vmem %s8, 32
    %v568 = vld [vmem:[%s567] sm:$0xff]
    %v569 = vld [vmem:[%s567 + $0x8] sm:$0xff]
    %v570 = vld [vmem:[%s567 + $0x10] sm:$0xff]
    %v571 = vld [vmem:[%s567 + $0x18] sm:$0xff]
    %s572 = scalar_lea.vmem %s9, 1
    %v573 = vld [vmem:[%s572] sm:$0x1]
    %v575 = vlaneseq
    %v576 = vshrl.u32 %v575, 7
    %v577 = vsub.s32 0, %v576
    %v578 = vrot.slane %v573, %v577
    %580 = vmatprep.subr.mxu0 0.0
    %581 = vmatpush1.msra.mxu0 %v568
    %582 = vmatprep.subr.mxu0 0.0
    %583 = vmatpush1.msra.mxu0 %v569
    %584 = vmatprep.subr.mxu0 0.0
    %585 = vmatpush1.msra.mxu0 %v570
    %586 = vmatprep.subr.mxu0 0.0
    %587 = vmatpush1.msra.mxu0 %v571
    %588 = vmatprep.subr.mxu0 0.0
    %589 = vmatpush1.msra.mxu0 0.0
    %590 = vmatprep.subr.mxu0 0.0
    %591 = vmatpush1.msra.mxu0 0.0
    %592 = vmatprep.subr.mxu0 0.0
    %593 = vmatpush1.msra.mxu0 0.0
    %594 = vmatprep.subr.mxu0 0.0
    %595 = vmatpush1.msra.mxu0 0.0
    %596 = vmatprep.subr.mxu0 0.0
    %597 = vmatpush1.msra.mxu0 0.0
    %598 = vmatprep.subr.mxu0 0.0
    %599 = vmatpush1.msra.mxu0 0.0
    %600 = vmatprep.subr.mxu0 0.0
    %601 = vmatpush1.msra.mxu0 0.0
    %602 = vmatprep.subr.mxu0 0.0
    %603 = vmatpush1.msra.mxu0 0.0
    %604 = vmatprep.subr.mxu0 0.0
    %605 = vmatpush1.msra.mxu0 0.0
    %606 = vmatprep.subr.mxu0 0.0
    %607 = vmatpush1.msra.mxu0 0.0
    %608 = vmatprep.subr.mxu0 0.0
    %609 = vmatpush1.msra.mxu0 0.0
    %610 = vmatprep.subr.mxu0 0.0
    %611 = vmatpush1.msra.mxu0 0.0
    %612 = vmatprep.subr.mxu0 0.0
    %613 = vmatpush1.msra.mxu0 0.0
    %614 = vmatprep.subr.mxu0 0.0
    %615 = vmatpush1.msra.mxu0 0.0
    %616 = vmatprep.subr.mxu0 0.0
    %617 = vmatpush1.msra.mxu0 0.0
    %618 = vmatprep.subr.mxu0 0.0
    %619 = vmatpush1.msra.mxu0 0.0
    %620 = vmatprep.subr.mxu0 0.0
    %621 = vmatpush1.msra.mxu0 0.0
    %622 = vmatprep.subr.mxu0 0.0
    %623 = vmatpush1.msra.mxu0 0.0
    %624 = vmatprep.subr.mxu0 0.0
    %625 = vmatpush1.msra.mxu0 0.0
    %626 = vmatprep.subr.mxu0 0.0
    %627 = vmatpush1.msra.mxu0 0.0
    %628 = vmatprep.subr.mxu0 0.0
    %629 = vmatpush1.msra.mxu0 0.0
    %630 = vmatprep.subr.mxu0 0.0
    %631 = vmatpush1.msra.mxu0 0.0
    %632 = vmatprep.subr.mxu0 0.0
    %633 = vmatpush1.msra.mxu0 0.0
    %634 = vmatprep.subr.mxu0 0.0
    %635 = vmatpush1.msra.mxu0 0.0
    %636 = vmatprep.subr.mxu0 0.0
    %637 = vmatpush1.msra.mxu0 0.0
    %638 = vmatprep.subr.mxu0 0.0
    %639 = vmatpush1.msra.mxu0 0.0
    %640 = vmatprep.subr.mxu0 0.0
    %641 = vmatpush1.msra.mxu0 0.0
    %642 = vmatprep.subr.mxu0 0.0
    %643 = vmatpush1.msra.mxu0 0.0
    %644 = vmatprep.mubr.f32.mxu0 0.0
    %645 = vmatmul.mubr.f32.gmra.mrb[0].mxu0 %v139
    %v646 = vpop.f32.mrb[0].mxu0
    %v647 = vadd.f32 %v578, %v646
    %v648 = vpop.f32.mrb[0].mxu0
    %649 = vmatprep.mubr.f32.mxu0 0.0
    %650 = vmatmul.mubr.f32.gmra.mrb[0].mxu0 %v142
    %v651 = vpop.f32.mrb[0].mxu0
    %v652 = vadd.f32 %v578, %v651
    %v653 = vpop.f32.mrb[0].mxu0
    %654 = vdwg.mxu0
    %s655 = scalar_lea.vmem %s4, 64
    %v656 = vld [vmem:[%s655] sm:$0xff]
    %v657 = vld [vmem:[%s655 + $0x8] sm:$0xff]
    %v658 = vld [vmem:[%s655 + $0x10] sm:$0xff]
    %v659 = vld [vmem:[%s655 + $0x18] sm:$0xff]
    %s660 = scalar_lea.vmem %s5, 2
    %v661 = vld [vmem:[%s660] sm:$0x1]
    %v663 = vlaneseq
    %v664 = vshrl.u32 %v663, 7
    %v665 = vsub.s32 0, %v664
    %v666 = vrot.slane %v661, %v665
    %668 = vmatprep.subr.mxu0 0.0
    %669 = vmatpush1.msra.mxu0 %v656
    %670 = vmatprep.subr.mxu0 0.0
    %671 = vmatpush1.msra.mxu0 %v657
    %672 = vmatprep.subr.mxu0 0.0
    %673 = vmatpush1.msra.mxu0 %v658
    %674 = vmatprep.subr.mxu0 0.0
    %675 = vmatpush1.msra.mxu0 %v659
    %676 = vmatprep.subr.mxu0 0.0
    %677 = vmatpush1.msra.mxu0 0.0
    %678 = vmatprep.subr.mxu0 0.0
    %679 = vmatpush1.msra.mxu0 0.0
    %680 = vmatprep.subr.mxu0 0.0
    %681 = vmatpush1.msra.mxu0 0.0
    %682 = vmatprep.subr.mxu0 0.0
    %683 = vmatpush1.msra.mxu0 0.0
    %684 = vmatprep.subr.mxu0 0.0
    %685 = vmatpush1.msra.mxu0 0.0
    %686 = vmatprep.subr.mxu0 0.0
    %687 = vmatpush1.msra.mxu0 0.0
    %688 = vmatprep.subr.mxu0 0.0
    %689 = vmatpush1.msra.mxu0 0.0
    %690 = vmatprep.subr.mxu0 0.0
    %691 = vmatpush1.msra.mxu0 0.0
    %692 = vmatprep.subr.mxu0 0.0
    %693 = vmatpush1.msra.mxu0 0.0
    %694 = vmatprep.subr.mxu0 0.0
    %695 = vmatpush1.msra.mxu0 0.0
    %696 = vmatprep.subr.mxu0 0.0
    %697 = vmatpush1.msra.mxu0 0.0
    %698 = vmatprep.subr.mxu0 0.0
    %699 = vmatpush1.msra.mxu0 0.0
    %700 = vmatprep.subr.mxu0 0.0
    %701 = vmatpush1.msra.mxu0 0.0
    %702 = vmatprep.subr.mxu0 0.0
    %703 = vmatpush1.msra.mxu0 0.0
    %704 = vmatprep.subr.mxu0 0.0
    %705 = vmatpush1.msra.mxu0 0.0
    %706 = vmatprep.subr.mxu0 0.0
    %707 = vmatpush1.msra.mxu0 0.0
    %708 = vmatprep.subr.mxu0 0.0
    %709 = vmatpush1.msra.mxu0 0.0
    %710 = vmatprep.subr.mxu0 0.0
    %711 = vmatpush1.msra.mxu0 0.0
    %712 = vmatprep.subr.mxu0 0.0
    %713 = vmatpush1.msra.mxu0 0.0
    %714 = vmatprep.subr.mxu0 0.0
    %715 = vmatpush1.msra.mxu0 0.0
    %716 = vmatprep.subr.mxu0 0.0
    %717 = vmatpush1.msra.mxu0 0.0
    %718 = vmatprep.subr.mxu0 0.0
    %719 = vmatpush1.msra.mxu0 0.0
    %720 = vmatprep.subr.mxu0 0.0
    %721 = vmatpush1.msra.mxu0 0.0
    %722 = vmatprep.subr.mxu0 0.0
    %723 = vmatpush1.msra.mxu0 0.0
    %724 = vmatprep.subr.mxu0 0.0
    %725 = vmatpush1.msra.mxu0 0.0
    %726 = vmatprep.subr.mxu0 0.0
    %727 = vmatpush1.msra.mxu0 0.0
    %728 = vmatprep.subr.mxu0 0.0
    %729 = vmatpush1.msra.mxu0 0.0
    %730 = vmatprep.subr.mxu0 0.0
    %731 = vmatpush1.msra.mxu0 0.0
    %732 = vmatprep.mubr.f32.mxu0 0.0
    %733 = vmatmul.mubr.f32.gmra.mrb[0].mxu0 %v139
    %v734 = vpop.f32.mrb[0].mxu0
    %v735 = vadd.f32 %v666, %v734
    %v736 = vpop.f32.mrb[0].mxu0
    %737 = vmatprep.mubr.f32.mxu0 0.0
    %738 = vmatmul.mubr.f32.gmra.mrb[0].mxu0 %v142
    %v739 = vpop.f32.mrb[0].mxu0
    %v740 = vadd.f32 %v666, %v739
    %v741 = vpop.f32.mrb[0].mxu0
    %742 = vdwg.mxu0
    %s743 = scalar_lea.vmem %s6, 64
    %v744 = vld [vmem:[%s743] sm:$0xff]
    %v745 = vld [vmem:[%s743 + $0x8] sm:$0xff]
    %v746 = vld [vmem:[%s743 + $0x10] sm:$0xff]
    %v747 = vld [vmem:[%s743 + $0x18] sm:$0xff]
    %s748 = scalar_lea.vmem %s7, 2
    %v749 = vld [vmem:[%s748] sm:$0x1]
    %v751 = vlaneseq
    %v752 = vshrl.u32 %v751, 7
    %v753 = vsub.s32 0, %v752
    %v754 = vrot.slane %v749, %v753
    %756 = vmatprep.subr.mxu0 0.0
    %757 = vmatpush1.msra.mxu0 %v744
    %758 = vmatprep.subr.mxu0 0.0
    %759 = vmatpush1.msra.mxu0 %v745
    %760 = vmatprep.subr.mxu0 0.0
    %761 = vmatpush1.msra.mxu0 %v746
    %762 = vmatprep.subr.mxu0 0.0
    %763 = vmatpush1.msra.mxu0 %v747
    %764 = vmatprep.subr.mxu0 0.0
    %765 = vmatpush1.msra.mxu0 0.0
    %766 = vmatprep.subr.mxu0 0.0
    %767 = vmatpush1.msra.mxu0 0.0
    %768 = vmatprep.subr.mxu0 0.0
    %769 = vmatpush1.msra.mxu0 0.0
    %770 = vmatprep.subr.mxu0 0.0
    %771 = vmatpush1.msra.mxu0 0.0
    %772 = vmatprep.subr.mxu0 0.0
    %773 = vmatpush1.msra.mxu0 0.0
    %774 = vmatprep.subr.mxu0 0.0
    %775 = vmatpush1.msra.mxu0 0.0
    %776 = vmatprep.subr.mxu0 0.0
    %777 = vmatpush1.msra.mxu0 0.0
    %778 = vmatprep.subr.mxu0 0.0
    %779 = vmatpush1.msra.mxu0 0.0
    %780 = vmatprep.subr.mxu0 0.0
    %781 = vmatpush1.msra.mxu0 0.0
    %782 = vmatprep.subr.mxu0 0.0
    %783 = vmatpush1.msra.mxu0 0.0
    %784 = vmatprep.subr.mxu0 0.0
    %785 = vmatpush1.msra.mxu0 0.0
    %786 = vmatprep.subr.mxu0 0.0
    %787 = vmatpush1.msra.mxu0 0.0
    %788 = vmatprep.subr.mxu0 0.0
    %789 = vmatpush1.msra.mxu0 0.0
    %790 = vmatprep.subr.mxu0 0.0
    %791 = vmatpush1.msra.mxu0 0.0
    %792 = vmatprep.subr.mxu0 0.0
    %793 = vmatpush1.msra.mxu0 0.0
    %794 = vmatprep.subr.mxu0 0.0
    %795 = vmatpush1.msra.mxu0 0.0
    %796 = vmatprep.subr.mxu0 0.0
    %797 = vmatpush1.msra.mxu0 0.0
    %798 = vmatprep.subr.mxu0 0.0
    %799 = vmatpush1.msra.mxu0 0.0
    %800 = vmatprep.subr.mxu0 0.0
    %801 = vmatpush1.msra.mxu0 0.0
    %802 = vmatprep.subr.mxu0 0.0
    %803 = vmatpush1.msra.mxu0 0.0
    %804 = vmatprep.subr.mxu0 0.0
    %805 = vmatpush1.msra.mxu0 0.0
    %806 = vmatprep.subr.mxu0 0.0
    %807 = vmatpush1.msra.mxu0 0.0
    %808 = vmatprep.subr.mxu0 0.0
    %809 = vmatpush1.msra.mxu0 0.0
    %810 = vmatprep.subr.mxu0 0.0
    %811 = vmatpush1.msra.mxu0 0.0
    %812 = vmatprep.subr.mxu0 0.0
    %813 = vmatpush1.msra.mxu0 0.0
    %814 = vmatprep.subr.mxu0 0.0
    %815 = vmatpush1.msra.mxu0 0.0
    %816 = vmatprep.subr.mxu0 0.0
    %817 = vmatpush1.msra.mxu0 0.0
    %818 = vmatprep.subr.mxu0 0.0
    %819 = vmatpush1.msra.mxu0 0.0
    %820 = vmatprep.mubr.f32.mxu0 0.0
    %821 = vmatmul.mubr.f32.gmra.mrb[0].mxu0 %v139
    %v822 = vpop.f32.mrb[0].mxu0
    %v823 = vadd.f32 %v754, %v822
    %v824 = vpop.f32.mrb[0].mxu0
    %825 = vmatprep.mubr.f32.mxu0 0.0
    %826 = vmatmul.mubr.f32.gmra.mrb[0].mxu0 %v142
    %v827 = vpop.f32.mrb[0].mxu0
    %v828 = vadd.f32 %v754, %v827
    %v829 = vpop.f32.mrb[0].mxu0
    %830 = vdwg.mxu0
    %s831 = scalar_lea.vmem %s8, 64
    %v832 = vld [vmem:[%s831] sm:$0xff]
    %v833 = vld [vmem:[%s831 + $0x8] sm:$0xff]
    %v834 = vld [vmem:[%s831 + $0x10] sm:$0xff]
    %v835 = vld [vmem:[%s831 + $0x18] sm:$0xff]
    %s836 = scalar_lea.vmem %s9, 2
    %v837 = vld [vmem:[%s836] sm:$0x1]
    %v839 = vlaneseq
    %v840 = vshrl.u32 %v839, 7
    %v841 = vsub.s32 0, %v840
    %v842 = vrot.slane %v837, %v841
    %844 = vmatprep.subr.mxu0 0.0
    %845 = vmatpush1.msra.mxu0 %v832
    %846 = vmatprep.subr.mxu0 0.0
    %847 = vmatpush1.msra.mxu0 %v833
    %848 = vmatprep.subr.mxu0 0.0
    %849 = vmatpush1.msra.mxu0 %v834
    %850 = vmatprep.subr.mxu0 0.0
    %851 = vmatpush1.msra.mxu0 %v835
    %852 = vmatprep.subr.mxu0 0.0
    %853 = vmatpush1.msra.mxu0 0.0
    %854 = vmatprep.subr.mxu0 0.0
    %855 = vmatpush1.msra.mxu0 0.0
    %856 = vmatprep.subr.mxu0 0.0
    %857 = vmatpush1.msra.mxu0 0.0
    %858 = vmatprep.subr.mxu0 0.0
    %859 = vmatpush1.msra.mxu0 0.0
    %860 = vmatprep.subr.mxu0 0.0
    %861 = vmatpush1.msra.mxu0 0.0
    %862 = vmatprep.subr.mxu0 0.0
    %863 = vmatpush1.msra.mxu0 0.0
    %864 = vmatprep.subr.mxu0 0.0
    %865 = vmatpush1.msra.mxu0 0.0
    %866 = vmatprep.subr.mxu0 0.0
    %867 = vmatpush1.msra.mxu0 0.0
    %868 = vmatprep.subr.mxu0 0.0
    %869 = vmatpush1.msra.mxu0 0.0
    %870 = vmatprep.subr.mxu0 0.0
    %871 = vmatpush1.msra.mxu0 0.0
    %872 = vmatprep.subr.mxu0 0.0
    %873 = vmatpush1.msra.mxu0 0.0
    %874 = vmatprep.subr.mxu0 0.0
    %875 = vmatpush1.msra.mxu0 0.0
    %876 = vmatprep.subr.mxu0 0.0
    %877 = vmatpush1.msra.mxu0 0.0
    %878 = vmatprep.subr.mxu0 0.0
    %879 = vmatpush1.msra.mxu0 0.0
    %880 = vmatprep.subr.mxu0 0.0
    %881 = vmatpush1.msra.mxu0 0.0
    %882 = vmatprep.subr.mxu0 0.0
    %883 = vmatpush1.msra.mxu0 0.0
    %884 = vmatprep.subr.mxu0 0.0
    %885 = vmatpush1.msra.mxu0 0.0
    %886 = vmatprep.subr.mxu0 0.0
    %887 = vmatpush1.msra.mxu0 0.0
    %888 = vmatprep.subr.mxu0 0.0
    %889 = vmatpush1.msra.mxu0 0.0
    %890 = vmatprep.subr.mxu0 0.0
    %891 = vmatpush1.msra.mxu0 0.0
    %892 = vmatprep.subr.mxu0 0.0
    %893 = vmatpush1.msra.mxu0 0.0
    %894 = vmatprep.subr.mxu0 0.0
    %895 = vmatpush1.msra.mxu0 0.0
    %896 = vmatprep.subr.mxu0 0.0
    %897 = vmatpush1.msra.mxu0 0.0
    %898 = vmatprep.subr.mxu0 0.0
    %899 = vmatpush1.msra.mxu0 0.0
    %900 = vmatprep.subr.mxu0 0.0
    %901 = vmatpush1.msra.mxu0 0.0
    %902 = vmatprep.subr.mxu0 0.0
    %903 = vmatpush1.msra.mxu0 0.0
    %904 = vmatprep.subr.mxu0 0.0
    %905 = vmatpush1.msra.mxu0 0.0
    %906 = vmatprep.subr.mxu0 0.0
    %907 = vmatpush1.msra.mxu0 0.0
    %908 = vmatprep.mubr.f32.mxu0 0.0
    %909 = vmatmul.mubr.f32.gmra.mrb[0].mxu0 %v139
    %v910 = vpop.f32.mrb[0].mxu0
    %v911 = vadd.f32 %v842, %v910
    %v912 = vpop.f32.mrb[0].mxu0
    %913 = vmatprep.mubr.f32.mxu0 0.0
    %914 = vmatmul.mubr.f32.gmra.mrb[0].mxu0 %v142
    %v915 = vpop.f32.mrb[0].mxu0
    %v916 = vadd.f32 %v842, %v915
    %v917 = vpop.f32.mrb[0].mxu0
    %918 = vdwg.mxu0
    %s919 = scalar_lea.vmem %s4, 96
    %v920 = vld [vmem:[%s919] sm:$0xff]
    %v921 = vld [vmem:[%s919 + $0x8] sm:$0xff]
    %v922 = vld [vmem:[%s919 + $0x10] sm:$0xff]
    %v923 = vld [vmem:[%s919 + $0x18] sm:$0xff]
    %s924 = scalar_lea.vmem %s5, 3
    %v925 = vld [vmem:[%s924] sm:$0x1]
    %v927 = vlaneseq
    %v928 = vshrl.u32 %v927, 7
    %v929 = vsub.s32 0, %v928
    %v930 = vrot.slane %v925, %v929
    %932 = vmatprep.subr.mxu0 0.0
    %933 = vmatpush1.msra.mxu0 %v920
    %934 = vmatprep.subr.mxu0 0.0
    %935 = vmatpush1.msra.mxu0 %v921
    %936 = vmatprep.subr.mxu0 0.0
    %937 = vmatpush1.msra.mxu0 %v922
    %938 = vmatprep.subr.mxu0 0.0
    %939 = vmatpush1.msra.mxu0 %v923
    %940 = vmatprep.subr.mxu0 0.0
    %941 = vmatpush1.msra.mxu0 0.0
    %942 = vmatprep.subr.mxu0 0.0
    %943 = vmatpush1.msra.mxu0 0.0
    %944 = vmatprep.subr.mxu0 0.0
    %945 = vmatpush1.msra.mxu0 0.0
    %946 = vmatprep.subr.mxu0 0.0
    %947 = vmatpush1.msra.mxu0 0.0
    %948 = vmatprep.subr.mxu0 0.0
    %949 = vmatpush1.msra.mxu0 0.0
    %950 = vmatprep.subr.mxu0 0.0
    %951 = vmatpush1.msra.mxu0 0.0
    %952 = vmatprep.subr.mxu0 0.0
    %953 = vmatpush1.msra.mxu0 0.0
    %954 = vmatprep.subr.mxu0 0.0
    %955 = vmatpush1.msra.mxu0 0.0
    %956 = vmatprep.subr.mxu0 0.0
    %957 = vmatpush1.msra.mxu0 0.0
    %958 = vmatprep.subr.mxu0 0.0
    %959 = vmatpush1.msra.mxu0 0.0
    %960 = vmatprep.subr.mxu0 0.0
    %961 = vmatpush1.msra.mxu0 0.0
    %962 = vmatprep.subr.mxu0 0.0
    %963 = vmatpush1.msra.mxu0 0.0
    %964 = vmatprep.subr.mxu0 0.0
    %965 = vmatpush1.msra.mxu0 0.0
    %966 = vmatprep.subr.mxu0 0.0
    %967 = vmatpush1.msra.mxu0 0.0
    %968 = vmatprep.subr.mxu0 0.0
    %969 = vmatpush1.msra.mxu0 0.0
    %970 = vmatprep.subr.mxu0 0.0
    %971 = vmatpush1.msra.mxu0 0.0
    %972 = vmatprep.subr.mxu0 0.0
    %973 = vmatpush1.msra.mxu0 0.0
    %974 = vmatprep.subr.mxu0 0.0
    %975 = vmatpush1.msra.mxu0 0.0
    %976 = vmatprep.subr.mxu0 0.0
    %977 = vmatpush1.msra.mxu0 0.0
    %978 = vmatprep.subr.mxu0 0.0
    %979 = vmatpush1.msra.mxu0 0.0
    %980 = vmatprep.subr.mxu0 0.0
    %981 = vmatpush1.msra.mxu0 0.0
    %982 = vmatprep.subr.mxu0 0.0
    %983 = vmatpush1.msra.mxu0 0.0
    %984 = vmatprep.subr.mxu0 0.0
    %985 = vmatpush1.msra.mxu0 0.0
    %986 = vmatprep.subr.mxu0 0.0
    %987 = vmatpush1.msra.mxu0 0.0
    %988 = vmatprep.subr.mxu0 0.0
    %989 = vmatpush1.msra.mxu0 0.0
    %990 = vmatprep.subr.mxu0 0.0
    %991 = vmatpush1.msra.mxu0 0.0
    %992 = vmatprep.subr.mxu0 0.0
    %993 = vmatpush1.msra.mxu0 0.0
    %994 = vmatprep.subr.mxu0 0.0
    %995 = vmatpush1.msra.mxu0 0.0
    %996 = vmatprep.mubr.f32.mxu0 0.0
    %997 = vmatmul.mubr.f32.gmra.mrb[0].mxu0 %v139
    %v998 = vpop.f32.mrb[0].mxu0
    %v999 = vadd.f32 %v930, %v998
    %v1000 = vpop.f32.mrb[0].mxu0
    %1001 = vmatprep.mubr.f32.mxu0 0.0
    %1002 = vmatmul.mubr.f32.gmra.mrb[0].mxu0 %v142
    %v1003 = vpop.f32.mrb[0].mxu0
    %v1004 = vadd.f32 %v930, %v1003
    %v1005 = vpop.f32.mrb[0].mxu0
    %1006 = vdwg.mxu0
    %s1007 = scalar_lea.vmem %s6, 96
    %v1008 = vld [vmem:[%s1007] sm:$0xff]
    %v1009 = vld [vmem:[%s1007 + $0x8] sm:$0xff]
    %v1010 = vld [vmem:[%s1007 + $0x10] sm:$0xff]
    %v1011 = vld [vmem:[%s1007 + $0x18] sm:$0xff]
    %s1012 = scalar_lea.vmem %s7, 3
    %v1013 = vld [vmem:[%s1012] sm:$0x1]
    %v1015 = vlaneseq
    %v1016 = vshrl.u32 %v1015, 7
    %v1017 = vsub.s32 0, %v1016
    %v1018 = vrot.slane %v1013, %v1017
    %1020 = vmatprep.subr.mxu0 0.0
    %1021 = vmatpush1.msra.mxu0 %v1008
    %1022 = vmatprep.subr.mxu0 0.0
    %1023 = vmatpush1.msra.mxu0 %v1009
    %1024 = vmatprep.subr.mxu0 0.0
    %1025 = vmatpush1.msra.mxu0 %v1010
    %1026 = vmatprep.subr.mxu0 0.0
    %1027 = vmatpush1.msra.mxu0 %v1011
    %1028 = vmatprep.subr.mxu0 0.0
    %1029 = vmatpush1.msra.mxu0 0.0
    %1030 = vmatprep.subr.mxu0 0.0
    %1031 = vmatpush1.msra.mxu0 0.0
    %1032 = vmatprep.subr.mxu0 0.0
    %1033 = vmatpush1.msra.mxu0 0.0
    %1034 = vmatprep.subr.mxu0 0.0
    %1035 = vmatpush1.msra.mxu0 0.0
    %1036 = vmatprep.subr.mxu0 0.0
    %1037 = vmatpush1.msra.mxu0 0.0
    %1038 = vmatprep.subr.mxu0 0.0
    %1039 = vmatpush1.msra.mxu0 0.0
    %1040 = vmatprep.subr.mxu0 0.0
    %1041 = vmatpush1.msra.mxu0 0.0
    %1042 = vmatprep.subr.mxu0 0.0
    %1043 = vmatpush1.msra.mxu0 0.0
    %1044 = vmatprep.subr.mxu0 0.0
    %1045 = vmatpush1.msra.mxu0 0.0
    %1046 = vmatprep.subr.mxu0 0.0
    %1047 = vmatpush1.msra.mxu0 0.0
    %1048 = vmatprep.subr.mxu0 0.0
    %1049 = vmatpush1.msra.mxu0 0.0
    %1050 = vmatprep.subr.mxu0 0.0
    %1051 = vmatpush1.msra.mxu0 0.0
    %1052 = vmatprep.subr.mxu0 0.0
    %1053 = vmatpush1.msra.mxu0 0.0
    %1054 = vmatprep.subr.mxu0 0.0
    %1055 = vmatpush1.msra.mxu0 0.0
    %1056 = vmatprep.subr.mxu0 0.0
    %1057 = vmatpush1.msra.mxu0 0.0
    %1058 = vmatprep.subr.mxu0 0.0
    %1059 = vmatpush1.msra.mxu0 0.0
    %1060 = vmatprep.subr.mxu0 0.0
    %1061 = vmatpush1.msra.mxu0 0.0
    %1062 = vmatprep.subr.mxu0 0.0
    %1063 = vmatpush1.msra.mxu0 0.0
    %1064 = vmatprep.subr.mxu0 0.0
    %1065 = vmatpush1.msra.mxu0 0.0
    %1066 = vmatprep.subr.mxu0 0.0
    %1067 = vmatpush1.msra.mxu0 0.0
    %1068 = vmatprep.subr.mxu0 0.0
    %1069 = vmatpush1.msra.mxu0 0.0
    %1070 = vmatprep.subr.mxu0 0.0
    %1071 = vmatpush1.msra.mxu0 0.0
    %1072 = vmatprep.subr.mxu0 0.0
    %1073 = vmatpush1.msra.mxu0 0.0
    %1074 = vmatprep.subr.mxu0 0.0
    %1075 = vmatpush1.msra.mxu0 0.0
    %1076 = vmatprep.subr.mxu0 0.0
    %1077 = vmatpush1.msra.mxu0 0.0
    %1078 = vmatprep.subr.mxu0 0.0
    %1079 = vmatpush1.msra.mxu0 0.0
    %1080 = vmatprep.subr.mxu0 0.0
    %1081 = vmatpush1.msra.mxu0 0.0
    %1082 = vmatprep.subr.mxu0 0.0
    %1083 = vmatpush1.msra.mxu0 0.0
    %1084 = vmatprep.mubr.f32.mxu0 0.0
    %1085 = vmatmul.mubr.f32.gmra.mrb[0].mxu0 %v139
    %v1086 = vpop.f32.mrb[0].mxu0
    %v1087 = vadd.f32 %v1018, %v1086
    %v1088 = vpop.f32.mrb[0].mxu0
    %1089 = vmatprep.mubr.f32.mxu0 0.0
    %1090 = vmatmul.mubr.f32.gmra.mrb[0].mxu0 %v142
    %v1091 = vpop.f32.mrb[0].mxu0
    %v1092 = vadd.f32 %v1018, %v1091
    %v1093 = vpop.f32.mrb[0].mxu0
    %1094 = vdwg.mxu0
    %s1095 = scalar_lea.vmem %s8, 96
    %v1096 = vld [vmem:[%s1095] sm:$0xff]
    %v1097 = vld [vmem:[%s1095 + $0x8] sm:$0xff]
    %v1098 = vld [vmem:[%s1095 + $0x10] sm:$0xff]
    %v1099 = vld [vmem:[%s1095 + $0x18] sm:$0xff]
    %s1100 = scalar_lea.vmem %s9, 3
    %v1101 = vld [vmem:[%s1100] sm:$0x1]
    %v1103 = vlaneseq
    %v1104 = vshrl.u32 %v1103, 7
    %v1105 = vsub.s32 0, %v1104
    %v1106 = vrot.slane %v1101, %v1105
    %1108 = vmatprep.subr.mxu0 0.0
    %1109 = vmatpush1.msra.mxu0 %v1096
    %1110 = vmatprep.subr.mxu0 0.0
    %1111 = vmatpush1.msra.mxu0 %v1097
    %1112 = vmatprep.subr.mxu0 0.0
    %1113 = vmatpush1.msra.mxu0 %v1098
    %1114 = vmatprep.subr.mxu0 0.0
    %1115 = vmatpush1.msra.mxu0 %v1099
    %1116 = vmatprep.subr.mxu0 0.0
    %1117 = vmatpush1.msra.mxu0 0.0
    %1118 = vmatprep.subr.mxu0 0.0
    %1119 = vmatpush1.msra.mxu0 0.0
    %1120 = vmatprep.subr.mxu0 0.0
    %1121 = vmatpush1.msra.mxu0 0.0
    %1122 = vmatprep.subr.mxu0 0.0
    %1123 = vmatpush1.msra.mxu0 0.0
    %1124 = vmatprep.subr.mxu0 0.0
    %1125 = vmatpush1.msra.mxu0 0.0
    %1126 = vmatprep.subr.mxu0 0.0
    %1127 = vmatpush1.msra.mxu0 0.0
    %1128 = vmatprep.subr.mxu0 0.0
    %1129 = vmatpush1.msra.mxu0 0.0
    %1130 = vmatprep.subr.mxu0 0.0
    %1131 = vmatpush1.msra.mxu0 0.0
    %1132 = vmatprep.subr.mxu0 0.0
    %1133 = vmatpush1.msra.mxu0 0.0
    %1134 = vmatprep.subr.mxu0 0.0
    %1135 = vmatpush1.msra.mxu0 0.0
    %1136 = vmatprep.subr.mxu0 0.0
    %1137 = vmatpush1.msra.mxu0 0.0
    %1138 = vmatprep.subr.mxu0 0.0
    %1139 = vmatpush1.msra.mxu0 0.0
    %1140 = vmatprep.subr.mxu0 0.0
    %1141 = vmatpush1.msra.mxu0 0.0
    %1142 = vmatprep.subr.mxu0 0.0
    %1143 = vmatpush1.msra.mxu0 0.0
    %1144 = vmatprep.subr.mxu0 0.0
    %1145 = vmatpush1.msra.mxu0 0.0
    %1146 = vmatprep.subr.mxu0 0.0
    %1147 = vmatpush1.msra.mxu0 0.0
    %1148 = vmatprep.subr.mxu0 0.0
    %1149 = vmatpush1.msra.mxu0 0.0
    %1150 = vmatprep.subr.mxu0 0.0
    %1151 = vmatpush1.msra.mxu0 0.0
    %1152 = vmatprep.subr.mxu0 0.0
    %1153 = vmatpush1.msra.mxu0 0.0
    %1154 = vmatprep.subr.mxu0 0.0
    %1155 = vmatpush1.msra.mxu0 0.0
    %1156 = vmatprep.subr.mxu0 0.0
    %1157 = vmatpush1.msra.mxu0 0.0
    %1158 = vmatprep.subr.mxu0 0.0
    %1159 = vmatpush1.msra.mxu0 0.0
    %1160 = vmatprep.subr.mxu0 0.0
    %1161 = vmatpush1.msra.mxu0 0.0
    %1162 = vmatprep.subr.mxu0 0.0
    %1163 = vmatpush1.msra.mxu0 0.0
    %1164 = vmatprep.subr.mxu0 0.0
    %1165 = vmatpush1.msra.mxu0 0.0
    %1166 = vmatprep.subr.mxu0 0.0
    %1167 = vmatpush1.msra.mxu0 0.0
    %1168 = vmatprep.subr.mxu0 0.0
    %1169 = vmatpush1.msra.mxu0 0.0
    %1170 = vmatprep.subr.mxu0 0.0
    %1171 = vmatpush1.msra.mxu0 0.0
    %1172 = vmatprep.mubr.f32.mxu0 0.0
    %1173 = vmatmul.mubr.f32.gmra.mrb[0].mxu0 %v139
    %v1174 = vpop.f32.mrb[0].mxu0
    %v1175 = vadd.f32 %v1106, %v1174
    %v1176 = vpop.f32.mrb[0].mxu0
    %1177 = vmatprep.mubr.f32.mxu0 0.0
    %1178 = vmatmul.mubr.f32.gmra.mrb[0].mxu0 %v142
    %v1179 = vpop.f32.mrb[0].mxu0
    %v1180 = vadd.f32 %v1106, %v1179
    %v1181 = vpop.f32.mrb[0].mxu0
    %1182 = vdwg.mxu0
    %v1184 = vlaneseq
    %v1185 = vshrl.u32 %v1184, 7
    %v1186 = vsub.s32 0, %v1185
    %v1187 = vrot.slane %v122, %v1186
    %vm1189 = vcmask 64512
    %v1191 = vsel %vm1189, %v211, 0
    %v1194 = vsel %vm1189, %v297, 0
    %1196 = vmatprep.subr.mxu0 0.0
    %1197 = vmatpush1.xpose.msra.mxu0 %v1194
    %1198 = vmatprep.subr.mxu0 0.0
    %1199 = vmatpush1.xpose.msra.mxu0 0.0
    %1200 = vmatprep.subr.mxu0 0.0
    %1201 = vmatpush1.xpose.msra.mxu0 0.0
    %1202 = vmatprep.subr.mxu0 0.0
    %1203 = vmatpush1.xpose.msra.mxu0 0.0
    %1204 = vmatprep.subr.mxu0 0.0
    %1205 = vmatpush1.xpose.msra.mxu0 0.0
    %1206 = vmatprep.subr.mxu0 0.0
    %1207 = vmatpush1.xpose.msra.mxu0 0.0
    %1208 = vmatprep.subr.mxu0 0.0
    %1209 = vmatpush1.xpose.msra.mxu0 0.0
    %1210 = vmatprep.subr.mxu0 0.0
    %1211 = vmatpush1.xpose.msra.mxu0 0.0
    %1212 = vmatprep.subr.mxu0 0.0
    %1213 = vmatpush1.xpose.msra.mxu0 0.0
    %1214 = vmatprep.subr.mxu0 0.0
    %1215 = vmatpush1.xpose.msra.mxu0 0.0
    %1216 = vmatprep.subr.mxu0 0.0
    %1217 = vmatpush1.xpose.msra.mxu0 0.0
    %1218 = vmatprep.subr.mxu0 0.0
    %1219 = vmatpush1.xpose.msra.mxu0 0.0
    %1220 = vmatprep.subr.mxu0 0.0
    %1221 = vmatpush1.xpose.msra.mxu0 0.0
    %1222 = vmatprep.subr.mxu0 0.0
    %1223 = vmatpush1.xpose.msra.mxu0 0.0
    %1224 = vmatprep.subr.mxu0 0.0
    %1225 = vmatpush1.xpose.msra.mxu0 0.0
    %1226 = vmatprep.subr.mxu0 0.0
    %1227 = vmatpush1.xpose.msra.mxu0 0.0
    %1228 = vmatprep.subr.mxu0 0.0
    %1229 = vmatpush1.xpose.msra.mxu0 0.0
    %1230 = vmatprep.subr.mxu0 0.0
    %1231 = vmatpush1.xpose.msra.mxu0 0.0
    %1232 = vmatprep.subr.mxu0 0.0
    %1233 = vmatpush1.xpose.msra.mxu0 0.0
    %1234 = vmatprep.subr.mxu0 0.0
    %1235 = vmatpush1.xpose.msra.mxu0 0.0
    %1236 = vmatprep.subr.mxu0 0.0
    %1237 = vmatpush1.xpose.msra.mxu0 0.0
    %1238 = vmatprep.subr.mxu0 0.0
    %1239 = vmatpush1.xpose.msra.mxu0 0.0
    %1240 = vmatprep.subr.mxu0 0.0
    %1241 = vmatpush1.xpose.msra.mxu0 0.0
    %1242 = vmatprep.subr.mxu0 0.0
    %1243 = vmatpush1.xpose.msra.mxu0 0.0
    %1244 = vmatprep.subr.mxu0 0.0
    %1245 = vmatpush1.xpose.msra.mxu0 0.0
    %1246 = vmatprep.subr.mxu0 0.0
    %1247 = vmatpush1.xpose.msra.mxu0 0.0
    %1248 = vmatprep.subr.mxu0 0.0
    %1249 = vmatpush1.xpose.msra.mxu0 0.0
    %1250 = vmatprep.subr.mxu0 0.0
    %1251 = vmatpush1.xpose.msra.mxu0 0.0
    %1252 = vmatprep.subr.mxu0 0.0
    %1253 = vmatpush1.xpose.msra.mxu0 0.0
    %1254 = vmatprep.subr.mxu0 0.0
    %1255 = vmatpush1.xpose.msra.mxu0 0.0
    %1256 = vmatprep.subr.mxu0 0.0
    %1257 = vmatpush1.xpose.msra.mxu0 0.0
    %1258 = vmatprep.subr.mxu0 0.0
    %1259 = vmatpush1.xpose.msra.mxu0 0.0
    %1260 = vmatprep.mubr.f32.mxu0 0.0
    %1261 = vmatmul.mubr.f32.gmra.mrb[0].mxu0 %v1191
    %v1262 = vpop.f32.mrb[0].mxu0
    %v1263 = vadd.f32 %v1187, %v1262
    %v1264 = vpop.f32.mrb[0].mxu0
    %1265 = vdwg.mxu0
    %v1266 = vsel %vm1189, %v1263, -inf
    %1267 = vmax.xlane.f32.xlu0 %v1266
    %v1268 = vpop.xlane.xlu0 %1267
    %v1269 = vsub.f32 %v1263, %v1268
    %v1270 = vmul.f32 %v1269, 1.442695
    %v1271 = vpow.pop %v1270
    %v1272 = vsel %vm1189, %v1271, 0.0
    %1273 = vadd.xlane.f32.xlu0 %v1272
    %v1274 = vpop.xlane.xlu0 %1273
    %v1275 = vrcp.pop %v1274
    %v1276 = vmul.f32 %v1271, %v1275
    %v1278 = vsel %vm1189, %v1276, 0
    %1280 = vmatprep.subr.mxu0 0.0
    %1281 = vmatpush1.msra.mxu0 %v383
    %1282 = vmatprep.subr.mxu0 0.0
    %1283 = vmatpush1.msra.mxu0 0.0
    %1284 = vmatprep.subr.mxu0 0.0
    %1285 = vmatpush1.msra.mxu0 0.0
    %1286 = vmatprep.subr.mxu0 0.0
    %1287 = vmatpush1.msra.mxu0 0.0
    %1288 = vmatprep.subr.mxu0 0.0
    %1289 = vmatpush1.msra.mxu0 0.0
    %1290 = vmatprep.subr.mxu0 0.0
    %1291 = vmatpush1.msra.mxu0 0.0
    %1292 = vmatprep.subr.mxu0 0.0
    %1293 = vmatpush1.msra.mxu0 0.0
    %1294 = vmatprep.subr.mxu0 0.0
    %1295 = vmatpush1.msra.mxu0 0.0
    %1296 = vmatprep.subr.mxu0 0.0
    %1297 = vmatpush1.msra.mxu0 0.0
    %1298 = vmatprep.subr.mxu0 0.0
    %1299 = vmatpush1.msra.mxu0 0.0
    %1300 = vmatprep.subr.mxu0 0.0
    %1301 = vmatpush1.msra.mxu0 0.0
    %1302 = vmatprep.subr.mxu0 0.0
    %1303 = vmatpush1.msra.mxu0 0.0
    %1304 = vmatprep.subr.mxu0 0.0
    %1305 = vmatpush1.msra.mxu0 0.0
    %1306 = vmatprep.subr.mxu0 0.0
    %1307 = vmatpush1.msra.mxu0 0.0
    %1308 = vmatprep.subr.mxu0 0.0
    %1309 = vmatpush1.msra.mxu0 0.0
    %1310 = vmatprep.subr.mxu0 0.0
    %1311 = vmatpush1.msra.mxu0 0.0
    %1312 = vmatprep.subr.mxu0 0.0
    %1313 = vmatpush1.msra.mxu0 0.0
    %1314 = vmatprep.subr.mxu0 0.0
    %1315 = vmatpush1.msra.mxu0 0.0
    %1316 = vmatprep.subr.mxu0 0.0
    %1317 = vmatpush1.msra.mxu0 0.0
    %1318 = vmatprep.subr.mxu0 0.0
    %1319 = vmatpush1.msra.mxu0 0.0
    %1320 = vmatprep.subr.mxu0 0.0
    %1321 = vmatpush1.msra.mxu0 0.0
    %1322 = vmatprep.subr.mxu0 0.0
    %1323 = vmatpush1.msra.mxu0 0.0
    %1324 = vmatprep.subr.mxu0 0.0
    %1325 = vmatpush1.msra.mxu0 0.0
    %1326 = vmatprep.subr.mxu0 0.0
    %1327 = vmatpush1.msra.mxu0 0.0
    %1328 = vmatprep.subr.mxu0 0.0
    %1329 = vmatpush1.msra.mxu0 0.0
    %1330 = vmatprep.subr.mxu0 0.0
    %1331 = vmatpush1.msra.mxu0 0.0
    %1332 = vmatprep.subr.mxu0 0.0
    %1333 = vmatpush1.msra.mxu0 0.0
    %1334 = vmatprep.subr.mxu0 0.0
    %1335 = vmatpush1.msra.mxu0 0.0
    %1336 = vmatprep.subr.mxu0 0.0
    %1337 = vmatpush1.msra.mxu0 0.0
    %1338 = vmatprep.subr.mxu0 0.0
    %1339 = vmatpush1.msra.mxu0 0.0
    %1340 = vmatprep.subr.mxu0 0.0
    %1341 = vmatpush1.msra.mxu0 0.0
    %1342 = vmatprep.subr.mxu0 0.0
    %1343 = vmatpush1.msra.mxu0 0.0
    %1344 = vmatprep.mubr.f32.mxu0 0.0
    %1345 = vmatmul.mubr.f32.gmra.mrb[0].mxu0 %v1278
    %v1346 = vpop.f32.mrb[0].mxu0
    %v1347 = vadd.f32 0.0, %v1346
    %v1348 = vpop.f32.mrb[0].mxu0
    %1349 = vdwg.mxu0
    %1350 = vst.msk [vmem:[#allocation2] sm:$0xff] %vm1189, %v1347
    %v1352 = vsel %vm1189, %v471, 0
    %v1355 = vsel %vm1189, %v559, 0
    %1357 = vmatprep.subr.mxu0 0.0
    %1358 = vmatpush1.xpose.msra.mxu0 %v1355
    %1359 = vmatprep.subr.mxu0 0.0
    %1360 = vmatpush1.xpose.msra.mxu0 0.0
    %1361 = vmatprep.subr.mxu0 0.0
    %1362 = vmatpush1.xpose.msra.mxu0 0.0
    %1363 = vmatprep.subr.mxu0 0.0
    %1364 = vmatpush1.xpose.msra.mxu0 0.0
    %1365 = vmatprep.subr.mxu0 0.0
    %1366 = vmatpush1.xpose.msra.mxu0 0.0
    %1367 = vmatprep.subr.mxu0 0.0
    %1368 = vmatpush1.xpose.msra.mxu0 0.0
    %1369 = vmatprep.subr.mxu0 0.0
    %1370 = vmatpush1.xpose.msra.mxu0 0.0
    %1371 = vmatprep.subr.mxu0 0.0
    %1372 = vmatpush1.xpose.msra.mxu0 0.0
    %1373 = vmatprep.subr.mxu0 0.0
    %1374 = vmatpush1.xpose.msra.mxu0 0.0
    %1375 = vmatprep.subr.mxu0 0.0
    %1376 = vmatpush1.xpose.msra.mxu0 0.0
    %1377 = vmatprep.subr.mxu0 0.0
    %1378 = vmatpush1.xpose.msra.mxu0 0.0
    %1379 = vmatprep.subr.mxu0 0.0
    %1380 = vmatpush1.xpose.msra.mxu0 0.0
    %1381 = vmatprep.subr.mxu0 0.0
    %1382 = vmatpush1.xpose.msra.mxu0 0.0
    %1383 = vmatprep.subr.mxu0 0.0
    %1384 = vmatpush1.xpose.msra.mxu0 0.0
    %1385 = vmatprep.subr.mxu0 0.0
    %1386 = vmatpush1.xpose.msra.mxu0 0.0
    %1387 = vmatprep.subr.mxu0 0.0
    %1388 = vmatpush1.xpose.msra.mxu0 0.0
    %1389 = vmatprep.subr.mxu0 0.0
    %1390 = vmatpush1.xpose.msra.mxu0 0.0
    %1391 = vmatprep.subr.mxu0 0.0
    %1392 = vmatpush1.xpose.msra.mxu0 0.0
    %1393 = vmatprep.subr.mxu0 0.0
    %1394 = vmatpush1.xpose.msra.mxu0 0.0
    %1395 = vmatprep.subr.mxu0 0.0
    %1396 = vmatpush1.xpose.msra.mxu0 0.0
    %1397 = vmatprep.subr.mxu0 0.0
    %1398 = vmatpush1.xpose.msra.mxu0 0.0
    %1399 = vmatprep.subr.mxu0 0.0
    %1400 = vmatpush1.xpose.msra.mxu0 0.0
    %1401 = vmatprep.subr.mxu0 0.0
    %1402 = vmatpush1.xpose.msra.mxu0 0.0
    %1403 = vmatprep.subr.mxu0 0.0
    %1404 = vmatpush1.xpose.msra.mxu0 0.0
    %1405 = vmatprep.subr.mxu0 0.0
    %1406 = vmatpush1.xpose.msra.mxu0 0.0
    %1407 = vmatprep.subr.mxu0 0.0
    %1408 = vmatpush1.xpose.msra.mxu0 0.0
    %1409 = vmatprep.subr.mxu0 0.0
    %1410 = vmatpush1.xpose.msra.mxu0 0.0
    %1411 = vmatprep.subr.mxu0 0.0
    %1412 = vmatpush1.xpose.msra.mxu0 0.0
    %1413 = vmatprep.subr.mxu0 0.0
    %1414 = vmatpush1.xpose.msra.mxu0 0.0
    %1415 = vmatprep.subr.mxu0 0.0
    %1416 = vmatpush1.xpose.msra.mxu0 0.0
    %1417 = vmatprep.subr.mxu0 0.0
    %1418 = vmatpush1.xpose.msra.mxu0 0.0
    %1419 = vmatprep.subr.mxu0 0.0
    %1420 = vmatpush1.xpose.msra.mxu0 0.0
    %1421 = vmatprep.mubr.f32.mxu0 0.0
    %1422 = vmatmul.mubr.f32.gmra.mrb[0].mxu0 %v1352
    %v1423 = vpop.f32.mrb[0].mxu0
    %v1424 = vadd.f32 %v1187, %v1423
    %v1425 = vpop.f32.mrb[0].mxu0
    %1426 = vdwg.mxu0
    %v1427 = vsel %vm1189, %v1424, -inf
    %1428 = vmax.xlane.f32.xlu0 %v1427
    %v1429 = vpop.xlane.xlu0 %1428
    %v1430 = vsub.f32 %v1424, %v1429
    %v1431 = vmul.f32 %v1430, 1.442695
    %v1432 = vpow.pop %v1431
    %v1433 = vsel %vm1189, %v1432, 0.0
    %1434 = vadd.xlane.f32.xlu0 %v1433
    %v1435 = vpop.xlane.xlu0 %1434
    %v1436 = vrcp.pop %v1435
    %v1437 = vmul.f32 %v1432, %v1436
    %v1439 = vsel %vm1189, %v1437, 0
    %1441 = vmatprep.subr.mxu0 0.0
    %1442 = vmatpush1.msra.mxu0 %v647
    %1443 = vmatprep.subr.mxu0 0.0
    %1444 = vmatpush1.msra.mxu0 0.0
    %1445 = vmatprep.subr.mxu0 0.0
    %1446 = vmatpush1.msra.mxu0 0.0
    %1447 = vmatprep.subr.mxu0 0.0
    %1448 = vmatpush1.msra.mxu0 0.0
    %1449 = vmatprep.subr.mxu0 0.0
    %1450 = vmatpush1.msra.mxu0 0.0
    %1451 = vmatprep.subr.mxu0 0.0
    %1452 = vmatpush1.msra.mxu0 0.0
    %1453 = vmatprep.subr.mxu0 0.0
    %1454 = vmatpush1.msra.mxu0 0.0
    %1455 = vmatprep.subr.mxu0 0.0
    %1456 = vmatpush1.msra.mxu0 0.0
    %1457 = vmatprep.subr.mxu0 0.0
    %1458 = vmatpush1.msra.mxu0 0.0
    %1459 = vmatprep.subr.mxu0 0.0
    %1460 = vmatpush1.msra.mxu0 0.0
    %1461 = vmatprep.subr.mxu0 0.0
    %1462 = vmatpush1.msra.mxu0 0.0
    %1463 = vmatprep.subr.mxu0 0.0
    %1464 = vmatpush1.msra.mxu0 0.0
    %1465 = vmatprep.subr.mxu0 0.0
    %1466 = vmatpush1.msra.mxu0 0.0
    %1467 = vmatprep.subr.mxu0 0.0
    %1468 = vmatpush1.msra.mxu0 0.0
    %1469 = vmatprep.subr.mxu0 0.0
    %1470 = vmatpush1.msra.mxu0 0.0
    %1471 = vmatprep.subr.mxu0 0.0
    %1472 = vmatpush1.msra.mxu0 0.0
    %1473 = vmatprep.subr.mxu0 0.0
    %1474 = vmatpush1.msra.mxu0 0.0
    %1475 = vmatprep.subr.mxu0 0.0
    %1476 = vmatpush1.msra.mxu0 0.0
    %1477 = vmatprep.subr.mxu0 0.0
    %1478 = vmatpush1.msra.mxu0 0.0
    %1479 = vmatprep.subr.mxu0 0.0
    %1480 = vmatpush1.msra.mxu0 0.0
    %1481 = vmatprep.subr.mxu0 0.0
    %1482 = vmatpush1.msra.mxu0 0.0
    %1483 = vmatprep.subr.mxu0 0.0
    %1484 = vmatpush1.msra.mxu0 0.0
    %1485 = vmatprep.subr.mxu0 0.0
    %1486 = vmatpush1.msra.mxu0 0.0
    %1487 = vmatprep.subr.mxu0 0.0
    %1488 = vmatpush1.msra.mxu0 0.0
    %1489 = vmatprep.subr.mxu0 0.0
    %1490 = vmatpush1.msra.mxu0 0.0
    %1491 = vmatprep.subr.mxu0 0.0
    %1492 = vmatpush1.msra.mxu0 0.0
    %1493 = vmatprep.subr.mxu0 0.0
    %1494 = vmatpush1.msra.mxu0 0.0
    %1495 = vmatprep.subr.mxu0 0.0
    %1496 = vmatpush1.msra.mxu0 0.0
    %1497 = vmatprep.subr.mxu0 0.0
    %1498 = vmatpush1.msra.mxu0 0.0
    %1499 = vmatprep.subr.mxu0 0.0
    %1500 = vmatpush1.msra.mxu0 0.0
    %1501 = vmatprep.subr.mxu0 0.0
    %1502 = vmatpush1.msra.mxu0 0.0
    %1503 = vmatprep.subr.mxu0 0.0
    %1504 = vmatpush1.msra.mxu0 0.0
    %1505 = vmatprep.mubr.f32.mxu0 0.0
    %1506 = vmatmul.mubr.f32.gmra.mrb[0].mxu0 %v1439
    %v1507 = vpop.f32.mrb[0].mxu0
    %v1508 = vadd.f32 0.0, %v1507
    %v1509 = vpop.f32.mrb[0].mxu0
    %1510 = vdwg.mxu0
    %1512 = vrot.lane.b32.xlu0 %v1508, 8
    %v1513 = vpop.permute.xlu0 %1512
    %vm1515 = vcmask 130112
    %1516 = vst.msk [vmem:[#allocation2] sm:$0xff] %vm1515, %v1513
    %v1518 = vsel %vm1189, %v735, 0
    %v1521 = vsel %vm1189, %v823, 0
    %1523 = vmatprep.subr.mxu0 0.0
    %1524 = vmatpush1.xpose.msra.mxu0 %v1521
    %1525 = vmatprep.subr.mxu0 0.0
    %1526 = vmatpush1.xpose.msra.mxu0 0.0
    %1527 = vmatprep.subr.mxu0 0.0
    %1528 = vmatpush1.xpose.msra.mxu0 0.0
    %1529 = vmatprep.subr.mxu0 0.0
    %1530 = vmatpush1.xpose.msra.mxu0 0.0
    %1531 = vmatprep.subr.mxu0 0.0
    %1532 = vmatpush1.xpose.msra.mxu0 0.0
    %1533 = vmatprep.subr.mxu0 0.0
    %1534 = vmatpush1.xpose.msra.mxu0 0.0
    %1535 = vmatprep.subr.mxu0 0.0
    %1536 = vmatpush1.xpose.msra.mxu0 0.0
    %1537 = vmatprep.subr.mxu0 0.0
    %1538 = vmatpush1.xpose.msra.mxu0 0.0
    %1539 = vmatprep.subr.mxu0 0.0
    %1540 = vmatpush1.xpose.msra.mxu0 0.0
    %1541 = vmatprep.subr.mxu0 0.0
    %1542 = vmatpush1.xpose.msra.mxu0 0.0
    %1543 = vmatprep.subr.mxu0 0.0
    %1544 = vmatpush1.xpose.msra.mxu0 0.0
    %1545 = vmatprep.subr.mxu0 0.0
    %1546 = vmatpush1.xpose.msra.mxu0 0.0
    %1547 = vmatprep.subr.mxu0 0.0
    %1548 = vmatpush1.xpose.msra.mxu0 0.0
    %1549 = vmatprep.subr.mxu0 0.0
    %1550 = vmatpush1.xpose.msra.mxu0 0.0
    %1551 = vmatprep.subr.mxu0 0.0
    %1552 = vmatpush1.xpose.msra.mxu0 0.0
    %1553 = vmatprep.subr.mxu0 0.0
    %1554 = vmatpush1.xpose.msra.mxu0 0.0
    %1555 = vmatprep.subr.mxu0 0.0
    %1556 = vmatpush1.xpose.msra.mxu0 0.0
    %1557 = vmatprep.subr.mxu0 0.0
    %1558 = vmatpush1.xpose.msra.mxu0 0.0
    %1559 = vmatprep.subr.mxu0 0.0
    %1560 = vmatpush1.xpose.msra.mxu0 0.0
    %1561 = vmatprep.subr.mxu0 0.0
    %1562 = vmatpush1.xpose.msra.mxu0 0.0
    %1563 = vmatprep.subr.mxu0 0.0
    %1564 = vmatpush1.xpose.msra.mxu0 0.0
    %1565 = vmatprep.subr.mxu0 0.0
    %1566 = vmatpush1.xpose.msra.mxu0 0.0
    %1567 = vmatprep.subr.mxu0 0.0
    %1568 = vmatpush1.xpose.msra.mxu0 0.0
    %1569 = vmatprep.subr.mxu0 0.0
    %1570 = vmatpush1.xpose.msra.mxu0 0.0
    %1571 = vmatprep.subr.mxu0 0.0
    %1572 = vmatpush1.xpose.msra.mxu0 0.0
    %1573 = vmatprep.subr.mxu0 0.0
    %1574 = vmatpush1.xpose.msra.mxu0 0.0
    %1575 = vmatprep.subr.mxu0 0.0
    %1576 = vmatpush1.xpose.msra.mxu0 0.0
    %1577 = vmatprep.subr.mxu0 0.0
    %1578 = vmatpush1.xpose.msra.mxu0 0.0
    %1579 = vmatprep.subr.mxu0 0.0
    %1580 = vmatpush1.xpose.msra.mxu0 0.0
    %1581 = vmatprep.subr.mxu0 0.0
    %1582 = vmatpush1.xpose.msra.mxu0 0.0
    %1583 = vmatprep.subr.mxu0 0.0
    %1584 = vmatpush1.xpose.msra.mxu0 0.0
    %1585 = vmatprep.subr.mxu0 0.0
    %1586 = vmatpush1.xpose.msra.mxu0 0.0
    %1587 = vmatprep.mubr.f32.mxu0 0.0
    %1588 = vmatmul.mubr.f32.gmra.mrb[0].mxu0 %v1518
    %v1589 = vpop.f32.mrb[0].mxu0
    %v1590 = vadd.f32 %v1187, %v1589
    %v1591 = vpop.f32.mrb[0].mxu0
    %1592 = vdwg.mxu0
    %v1593 = vsel %vm1189, %v1590, -inf
    %1594 = vmax.xlane.f32.xlu0 %v1593
    %v1595 = vpop.xlane.xlu0 %1594
    %v1596 = vsub.f32 %v1590, %v1595
    %v1597 = vmul.f32 %v1596, 1.442695
    %v1598 = vpow.pop %v1597
    %v1599 = vsel %vm1189, %v1598, 0.0
    %1600 = vadd.xlane.f32.xlu0 %v1599
    %v1601 = vpop.xlane.xlu0 %1600
    %v1602 = vrcp.pop %v1601
    %v1603 = vmul.f32 %v1598, %v1602
    %v1605 = vsel %vm1189, %v1603, 0
    %1607 = vmatprep.subr.mxu0 0.0
    %1608 = vmatpush1.msra.mxu0 %v911
    %1609 = vmatprep.subr.mxu0 0.0
    %1610 = vmatpush1.msra.mxu0 0.0
    %1611 = vmatprep.subr.mxu0 0.0
    %1612 = vmatpush1.msra.mxu0 0.0
    %1613 = vmatprep.subr.mxu0 0.0
    %1614 = vmatpush1.msra.mxu0 0.0
    %1615 = vmatprep.subr.mxu0 0.0
    %1616 = vmatpush1.msra.mxu0 0.0
    %1617 = vmatprep.subr.mxu0 0.0
    %1618 = vmatpush1.msra.mxu0 0.0
    %1619 = vmatprep.subr.mxu0 0.0
    %1620 = vmatpush1.msra.mxu0 0.0
    %1621 = vmatprep.subr.mxu0 0.0
    %1622 = vmatpush1.msra.mxu0 0.0
    %1623 = vmatprep.subr.mxu0 0.0
    %1624 = vmatpush1.msra.mxu0 0.0
    %1625 = vmatprep.subr.mxu0 0.0
    %1626 = vmatpush1.msra.mxu0 0.0
    %1627 = vmatprep.subr.mxu0 0.0
    %1628 = vmatpush1.msra.mxu0 0.0
    %1629 = vmatprep.subr.mxu0 0.0
    %1630 = vmatpush1.msra.mxu0 0.0
    %1631 = vmatprep.subr.mxu0 0.0
    %1632 = vmatpush1.msra.mxu0 0.0
    %1633 = vmatprep.subr.mxu0 0.0
    %1634 = vmatpush1.msra.mxu0 0.0
    %1635 = vmatprep.subr.mxu0 0.0
    %1636 = vmatpush1.msra.mxu0 0.0
    %1637 = vmatprep.subr.mxu0 0.0
    %1638 = vmatpush1.msra.mxu0 0.0
    %1639 = vmatprep.subr.mxu0 0.0
    %1640 = vmatpush1.msra.mxu0 0.0
    %1641 = vmatprep.subr.mxu0 0.0
    %1642 = vmatpush1.msra.mxu0 0.0
    %1643 = vmatprep.subr.mxu0 0.0
    %1644 = vmatpush1.msra.mxu0 0.0
    %1645 = vmatprep.subr.mxu0 0.0
    %1646 = vmatpush1.msra.mxu0 0.0
    %1647 = vmatprep.subr.mxu0 0.0
    %1648 = vmatpush1.msra.mxu0 0.0
    %1649 = vmatprep.subr.mxu0 0.0
    %1650 = vmatpush1.msra.mxu0 0.0
    %1651 = vmatprep.subr.mxu0 0.0
    %1652 = vmatpush1.msra.mxu0 0.0
    %1653 = vmatprep.subr.mxu0 0.0
    %1654 = vmatpush1.msra.mxu0 0.0
    %1655 = vmatprep.subr.mxu0 0.0
    %1656 = vmatpush1.msra.mxu0 0.0
    %1657 = vmatprep.subr.mxu0 0.0
    %1658 = vmatpush1.msra.mxu0 0.0
    %1659 = vmatprep.subr.mxu0 0.0
    %1660 = vmatpush1.msra.mxu0 0.0
    %1661 = vmatprep.subr.mxu0 0.0
    %1662 = vmatpush1.msra.mxu0 0.0
    %1663 = vmatprep.subr.mxu0 0.0
    %1664 = vmatpush1.msra.mxu0 0.0
    %1665 = vmatprep.subr.mxu0 0.0
    %1666 = vmatpush1.msra.mxu0 0.0
    %1667 = vmatprep.subr.mxu0 0.0
    %1668 = vmatpush1.msra.mxu0 0.0
    %1669 = vmatprep.subr.mxu0 0.0
    %1670 = vmatpush1.msra.mxu0 0.0
    %1671 = vmatprep.mubr.f32.mxu0 0.0
    %1672 = vmatmul.mubr.f32.gmra.mrb[0].mxu0 %v1605
    %v1673 = vpop.f32.mrb[0].mxu0
    %v1674 = vadd.f32 0.0, %v1673
    %v1675 = vpop.f32.mrb[0].mxu0
    %1676 = vdwg.mxu0
    %1678 = vrot.lane.b32.xlu0 %v1674, 16
    %v1679 = vpop.permute.xlu0 %1678
    %vm1681 = vcmask 195712
    %1682 = vst.msk [vmem:[#allocation2] sm:$0xff] %vm1681, %v1679
    %v1684 = vsel %vm1189, %v999, 0
    %v1687 = vsel %vm1189, %v1087, 0
    %1689 = vmatprep.subr.mxu0 0.0
    %1690 = vmatpush1.xpose.msra.mxu0 %v1687
    %1691 = vmatprep.subr.mxu0 0.0
    %1692 = vmatpush1.xpose.msra.mxu0 0.0
    %1693 = vmatprep.subr.mxu0 0.0
    %1694 = vmatpush1.xpose.msra.mxu0 0.0
    %1695 = vmatprep.subr.mxu0 0.0
    %1696 = vmatpush1.xpose.msra.mxu0 0.0
    %1697 = vmatprep.subr.mxu0 0.0
    %1698 = vmatpush1.xpose.msra.mxu0 0.0
    %1699 = vmatprep.subr.mxu0 0.0
    %1700 = vmatpush1.xpose.msra.mxu0 0.0
    %1701 = vmatprep.subr.mxu0 0.0
    %1702 = vmatpush1.xpose.msra.mxu0 0.0
    %1703 = vmatprep.subr.mxu0 0.0
    %1704 = vmatpush1.xpose.msra.mxu0 0.0
    %1705 = vmatprep.subr.mxu0 0.0
    %1706 = vmatpush1.xpose.msra.mxu0 0.0
    %1707 = vmatprep.subr.mxu0 0.0
    %1708 = vmatpush1.xpose.msra.mxu0 0.0
    %1709 = vmatprep.subr.mxu0 0.0
    %1710 = vmatpush1.xpose.msra.mxu0 0.0
    %1711 = vmatprep.subr.mxu0 0.0
    %1712 = vmatpush1.xpose.msra.mxu0 0.0
    %1713 = vmatprep.subr.mxu0 0.0
    %1714 = vmatpush1.xpose.msra.mxu0 0.0
    %1715 = vmatprep.subr.mxu0 0.0
    %1716 = vmatpush1.xpose.msra.mxu0 0.0
    %1717 = vmatprep.subr.mxu0 0.0
    %1718 = vmatpush1.xpose.msra.mxu0 0.0
    %1719 = vmatprep.subr.mxu0 0.0
    %1720 = vmatpush1.xpose.msra.mxu0 0.0
    %1721 = vmatprep.subr.mxu0 0.0
    %1722 = vmatpush1.xpose.msra.mxu0 0.0
    %1723 = vmatprep.subr.mxu0 0.0
    %1724 = vmatpush1.xpose.msra.mxu0 0.0
    %1725 = vmatprep.subr.mxu0 0.0
    %1726 = vmatpush1.xpose.msra.mxu0 0.0
    %1727 = vmatprep.subr.mxu0 0.0
    %1728 = vmatpush1.xpose.msra.mxu0 0.0
    %1729 = vmatprep.subr.mxu0 0.0
    %1730 = vmatpush1.xpose.msra.mxu0 0.0
    %1731 = vmatprep.subr.mxu0 0.0
    %1732 = vmatpush1.xpose.msra.mxu0 0.0
    %1733 = vmatprep.subr.mxu0 0.0
    %1734 = vmatpush1.xpose.msra.mxu0 0.0
    %1735 = vmatprep.subr.mxu0 0.0
    %1736 = vmatpush1.xpose.msra.mxu0 0.0
    %1737 = vmatprep.subr.mxu0 0.0
    %1738 = vmatpush1.xpose.msra.mxu0 0.0
    %1739 = vmatprep.subr.mxu0 0.0
    %1740 = vmatpush1.xpose.msra.mxu0 0.0
    %1741 = vmatprep.subr.mxu0 0.0
    %1742 = vmatpush1.xpose.msra.mxu0 0.0
    %1743 = vmatprep.subr.mxu0 0.0
    %1744 = vmatpush1.xpose.msra.mxu0 0.0
    %1745 = vmatprep.subr.mxu0 0.0
    %1746 = vmatpush1.xpose.msra.mxu0 0.0
    %1747 = vmatprep.subr.mxu0 0.0
    %1748 = vmatpush1.xpose.msra.mxu0 0.0
    %1749 = vmatprep.subr.mxu0 0.0
    %1750 = vmatpush1.xpose.msra.mxu0 0.0
    %1751 = vmatprep.subr.mxu0 0.0
    %1752 = vmatpush1.xpose.msra.mxu0 0.0
    %1753 = vmatprep.mubr.f32.mxu0 0.0
    %1754 = vmatmul.mubr.f32.gmra.mrb[0].mxu0 %v1684
    %v1755 = vpop.f32.mrb[0].mxu0
    %v1756 = vadd.f32 %v1187, %v1755
    %v1757 = vpop.f32.mrb[0].mxu0
    %1758 = vdwg.mxu0
    %v1759 = vsel %vm1189, %v1756, -inf
    %1760 = vmax.xlane.f32.xlu0 %v1759
    %v1761 = vpop.xlane.xlu0 %1760
    %v1762 = vsub.f32 %v1756, %v1761
    %v1763 = vmul.f32 %v1762, 1.442695
    %v1764 = vpow.pop %v1763
    %v1765 = vsel %vm1189, %v1764, 0.0
    %1766 = vadd.xlane.f32.xlu0 %v1765
    %v1767 = vpop.xlane.xlu0 %1766
    %v1768 = vrcp.pop %v1767
    %v1769 = vmul.f32 %v1764, %v1768
    %v1771 = vsel %vm1189, %v1769, 0
    %1773 = vmatprep.subr.mxu0 0.0
    %1774 = vmatpush1.msra.mxu0 %v1175
    %1775 = vmatprep.subr.mxu0 0.0
    %1776 = vmatpush1.msra.mxu0 0.0
    %1777 = vmatprep.subr.mxu0 0.0
    %1778 = vmatpush1.msra.mxu0 0.0
    %1779 = vmatprep.subr.mxu0 0.0
    %1780 = vmatpush1.msra.mxu0 0.0
    %1781 = vmatprep.subr.mxu0 0.0
    %1782 = vmatpush1.msra.mxu0 0.0
    %1783 = vmatprep.subr.mxu0 0.0
    %1784 = vmatpush1.msra.mxu0 0.0
    %1785 = vmatprep.subr.mxu0 0.0
    %1786 = vmatpush1.msra.mxu0 0.0
    %1787 = vmatprep.subr.mxu0 0.0
    %1788 = vmatpush1.msra.mxu0 0.0
    %1789 = vmatprep.subr.mxu0 0.0
    %1790 = vmatpush1.msra.mxu0 0.0
    %1791 = vmatprep.subr.mxu0 0.0
    %1792 = vmatpush1.msra.mxu0 0.0
    %1793 = vmatprep.subr.mxu0 0.0
    %1794 = vmatpush1.msra.mxu0 0.0
    %1795 = vmatprep.subr.mxu0 0.0
    %1796 = vmatpush1.msra.mxu0 0.0
    %1797 = vmatprep.subr.mxu0 0.0
    %1798 = vmatpush1.msra.mxu0 0.0
    %1799 = vmatprep.subr.mxu0 0.0
    %1800 = vmatpush1.msra.mxu0 0.0
    %1801 = vmatprep.subr.mxu0 0.0
    %1802 = vmatpush1.msra.mxu0 0.0
    %1803 = vmatprep.subr.mxu0 0.0
    %1804 = vmatpush1.msra.mxu0 0.0
    %1805 = vmatprep.subr.mxu0 0.0
    %1806 = vmatpush1.msra.mxu0 0.0
    %1807 = vmatprep.subr.mxu0 0.0
    %1808 = vmatpush1.msra.mxu0 0.0
    %1809 = vmatprep.subr.mxu0 0.0
    %1810 = vmatpush1.msra.mxu0 0.0
    %1811 = vmatprep.subr.mxu0 0.0
    %1812 = vmatpush1.msra.mxu0 0.0
    %1813 = vmatprep.subr.mxu0 0.0
    %1814 = vmatpush1.msra.mxu0 0.0
    %1815 = vmatprep.subr.mxu0 0.0
    %1816 = vmatpush1.msra.mxu0 0.0
    %1817 = vmatprep.subr.mxu0 0.0
    %1818 = vmatpush1.msra.mxu0 0.0
    %1819 = vmatprep.subr.mxu0 0.0
    %1820 = vmatpush1.msra.mxu0 0.0
    %1821 = vmatprep.subr.mxu0 0.0
    %1822 = vmatpush1.msra.mxu0 0.0
    %1823 = vmatprep.subr.mxu0 0.0
    %1824 = vmatpush1.msra.mxu0 0.0
    %1825 = vmatprep.subr.mxu0 0.0
    %1826 = vmatpush1.msra.mxu0 0.0
    %1827 = vmatprep.subr.mxu0 0.0
    %1828 = vmatpush1.msra.mxu0 0.0
    %1829 = vmatprep.subr.mxu0 0.0
    %1830 = vmatpush1.msra.mxu0 0.0
    %1831 = vmatprep.subr.mxu0 0.0
    %1832 = vmatpush1.msra.mxu0 0.0
    %1833 = vmatprep.subr.mxu0 0.0
    %1834 = vmatpush1.msra.mxu0 0.0
    %1835 = vmatprep.subr.mxu0 0.0
    %1836 = vmatpush1.msra.mxu0 0.0
    %1837 = vmatprep.mubr.f32.mxu0 0.0
    %1838 = vmatmul.mubr.f32.gmra.mrb[0].mxu0 %v1771
    %v1839 = vpop.f32.mrb[0].mxu0
    %v1840 = vadd.f32 0.0, %v1839
    %v1841 = vpop.f32.mrb[0].mxu0
    %1842 = vdwg.mxu0
    %1844 = vrot.lane.b32.xlu0 %v1840, 24
    %v1845 = vpop.permute.xlu0 %1844
    %vm1847 = vcmask 261312
    %1848 = vst.msk [vmem:[#allocation2] sm:$0xff] %vm1847, %v1845
    %v1850 = vlaneseq
    %v1851 = vshrl.u32 %v1850, 7
    %v1852 = vsub.s32 0, %v1851
    %v1853 = vrot.slane %v126, %v1852
    %v1856 = vsel %vm1189, %v216, 0
    %v1859 = vsel %vm1189, %v302, 0
    %1861 = vmatprep.subr.mxu0 0.0
    %1862 = vmatpush1.xpose.msra.mxu0 %v1859
    %1863 = vmatprep.subr.mxu0 0.0
    %1864 = vmatpush1.xpose.msra.mxu0 0.0
    %1865 = vmatprep.subr.mxu0 0.0
    %1866 = vmatpush1.xpose.msra.mxu0 0.0
    %1867 = vmatprep.subr.mxu0 0.0
    %1868 = vmatpush1.xpose.msra.mxu0 0.0
    %1869 = vmatprep.subr.mxu0 0.0
    %1870 = vmatpush1.xpose.msra.mxu0 0.0
    %1871 = vmatprep.subr.mxu0 0.0
    %1872 = vmatpush1.xpose.msra.mxu0 0.0
    %1873 = vmatprep.subr.mxu0 0.0
    %1874 = vmatpush1.xpose.msra.mxu0 0.0
    %1875 = vmatprep.subr.mxu0 0.0
    %1876 = vmatpush1.xpose.msra.mxu0 0.0
    %1877 = vmatprep.subr.mxu0 0.0
    %1878 = vmatpush1.xpose.msra.mxu0 0.0
    %1879 = vmatprep.subr.mxu0 0.0
    %1880 = vmatpush1.xpose.msra.mxu0 0.0
    %1881 = vmatprep.subr.mxu0 0.0
    %1882 = vmatpush1.xpose.msra.mxu0 0.0
    %1883 = vmatprep.subr.mxu0 0.0
    %1884 = vmatpush1.xpose.msra.mxu0 0.0
    %1885 = vmatprep.subr.mxu0 0.0
    %1886 = vmatpush1.xpose.msra.mxu0 0.0
    %1887 = vmatprep.subr.mxu0 0.0
    %1888 = vmatpush1.xpose.msra.mxu0 0.0
    %1889 = vmatprep.subr.mxu0 0.0
    %1890 = vmatpush1.xpose.msra.mxu0 0.0
    %1891 = vmatprep.subr.mxu0 0.0
    %1892 = vmatpush1.xpose.msra.mxu0 0.0
    %1893 = vmatprep.subr.mxu0 0.0
    %1894 = vmatpush1.xpose.msra.mxu0 0.0
    %1895 = vmatprep.subr.mxu0 0.0
    %1896 = vmatpush1.xpose.msra.mxu0 0.0
    %1897 = vmatprep.subr.mxu0 0.0
    %1898 = vmatpush1.xpose.msra.mxu0 0.0
    %1899 = vmatprep.subr.mxu0 0.0
    %1900 = vmatpush1.xpose.msra.mxu0 0.0
    %1901 = vmatprep.subr.mxu0 0.0
    %1902 = vmatpush1.xpose.msra.mxu0 0.0
    %1903 = vmatprep.subr.mxu0 0.0
    %1904 = vmatpush1.xpose.msra.mxu0 0.0
    %1905 = vmatprep.subr.mxu0 0.0
    %1906 = vmatpush1.xpose.msra.mxu0 0.0
    %1907 = vmatprep.subr.mxu0 0.0
    %1908 = vmatpush1.xpose.msra.mxu0 0.0
    %1909 = vmatprep.subr.mxu0 0.0
    %1910 = vmatpush1.xpose.msra.mxu0 0.0
    %1911 = vmatprep.subr.mxu0 0.0
    %1912 = vmatpush1.xpose.msra.mxu0 0.0
    %1913 = vmatprep.subr.mxu0 0.0
    %1914 = vmatpush1.xpose.msra.mxu0 0.0
    %1915 = vmatprep.subr.mxu0 0.0
    %1916 = vmatpush1.xpose.msra.mxu0 0.0
    %1917 = vmatprep.subr.mxu0 0.0
    %1918 = vmatpush1.xpose.msra.mxu0 0.0
    %1919 = vmatprep.subr.mxu0 0.0
    %1920 = vmatpush1.xpose.msra.mxu0 0.0
    %1921 = vmatprep.subr.mxu0 0.0
    %1922 = vmatpush1.xpose.msra.mxu0 0.0
    %1923 = vmatprep.subr.mxu0 0.0
    %1924 = vmatpush1.xpose.msra.mxu0 0.0
    %1925 = vmatprep.mubr.f32.mxu0 0.0
    %1926 = vmatmul.mubr.f32.gmra.mrb[0].mxu0 %v1856
    %v1927 = vpop.f32.mrb[0].mxu0
    %v1928 = vadd.f32 %v1853, %v1927
    %v1929 = vpop.f32.mrb[0].mxu0
    %1930 = vdwg.mxu0
    %v1931 = vsel %vm1189, %v1928, -inf
    %1932 = vmax.xlane.f32.xlu0 %v1931
    %v1933 = vpop.xlane.xlu0 %1932
    %v1934 = vsub.f32 %v1928, %v1933
    %v1935 = vmul.f32 %v1934, 1.442695
    %v1936 = vpow.pop %v1935
    %v1937 = vsel %vm1189, %v1936, 0.0
    %1938 = vadd.xlane.f32.xlu0 %v1937
    %v1939 = vpop.xlane.xlu0 %1938
    %v1940 = vrcp.pop %v1939
    %v1941 = vmul.f32 %v1936, %v1940
    %v1943 = vsel %vm1189, %v1941, 0
    %1945 = vmatprep.subr.mxu0 0.0
    %1946 = vmatpush1.msra.mxu0 %v388
    %1947 = vmatprep.subr.mxu0 0.0
    %1948 = vmatpush1.msra.mxu0 0.0
    %1949 = vmatprep.subr.mxu0 0.0
    %1950 = vmatpush1.msra.mxu0 0.0
    %1951 = vmatprep.subr.mxu0 0.0
    %1952 = vmatpush1.msra.mxu0 0.0
    %1953 = vmatprep.subr.mxu0 0.0
    %1954 = vmatpush1.msra.mxu0 0.0
    %1955 = vmatprep.subr.mxu0 0.0
    %1956 = vmatpush1.msra.mxu0 0.0
    %1957 = vmatprep.subr.mxu0 0.0
    %1958 = vmatpush1.msra.mxu0 0.0
    %1959 = vmatprep.subr.mxu0 0.0
    %1960 = vmatpush1.msra.mxu0 0.0
    %1961 = vmatprep.subr.mxu0 0.0
    %1962 = vmatpush1.msra.mxu0 0.0
    %1963 = vmatprep.subr.mxu0 0.0
    %1964 = vmatpush1.msra.mxu0 0.0
    %1965 = vmatprep.subr.mxu0 0.0
    %1966 = vmatpush1.msra.mxu0 0.0
    %1967 = vmatprep.subr.mxu0 0.0
    %1968 = vmatpush1.msra.mxu0 0.0
    %1969 = vmatprep.subr.mxu0 0.0
    %1970 = vmatpush1.msra.mxu0 0.0
    %1971 = vmatprep.subr.mxu0 0.0
    %1972 = vmatpush1.msra.mxu0 0.0
    %1973 = vmatprep.subr.mxu0 0.0
    %1974 = vmatpush1.msra.mxu0 0.0
    %1975 = vmatprep.subr.mxu0 0.0
    %1976 = vmatpush1.msra.mxu0 0.0
    %1977 = vmatprep.subr.mxu0 0.0
    %1978 = vmatpush1.msra.mxu0 0.0
    %1979 = vmatprep.subr.mxu0 0.0
    %1980 = vmatpush1.msra.mxu0 0.0
    %1981 = vmatprep.subr.mxu0 0.0
    %1982 = vmatpush1.msra.mxu0 0.0
    %1983 = vmatprep.subr.mxu0 0.0
    %1984 = vmatpush1.msra.mxu0 0.0
    %1985 = vmatprep.subr.mxu0 0.0
    %1986 = vmatpush1.msra.mxu0 0.0
    %1987 = vmatprep.subr.mxu0 0.0
    %1988 = vmatpush1.msra.mxu0 0.0
    %1989 = vmatprep.subr.mxu0 0.0
    %1990 = vmatpush1.msra.mxu0 0.0
    %1991 = vmatprep.subr.mxu0 0.0
    %1992 = vmatpush1.msra.mxu0 0.0
    %1993 = vmatprep.subr.mxu0 0.0
    %1994 = vmatpush1.msra.mxu0 0.0
    %1995 = vmatprep.subr.mxu0 0.0
    %1996 = vmatpush1.msra.mxu0 0.0
    %1997 = vmatprep.subr.mxu0 0.0
    %1998 = vmatpush1.msra.mxu0 0.0
    %1999 = vmatprep.subr.mxu0 0.0
    %2000 = vmatpush1.msra.mxu0 0.0
    %2001 = vmatprep.subr.mxu0 0.0
    %2002 = vmatpush1.msra.mxu0 0.0
    %2003 = vmatprep.subr.mxu0 0.0
    %2004 = vmatpush1.msra.mxu0 0.0
    %2005 = vmatprep.subr.mxu0 0.0
    %2006 = vmatpush1.msra.mxu0 0.0
    %2007 = vmatprep.subr.mxu0 0.0
    %2008 = vmatpush1.msra.mxu0 0.0
    %2009 = vmatprep.mubr.f32.mxu0 0.0
    %2010 = vmatmul.mubr.f32.gmra.mrb[0].mxu0 %v1943
    %v2011 = vpop.f32.mrb[0].mxu0
    %v2012 = vadd.f32 0.0, %v2011
    %v2013 = vpop.f32.mrb[0].mxu0
    %2014 = vdwg.mxu0
    %2015 = vst.msk [vmem:[#allocation2 + $0x8] sm:$0xff] %vm1189, %v2012
    %v2017 = vsel %vm1189, %v476, 0
    %v2020 = vsel %vm1189, %v564, 0
    %2022 = vmatprep.subr.mxu0 0.0
    %2023 = vmatpush1.xpose.msra.mxu0 %v2020
    %2024 = vmatprep.subr.mxu0 0.0
    %2025 = vmatpush1.xpose.msra.mxu0 0.0
    %2026 = vmatprep.subr.mxu0 0.0
    %2027 = vmatpush1.xpose.msra.mxu0 0.0
    %2028 = vmatprep.subr.mxu0 0.0
    %2029 = vmatpush1.xpose.msra.mxu0 0.0
    %2030 = vmatprep.subr.mxu0 0.0
    %2031 = vmatpush1.xpose.msra.mxu0 0.0
    %2032 = vmatprep.subr.mxu0 0.0
    %2033 = vmatpush1.xpose.msra.mxu0 0.0
    %2034 = vmatprep.subr.mxu0 0.0
    %2035 = vmatpush1.xpose.msra.mxu0 0.0
    %2036 = vmatprep.subr.mxu0 0.0
    %2037 = vmatpush1.xpose.msra.mxu0 0.0
    %2038 = vmatprep.subr.mxu0 0.0
    %2039 = vmatpush1.xpose.msra.mxu0 0.0
    %2040 = vmatprep.subr.mxu0 0.0
    %2041 = vmatpush1.xpose.msra.mxu0 0.0
    %2042 = vmatprep.subr.mxu0 0.0
    %2043 = vmatpush1.xpose.msra.mxu0 0.0
    %2044 = vmatprep.subr.mxu0 0.0
    %2045 = vmatpush1.xpose.msra.mxu0 0.0
    %2046 = vmatprep.subr.mxu0 0.0
    %2047 = vmatpush1.xpose.msra.mxu0 0.0
    %2048 = vmatprep.subr.mxu0 0.0
    %2049 = vmatpush1.xpose.msra.mxu0 0.0
    %2050 = vmatprep.subr.mxu0 0.0
    %2051 = vmatpush1.xpose.msra.mxu0 0.0
    %2052 = vmatprep.subr.mxu0 0.0
    %2053 = vmatpush1.xpose.msra.mxu0 0.0
    %2054 = vmatprep.subr.mxu0 0.0
    %2055 = vmatpush1.xpose.msra.mxu0 0.0
    %2056 = vmatprep.subr.mxu0 0.0
    %2057 = vmatpush1.xpose.msra.mxu0 0.0
    %2058 = vmatprep.subr.mxu0 0.0
    %2059 = vmatpush1.xpose.msra.mxu0 0.0
    %2060 = vmatprep.subr.mxu0 0.0
    %2061 = vmatpush1.xpose.msra.mxu0 0.0
    %2062 = vmatprep.subr.mxu0 0.0
    %2063 = vmatpush1.xpose.msra.mxu0 0.0
    %2064 = vmatprep.subr.mxu0 0.0
    %2065 = vmatpush1.xpose.msra.mxu0 0.0
    %2066 = vmatprep.subr.mxu0 0.0
    %2067 = vmatpush1.xpose.msra.mxu0 0.0
    %2068 = vmatprep.subr.mxu0 0.0
    %2069 = vmatpush1.xpose.msra.mxu0 0.0
    %2070 = vmatprep.subr.mxu0 0.0
    %2071 = vmatpush1.xpose.msra.mxu0 0.0
    %2072 = vmatprep.subr.mxu0 0.0
    %2073 = vmatpush1.xpose.msra.mxu0 0.0
    %2074 = vmatprep.subr.mxu0 0.0
    %2075 = vmatpush1.xpose.msra.mxu0 0.0
    %2076 = vmatprep.subr.mxu0 0.0
    %2077 = vmatpush1.xpose.msra.mxu0 0.0
    %2078 = vmatprep.subr.mxu0 0.0
    %2079 = vmatpush1.xpose.msra.mxu0 0.0
    %2080 = vmatprep.subr.mxu0 0.0
    %2081 = vmatpush1.xpose.msra.mxu0 0.0
    %2082 = vmatprep.subr.mxu0 0.0
    %2083 = vmatpush1.xpose.msra.mxu0 0.0
    %2084 = vmatprep.subr.mxu0 0.0
    %2085 = vmatpush1.xpose.msra.mxu0 0.0
    %2086 = vmatprep.mubr.f32.mxu0 0.0
    %2087 = vmatmul.mubr.f32.gmra.mrb[0].mxu0 %v2017
    %v2088 = vpop.f32.mrb[0].mxu0
    %v2089 = vadd.f32 %v1853, %v2088
    %v2090 = vpop.f32.mrb[0].mxu0
    %2091 = vdwg.mxu0
    %v2092 = vsel %vm1189, %v2089, -inf
    %2093 = vmax.xlane.f32.xlu0 %v2092
    %v2094 = vpop.xlane.xlu0 %2093
    %v2095 = vsub.f32 %v2089, %v2094
    %v2096 = vmul.f32 %v2095, 1.442695
    %v2097 = vpow.pop %v2096
    %v2098 = vsel %vm1189, %v2097, 0.0
    %2099 = vadd.xlane.f32.xlu0 %v2098
    %v2100 = vpop.xlane.xlu0 %2099
    %v2101 = vrcp.pop %v2100
    %v2102 = vmul.f32 %v2097, %v2101
    %v2104 = vsel %vm1189, %v2102, 0
    %2106 = vmatprep.subr.mxu0 0.0
    %2107 = vmatpush1.msra.mxu0 %v652
    %2108 = vmatprep.subr.mxu0 0.0
    %2109 = vmatpush1.msra.mxu0 0.0
    %2110 = vmatprep.subr.mxu0 0.0
    %2111 = vmatpush1.msra.mxu0 0.0
    %2112 = vmatprep.subr.mxu0 0.0
    %2113 = vmatpush1.msra.mxu0 0.0
    %2114 = vmatprep.subr.mxu0 0.0
    %2115 = vmatpush1.msra.mxu0 0.0
    %2116 = vmatprep.subr.mxu0 0.0
    %2117 = vmatpush1.msra.mxu0 0.0
    %2118 = vmatprep.subr.mxu0 0.0
    %2119 = vmatpush1.msra.mxu0 0.0
    %2120 = vmatprep.subr.mxu0 0.0
    %2121 = vmatpush1.msra.mxu0 0.0
    %2122 = vmatprep.subr.mxu0 0.0
    %2123 = vmatpush1.msra.mxu0 0.0
    %2124 = vmatprep.subr.mxu0 0.0
    %2125 = vmatpush1.msra.mxu0 0.0
    %2126 = vmatprep.subr.mxu0 0.0
    %2127 = vmatpush1.msra.mxu0 0.0
    %2128 = vmatprep.subr.mxu0 0.0
    %2129 = vmatpush1.msra.mxu0 0.0
    %2130 = vmatprep.subr.mxu0 0.0
    %2131 = vmatpush1.msra.mxu0 0.0
    %2132 = vmatprep.subr.mxu0 0.0
    %2133 = vmatpush1.msra.mxu0 0.0
    %2134 = vmatprep.subr.mxu0 0.0
    %2135 = vmatpush1.msra.mxu0 0.0
    %2136 = vmatprep.subr.mxu0 0.0
    %2137 = vmatpush1.msra.mxu0 0.0
    %2138 = vmatprep.subr.mxu0 0.0
    %2139 = vmatpush1.msra.mxu0 0.0
    %2140 = vmatprep.subr.mxu0 0.0
    %2141 = vmatpush1.msra.mxu0 0.0
    %2142 = vmatprep.subr.mxu0 0.0
    %2143 = vmatpush1.msra.mxu0 0.0
    %2144 = vmatprep.subr.mxu0 0.0
    %2145 = vmatpush1.msra.mxu0 0.0
    %2146 = vmatprep.subr.mxu0 0.0
    %2147 = vmatpush1.msra.mxu0 0.0
    %2148 = vmatprep.subr.mxu0 0.0
    %2149 = vmatpush1.msra.mxu0 0.0
    %2150 = vmatprep.subr.mxu0 0.0
    %2151 = vmatpush1.msra.mxu0 0.0
    %2152 = vmatprep.subr.mxu0 0.0
    %2153 = vmatpush1.msra.mxu0 0.0
    %2154 = vmatprep.subr.mxu0 0.0
    %2155 = vmatpush1.msra.mxu0 0.0
    %2156 = vmatprep.subr.mxu0 0.0
    %2157 = vmatpush1.msra.mxu0 0.0
    %2158 = vmatprep.subr.mxu0 0.0
    %2159 = vmatpush1.msra.mxu0 0.0
    %2160 = vmatprep.subr.mxu0 0.0
    %2161 = vmatpush1.msra.mxu0 0.0
    %2162 = vmatprep.subr.mxu0 0.0
    %2163 = vmatpush1.msra.mxu0 0.0
    %2164 = vmatprep.subr.mxu0 0.0
    %2165 = vmatpush1.msra.mxu0 0.0
    %2166 = vmatprep.subr.mxu0 0.0
    %2167 = vmatpush1.msra.mxu0 0.0
    %2168 = vmatprep.subr.mxu0 0.0
    %2169 = vmatpush1.msra.mxu0 0.0
    %2170 = vmatprep.mubr.f32.mxu0 0.0
    %2171 = vmatmul.mubr.f32.gmra.mrb[0].mxu0 %v2104
    %v2172 = vpop.f32.mrb[0].mxu0
    %v2173 = vadd.f32 0.0, %v2172
    %v2174 = vpop.f32.mrb[0].mxu0
    %2175 = vdwg.mxu0
    %2177 = vrot.lane.b32.xlu0 %v2173, 8
    %v2178 = vpop.permute.xlu0 %2177
    %2180 = vst.msk [vmem:[#allocation2 + $0x8] sm:$0xff] %vm1515, %v2178
    %v2182 = vsel %vm1189, %v740, 0
    %v2185 = vsel %vm1189, %v828, 0
    %2187 = vmatprep.subr.mxu0 0.0
    %2188 = vmatpush1.xpose.msra.mxu0 %v2185
    %2189 = vmatprep.subr.mxu0 0.0
    %2190 = vmatpush1.xpose.msra.mxu0 0.0
    %2191 = vmatprep.subr.mxu0 0.0
    %2192 = vmatpush1.xpose.msra.mxu0 0.0
    %2193 = vmatprep.subr.mxu0 0.0
    %2194 = vmatpush1.xpose.msra.mxu0 0.0
    %2195 = vmatprep.subr.mxu0 0.0
    %2196 = vmatpush1.xpose.msra.mxu0 0.0
    %2197 = vmatprep.subr.mxu0 0.0
    %2198 = vmatpush1.xpose.msra.mxu0 0.0
    %2199 = vmatprep.subr.mxu0 0.0
    %2200 = vmatpush1.xpose.msra.mxu0 0.0
    %2201 = vmatprep.subr.mxu0 0.0
    %2202 = vmatpush1.xpose.msra.mxu0 0.0
    %2203 = vmatprep.subr.mxu0 0.0
    %2204 = vmatpush1.xpose.msra.mxu0 0.0
    %2205 = vmatprep.subr.mxu0 0.0
    %2206 = vmatpush1.xpose.msra.mxu0 0.0
    %2207 = vmatprep.subr.mxu0 0.0
    %2208 = vmatpush1.xpose.msra.mxu0 0.0
    %2209 = vmatprep.subr.mxu0 0.0
    %2210 = vmatpush1.xpose.msra.mxu0 0.0
    %2211 = vmatprep.subr.mxu0 0.0
    %2212 = vmatpush1.xpose.msra.mxu0 0.0
    %2213 = vmatprep.subr.mxu0 0.0
    %2214 = vmatpush1.xpose.msra.mxu0 0.0
    %2215 = vmatprep.subr.mxu0 0.0
    %2216 = vmatpush1.xpose.msra.mxu0 0.0
    %2217 = vmatprep.subr.mxu0 0.0
    %2218 = vmatpush1.xpose.msra.mxu0 0.0
    %2219 = vmatprep.subr.mxu0 0.0
    %2220 = vmatpush1.xpose.msra.mxu0 0.0
    %2221 = vmatprep.subr.mxu0 0.0
    %2222 = vmatpush1.xpose.msra.mxu0 0.0
    %2223 = vmatprep.subr.mxu0 0.0
    %2224 = vmatpush1.xpose.msra.mxu0 0.0
    %2225 = vmatprep.subr.mxu0 0.0
    %2226 = vmatpush1.xpose.msra.mxu0 0.0
    %2227 = vmatprep.subr.mxu0 0.0
    %2228 = vmatpush1.xpose.msra.mxu0 0.0
    %2229 = vmatprep.subr.mxu0 0.0
    %2230 = vmatpush1.xpose.msra.mxu0 0.0
    %2231 = vmatprep.subr.mxu0 0.0
    %2232 = vmatpush1.xpose.msra.mxu0 0.0
    %2233 = vmatprep.subr.mxu0 0.0
    %2234 = vmatpush1.xpose.msra.mxu0 0.0
    %2235 = vmatprep.subr.mxu0 0.0
    %2236 = vmatpush1.xpose.msra.mxu0 0.0
    %2237 = vmatprep.subr.mxu0 0.0
    %2238 = vmatpush1.xpose.msra.mxu0 0.0
    %2239 = vmatprep.subr.mxu0 0.0
    %2240 = vmatpush1.xpose.msra.mxu0 0.0
    %2241 = vmatprep.subr.mxu0 0.0
    %2242 = vmatpush1.xpose.msra.mxu0 0.0
    %2243 = vmatprep.subr.mxu0 0.0
    %2244 = vmatpush1.xpose.msra.mxu0 0.0
    %2245 = vmatprep.subr.mxu0 0.0
    %2246 = vmatpush1.xpose.msra.mxu0 0.0
    %2247 = vmatprep.subr.mxu0 0.0
    %2248 = vmatpush1.xpose.msra.mxu0 0.0
    %2249 = vmatprep.subr.mxu0 0.0
    %2250 = vmatpush1.xpose.msra.mxu0 0.0
    %2251 = vmatprep.mubr.f32.mxu0 0.0
    %2252 = vmatmul.mubr.f32.gmra.mrb[0].mxu0 %v2182
    %v2253 = vpop.f32.mrb[0].mxu0
    %v2254 = vadd.f32 %v1853, %v2253
    %v2255 = vpop.f32.mrb[0].mxu0
    %2256 = vdwg.mxu0
    %v2257 = vsel %vm1189, %v2254, -inf
    %2258 = vmax.xlane.f32.xlu0 %v2257
    %v2259 = vpop.xlane.xlu0 %2258
    %v2260 = vsub.f32 %v2254, %v2259
    %v2261 = vmul.f32 %v2260, 1.442695
    %v2262 = vpow.pop %v2261
    %v2263 = vsel %vm1189, %v2262, 0.0
    %2264 = vadd.xlane.f32.xlu0 %v2263
    %v2265 = vpop.xlane.xlu0 %2264
    %v2266 = vrcp.pop %v2265
    %v2267 = vmul.f32 %v2262, %v2266
    %v2269 = vsel %vm1189, %v2267, 0
    %2271 = vmatprep.subr.mxu0 0.0
    %2272 = vmatpush1.msra.mxu0 %v916
    %2273 = vmatprep.subr.mxu0 0.0
    %2274 = vmatpush1.msra.mxu0 0.0
    %2275 = vmatprep.subr.mxu0 0.0
    %2276 = vmatpush1.msra.mxu0 0.0
    %2277 = vmatprep.subr.mxu0 0.0
    %2278 = vmatpush1.msra.mxu0 0.0
    %2279 = vmatprep.subr.mxu0 0.0
    %2280 = vmatpush1.msra.mxu0 0.0
    %2281 = vmatprep.subr.mxu0 0.0
    %2282 = vmatpush1.msra.mxu0 0.0
    %2283 = vmatprep.subr.mxu0 0.0
    %2284 = vmatpush1.msra.mxu0 0.0
    %2285 = vmatprep.subr.mxu0 0.0
    %2286 = vmatpush1.msra.mxu0 0.0
    %2287 = vmatprep.subr.mxu0 0.0
    %2288 = vmatpush1.msra.mxu0 0.0
    %2289 = vmatprep.subr.mxu0 0.0
    %2290 = vmatpush1.msra.mxu0 0.0
    %2291 = vmatprep.subr.mxu0 0.0
    %2292 = vmatpush1.msra.mxu0 0.0
    %2293 = vmatprep.subr.mxu0 0.0
    %2294 = vmatpush1.msra.mxu0 0.0
    %2295 = vmatprep.subr.mxu0 0.0
    %2296 = vmatpush1.msra.mxu0 0.0
    %2297 = vmatprep.subr.mxu0 0.0
    %2298 = vmatpush1.msra.mxu0 0.0
    %2299 = vmatprep.subr.mxu0 0.0
    %2300 = vmatpush1.msra.mxu0 0.0
    %2301 = vmatprep.subr.mxu0 0.0
    %2302 = vmatpush1.msra.mxu0 0.0
    %2303 = vmatprep.subr.mxu0 0.0
    %2304 = vmatpush1.msra.mxu0 0.0
    %2305 = vmatprep.subr.mxu0 0.0
    %2306 = vmatpush1.msra.mxu0 0.0
    %2307 = vmatprep.subr.mxu0 0.0
    %2308 = vmatpush1.msra.mxu0 0.0
    %2309 = vmatprep.subr.mxu0 0.0
    %2310 = vmatpush1.msra.mxu0 0.0
    %2311 = vmatprep.subr.mxu0 0.0
    %2312 = vmatpush1.msra.mxu0 0.0
    %2313 = vmatprep.subr.mxu0 0.0
    %2314 = vmatpush1.msra.mxu0 0.0
    %2315 = vmatprep.subr.mxu0 0.0
    %2316 = vmatpush1.msra.mxu0 0.0
    %2317 = vmatprep.subr.mxu0 0.0
    %2318 = vmatpush1.msra.mxu0 0.0
    %2319 = vmatprep.subr.mxu0 0.0
    %2320 = vmatpush1.msra.mxu0 0.0
    %2321 = vmatprep.subr.mxu0 0.0
    %2322 = vmatpush1.msra.mxu0 0.0
    %2323 = vmatprep.subr.mxu0 0.0
    %2324 = vmatpush1.msra.mxu0 0.0
    %2325 = vmatprep.subr.mxu0 0.0
    %2326 = vmatpush1.msra.mxu0 0.0
    %2327 = vmatprep.subr.mxu0 0.0
    %2328 = vmatpush1.msra.mxu0 0.0
    %2329 = vmatprep.subr.mxu0 0.0
    %2330 = vmatpush1.msra.mxu0 0.0
    %2331 = vmatprep.subr.mxu0 0.0
    %2332 = vmatpush1.msra.mxu0 0.0
    %2333 = vmatprep.subr.mxu0 0.0
    %2334 = vmatpush1.msra.mxu0 0.0
    %2335 = vmatprep.mubr.f32.mxu0 0.0
    %2336 = vmatmul.mubr.f32.gmra.mrb[0].mxu0 %v2269
    %v2337 = vpop.f32.mrb[0].mxu0
    %v2338 = vadd.f32 0.0, %v2337
    %v2339 = vpop.f32.mrb[0].mxu0
    %2340 = vdwg.mxu0
    %2342 = vrot.lane.b32.xlu0 %v2338, 16
    %v2343 = vpop.permute.xlu0 %2342
    %2345 = vst.msk [vmem:[#allocation2 + $0x8] sm:$0xff] %vm1681, %v2343
    %v2347 = vsel %vm1189, %v1004, 0
    %v2350 = vsel %vm1189, %v1092, 0
    %2352 = vmatprep.subr.mxu0 0.0
    %2353 = vmatpush1.xpose.msra.mxu0 %v2350
    %2354 = vmatprep.subr.mxu0 0.0
    %2355 = vmatpush1.xpose.msra.mxu0 0.0
    %2356 = vmatprep.subr.mxu0 0.0
    %2357 = vmatpush1.xpose.msra.mxu0 0.0
    %2358 = vmatprep.subr.mxu0 0.0
    %2359 = vmatpush1.xpose.msra.mxu0 0.0
    %2360 = vmatprep.subr.mxu0 0.0
    %2361 = vmatpush1.xpose.msra.mxu0 0.0
    %2362 = vmatprep.subr.mxu0 0.0
    %2363 = vmatpush1.xpose.msra.mxu0 0.0
    %2364 = vmatprep.subr.mxu0 0.0
    %2365 = vmatpush1.xpose.msra.mxu0 0.0
    %2366 = vmatprep.subr.mxu0 0.0
    %2367 = vmatpush1.xpose.msra.mxu0 0.0
    %2368 = vmatprep.subr.mxu0 0.0
    %2369 = vmatpush1.xpose.msra.mxu0 0.0
    %2370 = vmatprep.subr.mxu0 0.0
    %2371 = vmatpush1.xpose.msra.mxu0 0.0
    %2372 = vmatprep.subr.mxu0 0.0
    %2373 = vmatpush1.xpose.msra.mxu0 0.0
    %2374 = vmatprep.subr.mxu0 0.0
    %2375 = vmatpush1.xpose.msra.mxu0 0.0
    %2376 = vmatprep.subr.mxu0 0.0
    %2377 = vmatpush1.xpose.msra.mxu0 0.0
    %2378 = vmatprep.subr.mxu0 0.0
    %2379 = vmatpush1.xpose.msra.mxu0 0.0
    %2380 = vmatprep.subr.mxu0 0.0
    %2381 = vmatpush1.xpose.msra.mxu0 0.0
    %2382 = vmatprep.subr.mxu0 0.0
    %2383 = vmatpush1.xpose.msra.mxu0 0.0
    %2384 = vmatprep.subr.mxu0 0.0
    %2385 = vmatpush1.xpose.msra.mxu0 0.0
    %2386 = vmatprep.subr.mxu0 0.0
    %2387 = vmatpush1.xpose.msra.mxu0 0.0
    %2388 = vmatprep.subr.mxu0 0.0
    %2389 = vmatpush1.xpose.msra.mxu0 0.0
    %2390 = vmatprep.subr.mxu0 0.0
    %2391 = vmatpush1.xpose.msra.mxu0 0.0
    %2392 = vmatprep.subr.mxu0 0.0
    %2393 = vmatpush1.xpose.msra.mxu0 0.0
    %2394 = vmatprep.subr.mxu0 0.0
    %2395 = vmatpush1.xpose.msra.mxu0 0.0
    %2396 = vmatprep.subr.mxu0 0.0
    %2397 = vmatpush1.xpose.msra.mxu0 0.0
    %2398 = vmatprep.subr.mxu0 0.0
    %2399 = vmatpush1.xpose.msra.mxu0 0.0
    %2400 = vmatprep.subr.mxu0 0.0
    %2401 = vmatpush1.xpose.msra.mxu0 0.0
    %2402 = vmatprep.subr.mxu0 0.0
    %2403 = vmatpush1.xpose.msra.mxu0 0.0
    %2404 = vmatprep.subr.mxu0 0.0
    %2405 = vmatpush1.xpose.msra.mxu0 0.0
    %2406 = vmatprep.subr.mxu0 0.0
    %2407 = vmatpush1.xpose.msra.mxu0 0.0
    %2408 = vmatprep.subr.mxu0 0.0
    %2409 = vmatpush1.xpose.msra.mxu0 0.0
    %2410 = vmatprep.subr.mxu0 0.0
    %2411 = vmatpush1.xpose.msra.mxu0 0.0
    %2412 = vmatprep.subr.mxu0 0.0
    %2413 = vmatpush1.xpose.msra.mxu0 0.0
    %2414 = vmatprep.subr.mxu0 0.0
    %2415 = vmatpush1.xpose.msra.mxu0 0.0
    %2416 = vmatprep.mubr.f32.mxu0 0.0
    %2417 = vmatmul.mubr.f32.gmra.mrb[0].mxu0 %v2347
    %v2418 = vpop.f32.mrb[0].mxu0
    %v2419 = vadd.f32 %v1853, %v2418
    %v2420 = vpop.f32.mrb[0].mxu0
    %2421 = vdwg.mxu0
    %v2422 = vsel %vm1189, %v2419, -inf
    %2423 = vmax.xlane.f32.xlu0 %v2422
    %v2424 = vpop.xlane.xlu0 %2423
    %v2425 = vsub.f32 %v2419, %v2424
    %v2426 = vmul.f32 %v2425, 1.442695
    %v2427 = vpow.pop %v2426
    %v2428 = vsel %vm1189, %v2427, 0.0
    %2429 = vadd.xlane.f32.xlu0 %v2428
    %v2430 = vpop.xlane.xlu0 %2429
    %v2431 = vrcp.pop %v2430
    %v2432 = vmul.f32 %v2427, %v2431
    %v2434 = vsel %vm1189, %v2432, 0
    %2436 = vmatprep.subr.mxu0 0.0
    %2437 = vmatpush1.msra.mxu0 %v1180
    %2438 = vmatprep.subr.mxu0 0.0
    %2439 = vmatpush1.msra.mxu0 0.0
    %2440 = vmatprep.subr.mxu0 0.0
    %2441 = vmatpush1.msra.mxu0 0.0
    %2442 = vmatprep.subr.mxu0 0.0
    %2443 = vmatpush1.msra.mxu0 0.0
    %2444 = vmatprep.subr.mxu0 0.0
    %2445 = vmatpush1.msra.mxu0 0.0
    %2446 = vmatprep.subr.mxu0 0.0
    %2447 = vmatpush1.msra.mxu0 0.0
    %2448 = vmatprep.subr.mxu0 0.0
    %2449 = vmatpush1.msra.mxu0 0.0
    %2450 = vmatprep.subr.mxu0 0.0
    %2451 = vmatpush1.msra.mxu0 0.0
    %2452 = vmatprep.subr.mxu0 0.0
    %2453 = vmatpush1.msra.mxu0 0.0
    %2454 = vmatprep.subr.mxu0 0.0
    %2455 = vmatpush1.msra.mxu0 0.0
    %2456 = vmatprep.subr.mxu0 0.0
    %2457 = vmatpush1.msra.mxu0 0.0
    %2458 = vmatprep.subr.mxu0 0.0
    %2459 = vmatpush1.msra.mxu0 0.0
    %2460 = vmatprep.subr.mxu0 0.0
    %2461 = vmatpush1.msra.mxu0 0.0
    %2462 = vmatprep.subr.mxu0 0.0
    %2463 = vmatpush1.msra.mxu0 0.0
    %2464 = vmatprep.subr.mxu0 0.0
    %2465 = vmatpush1.msra.mxu0 0.0
    %2466 = vmatprep.subr.mxu0 0.0
    %2467 = vmatpush1.msra.mxu0 0.0
    %2468 = vmatprep.subr.mxu0 0.0
    %2469 = vmatpush1.msra.mxu0 0.0
    %2470 = vmatprep.subr.mxu0 0.0
    %2471 = vmatpush1.msra.mxu0 0.0
    %2472 = vmatprep.subr.mxu0 0.0
    %2473 = vmatpush1.msra.mxu0 0.0
    %2474 = vmatprep.subr.mxu0 0.0
    %2475 = vmatpush1.msra.mxu0 0.0
    %2476 = vmatprep.subr.mxu0 0.0
    %2477 = vmatpush1.msra.mxu0 0.0
    %2478 = vmatprep.subr.mxu0 0.0
    %2479 = vmatpush1.msra.mxu0 0.0
    %2480 = vmatprep.subr.mxu0 0.0
    %2481 = vmatpush1.msra.mxu0 0.0
    %2482 = vmatprep.subr.mxu0 0.0
    %2483 = vmatpush1.msra.mxu0 0.0
    %2484 = vmatprep.subr.mxu0 0.0
    %2485 = vmatpush1.msra.mxu0 0.0
    %2486 = vmatprep.subr.mxu0 0.0
    %2487 = vmatpush1.msra.mxu0 0.0
    %2488 = vmatprep.subr.mxu0 0.0
    %2489 = vmatpush1.msra.mxu0 0.0
    %2490 = vmatprep.subr.mxu0 0.0
    %2491 = vmatpush1.msra.mxu0 0.0
    %2492 = vmatprep.subr.mxu0 0.0
    %2493 = vmatpush1.msra.mxu0 0.0
    %2494 = vmatprep.subr.mxu0 0.0
    %2495 = vmatpush1.msra.mxu0 0.0
    %2496 = vmatprep.subr.mxu0 0.0
    %2497 = vmatpush1.msra.mxu0 0.0
    %2498 = vmatprep.subr.mxu0 0.0
    %2499 = vmatpush1.msra.mxu0 0.0
    %2500 = vmatprep.mubr.f32.mxu0 0.0
    %2501 = vmatmul.mubr.f32.gmra.mrb[0].mxu0 %v2434
    %v2502 = vpop.f32.mrb[0].mxu0
    %v2503 = vadd.f32 0.0, %v2502
    %v2504 = vpop.f32.mrb[0].mxu0
    %2505 = vdwg.mxu0
    %2507 = vrot.lane.b32.xlu0 %v2503, 24
    %v2508 = vpop.permute.xlu0 %2507
    %2510 = vst.msk [vmem:[#allocation2 + $0x8] sm:$0xff] %vm1847, %v2508
    %v2511 = vld [vmem:[#allocation2] sm:$0xff]
    %v2512 = vld [vmem:[#allocation2 + $0x8] sm:$0xff]
    %v2513 = vld [vmem:[%s10] sm:$0xff]
    %v2514 = vld [vmem:[%s10 + $0x8] sm:$0xff]
    %v2515 = vld [vmem:[%s10 + $0x10] sm:$0xff]
    %v2516 = vld [vmem:[%s10 + $0x18] sm:$0xff]
    %v2517 = vld [vmem:[%s11] sm:$0x1]
    %v2519 = vlaneseq
    %v2520 = vshrl.u32 %v2519, 7
    %v2521 = vsub.s32 0, %v2520
    %v2522 = vrot.slane %v2517, %v2521
    %v2525 = vsel %vm76, %v2511, 0
    %v2528 = vsel %vm76, %v2512, 0
    %2530 = vmatprep.subr.mxu0 0.0
    %2531 = vmatpush1.msra.mxu0 %v2513
    %2532 = vmatprep.subr.mxu0 0.0
    %2533 = vmatpush1.msra.mxu0 %v2514
    %2534 = vmatprep.subr.mxu0 0.0
    %2535 = vmatpush1.msra.mxu0 %v2515
    %2536 = vmatprep.subr.mxu0 0.0
    %2537 = vmatpush1.msra.mxu0 %v2516
    %2538 = vmatprep.subr.mxu0 0.0
    %2539 = vmatpush1.msra.mxu0 0.0
    %2540 = vmatprep.subr.mxu0 0.0
    %2541 = vmatpush1.msra.mxu0 0.0
    %2542 = vmatprep.subr.mxu0 0.0
    %2543 = vmatpush1.msra.mxu0 0.0
    %2544 = vmatprep.subr.mxu0 0.0
    %2545 = vmatpush1.msra.mxu0 0.0
    %2546 = vmatprep.subr.mxu0 0.0
    %2547 = vmatpush1.msra.mxu0 0.0
    %2548 = vmatprep.subr.mxu0 0.0
    %2549 = vmatpush1.msra.mxu0 0.0
    %2550 = vmatprep.subr.mxu0 0.0
    %2551 = vmatpush1.msra.mxu0 0.0
    %2552 = vmatprep.subr.mxu0 0.0
    %2553 = vmatpush1.msra.mxu0 0.0
    %2554 = vmatprep.subr.mxu0 0.0
    %2555 = vmatpush1.msra.mxu0 0.0
    %2556 = vmatprep.subr.mxu0 0.0
    %2557 = vmatpush1.msra.mxu0 0.0
    %2558 = vmatprep.subr.mxu0 0.0
    %2559 = vmatpush1.msra.mxu0 0.0
    %2560 = vmatprep.subr.mxu0 0.0
    %2561 = vmatpush1.msra.mxu0 0.0
    %2562 = vmatprep.subr.mxu0 0.0
    %2563 = vmatpush1.msra.mxu0 0.0
    %2564 = vmatprep.subr.mxu0 0.0
    %2565 = vmatpush1.msra.mxu0 0.0
    %2566 = vmatprep.subr.mxu0 0.0
    %2567 = vmatpush1.msra.mxu0 0.0
    %2568 = vmatprep.subr.mxu0 0.0
    %2569 = vmatpush1.msra.mxu0 0.0
    %2570 = vmatprep.subr.mxu0 0.0
    %2571 = vmatpush1.msra.mxu0 0.0
    %2572 = vmatprep.subr.mxu0 0.0
    %2573 = vmatpush1.msra.mxu0 0.0
    %2574 = vmatprep.subr.mxu0 0.0
    %2575 = vmatpush1.msra.mxu0 0.0
    %2576 = vmatprep.subr.mxu0 0.0
    %2577 = vmatpush1.msra.mxu0 0.0
    %2578 = vmatprep.subr.mxu0 0.0
    %2579 = vmatpush1.msra.mxu0 0.0
    %2580 = vmatprep.subr.mxu0 0.0
    %2581 = vmatpush1.msra.mxu0 0.0
    %2582 = vmatprep.subr.mxu0 0.0
    %2583 = vmatpush1.msra.mxu0 0.0
    %2584 = vmatprep.subr.mxu0 0.0
    %2585 = vmatpush1.msra.mxu0 0.0
    %2586 = vmatprep.subr.mxu0 0.0
    %2587 = vmatpush1.msra.mxu0 0.0
    %2588 = vmatprep.subr.mxu0 0.0
    %2589 = vmatpush1.msra.mxu0 0.0
    %2590 = vmatprep.subr.mxu0 0.0
    %2591 = vmatpush1.msra.mxu0 0.0
    %2592 = vmatprep.subr.mxu0 0.0
    %2593 = vmatpush1.msra.mxu0 0.0
    %2594 = vmatprep.mubr.f32.mxu0 0.0
    %2595 = vmatmul.mubr.f32.gmra.mrb[0].mxu0 %v2525
    %v2596 = vpop.f32.mrb[0].mxu0
    %v2597 = vadd.f32 %v2522, %v2596
    %v2598 = vpop.f32.mrb[0].mxu0
    %2599 = vmatprep.mubr.f32.mxu0 0.0
    %2600 = vmatmul.mubr.f32.gmra.mrb[0].mxu0 %v2528
    %v2601 = vpop.f32.mrb[0].mxu0
    %v2602 = vadd.f32 %v2522, %v2601
    %v2603 = vpop.f32.mrb[0].mxu0
    %2604 = vdwg.mxu0
    %v2605 = vadd.f32 %v118, %v2597
    %v2606 = vadd.f32 %v119, %v2602
    %v2607 = vld [vmem:[%s12] sm:$0x1]
    %v2608 = vld [vmem:[%s13] sm:$0x1]
    %v2609 = vsel %vm76, %v2605, 0.0
    %2610 = vadd.xlane.f32.xlu0 %v2609
    %v2611 = vpop.xlane.xlu0 %2610
    %v2612 = vsel %vm76, %v2606, 0.0
    %2613 = vadd.xlane.f32.xlu0 %v2612
    %v2614 = vpop.xlane.xlu0 %2613
    %v2615 = vmul.f32 %v2611, %v83
    %v2616 = vmul.f32 %v2614, %v83
    %v2617 = vsub.f32 %v2605, %v2615
    %v2618 = vsub.f32 %v2606, %v2616
    %v2619 = vmul.f32 %v2617, %v2617
    %v2620 = vmul.f32 %v2618, %v2618
    %v2621 = vsel %vm76, %v2619, 0.0
    %2622 = vadd.xlane.f32.xlu0 %v2621
    %v2623 = vpop.xlane.xlu0 %2622
    %v2624 = vsel %vm76, %v2620, 0.0
    %2625 = vadd.xlane.f32.xlu0 %v2624
    %v2626 = vpop.xlane.xlu0 %2625
    %v2627 = vmul.f32 %v2623, %v83
    %v2628 = vmul.f32 %v2626, %v83
    %v2629 = vadd.f32 %v2627, 1e-05
    %v2630 = vadd.f32 %v2628, 1e-05
    %v2631 = vrsqrt.pop %v2629
    %v2632 = vrsqrt.pop %v2630
    %v2633 = vmul.f32 %v2617, %v2631
    %v2634 = vmul.f32 %v2618, %v2632
    %v2636 = vlaneseq
    %v2637 = vshrl.u32 %v2636, 7
    %v2638 = vsub.s32 0, %v2637
    %v2639 = vrot.slane %v2607, %v2638
    %v2641 = vmul.f32 %v2633, %v2639
    %v2642 = vmul.f32 %v2634, %v2639
    %v2644 = vlaneseq
    %v2645 = vshrl.u32 %v2644, 7
    %v2646 = vsub.s32 0, %v2645
    %v2647 = vrot.slane %v2608, %v2646
    %v2649 = vadd.f32 %v2641, %v2647
    %v2650 = vadd.f32 %v2642, %v2647
    %v2651 = vld [vmem:[%s14] sm:$0xff]
    %v2652 = vld [vmem:[%s14 + $0x8] sm:$0xff]
    %v2653 = vld [vmem:[%s14 + $0x10] sm:$0xff]
    %v2654 = vld [vmem:[%s14 + $0x18] sm:$0xff]
    %v2655 = vld [vmem:[%s15] sm:$0x1]
    %v2657 = vlaneseq
    %v2658 = vshrl.u32 %v2657, 7
    %v2659 = vsub.s32 0, %v2658
    %v2660 = vrot.slane %v2655, %v2659
    %v2663 = vsel %vm76, %v2649, 0
    %v2666 = vsel %vm76, %v2650, 0
    %2668 = vmatprep.subr.mxu0 0.0
    %2669 = vmatpush1.msra.mxu0 %v2651
    %2670 = vmatprep.subr.mxu0 0.0
    %2671 = vmatpush1.msra.mxu0 %v2652
    %2672 = vmatprep.subr.mxu0 0.0
    %2673 = vmatpush1.msra.mxu0 %v2653
    %2674 = vmatprep.subr.mxu0 0.0
    %2675 = vmatpush1.msra.mxu0 %v2654
    %2676 = vmatprep.subr.mxu0 0.0
    %2677 = vmatpush1.msra.mxu0 0.0
    %2678 = vmatprep.subr.mxu0 0.0
    %2679 = vmatpush1.msra.mxu0 0.0
    %2680 = vmatprep.subr.mxu0 0.0
    %2681 = vmatpush1.msra.mxu0 0.0
    %2682 = vmatprep.subr.mxu0 0.0
    %2683 = vmatpush1.msra.mxu0 0.0
    %2684 = vmatprep.subr.mxu0 0.0
    %2685 = vmatpush1.msra.mxu0 0.0
    %2686 = vmatprep.subr.mxu0 0.0
    %2687 = vmatpush1.msra.mxu0 0.0
    %2688 = vmatprep.subr.mxu0 0.0
    %2689 = vmatpush1.msra.mxu0 0.0
    %2690 = vmatprep.subr.mxu0 0.0
    %2691 = vmatpush1.msra.mxu0 0.0
    %2692 = vmatprep.subr.mxu0 0.0
    %2693 = vmatpush1.msra.mxu0 0.0
    %2694 = vmatprep.subr.mxu0 0.0
    %2695 = vmatpush1.msra.mxu0 0.0
    %2696 = vmatprep.subr.mxu0 0.0
    %2697 = vmatpush1.msra.mxu0 0.0
    %2698 = vmatprep.subr.mxu0 0.0
    %2699 = vmatpush1.msra.mxu0 0.0
    %2700 = vmatprep.subr.mxu0 0.0
    %2701 = vmatpush1.msra.mxu0 0.0
    %2702 = vmatprep.subr.mxu0 0.0
    %2703 = vmatpush1.msra.mxu0 0.0
    %2704 = vmatprep.subr.mxu0 0.0
    %2705 = vmatpush1.msra.mxu0 0.0
    %2706 = vmatprep.subr.mxu0 0.0
    %2707 = vmatpush1.msra.mxu0 0.0
    %2708 = vmatprep.subr.mxu0 0.0
    %2709 = vmatpush1.msra.mxu0 0.0
    %2710 = vmatprep.subr.mxu0 0.0
    %2711 = vmatpush1.msra.mxu0 0.0
    %2712 = vmatprep.subr.mxu0 0.0
    %2713 = vmatpush1.msra.mxu0 0.0
    %2714 = vmatprep.subr.mxu0 0.0
    %2715 = vmatpush1.msra.mxu0 0.0
    %2716 = vmatprep.subr.mxu0 0.0
    %2717 = vmatpush1.msra.mxu0 0.0
    %2718 = vmatprep.subr.mxu0 0.0
    %2719 = vmatpush1.msra.mxu0 0.0
    %2720 = vmatprep.subr.mxu0 0.0
    %2721 = vmatpush1.msra.mxu0 0.0
    %2722 = vmatprep.subr.mxu0 0.0
    %2723 = vmatpush1.msra.mxu0 0.0
    %2724 = vmatprep.subr.mxu0 0.0
    %2725 = vmatpush1.msra.mxu0 0.0
    %2726 = vmatprep.subr.mxu0 0.0
    %2727 = vmatpush1.msra.mxu0 0.0
    %2728 = vmatprep.subr.mxu0 0.0
    %2729 = vmatpush1.msra.mxu0 0.0
    %2730 = vmatprep.subr.mxu0 0.0
    %2731 = vmatpush1.msra.mxu0 0.0
    %2732 = vmatprep.mubr.f32.mxu0 0.0
    %2733 = vmatmul.mubr.f32.gmra.mrb[0].mxu0 %v2663
    %v2734 = vpop.f32.mrb[0].mxu0
    %v2735 = vadd.f32 %v2660, %v2734
    %v2736 = vpop.f32.mrb[0].mxu0
    %2737 = vmatprep.mubr.f32.mxu0 0.0
    %2738 = vmatmul.mubr.f32.gmra.mrb[0].mxu0 %v2666
    %v2739 = vpop.f32.mrb[0].mxu0
    %v2740 = vadd.f32 %v2660, %v2739
    %v2741 = vpop.f32.mrb[0].mxu0
    %2742 = vdwg.mxu0
    %v2743 = vmul.f32 %v2735, %v2735
    %v2744 = vmul.f32 %v2740, %v2740
    %v2745 = vmul.f32 %v2735, %v2743
    %v2746 = vmul.f32 %v2740, %v2744
    %v2747 = vmul.f32 %v2745, 0.044715
    %v2748 = vmul.f32 %v2746, 0.044715
    %v2749 = vadd.f32 %v2735, %v2747
    %v2750 = vadd.f32 %v2740, %v2748
    %v2751 = vmul.f32 %v2749, 0.7978846
    %v2752 = vmul.f32 %v2750, 0.7978846
    %v2753 = vtanh.pop %v2751
    %v2754 = vtanh.pop %v2752
    %v2755 = vadd.f32 %v2753, 1.0
    %v2756 = vadd.f32 %v2754, 1.0
    %v2757 = vmul.f32 %v2755, 0.5
    %v2758 = vmul.f32 %v2756, 0.5
    %v2759 = vmul.f32 %v2735, %v2757
    %v2760 = vmul.f32 %v2740, %v2758
    %v2761 = vld [vmem:[%s16] sm:$0xff]
    %v2762 = vld [vmem:[%s16 + $0x8] sm:$0xff]
    %v2763 = vld [vmem:[%s16 + $0x10] sm:$0xff]
    %v2764 = vld [vmem:[%s16 + $0x18] sm:$0xff]
    %v2765 = vld [vmem:[%s16 + $0x20] sm:$0xff]
    %v2766 = vld [vmem:[%s16 + $0x28] sm:$0xff]
    %v2767 = vld [vmem:[%s16 + $0x30] sm:$0xff]
    %v2768 = vld [vmem:[%s16 + $0x38] sm:$0xff]
    %v2769 = vld [vmem:[%s17] sm:$0x1]
    %v2771 = vlaneseq
    %v2772 = vshrl.u32 %v2771, 7
    %v2773 = vsub.s32 0, %v2772
    %v2774 = vrot.slane %v2769, %v2773
    %vm2776 = vcmask 523264
    %v2778 = vsel %vm2776, %v2759, 0
    %v2781 = vsel %vm2776, %v2760, 0
    %2783 = vmatprep.subr.mxu0 0.0
    %2784 = vmatpush1.msra.mxu0 %v2761
    %2785 = vmatprep.subr.mxu0 0.0
    %2786 = vmatpush1.msra.mxu0 %v2762
    %2787 = vmatprep.subr.mxu0 0.0
    %2788 = vmatpush1.msra.mxu0 %v2763
    %2789 = vmatprep.subr.mxu0 0.0
    %2790 = vmatpush1.msra.mxu0 %v2764
    %2791 = vmatprep.subr.mxu0 0.0
    %2792 = vmatpush1.msra.mxu0 %v2765
    %2793 = vmatprep.subr.mxu0 0.0
    %2794 = vmatpush1.msra.mxu0 %v2766
    %2795 = vmatprep.subr.mxu0 0.0
    %2796 = vmatpush1.msra.mxu0 %v2767
    %2797 = vmatprep.subr.mxu0 0.0
    %2798 = vmatpush1.msra.mxu0 %v2768
    %2799 = vmatprep.subr.mxu0 0.0
    %2800 = vmatpush1.msra.mxu0 0.0
    %2801 = vmatprep.subr.mxu0 0.0
    %2802 = vmatpush1.msra.mxu0 0.0
    %2803 = vmatprep.subr.mxu0 0.0
    %2804 = vmatpush1.msra.mxu0 0.0
    %2805 = vmatprep.subr.mxu0 0.0
    %2806 = vmatpush1.msra.mxu0 0.0
    %2807 = vmatprep.subr.mxu0 0.0
    %2808 = vmatpush1.msra.mxu0 0.0
    %2809 = vmatprep.subr.mxu0 0.0
    %2810 = vmatpush1.msra.mxu0 0.0
    %2811 = vmatprep.subr.mxu0 0.0
    %2812 = vmatpush1.msra.mxu0 0.0
    %2813 = vmatprep.subr.mxu0 0.0
    %2814 = vmatpush1.msra.mxu0 0.0
    %2815 = vmatprep.subr.mxu0 0.0
    %2816 = vmatpush1.msra.mxu0 0.0
    %2817 = vmatprep.subr.mxu0 0.0
    %2818 = vmatpush1.msra.mxu0 0.0
    %2819 = vmatprep.subr.mxu0 0.0
    %2820 = vmatpush1.msra.mxu0 0.0
    %2821 = vmatprep.subr.mxu0 0.0
    %2822 = vmatpush1.msra.mxu0 0.0
    %2823 = vmatprep.subr.mxu0 0.0
    %2824 = vmatpush1.msra.mxu0 0.0
    %2825 = vmatprep.subr.mxu0 0.0
    %2826 = vmatpush1.msra.mxu0 0.0
    %2827 = vmatprep.subr.mxu0 0.0
    %2828 = vmatpush1.msra.mxu0 0.0
    %2829 = vmatprep.subr.mxu0 0.0
    %2830 = vmatpush1.msra.mxu0 0.0
    %2831 = vmatprep.subr.mxu0 0.0
    %2832 = vmatpush1.msra.mxu0 0.0
    %2833 = vmatprep.subr.mxu0 0.0
    %2834 = vmatpush1.msra.mxu0 0.0
    %2835 = vmatprep.subr.mxu0 0.0
    %2836 = vmatpush1.msra.mxu0 0.0
    %2837 = vmatprep.subr.mxu0 0.0
    %2838 = vmatpush1.msra.mxu0 0.0
    %2839 = vmatprep.subr.mxu0 0.0
    %2840 = vmatpush1.msra.mxu0 0.0
    %2841 = vmatprep.subr.mxu0 0.0
    %2842 = vmatpush1.msra.mxu0 0.0
    %2843 = vmatprep.subr.mxu0 0.0
    %2844 = vmatpush1.msra.mxu0 0.0
    %2845 = vmatprep.subr.mxu0 0.0
    %2846 = vmatpush1.msra.mxu0 0.0
    %2847 = vmatprep.mubr.f32.mxu0 0.0
    %2848 = vmatmul.mubr.f32.gmra.mrb[0].mxu0 %v2778
    %v2849 = vpop.f32.mrb[0].mxu0
    %v2850 = vadd.f32 %v2774, %v2849
    %v2851 = vpop.f32.mrb[0].mxu0
    %2852 = vmatprep.mubr.f32.mxu0 0.0
    %2853 = vmatmul.mubr.f32.gmra.mrb[0].mxu0 %v2781
    %v2854 = vpop.f32.mrb[0].mxu0
    %v2855 = vadd.f32 %v2774, %v2854
    %v2856 = vpop.f32.mrb[0].mxu0
    %2857 = vdwg.mxu0
    %v2858 = vadd.f32 %v2649, %v2850
    %v2859 = vadd.f32 %v2650, %v2855
    %v2860 = vld [vmem:[%s18] sm:$0x1]
    %v2861 = vld [vmem:[%s19] sm:$0x1]
    %v2862 = vsel %vm76, %v2858, 0.0
    %2863 = vadd.xlane.f32.xlu0 %v2862
    %v2864 = vpop.xlane.xlu0 %2863
    %v2865 = vsel %vm76, %v2859, 0.0
    %2866 = vadd.xlane.f32.xlu0 %v2865
    %v2867 = vpop.xlane.xlu0 %2866
    %v2868 = vmul.f32 %v2864, %v83
    %v2869 = vmul.f32 %v2867, %v83
    %v2870 = vsub.f32 %v2858, %v2868
    %v2871 = vsub.f32 %v2859, %v2869
    %v2872 = vmul.f32 %v2870, %v2870
    %v2873 = vmul.f32 %v2871, %v2871
    %v2874 = vsel %vm76, %v2872, 0.0
    %2875 = vadd.xlane.f32.xlu0 %v2874
    %v2876 = vpop.xlane.xlu0 %2875
    %v2877 = vsel %vm76, %v2873, 0.0
    %2878 = vadd.xlane.f32.xlu0 %v2877
    %v2879 = vpop.xlane.xlu0 %2878
    %v2880 = vmul.f32 %v2876, %v83
    %v2881 = vmul.f32 %v2879, %v83
    %v2882 = vadd.f32 %v2880, 1e-05
    %v2883 = vadd.f32 %v2881, 1e-05
    %v2884 = vrsqrt.pop %v2882
    %v2885 = vrsqrt.pop %v2883
    %v2886 = vmul.f32 %v2870, %v2884
    %v2887 = vmul.f32 %v2871, %v2885
    %v2889 = vlaneseq
    %v2890 = vshrl.u32 %v2889, 7
    %v2891 = vsub.s32 0, %v2890
    %v2892 = vrot.slane %v2860, %v2891
    %v2894 = vmul.f32 %v2886, %v2892
    %v2895 = vmul.f32 %v2887, %v2892
    %v2897 = vlaneseq
    %v2898 = vshrl.u32 %v2897, 7
    %v2899 = vsub.s32 0, %v2898
    %v2900 = vrot.slane %v2861, %v2899
    %v2902 = vadd.f32 %v2894, %v2900
    %v2903 = vadd.f32 %v2895, %v2900
    %s2904 = scalar_lea.vmem %s4, 128
    %v2905 = vld [vmem:[%s2904] sm:$0xff]
    %v2906 = vld [vmem:[%s2904 + $0x8] sm:$0xff]
    %v2907 = vld [vmem:[%s2904 + $0x10] sm:$0xff]
    %v2908 = vld [vmem:[%s2904 + $0x18] sm:$0xff]
    %s2909 = scalar_lea.vmem %s5, 4
    %v2910 = vld [vmem:[%s2909] sm:$0x1]
    %v2912 = vlaneseq
    %v2913 = vshrl.u32 %v2912, 7
    %v2914 = vsub.s32 0, %v2913
    %v2915 = vrot.slane %v2910, %v2914
    %v2918 = vsel %vm76, %v2902, 0
    %v2921 = vsel %vm76, %v2903, 0
    %2923 = vmatprep.subr.mxu0 0.0
    %2924 = vmatpush1.msra.mxu0 %v2905
    %2925 = vmatprep.subr.mxu0 0.0
    %2926 = vmatpush1.msra.mxu0 %v2906
    %2927 = vmatprep.subr.mxu0 0.0
    %2928 = vmatpush1.msra.mxu0 %v2907
    %2929 = vmatprep.subr.mxu0 0.0
    %2930 = vmatpush1.msra.mxu0 %v2908
    %2931 = vmatprep.subr.mxu0 0.0
    %2932 = vmatpush1.msra.mxu0 0.0
    %2933 = vmatprep.subr.mxu0 0.0
    %2934 = vmatpush1.msra.mxu0 0.0
    %2935 = vmatprep.subr.mxu0 0.0
    %2936 = vmatpush1.msra.mxu0 0.0
    %2937 = vmatprep.subr.mxu0 0.0
    %2938 = vmatpush1.msra.mxu0 0.0
    %2939 = vmatprep.subr.mxu0 0.0
    %2940 = vmatpush1.msra.mxu0 0.0
    %2941 = vmatprep.subr.mxu0 0.0
    %2942 = vmatpush1.msra.mxu0 0.0
    %2943 = vmatprep.subr.mxu0 0.0
    %2944 = vmatpush1.msra.mxu0 0.0
    %2945 = vmatprep.subr.mxu0 0.0
    %2946 = vmatpush1.msra.mxu0 0.0
    %2947 = vmatprep.subr.mxu0 0.0
    %2948 = vmatpush1.msra.mxu0 0.0
    %2949 = vmatprep.subr.mxu0 0.0
    %2950 = vmatpush1.msra.mxu0 0.0
    %2951 = vmatprep.subr.mxu0 0.0
    %2952 = vmatpush1.msra.mxu0 0.0
    %2953 = vmatprep.subr.mxu0 0.0
    %2954 = vmatpush1.msra.mxu0 0.0
    %2955 = vmatprep.subr.mxu0 0.0
    %2956 = vmatpush1.msra.mxu0 0.0
    %2957 = vmatprep.subr.mxu0 0.0
    %2958 = vmatpush1.msra.mxu0 0.0
    %2959 = vmatprep.subr.mxu0 0.0
    %2960 = vmatpush1.msra.mxu0 0.0
    %2961 = vmatprep.subr.mxu0 0.0
    %2962 = vmatpush1.msra.mxu0 0.0
    %2963 = vmatprep.subr.mxu0 0.0
    %2964 = vmatpush1.msra.mxu0 0.0
    %2965 = vmatprep.subr.mxu0 0.0
    %2966 = vmatpush1.msra.mxu0 0.0
    %2967 = vmatprep.subr.mxu0 0.0
    %2968 = vmatpush1.msra.mxu0 0.0
    %2969 = vmatprep.subr.mxu0 0.0
    %2970 = vmatpush1.msra.mxu0 0.0
    %2971 = vmatprep.subr.mxu0 0.0
    %2972 = vmatpush1.msra.mxu0 0.0
    %2973 = vmatprep.subr.mxu0 0.0
    %2974 = vmatpush1.msra.mxu0 0.0
    %2975 = vmatprep.subr.mxu0 0.0
    %2976 = vmatpush1.msra.mxu0 0.0
    %2977 = vmatprep.subr.mxu0 0.0
    %2978 = vmatpush1.msra.mxu0 0.0
    %2979 = vmatprep.subr.mxu0 0.0
    %2980 = vmatpush1.msra.mxu0 0.0
    %2981 = vmatprep.subr.mxu0 0.0
    %2982 = vmatpush1.msra.mxu0 0.0
    %2983 = vmatprep.subr.mxu0 0.0
    %2984 = vmatpush1.msra.mxu0 0.0
    %2985 = vmatprep.subr.mxu0 0.0
    %2986 = vmatpush1.msra.mxu0 0.0
    %2987 = vmatprep.mubr.f32.mxu0 0.0
    %2988 = vmatmul.mubr.f32.gmra.mrb[0].mxu0 %v2918
    %v2989 = vpop.f32.mrb[0].mxu0
    %v2990 = vadd.f32 %v2915, %v2989
    %v2991 = vpop.f32.mrb[0].mxu0
    %2992 = vmatprep.mubr.f32.mxu0 0.0
    %2993 = vmatmul.mubr.f32.gmra.mrb[0].mxu0 %v2921
    %v2994 = vpop.f32.mrb[0].mxu0
    %v2995 = vadd.f32 %v2915, %v2994
    %v2996 = vpop.f32.mrb[0].mxu0
    %2997 = vdwg.mxu0
    %s2998 = scalar_lea.vmem %s6, 128
    %v2999 = vld [vmem:[%s2998] sm:$0xff]
    %v3000 = vld [vmem:[%s2998 + $0x8] sm:$0xff]
    %v3001 = vld [vmem:[%s2998 + $0x10] sm:$0xff]
    %v3002 = vld [vmem:[%s2998 + $0x18] sm:$0xff]
    %s3003 = scalar_lea.vmem %s7, 4
    %v3004 = vld [vmem:[%s3003] sm:$0x1]
    %v3006 = vlaneseq
    %v3007 = vshrl.u32 %v3006, 7
    %v3008 = vsub.s32 0, %v3007
    %v3009 = vrot.slane %v3004, %v3008
    %3011 = vmatprep.subr.mxu0 0.0
    %3012 = vmatpush1.msra.mxu0 %v2999
    %3013 = vmatprep.subr.mxu0 0.0
    %3014 = vmatpush1.msra.mxu0 %v3000
    %3015 = vmatprep.subr.mxu0 0.0
    %3016 = vmatpush1.msra.mxu0 %v3001
    %3017 = vmatprep.subr.mxu0 0.0
    %3018 = vmatpush1.msra.mxu0 %v3002
    %3019 = vmatprep.subr.mxu0 0.0
    %3020 = vmatpush1.msra.mxu0 0.0
    %3021 = vmatprep.subr.mxu0 0.0
    %3022 = vmatpush1.msra.mxu0 0.0
    %3023 = vmatprep.subr.mxu0 0.0
    %3024 = vmatpush1.msra.mxu0 0.0
    %3025 = vmatprep.subr.mxu0 0.0
    %3026 = vmatpush1.msra.mxu0 0.0
    %3027 = vmatprep.subr.mxu0 0.0
    %3028 = vmatpush1.msra.mxu0 0.0
    %3029 = vmatprep.subr.mxu0 0.0
    %3030 = vmatpush1.msra.mxu0 0.0
    %3031 = vmatprep.subr.mxu0 0.0
    %3032 = vmatpush1.msra.mxu0 0.0
    %3033 = vmatprep.subr.mxu0 0.0
    %3034 = vmatpush1.msra.mxu0 0.0
    %3035 = vmatprep.subr.mxu0 0.0
    %3036 = vmatpush1.msra.mxu0 0.0
    %3037 = vmatprep.subr.mxu0 0.0
    %3038 = vmatpush1.msra.mxu0 0.0
    %3039 = vmatprep.subr.mxu0 0.0
    %3040 = vmatpush1.msra.mxu0 0.0
    %3041 = vmatprep.subr.mxu0 0.0
    %3042 = vmatpush1.msra.mxu0 0.0
    %3043 = vmatprep.subr.mxu0 0.0
    %3044 = vmatpush1.msra.mxu0 0.0
    %3045 = vmatprep.subr.mxu0 0.0
    %3046 = vmatpush1.msra.mxu0 0.0
    %3047 = vmatprep.subr.mxu0 0.0
    %3048 = vmatpush1.msra.mxu0 0.0
    %3049 = vmatprep.subr.mxu0 0.0
    %3050 = vmatpush1.msra.mxu0 0.0
    %3051 = vmatprep.subr.mxu0 0.0
    %3052 = vmatpush1.msra.mxu0 0.0
    %3053 = vmatprep.subr.mxu0 0.0
    %3054 = vmatpush1.msra.mxu0 0.0
    %3055 = vmatprep.subr.mxu0 0.0
    %3056 = vmatpush1.msra.mxu0 0.0
    %3057 = vmatprep.subr.mxu0 0.0
    %3058 = vmatpush1.msra.mxu0 0.0
    %3059 = vmatprep.subr.mxu0 0.0
    %3060 = vmatpush1.msra.mxu0 0.0
    %3061 = vmatprep.subr.mxu0 0.0
    %3062 = vmatpush1.msra.mxu0 0.0
    %3063 = vmatprep.subr.mxu0 0.0
    %3064 = vmatpush1.msra.mxu0 0.0
    %3065 = vmatprep.subr.mxu0 0.0
    %3066 = vmatpush1.msra.mxu0 0.0
    %3067 = vmatprep.subr.mxu0 0.0
    %3068 = vmatpush1.msra.mxu0 0.0
    %3069 = vmatprep.subr.mxu0 0.0
    %3070 = vmatpush1.msra.mxu0 0.0
    %3071 = vmatprep.subr.mxu0 0.0
    %3072 = vmatpush1.msra.mxu0 0.0
    %3073 = vmatprep.subr.mxu0 0.0
    %3074 = vmatpush1.msra.mxu0 0.0
    %3075 = vmatprep.mubr.f32.mxu0 0.0
    %3076 = vmatmul.mubr.f32.gmra.mrb[0].mxu0 %v2918
    %v3077 = vpop.f32.mrb[0].mxu0
    %v3078 = vadd.f32 %v3009, %v3077
    %v3079 = vpop.f32.mrb[0].mxu0
    %3080 = vmatprep.mubr.f32.mxu0 0.0
    %3081 = vmatmul.mubr.f32.gmra.mrb[0].mxu0 %v2921
    %v3082 = vpop.f32.mrb[0].mxu0
    %v3083 = vadd.f32 %v3009, %v3082
    %v3084 = vpop.f32.mrb[0].mxu0
    %3085 = vdwg.mxu0
    %s3086 = scalar_lea.vmem %s8, 128
    %v3087 = vld [vmem:[%s3086] sm:$0xff]
    %v3088 = vld [vmem:[%s3086 + $0x8] sm:$0xff]
    %v3089 = vld [vmem:[%s3086 + $0x10] sm:$0xff]
    %v3090 = vld [vmem:[%s3086 + $0x18] sm:$0xff]
    %s3091 = scalar_lea.vmem %s9, 4
    %v3092 = vld [vmem:[%s3091] sm:$0x1]
    %v3094 = vlaneseq
    %v3095 = vshrl.u32 %v3094, 7
    %v3096 = vsub.s32 0, %v3095
    %v3097 = vrot.slane %v3092, %v3096
    %3099 = vmatprep.subr.mxu0 0.0
    %3100 = vmatpush1.msra.mxu0 %v3087
    %3101 = vmatprep.subr.mxu0 0.0
    %3102 = vmatpush1.msra.mxu0 %v3088
    %3103 = vmatprep.subr.mxu0 0.0
    %3104 = vmatpush1.msra.mxu0 %v3089
    %3105 = vmatprep.subr.mxu0 0.0
    %3106 = vmatpush1.msra.mxu0 %v3090
    %3107 = vmatprep.subr.mxu0 0.0
    %3108 = vmatpush1.msra.mxu0 0.0
    %3109 = vmatprep.subr.mxu0 0.0
    %3110 = vmatpush1.msra.mxu0 0.0
    %3111 = vmatprep.subr.mxu0 0.0
    %3112 = vmatpush1.msra.mxu0 0.0
    %3113 = vmatprep.subr.mxu0 0.0
    %3114 = vmatpush1.msra.mxu0 0.0
    %3115 = vmatprep.subr.mxu0 0.0
    %3116 = vmatpush1.msra.mxu0 0.0
    %3117 = vmatprep.subr.mxu0 0.0
    %3118 = vmatpush1.msra.mxu0 0.0
    %3119 = vmatprep.subr.mxu0 0.0
    %3120 = vmatpush1.msra.mxu0 0.0
    %3121 = vmatprep.subr.mxu0 0.0
    %3122 = vmatpush1.msra.mxu0 0.0
    %3123 = vmatprep.subr.mxu0 0.0
    %3124 = vmatpush1.msra.mxu0 0.0
    %3125 = vmatprep.subr.mxu0 0.0
    %3126 = vmatpush1.msra.mxu0 0.0
    %3127 = vmatprep.subr.mxu0 0.0
    %3128 = vmatpush1.msra.mxu0 0.0
    %3129 = vmatprep.subr.mxu0 0.0
    %3130 = vmatpush1.msra.mxu0 0.0
    %3131 = vmatprep.subr.mxu0 0.0
    %3132 = vmatpush1.msra.mxu0 0.0
    %3133 = vmatprep.subr.mxu0 0.0
    %3134 = vmatpush1.msra.mxu0 0.0
    %3135 = vmatprep.subr.mxu0 0.0
    %3136 = vmatpush1.msra.mxu0 0.0
    %3137 = vmatprep.subr.mxu0 0.0
    %3138 = vmatpush1.msra.mxu0 0.0
    %3139 = vmatprep.subr.mxu0 0.0
    %3140 = vmatpush1.msra.mxu0 0.0
    %3141 = vmatprep.subr.mxu0 0.0
    %3142 = vmatpush1.msra.mxu0 0.0
    %3143 = vmatprep.subr.mxu0 0.0
    %3144 = vmatpush1.msra.mxu0 0.0
    %3145 = vmatprep.subr.mxu0 0.0
    %3146 = vmatpush1.msra.mxu0 0.0
    %3147 = vmatprep.subr.mxu0 0.0
    %3148 = vmatpush1.msra.mxu0 0.0
    %3149 = vmatprep.subr.mxu0 0.0
    %3150 = vmatpush1.msra.mxu0 0.0
    %3151 = vmatprep.subr.mxu0 0.0
    %3152 = vmatpush1.msra.mxu0 0.0
    %3153 = vmatprep.subr.mxu0 0.0
    %3154 = vmatpush1.msra.mxu0 0.0
    %3155 = vmatprep.subr.mxu0 0.0
    %3156 = vmatpush1.msra.mxu0 0.0
    %3157 = vmatprep.subr.mxu0 0.0
    %3158 = vmatpush1.msra.mxu0 0.0
    %3159 = vmatprep.subr.mxu0 0.0
    %3160 = vmatpush1.msra.mxu0 0.0
    %3161 = vmatprep.subr.mxu0 0.0
    %3162 = vmatpush1.msra.mxu0 0.0
    %3163 = vmatprep.mubr.f32.mxu0 0.0
    %3164 = vmatmul.mubr.f32.gmra.mrb[0].mxu0 %v2918
    %v3165 = vpop.f32.mrb[0].mxu0
    %v3166 = vadd.f32 %v3097, %v3165
    %v3167 = vpop.f32.mrb[0].mxu0
    %3168 = vmatprep.mubr.f32.mxu0 0.0
    %3169 = vmatmul.mubr.f32.gmra.mrb[0].mxu0 %v2921
    %v3170 = vpop.f32.mrb[0].mxu0
    %v3171 = vadd.f32 %v3097, %v3170
    %v3172 = vpop.f32.mrb[0].mxu0
    %3173 = vdwg.mxu0
    %s3174 = scalar_lea.vmem %s4, 160
    %v3175 = vld [vmem:[%s3174] sm:$0xff]
    %v3176 = vld [vmem:[%s3174 + $0x8] sm:$0xff]
    %v3177 = vld [vmem:[%s3174 + $0x10] sm:$0xff]
    %v3178 = vld [vmem:[%s3174 + $0x18] sm:$0xff]
    %s3179 = scalar_lea.vmem %s5, 5
    %v3180 = vld [vmem:[%s3179] sm:$0x1]
    %v3182 = vlaneseq
    %v3183 = vshrl.u32 %v3182, 7
    %v3184 = vsub.s32 0, %v3183
    %v3185 = vrot.slane %v3180, %v3184
    %3187 = vmatprep.subr.mxu0 0.0
    %3188 = vmatpush1.msra.mxu0 %v3175
    %3189 = vmatprep.subr.mxu0 0.0
    %3190 = vmatpush1.msra.mxu0 %v3176
    %3191 = vmatprep.subr.mxu0 0.0
    %3192 = vmatpush1.msra.mxu0 %v3177
    %3193 = vmatprep.subr.mxu0 0.0
    %3194 = vmatpush1.msra.mxu0 %v3178
    %3195 = vmatprep.subr.mxu0 0.0
    %3196 = vmatpush1.msra.mxu0 0.0
    %3197 = vmatprep.subr.mxu0 0.0
    %3198 = vmatpush1.msra.mxu0 0.0
    %3199 = vmatprep.subr.mxu0 0.0
    %3200 = vmatpush1.msra.mxu0 0.0
    %3201 = vmatprep.subr.mxu0 0.0
    %3202 = vmatpush1.msra.mxu0 0.0
    %3203 = vmatprep.subr.mxu0 0.0
    %3204 = vmatpush1.msra.mxu0 0.0
    %3205 = vmatprep.subr.mxu0 0.0
    %3206 = vmatpush1.msra.mxu0 0.0
    %3207 = vmatprep.subr.mxu0 0.0
    %3208 = vmatpush1.msra.mxu0 0.0
    %3209 = vmatprep.subr.mxu0 0.0
    %3210 = vmatpush1.msra.mxu0 0.0
    %3211 = vmatprep.subr.mxu0 0.0
    %3212 = vmatpush1.msra.mxu0 0.0
    %3213 = vmatprep.subr.mxu0 0.0
    %3214 = vmatpush1.msra.mxu0 0.0
    %3215 = vmatprep.subr.mxu0 0.0
    %3216 = vmatpush1.msra.mxu0 0.0
    %3217 = vmatprep.subr.mxu0 0.0
    %3218 = vmatpush1.msra.mxu0 0.0
    %3219 = vmatprep.subr.mxu0 0.0
    %3220 = vmatpush1.msra.mxu0 0.0
    %3221 = vmatprep.subr.mxu0 0.0
    %3222 = vmatpush1.msra.mxu0 0.0
    %3223 = vmatprep.subr.mxu0 0.0
    %3224 = vmatpush1.msra.mxu0 0.0
    %3225 = vmatprep.subr.mxu0 0.0
    %3226 = vmatpush1.msra.mxu0 0.0
    %3227 = vmatprep.subr.mxu0 0.0
    %3228 = vmatpush1.msra.mxu0 0.0
    %3229 = vmatprep.subr.mxu0 0.0
    %3230 = vmatpush1.msra.mxu0 0.0
    %3231 = vmatprep.subr.mxu0 0.0
    %3232 = vmatpush1.msra.mxu0 0.0
    %3233 = vmatprep.subr.mxu0 0.0
    %3234 = vmatpush1.msra.mxu0 0.0
    %3235 = vmatprep.subr.mxu0 0.0
    %3236 = vmatpush1.msra.mxu0 0.0
    %3237 = vmatprep.subr.mxu0 0.0
    %3238 = vmatpush1.msra.mxu0 0.0
    %3239 = vmatprep.subr.mxu0 0.0
    %3240 = vmatpush1.msra.mxu0 0.0
    %3241 = vmatprep.subr.mxu0 0.0
    %3242 = vmatpush1.msra.mxu0 0.0
    %3243 = vmatprep.subr.mxu0 0.0
    %3244 = vmatpush1.msra.mxu0 0.0
    %3245 = vmatprep.subr.mxu0 0.0
    %3246 = vmatpush1.msra.mxu0 0.0
    %3247 = vmatprep.subr.mxu0 0.0
    %3248 = vmatpush1.msra.mxu0 0.0
    %3249 = vmatprep.subr.mxu0 0.0
    %3250 = vmatpush1.msra.mxu0 0.0
    %3251 = vmatprep.mubr.f32.mxu0 0.0
    %3252 = vmatmul.mubr.f32.gmra.mrb[0].mxu0 %v2918
    %v3253 = vpop.f32.mrb[0].mxu0
    %v3254 = vadd.f32 %v3185, %v3253
    %v3255 = vpop.f32.mrb[0].mxu0
    %3256 = vmatprep.mubr.f32.mxu0 0.0
    %3257 = vmatmul.mubr.f32.gmra.mrb[0].mxu0 %v2921
    %v3258 = vpop.f32.mrb[0].mxu0
    %v3259 = vadd.f32 %v3185, %v3258
    %v3260 = vpop.f32.mrb[0].mxu0
    %3261 = vdwg.mxu0
    %s3262 = scalar_lea.vmem %s6, 160
    %v3263 = vld [vmem:[%s3262] sm:$0xff]
    %v3264 = vld [vmem:[%s3262 + $0x8] sm:$0xff]
    %v3265 = vld [vmem:[%s3262 + $0x10] sm:$0xff]
    %v3266 = vld [vmem:[%s3262 + $0x18] sm:$0xff]
    %s3267 = scalar_lea.vmem %s7, 5
    %v3268 = vld [vmem:[%s3267] sm:$0x1]
    %v3270 = vlaneseq
    %v3271 = vshrl.u32 %v3270, 7
    %v3272 = vsub.s32 0, %v3271
    %v3273 = vrot.slane %v3268, %v3272
    %3275 = vmatprep.subr.mxu0 0.0
    %3276 = vmatpush1.msra.mxu0 %v3263
    %3277 = vmatprep.subr.mxu0 0.0
    %3278 = vmatpush1.msra.mxu0 %v3264
    %3279 = vmatprep.subr.mxu0 0.0
    %3280 = vmatpush1.msra.mxu0 %v3265
    %3281 = vmatprep.subr.mxu0 0.0
    %3282 = vmatpush1.msra.mxu0 %v3266
    %3283 = vmatprep.subr.mxu0 0.0
    %3284 = vmatpush1.msra.mxu0 0.0
    %3285 = vmatprep.subr.mxu0 0.0
    %3286 = vmatpush1.msra.mxu0 0.0
    %3287 = vmatprep.subr.mxu0 0.0
    %3288 = vmatpush1.msra.mxu0 0.0
    %3289 = vmatprep.subr.mxu0 0.0
    %3290 = vmatpush1.msra.mxu0 0.0
    %3291 = vmatprep.subr.mxu0 0.0
    %3292 = vmatpush1.msra.mxu0 0.0
    %3293 = vmatprep.subr.mxu0 0.0
    %3294 = vmatpush1.msra.mxu0 0.0
    %3295 = vmatprep.subr.mxu0 0.0
    %3296 = vmatpush1.msra.mxu0 0.0
    %3297 = vmatprep.subr.mxu0 0.0
    %3298 = vmatpush1.msra.mxu0 0.0
    %3299 = vmatprep.subr.mxu0 0.0
    %3300 = vmatpush1.msra.mxu0 0.0
    %3301 = vmatprep.subr.mxu0 0.0
    %3302 = vmatpush1.msra.mxu0 0.0
    %3303 = vmatprep.subr.mxu0 0.0
    %3304 = vmatpush1.msra.mxu0 0.0
    %3305 = vmatprep.subr.mxu0 0.0
    %3306 = vmatpush1.msra.mxu0 0.0
    %3307 = vmatprep.subr.mxu0 0.0
    %3308 = vmatpush1.msra.mxu0 0.0
    %3309 = vmatprep.subr.mxu0 0.0
    %3310 = vmatpush1.msra.mxu0 0.0
    %3311 = vmatprep.subr.mxu0 0.0
    %3312 = vmatpush1.msra.mxu0 0.0
    %3313 = vmatprep.subr.mxu0 0.0
    %3314 = vmatpush1.msra.mxu0 0.0
    %3315 = vmatprep.subr.mxu0 0.0
    %3316 = vmatpush1.msra.mxu0 0.0
    %3317 = vmatprep.subr.mxu0 0.0
    %3318 = vmatpush1.msra.mxu0 0.0
    %3319 = vmatprep.subr.mxu0 0.0
    %3320 = vmatpush1.msra.mxu0 0.0
    %3321 = vmatprep.subr.mxu0 0.0
    %3322 = vmatpush1.msra.mxu0 0.0
    %3323 = vmatprep.subr.mxu0 0.0
    %3324 = vmatpush1.msra.mxu0 0.0
    %3325 = vmatprep.subr.mxu0 0.0
    %3326 = vmatpush1.msra.mxu0 0.0
    %3327 = vmatprep.subr.mxu0 0.0
    %3328 = vmatpush1.msra.mxu0 0.0
    %3329 = vmatprep.subr.mxu0 0.0
    %3330 = vmatpush1.msra.mxu0 0.0
    %3331 = vmatprep.subr.mxu0 0.0
    %3332 = vmatpush1.msra.mxu0 0.0
    %3333 = vmatprep.subr.mxu0 0.0
    %3334 = vmatpush1.msra.mxu0 0.0
    %3335 = vmatprep.subr.mxu0 0.0
    %3336 = vmatpush1.msra.mxu0 0.0
    %3337 = vmatprep.subr.mxu0 0.0
    %3338 = vmatpush1.msra.mxu0 0.0
    %3339 = vmatprep.mubr.f32.mxu0 0.0
    %3340 = vmatmul.mubr.f32.gmra.mrb[0].mxu0 %v2918
    %v3341 = vpop.f32.mrb[0].mxu0
    %v3342 = vadd.f32 %v3273, %v3341
    %v3343 = vpop.f32.mrb[0].mxu0
    %3344 = vmatprep.mubr.f32.mxu0 0.0
    %3345 = vmatmul.mubr.f32.gmra.mrb[0].mxu0 %v2921
    %v3346 = vpop.f32.mrb[0].mxu0
    %v3347 = vadd.f32 %v3273, %v3346
    %v3348 = vpop.f32.mrb[0].mxu0
    %3349 = vdwg.mxu0
    %s3350 = scalar_lea.vmem %s8, 160
    %v3351 = vld [vmem:[%s3350] sm:$0xff]
    %v3352 = vld [vmem:[%s3350 + $0x8] sm:$0xff]
    %v3353 = vld [vmem:[%s3350 + $0x10] sm:$0xff]
    %v3354 = vld [vmem:[%s3350 + $0x18] sm:$0xff]
    %s3355 = scalar_lea.vmem %s9, 5
    %v3356 = vld [vmem:[%s3355] sm:$0x1]
    %v3358 = vlaneseq
    %v3359 = vshrl.u32 %v3358, 7
    %v3360 = vsub.s32 0, %v3359
    %v3361 = vrot.slane %v3356, %v3360
    %3363 = vmatprep.subr.mxu0 0.0
    %3364 = vmatpush1.msra.mxu0 %v3351
    %3365 = vmatprep.subr.mxu0 0.0
    %3366 = vmatpush1.msra.mxu0 %v3352
    %3367 = vmatprep.subr.mxu0 0.0
    %3368 = vmatpush1.msra.mxu0 %v3353
    %3369 = vmatprep.subr.mxu0 0.0
    %3370 = vmatpush1.msra.mxu0 %v3354
    %3371 = vmatprep.subr.mxu0 0.0
    %3372 = vmatpush1.msra.mxu0 0.0
    %3373 = vmatprep.subr.mxu0 0.0
    %3374 = vmatpush1.msra.mxu0 0.0
    %3375 = vmatprep.subr.mxu0 0.0
    %3376 = vmatpush1.msra.mxu0 0.0
    %3377 = vmatprep.subr.mxu0 0.0
    %3378 = vmatpush1.msra.mxu0 0.0
    %3379 = vmatprep.subr.mxu0 0.0
    %3380 = vmatpush1.msra.mxu0 0.0
    %3381 = vmatprep.subr.mxu0 0.0
    %3382 = vmatpush1.msra.mxu0 0.0
    %3383 = vmatprep.subr.mxu0 0.0
    %3384 = vmatpush1.msra.mxu0 0.0
    %3385 = vmatprep.subr.mxu0 0.0
    %3386 = vmatpush1.msra.mxu0 0.0
    %3387 = vmatprep.subr.mxu0 0.0
    %3388 = vmatpush1.msra.mxu0 0.0
    %3389 = vmatprep.subr.mxu0 0.0
    %3390 = vmatpush1.msra.mxu0 0.0
    %3391 = vmatprep.subr.mxu0 0.0
    %3392 = vmatpush1.msra.mxu0 0.0
    %3393 = vmatprep.subr.mxu0 0.0
    %3394 = vmatpush1.msra.mxu0 0.0
    %3395 = vmatprep.subr.mxu0 0.0
    %3396 = vmatpush1.msra.mxu0 0.0
    %3397 = vmatprep.subr.mxu0 0.0
    %3398 = vmatpush1.msra.mxu0 0.0
    %3399 = vmatprep.subr.mxu0 0.0
    %3400 = vmatpush1.msra.mxu0 0.0
    %3401 = vmatprep.subr.mxu0 0.0
    %3402 = vmatpush1.msra.mxu0 0.0
    %3403 = vmatprep.subr.mxu0 0.0
    %3404 = vmatpush1.msra.mxu0 0.0
    %3405 = vmatprep.subr.mxu0 0.0
    %3406 = vmatpush1.msra.mxu0 0.0
    %3407 = vmatprep.subr.mxu0 0.0
    %3408 = vmatpush1.msra.mxu0 0.0
    %3409 = vmatprep.subr.mxu0 0.0
    %3410 = vmatpush1.msra.mxu0 0.0
    %3411 = vmatprep.subr.mxu0 0.0
    %3412 = vmatpush1.msra.mxu0 0.0
    %3413 = vmatprep.subr.mxu0 0.0
    %3414 = vmatpush1.msra.mxu0 0.0
    %3415 = vmatprep.subr.mxu0 0.0
    %3416 = vmatpush1.msra.mxu0 0.0
    %3417 = vmatprep.subr.mxu0 0.0
    %3418 = vmatpush1.msra.mxu0 0.0
    %3419 = vmatprep.subr.mxu0 0.0
    %3420 = vmatpush1.msra.mxu0 0.0
    %3421 = vmatprep.subr.mxu0 0.0
    %3422 = vmatpush1.msra.mxu0 0.0
    %3423 = vmatprep.subr.mxu0 0.0
    %3424 = vmatpush1.msra.mxu0 0.0
    %3425 = vmatprep.subr.mxu0 0.0
    %3426 = vmatpush1.msra.mxu0 0.0
    %3427 = vmatprep.mubr.f32.mxu0 0.0
    %3428 = vmatmul.mubr.f32.gmra.mrb[0].mxu0 %v2918
    %v3429 = vpop.f32.mrb[0].mxu0
    %v3430 = vadd.f32 %v3361, %v3429
    %v3431 = vpop.f32.mrb[0].mxu0
    %3432 = vmatprep.mubr.f32.mxu0 0.0
    %3433 = vmatmul.mubr.f32.gmra.mrb[0].mxu0 %v2921
    %v3434 = vpop.f32.mrb[0].mxu0
    %v3435 = vadd.f32 %v3361, %v3434
    %v3436 = vpop.f32.mrb[0].mxu0
    %3437 = vdwg.mxu0
    %s3438 = scalar_lea.vmem %s4, 192
    %v3439 = vld [vmem:[%s3438] sm:$0xff]
    %v3440 = vld [vmem:[%s3438 + $0x8] sm:$0xff]
    %v3441 = vld [vmem:[%s3438 + $0x10] sm:$0xff]
    %v3442 = vld [vmem:[%s3438 + $0x18] sm:$0xff]
    %s3443 = scalar_lea.vmem %s5, 6
    %v3444 = vld [vmem:[%s3443] sm:$0x1]
    %v3446 = vlaneseq
    %v3447 = vshrl.u32 %v3446, 7
    %v3448 = vsub.s32 0, %v3447
    %v3449 = vrot.slane %v3444, %v3448
    %3451 = vmatprep.subr.mxu0 0.0
    %3452 = vmatpush1.msra.mxu0 %v3439
    %3453 = vmatprep.subr.mxu0 0.0
    %3454 = vmatpush1.msra.mxu0 %v3440
    %3455 = vmatprep.subr.mxu0 0.0
    %3456 = vmatpush1.msra.mxu0 %v3441
    %3457 = vmatprep.subr.mxu0 0.0
    %3458 = vmatpush1.msra.mxu0 %v3442
    %3459 = vmatprep.subr.mxu0 0.0
    %3460 = vmatpush1.msra.mxu0 0.0
    %3461 = vmatprep.subr.mxu0 0.0
    %3462 = vmatpush1.msra.mxu0 0.0
    %3463 = vmatprep.subr.mxu0 0.0
    %3464 = vmatpush1.msra.mxu0 0.0
    %3465 = vmatprep.subr.mxu0 0.0
    %3466 = vmatpush1.msra.mxu0 0.0
    %3467 = vmatprep.subr.mxu0 0.0
    %3468 = vmatpush1.msra.mxu0 0.0
    %3469 = vmatprep.subr.mxu0 0.0
    %3470 = vmatpush1.msra.mxu0 0.0
    %3471 = vmatprep.subr.mxu0 0.0
    %3472 = vmatpush1.msra.mxu0 0.0
    %3473 = vmatprep.subr.mxu0 0.0
    %3474 = vmatpush1.msra.mxu0 0.0
    %3475 = vmatprep.subr.mxu0 0.0
    %3476 = vmatpush1.msra.mxu0 0.0
    %3477 = vmatprep.subr.mxu0 0.0
    %3478 = vmatpush1.msra.mxu0 0.0
    %3479 = vmatprep.subr.mxu0 0.0
    %3480 = vmatpush1.msra.mxu0 0.0
    %3481 = vmatprep.subr.mxu0 0.0
    %3482 = vmatpush1.msra.mxu0 0.0
    %3483 = vmatprep.subr.mxu0 0.0
    %3484 = vmatpush1.msra.mxu0 0.0
    %3485 = vmatprep.subr.mxu0 0.0
    %3486 = vmatpush1.msra.mxu0 0.0
    %3487 = vmatprep.subr.mxu0 0.0
    %3488 = vmatpush1.msra.mxu0 0.0
    %3489 = vmatprep.subr.mxu0 0.0
    %3490 = vmatpush1.msra.mxu0 0.0
    %3491 = vmatprep.subr.mxu0 0.0
    %3492 = vmatpush1.msra.mxu0 0.0
    %3493 = vmatprep.subr.mxu0 0.0
    %3494 = vmatpush1.msra.mxu0 0.0
    %3495 = vmatprep.subr.mxu0 0.0
    %3496 = vmatpush1.msra.mxu0 0.0
    %3497 = vmatprep.subr.mxu0 0.0
    %3498 = vmatpush1.msra.mxu0 0.0
    %3499 = vmatprep.subr.mxu0 0.0
    %3500 = vmatpush1.msra.mxu0 0.0
    %3501 = vmatprep.subr.mxu0 0.0
    %3502 = vmatpush1.msra.mxu0 0.0
    %3503 = vmatprep.subr.mxu0 0.0
    %3504 = vmatpush1.msra.mxu0 0.0
    %3505 = vmatprep.subr.mxu0 0.0
    %3506 = vmatpush1.msra.mxu0 0.0
    %3507 = vmatprep.subr.mxu0 0.0
    %3508 = vmatpush1.msra.mxu0 0.0
    %3509 = vmatprep.subr.mxu0 0.0
    %3510 = vmatpush1.msra.mxu0 0.0
    %3511 = vmatprep.subr.mxu0 0.0
    %3512 = vmatpush1.msra.mxu0 0.0
    %3513 = vmatprep.subr.mxu0 0.0
    %3514 = vmatpush1.msra.mxu0 0.0
    %3515 = vmatprep.mubr.f32.mxu0 0.0
    %3516 = vmatmul.mubr.f32.gmra.mrb[0].mxu0 %v2918
    %v3517 = vpop.f32.mrb[0].mxu0
    %v3518 = vadd.f32 %v3449, %v3517
    %v3519 = vpop.f32.mrb[0].mxu0
    %3520 = vmatprep.mubr.f32.mxu0 0.0
    %3521 = vmatmul.mubr.f32.gmra.mrb[0].mxu0 %v2921
    %v3522 = vpop.f32.mrb[0].mxu0
    %v3523 = vadd.f32 %v3449, %v3522
    %v3524 = vpop.f32.mrb[0].mxu0
    %3525 = vdwg.mxu0
    %s3526 = scalar_lea.vmem %s6, 192
    %v3527 = vld [vmem:[%s3526] sm:$0xff]
    %v3528 = vld [vmem:[%s3526 + $0x8] sm:$0xff]
    %v3529 = vld [vmem:[%s3526 + $0x10] sm:$0xff]
    %v3530 = vld [vmem:[%s3526 + $0x18] sm:$0xff]
    %s3531 = scalar_lea.vmem %s7, 6
    %v3532 = vld [vmem:[%s3531] sm:$0x1]
    %v3534 = vlaneseq
    %v3535 = vshrl.u32 %v3534, 7
    %v3536 = vsub.s32 0, %v3535
    %v3537 = vrot.slane %v3532, %v3536
    %3539 = vmatprep.subr.mxu0 0.0
    %3540 = vmatpush1.msra.mxu0 %v3527
    %3541 = vmatprep.subr.mxu0 0.0
    %3542 = vmatpush1.msra.mxu0 %v3528
    %3543 = vmatprep.subr.mxu0 0.0
    %3544 = vmatpush1.msra.mxu0 %v3529
    %3545 = vmatprep.subr.mxu0 0.0
    %3546 = vmatpush1.msra.mxu0 %v3530
    %3547 = vmatprep.subr.mxu0 0.0
    %3548 = vmatpush1.msra.mxu0 0.0
    %3549 = vmatprep.subr.mxu0 0.0
    %3550 = vmatpush1.msra.mxu0 0.0
    %3551 = vmatprep.subr.mxu0 0.0
    %3552 = vmatpush1.msra.mxu0 0.0
    %3553 = vmatprep.subr.mxu0 0.0
    %3554 = vmatpush1.msra.mxu0 0.0
    %3555 = vmatprep.subr.mxu0 0.0
    %3556 = vmatpush1.msra.mxu0 0.0
    %3557 = vmatprep.subr.mxu0 0.0
    %3558 = vmatpush1.msra.mxu0 0.0
    %3559 = vmatprep.subr.mxu0 0.0
    %3560 = vmatpush1.msra.mxu0 0.0
    %3561 = vmatprep.subr.mxu0 0.0
    %3562 = vmatpush1.msra.mxu0 0.0
    %3563 = vmatprep.subr.mxu0 0.0
    %3564 = vmatpush1.msra.mxu0 0.0
    %3565 = vmatprep.subr.mxu0 0.0
    %3566 = vmatpush1.msra.mxu0 0.0
    %3567 = vmatprep.subr.mxu0 0.0
    %3568 = vmatpush1.msra.mxu0 0.0
    %3569 = vmatprep.subr.mxu0 0.0
    %3570 = vmatpush1.msra.mxu0 0.0
    %3571 = vmatprep.subr.mxu0 0.0
    %3572 = vmatpush1.msra.mxu0 0.0
    %3573 = vmatprep.subr.mxu0 0.0
    %3574 = vmatpush1.msra.mxu0 0.0
    %3575 = vmatprep.subr.mxu0 0.0
    %3576 = vmatpush1.msra.mxu0 0.0
    %3577 = vmatprep.subr.mxu0 0.0
    %3578 = vmatpush1.msra.mxu0 0.0
    %3579 = vmatprep.subr.mxu0 0.0
    %3580 = vmatpush1.msra.mxu0 0.0
    %3581 = vmatprep.subr.mxu0 0.0
    %3582 = vmatpush1.msra.mxu0 0.0
    %3583 = vmatprep.subr.mxu0 0.0
    %3584 = vmatpush1.msra.mxu0 0.0
    %3585 = vmatprep.subr.mxu0 0.0
    %3586 = vmatpush1.msra.mxu0 0.0
    %3587 = vmatprep.subr.mxu0 0.0
    %3588 = vmatpush1.msra.mxu0 0.0
    %3589 = vmatprep.subr.mxu0 0.0
    %3590 = vmatpush1.msra.mxu0 0.0
    %3591 = vmatprep.subr.mxu0 0.0
    %3592 = vmatpush1.msra.mxu0 0.0
    %3593 = vmatprep.subr.mxu0 0.0
    %3594 = vmatpush1.msra.mxu0 0.0
    %3595 = vmatprep.subr.mxu0 0.0
    %3596 = vmatpush1.msra.mxu0 0.0
    %3597 = vmatprep.subr.mxu0 0.0
    %3598 = vmatpush1.msra.mxu0 0.0
    %3599 = vmatprep.subr.mxu0 0.0
    %3600 = vmatpush1.msra.mxu0 0.0
    %3601 = vmatprep.subr.mxu0 0.0
    %3602 = vmatpush1.msra.mxu0 0.0
    %3603 = vmatprep.mubr.f32.mxu0 0.0
    %3604 = vmatmul.mubr.f32.gmra.mrb[0].mxu0 %v2918
    %v3605 = vpop.f32.mrb[0].mxu0
    %v3606 = vadd.f32 %v3537, %v3605
    %v3607 = vpop.f32.mrb[0].mxu0
    %3608 = vmatprep.mubr.f32.mxu0 0.0
    %3609 = vmatmul.mubr.f32.gmra.mrb[0].mxu0 %v2921
    %v3610 = vpop.f32.mrb[0].mxu0
    %v3611 = vadd.f32 %v3537, %v3610
    %v3612 = vpop.f32.mrb[0].mxu0
    %3613 = vdwg.mxu0
    %s3614 = scalar_lea.vmem %s8, 192
    %v3615 = vld [vmem:[%s3614] sm:$0xff]
    %v3616 = vld [vmem:[%s3614 + $0x8] sm:$0xff]
    %v3617 = vld [vmem:[%s3614 + $0x10] sm:$0xff]
    %v3618 = vld [vmem:[%s3614 + $0x18] sm:$0xff]
    %s3619 = scalar_lea.vmem %s9, 6
    %v3620 = vld [vmem:[%s3619] sm:$0x1]
    %v3622 = vlaneseq
    %v3623 = vshrl.u32 %v3622, 7
    %v3624 = vsub.s32 0, %v3623
    %v3625 = vrot.slane %v3620, %v3624
    %3627 = vmatprep.subr.mxu0 0.0
    %3628 = vmatpush1.msra.mxu0 %v3615
    %3629 = vmatprep.subr.mxu0 0.0
    %3630 = vmatpush1.msra.mxu0 %v3616
    %3631 = vmatprep.subr.mxu0 0.0
    %3632 = vmatpush1.msra.mxu0 %v3617
    %3633 = vmatprep.subr.mxu0 0.0
    %3634 = vmatpush1.msra.mxu0 %v3618
    %3635 = vmatprep.subr.mxu0 0.0
    %3636 = vmatpush1.msra.mxu0 0.0
    %3637 = vmatprep.subr.mxu0 0.0
    %3638 = vmatpush1.msra.mxu0 0.0
    %3639 = vmatprep.subr.mxu0 0.0
    %3640 = vmatpush1.msra.mxu0 0.0
    %3641 = vmatprep.subr.mxu0 0.0
    %3642 = vmatpush1.msra.mxu0 0.0
    %3643 = vmatprep.subr.mxu0 0.0
    %3644 = vmatpush1.msra.mxu0 0.0
    %3645 = vmatprep.subr.mxu0 0.0
    %3646 = vmatpush1.msra.mxu0 0.0
    %3647 = vmatprep.subr.mxu0 0.0
    %3648 = vmatpush1.msra.mxu0 0.0
    %3649 = vmatprep.subr.mxu0 0.0
    %3650 = vmatpush1.msra.mxu0 0.0
    %3651 = vmatprep.subr.mxu0 0.0
    %3652 = vmatpush1.msra.mxu0 0.0
    %3653 = vmatprep.subr.mxu0 0.0
    %3654 = vmatpush1.msra.mxu0 0.0
    %3655 = vmatprep.subr.mxu0 0.0
    %3656 = vmatpush1.msra.mxu0 0.0
    %3657 = vmatprep.subr.mxu0 0.0
    %3658 = vmatpush1.msra.mxu0 0.0
    %3659 = vmatprep.subr.mxu0 0.0
    %3660 = vmatpush1.msra.mxu0 0.0
    %3661 = vmatprep.subr.mxu0 0.0
    %3662 = vmatpush1.msra.mxu0 0.0
    %3663 = vmatprep.subr.mxu0 0.0
    %3664 = vmatpush1.msra.mxu0 0.0
    %3665 = vmatprep.subr.mxu0 0.0
    %3666 = vmatpush1.msra.mxu0 0.0
    %3667 = vmatprep.subr.mxu0 0.0
    %3668 = vmatpush1.msra.mxu0 0.0
    %3669 = vmatprep.subr.mxu0 0.0
    %3670 = vmatpush1.msra.mxu0 0.0
    %3671 = vmatprep.subr.mxu0 0.0
    %3672 = vmatpush1.msra.mxu0 0.0
    %3673 = vmatprep.subr.mxu0 0.0
    %3674 = vmatpush1.msra.mxu0 0.0
    %3675 = vmatprep.subr.mxu0 0.0
    %3676 = vmatpush1.msra.mxu0 0.0
    %3677 = vmatprep.subr.mxu0 0.0
    %3678 = vmatpush1.msra.mxu0 0.0
    %3679 = vmatprep.subr.mxu0 0.0
    %3680 = vmatpush1.msra.mxu0 0.0
    %3681 = vmatprep.subr.mxu0 0.0
    %3682 = vmatpush1.msra.mxu0 0.0
    %3683 = vmatprep.subr.mxu0 0.0
    %3684 = vmatpush1.msra.mxu0 0.0
    %3685 = vmatprep.subr.mxu0 0.0
    %3686 = vmatpush1.msra.mxu0 0.0
    %3687 = vmatprep.subr.mxu0 0.0
    %3688 = vmatpush1.msra.mxu0 0.0
    %3689 = vmatprep.subr.mxu0 0.0
    %3690 = vmatpush1.msra.mxu0 0.0
    %3691 = vmatprep.mubr.f32.mxu0 0.0
    %3692 = vmatmul.mubr.f32.gmra.mrb[0].mxu0 %v2918
    %v3693 = vpop.f32.mrb[0].mxu0
    %v3694 = vadd.f32 %v3625, %v3693
    %v3695 = vpop.f32.mrb[0].mxu0
    %3696 = vmatprep.mubr.f32.mxu0 0.0
    %3697 = vmatmul.mubr.f32.gmra.mrb[0].mxu0 %v2921
    %v3698 = vpop.f32.mrb[0].mxu0
    %v3699 = vadd.f32 %v3625, %v3698
    %v3700 = vpop.f32.mrb[0].mxu0
    %3701 = vdwg.mxu0
    %s3702 = scalar_lea.vmem %s4, 224
    %v3703 = vld [vmem:[%s3702] sm:$0xff]
    %v3704 = vld [vmem:[%s3702 + $0x8] sm:$0xff]
    %v3705 = vld [vmem:[%s3702 + $0x10] sm:$0xff]
    %v3706 = vld [vmem:[%s3702 + $0x18] sm:$0xff]
    %s3707 = scalar_lea.vmem %s5, 7
    %v3708 = vld [vmem:[%s3707] sm:$0x1]
    %v3710 = vlaneseq
    %v3711 = vshrl.u32 %v3710, 7
    %v3712 = vsub.s32 0, %v3711
    %v3713 = vrot.slane %v3708, %v3712
    %3715 = vmatprep.subr.mxu0 0.0
    %3716 = vmatpush1.msra.mxu0 %v3703
    %3717 = vmatprep.subr.mxu0 0.0
    %3718 = vmatpush1.msra.mxu0 %v3704
    %3719 = vmatprep.subr.mxu0 0.0
    %3720 = vmatpush1.msra.mxu0 %v3705
    %3721 = vmatprep.subr.mxu0 0.0
    %3722 = vmatpush1.msra.mxu0 %v3706
    %3723 = vmatprep.subr.mxu0 0.0
    %3724 = vmatpush1.msra.mxu0 0.0
    %3725 = vmatprep.subr.mxu0 0.0
    %3726 = vmatpush1.msra.mxu0 0.0
    %3727 = vmatprep.subr.mxu0 0.0
    %3728 = vmatpush1.msra.mxu0 0.0
    %3729 = vmatprep.subr.mxu0 0.0
    %3730 = vmatpush1.msra.mxu0 0.0
    %3731 = vmatprep.subr.mxu0 0.0
    %3732 = vmatpush1.msra.mxu0 0.0
    %3733 = vmatprep.subr.mxu0 0.0
    %3734 = vmatpush1.msra.mxu0 0.0
    %3735 = vmatprep.subr.mxu0 0.0
    %3736 = vmatpush1.msra.mxu0 0.0
    %3737 = vmatprep.subr.mxu0 0.0
    %3738 = vmatpush1.msra.mxu0 0.0
    %3739 = vmatprep.subr.mxu0 0.0
    %3740 = vmatpush1.msra.mxu0 0.0
    %3741 = vmatprep.subr.mxu0 0.0
    %3742 = vmatpush1.msra.mxu0 0.0
    %3743 = vmatprep.subr.mxu0 0.0
    %3744 = vmatpush1.msra.mxu0 0.0
    %3745 = vmatprep.subr.mxu0 0.0
    %3746 = vmatpush1.msra.mxu0 0.0
    %3747 = vmatprep.subr.mxu0 0.0
    %3748 = vmatpush1.msra.mxu0 0.0
    %3749 = vmatprep.subr.mxu0 0.0
    %3750 = vmatpush1.msra.mxu0 0.0
    %3751 = vmatprep.subr.mxu0 0.0
    %3752 = vmatpush1.msra.mxu0 0.0
    %3753 = vmatprep.subr.mxu0 0.0
    %3754 = vmatpush1.msra.mxu0 0.0
    %3755 = vmatprep.subr.mxu0 0.0
    %3756 = vmatpush1.msra.mxu0 0.0
    %3757 = vmatprep.subr.mxu0 0.0
    %3758 = vmatpush1.msra.mxu0 0.0
    %3759 = vmatprep.subr.mxu0 0.0
    %3760 = vmatpush1.msra.mxu0 0.0
    %3761 = vmatprep.subr.mxu0 0.0
    %3762 = vmatpush1.msra.mxu0 0.0
    %3763 = vmatprep.subr.mxu0 0.0
    %3764 = vmatpush1.msra.mxu0 0.0
    %3765 = vmatprep.subr.mxu0 0.0
    %3766 = vmatpush1.msra.mxu0 0.0
    %3767 = vmatprep.subr.mxu0 0.0
    %3768 = vmatpush1.msra.mxu0 0.0
    %3769 = vmatprep.subr.mxu0 0.0
    %3770 = vmatpush1.msra.mxu0 0.0
    %3771 = vmatprep.subr.mxu0 0.0
    %3772 = vmatpush1.msra.mxu0 0.0
    %3773 = vmatprep.subr.mxu0 0.0
    %3774 = vmatpush1.msra.mxu0 0.0
    %3775 = vmatprep.subr.mxu0 0.0
    %3776 = vmatpush1.msra.mxu0 0.0
    %3777 = vmatprep.subr.mxu0 0.0
    %3778 = vmatpush1.msra.mxu0 0.0
    %3779 = vmatprep.mubr.f32.mxu0 0.0
    %3780 = vmatmul.mubr.f32.gmra.mrb[0].mxu0 %v2918
    %v3781 = vpop.f32.mrb[0].mxu0
    %v3782 = vadd.f32 %v3713, %v3781
    %v3783 = vpop.f32.mrb[0].mxu0
    %3784 = vmatprep.mubr.f32.mxu0 0.0
    %3785 = vmatmul.mubr.f32.gmra.mrb[0].mxu0 %v2921
    %v3786 = vpop.f32.mrb[0].mxu0
    %v3787 = vadd.f32 %v3713, %v3786
    %v3788 = vpop.f32.mrb[0].mxu0
    %3789 = vdwg.mxu0
    %s3790 = scalar_lea.vmem %s6, 224
    %v3791 = vld [vmem:[%s3790] sm:$0xff]
    %v3792 = vld [vmem:[%s3790 + $0x8] sm:$0xff]
    %v3793 = vld [vmem:[%s3790 + $0x10] sm:$0xff]
    %v3794 = vld [vmem:[%s3790 + $0x18] sm:$0xff]
    %s3795 = scalar_lea.vmem %s7, 7
    %v3796 = vld [vmem:[%s3795] sm:$0x1]
    %v3798 = vlaneseq
    %v3799 = vshrl.u32 %v3798, 7
    %v3800 = vsub.s32 0, %v3799
    %v3801 = vrot.slane %v3796, %v3800
    %3803 = vmatprep.subr.mxu0 0.0
    %3804 = vmatpush1.msra.mxu0 %v3791
    %3805 = vmatprep.subr.mxu0 0.0
    %3806 = vmatpush1.msra.mxu0 %v3792
    %3807 = vmatprep.subr.mxu0 0.0
    %3808 = vmatpush1.msra.mxu0 %v3793
    %3809 = vmatprep.subr.mxu0 0.0
    %3810 = vmatpush1.msra.mxu0 %v3794
    %3811 = vmatprep.subr.mxu0 0.0
    %3812 = vmatpush1.msra.mxu0 0.0
    %3813 = vmatprep.subr.mxu0 0.0
    %3814 = vmatpush1.msra.mxu0 0.0
    %3815 = vmatprep.subr.mxu0 0.0
    %3816 = vmatpush1.msra.mxu0 0.0
    %3817 = vmatprep.subr.mxu0 0.0
    %3818 = vmatpush1.msra.mxu0 0.0
    %3819 = vmatprep.subr.mxu0 0.0
    %3820 = vmatpush1.msra.mxu0 0.0
    %3821 = vmatprep.subr.mxu0 0.0
    %3822 = vmatpush1.msra.mxu0 0.0
    %3823 = vmatprep.subr.mxu0 0.0
    %3824 = vmatpush1.msra.mxu0 0.0
    %3825 = vmatprep.subr.mxu0 0.0
    %3826 = vmatpush1.msra.mxu0 0.0
    %3827 = vmatprep.subr.mxu0 0.0
    %3828 = vmatpush1.msra.mxu0 0.0
    %3829 = vmatprep.subr.mxu0 0.0
    %3830 = vmatpush1.msra.mxu0 0.0
    %3831 = vmatprep.subr.mxu0 0.0
    %3832 = vmatpush1.msra.mxu0 0.0
    %3833 = vmatprep.subr.mxu0 0.0
    %3834 = vmatpush1.msra.mxu0 0.0
    %3835 = vmatprep.subr.mxu0 0.0
    %3836 = vmatpush1.msra.mxu0 0.0
    %3837 = vmatprep.subr.mxu0 0.0
    %3838 = vmatpush1.msra.mxu0 0.0
    %3839 = vmatprep.subr.mxu0 0.0
    %3840 = vmatpush1.msra.mxu0 0.0
    %3841 = vmatprep.subr.mxu0 0.0
    %3842 = vmatpush1.msra.mxu0 0.0
    %3843 = vmatprep.subr.mxu0 0.0
    %3844 = vmatpush1.msra.mxu0 0.0
    %3845 = vmatprep.subr.mxu0 0.0
    %3846 = vmatpush1.msra.mxu0 0.0
    %3847 = vmatprep.subr.mxu0 0.0
    %3848 = vmatpush1.msra.mxu0 0.0
    %3849 = vmatprep.subr.mxu0 0.0
    %3850 = vmatpush1.msra.mxu0 0.0
    %3851 = vmatprep.subr.mxu0 0.0
    %3852 = vmatpush1.msra.mxu0 0.0
    %3853 = vmatprep.subr.mxu0 0.0
    %3854 = vmatpush1.msra.mxu0 0.0
    %3855 = vmatprep.subr.mxu0 0.0
    %3856 = vmatpush1.msra.mxu0 0.0
    %3857 = vmatprep.subr.mxu0 0.0
    %3858 = vmatpush1.msra.mxu0 0.0
    %3859 = vmatprep.subr.mxu0 0.0
    %3860 = vmatpush1.msra.mxu0 0.0
    %3861 = vmatprep.subr.mxu0 0.0
    %3862 = vmatpush1.msra.mxu0 0.0
    %3863 = vmatprep.subr.mxu0 0.0
    %3864 = vmatpush1.msra.mxu0 0.0
    %3865 = vmatprep.subr.mxu0 0.0
    %3866 = vmatpush1.msra.mxu0 0.0
    %3867 = vmatprep.mubr.f32.mxu0 0.0
    %3868 = vmatmul.mubr.f32.gmra.mrb[0].mxu0 %v2918
    %v3869 = vpop.f32.mrb[0].mxu0
    %v3870 = vadd.f32 %v3801, %v3869
    %v3871 = vpop.f32.mrb[0].mxu0
    %3872 = vmatprep.mubr.f32.mxu0 0.0
    %3873 = vmatmul.mubr.f32.gmra.mrb[0].mxu0 %v2921
    %v3874 = vpop.f32.mrb[0].mxu0
    %v3875 = vadd.f32 %v3801, %v3874
    %v3876 = vpop.f32.mrb[0].mxu0
    %3877 = vdwg.mxu0
    %s3878 = scalar_lea.vmem %s8, 224
    %v3879 = vld [vmem:[%s3878] sm:$0xff]
    %v3880 = vld [vmem:[%s3878 + $0x8] sm:$0xff]
    %v3881 = vld [vmem:[%s3878 + $0x10] sm:$0xff]
    %v3882 = vld [vmem:[%s3878 + $0x18] sm:$0xff]
    %s3883 = scalar_lea.vmem %s9, 7
    %v3884 = vld [vmem:[%s3883] sm:$0x1]
    %v3886 = vlaneseq
    %v3887 = vshrl.u32 %v3886, 7
    %v3888 = vsub.s32 0, %v3887
    %v3889 = vrot.slane %v3884, %v3888
    %3891 = vmatprep.subr.mxu0 0.0
    %3892 = vmatpush1.msra.mxu0 %v3879
    %3893 = vmatprep.subr.mxu0 0.0
    %3894 = vmatpush1.msra.mxu0 %v3880
    %3895 = vmatprep.subr.mxu0 0.0
    %3896 = vmatpush1.msra.mxu0 %v3881
    %3897 = vmatprep.subr.mxu0 0.0
    %3898 = vmatpush1.msra.mxu0 %v3882
    %3899 = vmatprep.subr.mxu0 0.0
    %3900 = vmatpush1.msra.mxu0 0.0
    %3901 = vmatprep.subr.mxu0 0.0
    %3902 = vmatpush1.msra.mxu0 0.0
    %3903 = vmatprep.subr.mxu0 0.0
    %3904 = vmatpush1.msra.mxu0 0.0
    %3905 = vmatprep.subr.mxu0 0.0
    %3906 = vmatpush1.msra.mxu0 0.0
    %3907 = vmatprep.subr.mxu0 0.0
    %3908 = vmatpush1.msra.mxu0 0.0
    %3909 = vmatprep.subr.mxu0 0.0
    %3910 = vmatpush1.msra.mxu0 0.0
    %3911 = vmatprep.subr.mxu0 0.0
    %3912 = vmatpush1.msra.mxu0 0.0
    %3913 = vmatprep.subr.mxu0 0.0
    %3914 = vmatpush1.msra.mxu0 0.0
    %3915 = vmatprep.subr.mxu0 0.0
    %3916 = vmatpush1.msra.mxu0 0.0
    %3917 = vmatprep.subr.mxu0 0.0
    %3918 = vmatpush1.msra.mxu0 0.0
    %3919 = vmatprep.subr.mxu0 0.0
    %3920 = vmatpush1.msra.mxu0 0.0
    %3921 = vmatprep.subr.mxu0 0.0
    %3922 = vmatpush1.msra.mxu0 0.0
    %3923 = vmatprep.subr.mxu0 0.0
    %3924 = vmatpush1.msra.mxu0 0.0
    %3925 = vmatprep.subr.mxu0 0.0
    %3926 = vmatpush1.msra.mxu0 0.0
    %3927 = vmatprep.subr.mxu0 0.0
    %3928 = vmatpush1.msra.mxu0 0.0
    %3929 = vmatprep.subr.mxu0 0.0
    %3930 = vmatpush1.msra.mxu0 0.0
    %3931 = vmatprep.subr.mxu0 0.0
    %3932 = vmatpush1.msra.mxu0 0.0
    %3933 = vmatprep.subr.mxu0 0.0
    %3934 = vmatpush1.msra.mxu0 0.0
    %3935 = vmatprep.subr.mxu0 0.0
    %3936 = vmatpush1.msra.mxu0 0.0
    %3937 = vmatprep.subr.mxu0 0.0
    %3938 = vmatpush1.msra.mxu0 0.0
    %3939 = vmatprep.subr.mxu0 0.0
    %3940 = vmatpush1.msra.mxu0 0.0
    %3941 = vmatprep.subr.mxu0 0.0
    %3942 = vmatpush1.msra.mxu0 0.0
    %3943 = vmatprep.subr.mxu0 0.0
    %3944 = vmatpush1.msra.mxu0 0.0
    %3945 = vmatprep.subr.mxu0 0.0
    %3946 = vmatpush1.msra.mxu0 0.0
    %3947 = vmatprep.subr.mxu0 0.0
    %3948 = vmatpush1.msra.mxu0 0.0
    %3949 = vmatprep.subr.mxu0 0.0
    %3950 = vmatpush1.msra.mxu0 0.0
    %3951 = vmatprep.subr.mxu0 0.0
    %3952 = vmatpush1.msra.mxu0 0.0
    %3953 = vmatprep.subr.mxu0 0.0
    %3954 = vmatpush1.msra.mxu0 0.0
    %3955 = vmatprep.mubr.f32.mxu0 0.0
    %3956 = vmatmul.mubr.f32.gmra.mrb[0].mxu0 %v2918
    %v3957 = vpop.f32.mrb[0].mxu0
    %v3958 = vadd.f32 %v3889, %v3957
    %v3959 = vpop.f32.mrb[0].mxu0
    %3960 = vmatprep.mubr.f32.mxu0 0.0
    %3961 = vmatmul.mubr.f32.gmra.mrb[0].mxu0 %v2921
    %v3962 = vpop.f32.mrb[0].mxu0
    %v3963 = vadd.f32 %v3889, %v3962
    %v3964 = vpop.f32.mrb[0].mxu0
    %3965 = vdwg.mxu0
    %v3967 = vsel %vm1189, %v2990, 0
    %v3970 = vsel %vm1189, %v3078, 0
    %3972 = vmatprep.subr.mxu0 0.0
    %3973 = vmatpush1.xpose.msra.mxu0 %v3970
    %3974 = vmatprep.subr.mxu0 0.0
    %3975 = vmatpush1.xpose.msra.mxu0 0.0
    %3976 = vmatprep.subr.mxu0 0.0
    %3977 = vmatpush1.xpose.msra.mxu0 0.0
    %3978 = vmatprep.subr.mxu0 0.0
    %3979 = vmatpush1.xpose.msra.mxu0 0.0
    %3980 = vmatprep.subr.mxu0 0.0
    %3981 = vmatpush1.xpose.msra.mxu0 0.0
    %3982 = vmatprep.subr.mxu0 0.0
    %3983 = vmatpush1.xpose.msra.mxu0 0.0
    %3984 = vmatprep.subr.mxu0 0.0
    %3985 = vmatpush1.xpose.msra.mxu0 0.0
    %3986 = vmatprep.subr.mxu0 0.0
    %3987 = vmatpush1.xpose.msra.mxu0 0.0
    %3988 = vmatprep.subr.mxu0 0.0
    %3989 = vmatpush1.xpose.msra.mxu0 0.0
    %3990 = vmatprep.subr.mxu0 0.0
    %3991 = vmatpush1.xpose.msra.mxu0 0.0
    %3992 = vmatprep.subr.mxu0 0.0
    %3993 = vmatpush1.xpose.msra.mxu0 0.0
    %3994 = vmatprep.subr.mxu0 0.0
    %3995 = vmatpush1.xpose.msra.mxu0 0.0
    %3996 = vmatprep.subr.mxu0 0.0
    %3997 = vmatpush1.xpose.msra.mxu0 0.0
    %3998 = vmatprep.subr.mxu0 0.0
    %3999 = vmatpush1.xpose.msra.mxu0 0.0
    %4000 = vmatprep.subr.mxu0 0.0
    %4001 = vmatpush1.xpose.msra.mxu0 0.0
    %4002 = vmatprep.subr.mxu0 0.0
    %4003 = vmatpush1.xpose.msra.mxu0 0.0
    %4004 = vmatprep.subr.mxu0 0.0
    %4005 = vmatpush1.xpose.msra.mxu0 0.0
    %4006 = vmatprep.subr.mxu0 0.0
    %4007 = vmatpush1.xpose.msra.mxu0 0.0
    %4008 = vmatprep.subr.mxu0 0.0
    %4009 = vmatpush1.xpose.msra.mxu0 0.0
    %4010 = vmatprep.subr.mxu0 0.0
    %4011 = vmatpush1.xpose.msra.mxu0 0.0
    %4012 = vmatprep.subr.mxu0 0.0
    %4013 = vmatpush1.xpose.msra.mxu0 0.0
    %4014 = vmatprep.subr.mxu0 0.0
    %4015 = vmatpush1.xpose.msra.mxu0 0.0
    %4016 = vmatprep.subr.mxu0 0.0
    %4017 = vmatpush1.xpose.msra.mxu0 0.0
    %4018 = vmatprep.subr.mxu0 0.0
    %4019 = vmatpush1.xpose.msra.mxu0 0.0
    %4020 = vmatprep.subr.mxu0 0.0
    %4021 = vmatpush1.xpose.msra.mxu0 0.0
    %4022 = vmatprep.subr.mxu0 0.0
    %4023 = vmatpush1.xpose.msra.mxu0 0.0
    %4024 = vmatprep.subr.mxu0 0.0
    %4025 = vmatpush1.xpose.msra.mxu0 0.0
    %4026 = vmatprep.subr.mxu0 0.0
    %4027 = vmatpush1.xpose.msra.mxu0 0.0
    %4028 = vmatprep.subr.mxu0 0.0
    %4029 = vmatpush1.xpose.msra.mxu0 0.0
    %4030 = vmatprep.subr.mxu0 0.0
    %4031 = vmatpush1.xpose.msra.mxu0 0.0
    %4032 = vmatprep.subr.mxu0 0.0
    %4033 = vmatpush1.xpose.msra.mxu0 0.0
    %4034 = vmatprep.subr.mxu0 0.0
    %4035 = vmatpush1.xpose.msra.mxu0 0.0
    %4036 = vmatprep.mubr.f32.mxu0 0.0
    %4037 = vmatmul.mubr.f32.gmra.mrb[0].mxu0 %v3967
    %v4038 = vpop.f32.mrb[0].mxu0
    %v4039 = vadd.f32 %v1187, %v4038
    %v4040 = vpop.f32.mrb[0].mxu0
    %4041 = vdwg.mxu0
    %v4042 = vsel %vm1189, %v4039, -inf
    %4043 = vmax.xlane.f32.xlu0 %v4042
    %v4044 = vpop.xlane.xlu0 %4043
    %v4045 = vsub.f32 %v4039, %v4044
    %v4046 = vmul.f32 %v4045, 1.442695
    %v4047 = vpow.pop %v4046
    %v4048 = vsel %vm1189, %v4047, 0.0
    %4049 = vadd.xlane.f32.xlu0 %v4048
    %v4050 = vpop.xlane.xlu0 %4049
    %v4051 = vrcp.pop %v4050
    %v4052 = vmul.f32 %v4047, %v4051
    %v4054 = vsel %vm1189, %v4052, 0
    %4056 = vmatprep.subr.mxu0 0.0
    %4057 = vmatpush1.msra.mxu0 %v3166
    %4058 = vmatprep.subr.mxu0 0.0
    %4059 = vmatpush1.msra.mxu0 0.0
    %4060 = vmatprep.subr.mxu0 0.0
    %4061 = vmatpush1.msra.mxu0 0.0
    %4062 = vmatprep.subr.mxu0 0.0
    %4063 = vmatpush1.msra.mxu0 0.0
    %4064 = vmatprep.subr.mxu0 0.0
    %4065 = vmatpush1.msra.mxu0 0.0
    %4066 = vmatprep.subr.mxu0 0.0
    %4067 = vmatpush1.msra.mxu0 0.0
    %4068 = vmatprep.subr.mxu0 0.0
    %4069 = vmatpush1.msra.mxu0 0.0
    %4070 = vmatprep.subr.mxu0 0.0
    %4071 = vmatpush1.msra.mxu0 0.0
    %4072 = vmatprep.subr.mxu0 0.0
    %4073 = vmatpush1.msra.mxu0 0.0
    %4074 = vmatprep.subr.mxu0 0.0
    %4075 = vmatpush1.msra.mxu0 0.0
    %4076 = vmatprep.subr.mxu0 0.0
    %4077 = vmatpush1.msra.mxu0 0.0
    %4078 = vmatprep.subr.mxu0 0.0
    %4079 = vmatpush1.msra.mxu0 0.0
    %4080 = vmatprep.subr.mxu0 0.0
    %4081 = vmatpush1.msra.mxu0 0.0
    %4082 = vmatprep.subr.mxu0 0.0
    %4083 = vmatpush1.msra.mxu0 0.0
    %4084 = vmatprep.subr.mxu0 0.0
    %4085 = vmatpush1.msra.mxu0 0.0
    %4086 = vmatprep.subr.mxu0 0.0
    %4087 = vmatpush1.msra.mxu0 0.0
    %4088 = vmatprep.subr.mxu0 0.0
    %4089 = vmatpush1.msra.mxu0 0.0
    %4090 = vmatprep.subr.mxu0 0.0
    %4091 = vmatpush1.msra.mxu0 0.0
    %4092 = vmatprep.subr.mxu0 0.0
    %4093 = vmatpush1.msra.mxu0 0.0
    %4094 = vmatprep.subr.mxu0 0.0
    %4095 = vmatpush1.msra.mxu0 0.0
    %4096 = vmatprep.subr.mxu0 0.0
    %4097 = vmatpush1.msra.mxu0 0.0
    %4098 = vmatprep.subr.mxu0 0.0
    %4099 = vmatpush1.msra.mxu0 0.0
    %4100 = vmatprep.subr.mxu0 0.0
    %4101 = vmatpush1.msra.mxu0 0.0
    %4102 = vmatprep.subr.mxu0 0.0
    %4103 = vmatpush1.msra.mxu0 0.0
    %4104 = vmatprep.subr.mxu0 0.0
    %4105 = vmatpush1.msra.mxu0 0.0
    %4106 = vmatprep.subr.mxu0 0.0
    %4107 = vmatpush1.msra.mxu0 0.0
    %4108 = vmatprep.subr.mxu0 0.0
    %4109 = vmatpush1.msra.mxu0 0.0
    %4110 = vmatprep.subr.mxu0 0.0
    %4111 = vmatpush1.msra.mxu0 0.0
    %4112 = vmatprep.subr.mxu0 0.0
    %4113 = vmatpush1.msra.mxu0 0.0
    %4114 = vmatprep.subr.mxu0 0.0
    %4115 = vmatpush1.msra.mxu0 0.0
    %4116 = vmatprep.subr.mxu0 0.0
    %4117 = vmatpush1.msra.mxu0 0.0
    %4118 = vmatprep.subr.mxu0 0.0
    %4119 = vmatpush1.msra.mxu0 0.0
    %4120 = vmatprep.mubr.f32.mxu0 0.0
    %4121 = vmatmul.mubr.f32.gmra.mrb[0].mxu0 %v4054
    %v4122 = vpop.f32.mrb[0].mxu0
    %v4123 = vadd.f32 0.0, %v4122
    %v4124 = vpop.f32.mrb[0].mxu0
    %4125 = vdwg.mxu0
    %4126 = vst.msk [vmem:[#allocation2] sm:$0xff] %vm1189, %v4123
    %v4128 = vsel %vm1189, %v3254, 0
    %v4131 = vsel %vm1189, %v3342, 0
    %4133 = vmatprep.subr.mxu0 0.0
    %4134 = vmatpush1.xpose.msra.mxu0 %v4131
    %4135 = vmatprep.subr.mxu0 0.0
    %4136 = vmatpush1.xpose.msra.mxu0 0.0
    %4137 = vmatprep.subr.mxu0 0.0
    %4138 = vmatpush1.xpose.msra.mxu0 0.0
    %4139 = vmatprep.subr.mxu0 0.0
    %4140 = vmatpush1.xpose.msra.mxu0 0.0
    %4141 = vmatprep.subr.mxu0 0.0
    %4142 = vmatpush1.xpose.msra.mxu0 0.0
    %4143 = vmatprep.subr.mxu0 0.0
    %4144 = vmatpush1.xpose.msra.mxu0 0.0
    %4145 = vmatprep.subr.mxu0 0.0
    %4146 = vmatpush1.xpose.msra.mxu0 0.0
    %4147 = vmatprep.subr.mxu0 0.0
    %4148 = vmatpush1.xpose.msra.mxu0 0.0
    %4149 = vmatprep.subr.mxu0 0.0
    %4150 = vmatpush1.xpose.msra.mxu0 0.0
    %4151 = vmatprep.subr.mxu0 0.0
    %4152 = vmatpush1.xpose.msra.mxu0 0.0
    %4153 = vmatprep.subr.mxu0 0.0
    %4154 = vmatpush1.xpose.msra.mxu0 0.0
    %4155 = vmatprep.subr.mxu0 0.0
    %4156 = vmatpush1.xpose.msra.mxu0 0.0
    %4157 = vmatprep.subr.mxu0 0.0
    %4158 = vmatpush1.xpose.msra.mxu0 0.0
    %4159 = vmatprep.subr.mxu0 0.0
    %4160 = vmatpush1.xpose.msra.mxu0 0.0
    %4161 = vmatprep.subr.mxu0 0.0
    %4162 = vmatpush1.xpose.msra.mxu0 0.0
    %4163 = vmatprep.subr.mxu0 0.0
    %4164 = vmatpush1.xpose.msra.mxu0 0.0
    %4165 = vmatprep.subr.mxu0 0.0
    %4166 = vmatpush1.xpose.msra.mxu0 0.0
    %4167 = vmatprep.subr.mxu0 0.0
    %4168 = vmatpush1.xpose.msra.mxu0 0.0
    %4169 = vmatprep.subr.mxu0 0.0
    %4170 = vmatpush1.xpose.msra.mxu0 0.0
    %4171 = vmatprep.subr.mxu0 0.0
    %4172 = vmatpush1.xpose.msra.mxu0 0.0
    %4173 = vmatprep.subr.mxu0 0.0
    %4174 = vmatpush1.xpose.msra.mxu0 0.0
    %4175 = vmatprep.subr.mxu0 0.0
    %4176 = vmatpush1.xpose.msra.mxu0 0.0
    %4177 = vmatprep.subr.mxu0 0.0
    %4178 = vmatpush1.xpose.msra.mxu0 0.0
    %4179 = vmatprep.subr.mxu0 0.0
    %4180 = vmatpush1.xpose.msra.mxu0 0.0
    %4181 = vmatprep.subr.mxu0 0.0
    %4182 = vmatpush1.xpose.msra.mxu0 0.0
    %4183 = vmatprep.subr.mxu0 0.0
    %4184 = vmatpush1.xpose.msra.mxu0 0.0
    %4185 = vmatprep.subr.mxu0 0.0
    %4186 = vmatpush1.xpose.msra.mxu0 0.0
    %4187 = vmatprep.subr.mxu0 0.0
    %4188 = vmatpush1.xpose.msra.mxu0 0.0
    %4189 = vmatprep.subr.mxu0 0.0
    %4190 = vmatpush1.xpose.msra.mxu0 0.0
    %4191 = vmatprep.subr.mxu0 0.0
    %4192 = vmatpush1.xpose.msra.mxu0 0.0
    %4193 = vmatprep.subr.mxu0 0.0
    %4194 = vmatpush1.xpose.msra.mxu0 0.0
    %4195 = vmatprep.subr.mxu0 0.0
    %4196 = vmatpush1.xpose.msra.mxu0 0.0
    %4197 = vmatprep.mubr.f32.mxu0 0.0
    %4198 = vmatmul.mubr.f32.gmra.mrb[0].mxu0 %v4128
    %v4199 = vpop.f32.mrb[0].mxu0
    %v4200 = vadd.f32 %v1187, %v4199
    %v4201 = vpop.f32.mrb[0].mxu0
    %4202 = vdwg.mxu0
    %v4203 = vsel %vm1189, %v4200, -inf
    %4204 = vmax.xlane.f32.xlu0 %v4203
    %v4205 = vpop.xlane.xlu0 %4204
    %v4206 = vsub.f32 %v4200, %v4205
    %v4207 = vmul.f32 %v4206, 1.442695
    %v4208 = vpow.pop %v4207
    %v4209 = vsel %vm1189, %v4208, 0.0
    %4210 = vadd.xlane.f32.xlu0 %v4209
    %v4211 = vpop.xlane.xlu0 %4210
    %v4212 = vrcp.pop %v4211
    %v4213 = vmul.f32 %v4208, %v4212
    %v4215 = vsel %vm1189, %v4213, 0
    %4217 = vmatprep.subr.mxu0 0.0
    %4218 = vmatpush1.msra.mxu0 %v3430
    %4219 = vmatprep.subr.mxu0 0.0
    %4220 = vmatpush1.msra.mxu0 0.0
    %4221 = vmatprep.subr.mxu0 0.0
    %4222 = vmatpush1.msra.mxu0 0.0
    %4223 = vmatprep.subr.mxu0 0.0
    %4224 = vmatpush1.msra.mxu0 0.0
    %4225 = vmatprep.subr.mxu0 0.0
    %4226 = vmatpush1.msra.mxu0 0.0
    %4227 = vmatprep.subr.mxu0 0.0
    %4228 = vmatpush1.msra.mxu0 0.0
    %4229 = vmatprep.subr.mxu0 0.0
    %4230 = vmatpush1.msra.mxu0 0.0
    %4231 = vmatprep.subr.mxu0 0.0
    %4232 = vmatpush1.msra.mxu0 0.0
    %4233 = vmatprep.subr.mxu0 0.0
    %4234 = vmatpush1.msra.mxu0 0.0
    %4235 = vmatprep.subr.mxu0 0.0
    %4236 = vmatpush1.msra.mxu0 0.0
    %4237 = vmatprep.subr.mxu0 0.0
    %4238 = vmatpush1.msra.mxu0 0.0
    %4239 = vmatprep.subr.mxu0 0.0
    %4240 = vmatpush1.msra.mxu0 0.0
    %4241 = vmatprep.subr.mxu0 0.0
    %4242 = vmatpush1.msra.mxu0 0.0
    %4243 = vmatprep.subr.mxu0 0.0
    %4244 = vmatpush1.msra.mxu0 0.0
    %4245 = vmatprep.subr.mxu0 0.0
    %4246 = vmatpush1.msra.mxu0 0.0
    %4247 = vmatprep.subr.mxu0 0.0
    %4248 = vmatpush1.msra.mxu0 0.0
    %4249 = vmatprep.subr.mxu0 0.0
    %4250 = vmatpush1.msra.mxu0 0.0
    %4251 = vmatprep.subr.mxu0 0.0
    %4252 = vmatpush1.msra.mxu0 0.0
    %4253 = vmatprep.subr.mxu0 0.0
    %4254 = vmatpush1.msra.mxu0 0.0
    %4255 = vmatprep.subr.mxu0 0.0
    %4256 = vmatpush1.msra.mxu0 0.0
    %4257 = vmatprep.subr.mxu0 0.0
    %4258 = vmatpush1.msra.mxu0 0.0
    %4259 = vmatprep.subr.mxu0 0.0
    %4260 = vmatpush1.msra.mxu0 0.0
    %4261 = vmatprep.subr.mxu0 0.0
    %4262 = vmatpush1.msra.mxu0 0.0
    %4263 = vmatprep.subr.mxu0 0.0
    %4264 = vmatpush1.msra.mxu0 0.0
    %4265 = vmatprep.subr.mxu0 0.0
    %4266 = vmatpush1.msra.mxu0 0.0
    %4267 = vmatprep.subr.mxu0 0.0
    %4268 = vmatpush1.msra.mxu0 0.0
    %4269 = vmatprep.subr.mxu0 0.0
    %4270 = vmatpush1.msra.mxu0 0.0
    %4271 = vmatprep.subr.mxu0 0.0
    %4272 = vmatpush1.msra.mxu0 0.0
    %4273 = vmatprep.subr.mxu0 0.0
    %4274 = vmatpush1.msra.mxu0 0.0
    %4275 = vmatprep.subr.mxu0 0.0
    %4276 = vmatpush1.msra.mxu0 0.0
    %4277 = vmatprep.subr.mxu0 0.0
    %4278 = vmatpush1.msra.mxu0 0.0
    %4279 = vmatprep.subr.mxu0 0.0
    %4280 = vmatpush1.msra.mxu0 0.0
    %4281 = vmatprep.mubr.f32.mxu0 0.0
    %4282 = vmatmul.mubr.f32.gmra.mrb[0].mxu0 %v4215
    %v4283 = vpop.f32.mrb[0].mxu0
    %v4284 = vadd.f32 0.0, %v4283
    %v4285 = vpop.f32.mrb[0].mxu0
    %4286 = vdwg.mxu0
    %4288 = vrot.lane.b32.xlu0 %v4284, 8
    %v4289 = vpop.permute.xlu0 %4288
    %4291 = vst.msk [vmem:[#allocation2] sm:$0xff] %vm1515, %v4289
    %v4293 = vsel %vm1189, %v3518, 0
    %v4296 = vsel %vm1189, %v3606, 0
    %4298 = vmatprep.subr.mxu0 0.0
    %4299 = vmatpush1.xpose.msra.mxu0 %v4296
    %4300 = vmatprep.subr.mxu0 0.0
    %4301 = vmatpush1.xpose.msra.mxu0 0.0
    %4302 = vmatprep.subr.mxu0 0.0
    %4303 = vmatpush1.xpose.msra.mxu0 0.0
    %4304 = vmatprep.subr.mxu0 0.0
    %4305 = vmatpush1.xpose.msra.mxu0 0.0
    %4306 = vmatprep.subr.mxu0 0.0
    %4307 = vmatpush1.xpose.msra.mxu0 0.0
    %4308 = vmatprep.subr.mxu0 0.0
    %4309 = vmatpush1.xpose.msra.mxu0 0.0
    %4310 = vmatprep.subr.mxu0 0.0
    %4311 = vmatpush1.xpose.msra.mxu0 0.0
    %4312 = vmatprep.subr.mxu0 0.0
    %4313 = vmatpush1.xpose.msra.mxu0 0.0
    %4314 = vmatprep.subr.mxu0 0.0
    %4315 = vmatpush1.xpose.msra.mxu0 0.0
    %4316 = vmatprep.subr.mxu0 0.0
    %4317 = vmatpush1.xpose.msra.mxu0 0.0
    %4318 = vmatprep.subr.mxu0 0.0
    %4319 = vmatpush1.xpose.msra.mxu0 0.0
    %4320 = vmatprep.subr.mxu0 0.0
    %4321 = vmatpush1.xpose.msra.mxu0 0.0
    %4322 = vmatprep.subr.mxu0 0.0
    %4323 = vmatpush1.xpose.msra.mxu0 0.0
    %4324 = vmatprep.subr.mxu0 0.0
    %4325 = vmatpush1.xpose.msra.mxu0 0.0
    %4326 = vmatprep.subr.mxu0 0.0
    %4327 = vmatpush1.xpose.msra.mxu0 0.0
    %4328 = vmatprep.subr.mxu0 0.0
    %4329 = vmatpush1.xpose.msra.mxu0 0.0
    %4330 = vmatprep.subr.mxu0 0.0
    %4331 = vmatpush1.xpose.msra.mxu0 0.0
    %4332 = vmatprep.subr.mxu0 0.0
    %4333 = vmatpush1.xpose.msra.mxu0 0.0
    %4334 = vmatprep.subr.mxu0 0.0
    %4335 = vmatpush1.xpose.msra.mxu0 0.0
    %4336 = vmatprep.subr.mxu0 0.0
    %4337 = vmatpush1.xpose.msra.mxu0 0.0
    %4338 = vmatprep.subr.mxu0 0.0
    %4339 = vmatpush1.xpose.msra.mxu0 0.0
    %4340 = vmatprep.subr.mxu0 0.0
    %4341 = vmatpush1.xpose.msra.mxu0 0.0
    %4342 = vmatprep.subr.mxu0 0.0
    %4343 = vmatpush1.xpose.msra.mxu0 0.0
    %4344 = vmatprep.subr.mxu0 0.0
    %4345 = vmatpush1.xpose.msra.mxu0 0.0
    %4346 = vmatprep.subr.mxu0 0.0
    %4347 = vmatpush1.xpose.msra.mxu0 0.0
    %4348 = vmatprep.subr.mxu0 0.0
    %4349 = vmatpush1.xpose.msra.mxu0 0.0
    %4350 = vmatprep.subr.mxu0 0.0
    %4351 = vmatpush1.xpose.msra.mxu0 0.0
    %4352 = vmatprep.subr.mxu0 0.0
    %4353 = vmatpush1.xpose.msra.mxu0 0.0
    %4354 = vmatprep.subr.mxu0 0.0
    %4355 = vmatpush1.xpose.msra.mxu0 0.0
    %4356 = vmatprep.subr.mxu0 0.0
    %4357 = vmatpush1.xpose.msra.mxu0 0.0
    %4358 = vmatprep.subr.mxu0 0.0
    %4359 = vmatpush1.xpose.msra.mxu0 0.0
    %4360 = vmatprep.subr.mxu0 0.0
    %4361 = vmatpush1.xpose.msra.mxu0 0.0
    %4362 = vmatprep.mubr.f32.mxu0 0.0
    %4363 = vmatmul.mubr.f32.gmra.mrb[0].mxu0 %v4293
    %v4364 = vpop.f32.mrb[0].mxu0
    %v4365 = vadd.f32 %v1187, %v4364
    %v4366 = vpop.f32.mrb[0].mxu0
    %4367 = vdwg.mxu0
    %v4368 = vsel %vm1189, %v4365, -inf
    %4369 = vmax.xlane.f32.xlu0 %v4368
    %v4370 = vpop.xlane.xlu0 %4369
    %v4371 = vsub.f32 %v4365, %v4370
    %v4372 = vmul.f32 %v4371, 1.442695
    %v4373 = vpow.pop %v4372
    %v4374 = vsel %vm1189, %v4373, 0.0
    %4375 = vadd.xlane.f32.xlu0 %v4374
    %v4376 = vpop.xlane.xlu0 %4375
    %v4377 = vrcp.pop %v4376
    %v4378 = vmul.f32 %v4373, %v4377
    %v4380 = vsel %vm1189, %v4378, 0
    %4382 = vmatprep.subr.mxu0 0.0
    %4383 = vmatpush1.msra.mxu0 %v3694
    %4384 = vmatprep.subr.mxu0 0.0
    %4385 = vmatpush1.msra.mxu0 0.0
    %4386 = vmatprep.subr.mxu0 0.0
    %4387 = vmatpush1.msra.mxu0 0.0
    %4388 = vmatprep.subr.mxu0 0.0
    %4389 = vmatpush1.msra.mxu0 0.0
    %4390 = vmatprep.subr.mxu0 0.0
    %4391 = vmatpush1.msra.mxu0 0.0
    %4392 = vmatprep.subr.mxu0 0.0
    %4393 = vmatpush1.msra.mxu0 0.0
    %4394 = vmatprep.subr.mxu0 0.0
    %4395 = vmatpush1.msra.mxu0 0.0
    %4396 = vmatprep.subr.mxu0 0.0
    %4397 = vmatpush1.msra.mxu0 0.0
    %4398 = vmatprep.subr.mxu0 0.0
    %4399 = vmatpush1.msra.mxu0 0.0
    %4400 = vmatprep.subr.mxu0 0.0
    %4401 = vmatpush1.msra.mxu0 0.0
    %4402 = vmatprep.subr.mxu0 0.0
    %4403 = vmatpush1.msra.mxu0 0.0
    %4404 = vmatprep.subr.mxu0 0.0
    %4405 = vmatpush1.msra.mxu0 0.0
    %4406 = vmatprep.subr.mxu0 0.0
    %4407 = vmatpush1.msra.mxu0 0.0
    %4408 = vmatprep.subr.mxu0 0.0
    %4409 = vmatpush1.msra.mxu0 0.0
    %4410 = vmatprep.subr.mxu0 0.0
    %4411 = vmatpush1.msra.mxu0 0.0
    %4412 = vmatprep.subr.mxu0 0.0
    %4413 = vmatpush1.msra.mxu0 0.0
    %4414 = vmatprep.subr.mxu0 0.0
    %4415 = vmatpush1.msra.mxu0 0.0
    %4416 = vmatprep.subr.mxu0 0.0
    %4417 = vmatpush1.msra.mxu0 0.0
    %4418 = vmatprep.subr.mxu0 0.0
    %4419 = vmatpush1.msra.mxu0 0.0
    %4420 = vmatprep.subr.mxu0 0.0
    %4421 = vmatpush1.msra.mxu0 0.0
    %4422 = vmatprep.subr.mxu0 0.0
    %4423 = vmatpush1.msra.mxu0 0.0
    %4424 = vmatprep.subr.mxu0 0.0
    %4425 = vmatpush1.msra.mxu0 0.0
    %4426 = vmatprep.subr.mxu0 0.0
    %4427 = vmatpush1.msra.mxu0 0.0
    %4428 = vmatprep.subr.mxu0 0.0
    %4429 = vmatpush1.msra.mxu0 0.0
    %4430 = vmatprep.subr.mxu0 0.0
    %4431 = vmatpush1.msra.mxu0 0.0
    %4432 = vmatprep.subr.mxu0 0.0
    %4433 = vmatpush1.msra.mxu0 0.0
    %4434 = vmatprep.subr.mxu0 0.0
    %4435 = vmatpush1.msra.mxu0 0.0
    %4436 = vmatprep.subr.mxu0 0.0
    %4437 = vmatpush1.msra.mxu0 0.0
    %4438 = vmatprep.subr.mxu0 0.0
    %4439 = vmatpush1.msra.mxu0 0.0
    %4440 = vmatprep.subr.mxu0 0.0
    %4441 = vmatpush1.msra.mxu0 0.0
    %4442 = vmatprep.subr.mxu0 0.0
    %4443 = vmatpush1.msra.mxu0 0.0
    %4444 = vmatprep.subr.mxu0 0.0
    %4445 = vmatpush1.msra.mxu0 0.0
    %4446 = vmatprep.mubr.f32.mxu0 0.0
    %4447 = vmatmul.mubr.f32.gmra.mrb[0].mxu0 %v4380
    %v4448 = vpop.f32.mrb[0].mxu0
    %v4449 = vadd.f32 0.0, %v4448
    %v4450 = vpop.f32.mrb[0].mxu0
    %4451 = vdwg.mxu0
    %4453 = vrot.lane.b32.xlu0 %v4449, 16
    %v4454 = vpop.permute.xlu0 %4453
    %4456 = vst.msk [vmem:[#allocation2] sm:$0xff] %vm1681, %v4454
    %v4458 = vsel %vm1189, %v3782, 0
    %v4461 = vsel %vm1189, %v3870, 0
    %4463 = vmatprep.subr.mxu0 0.0
    %4464 = vmatpush1.xpose.msra.mxu0 %v4461
    %4465 = vmatprep.subr.mxu0 0.0
    %4466 = vmatpush1.xpose.msra.mxu0 0.0
    %4467 = vmatprep.subr.mxu0 0.0
    %4468 = vmatpush1.xpose.msra.mxu0 0.0
    %4469 = vmatprep.subr.mxu0 0.0
    %4470 = vmatpush1.xpose.msra.mxu0 0.0
    %4471 = vmatprep.subr.mxu0 0.0
    %4472 = vmatpush1.xpose.msra.mxu0 0.0
    %4473 = vmatprep.subr.mxu0 0.0
    %4474 = vmatpush1.xpose.msra.mxu0 0.0
    %4475 = vmatprep.subr.mxu0 0.0
    %4476 = vmatpush1.xpose.msra.mxu0 0.0
    %4477 = vmatprep.subr.mxu0 0.0
    %4478 = vmatpush1.xpose.msra.mxu0 0.0
    %4479 = vmatprep.subr.mxu0 0.0
    %4480 = vmatpush1.xpose.msra.mxu0 0.0
    %4481 = vmatprep.subr.mxu0 0.0
    %4482 = vmatpush1.xpose.msra.mxu0 0.0
    %4483 = vmatprep.subr.mxu0 0.0
    %4484 = vmatpush1.xpose.msra.mxu0 0.0
    %4485 = vmatprep.subr.mxu0 0.0
    %4486 = vmatpush1.xpose.msra.mxu0 0.0
    %4487 = vmatprep.subr.mxu0 0.0
    %4488 = vmatpush1.xpose.msra.mxu0 0.0
    %4489 = vmatprep.subr.mxu0 0.0
    %4490 = vmatpush1.xpose.msra.mxu0 0.0
    %4491 = vmatprep.subr.mxu0 0.0
    %4492 = vmatpush1.xpose.msra.mxu0 0.0
    %4493 = vmatprep.subr.mxu0 0.0
    %4494 = vmatpush1.xpose.msra.mxu0 0.0
    %4495 = vmatprep.subr.mxu0 0.0
    %4496 = vmatpush1.xpose.msra.mxu0 0.0
    %4497 = vmatprep.subr.mxu0 0.0
    %4498 = vmatpush1.xpose.msra.mxu0 0.0
    %4499 = vmatprep.subr.mxu0 0.0
    %4500 = vmatpush1.xpose.msra.mxu0 0.0
    %4501 = vmatprep.subr.mxu0 0.0
    %4502 = vmatpush1.xpose.msra.mxu0 0.0
    %4503 = vmatprep.subr.mxu0 0.0
    %4504 = vmatpush1.xpose.msra.mxu0 0.0
    %4505 = vmatprep.subr.mxu0 0.0
    %4506 = vmatpush1.xpose.msra.mxu0 0.0
    %4507 = vmatprep.subr.mxu0 0.0
    %4508 = vmatpush1.xpose.msra.mxu0 0.0
    %4509 = vmatprep.subr.mxu0 0.0
    %4510 = vmatpush1.xpose.msra.mxu0 0.0
    %4511 = vmatprep.subr.mxu0 0.0
    %4512 = vmatpush1.xpose.msra.mxu0 0.0
    %4513 = vmatprep.subr.mxu0 0.0
    %4514 = vmatpush1.xpose.msra.mxu0 0.0
    %4515 = vmatprep.subr.mxu0 0.0
    %4516 = vmatpush1.xpose.msra.mxu0 0.0
    %4517 = vmatprep.subr.mxu0 0.0
    %4518 = vmatpush1.xpose.msra.mxu0 0.0
    %4519 = vmatprep.subr.mxu0 0.0
    %4520 = vmatpush1.xpose.msra.mxu0 0.0
    %4521 = vmatprep.subr.mxu0 0.0
    %4522 = vmatpush1.xpose.msra.mxu0 0.0
    %4523 = vmatprep.subr.mxu0 0.0
    %4524 = vmatpush1.xpose.msra.mxu0 0.0
    %4525 = vmatprep.subr.mxu0 0.0
    %4526 = vmatpush1.xpose.msra.mxu0 0.0
    %4527 = vmatprep.mubr.f32.mxu0 0.0
    %4528 = vmatmul.mubr.f32.gmra.mrb[0].mxu0 %v4458
    %v4529 = vpop.f32.mrb[0].mxu0
    %v4530 = vadd.f32 %v1187, %v4529
    %v4531 = vpop.f32.mrb[0].mxu0
    %4532 = vdwg.mxu0
    %v4533 = vsel %vm1189, %v4530, -inf
    %4534 = vmax.xlane.f32.xlu0 %v4533
    %v4535 = vpop.xlane.xlu0 %4534
    %v4536 = vsub.f32 %v4530, %v4535
    %v4537 = vmul.f32 %v4536, 1.442695
    %v4538 = vpow.pop %v4537
    %v4539 = vsel %vm1189, %v4538, 0.0
    %4540 = vadd.xlane.f32.xlu0 %v4539
    %v4541 = vpop.xlane.xlu0 %4540
    %v4542 = vrcp.pop %v4541
    %v4543 = vmul.f32 %v4538, %v4542
    %v4545 = vsel %vm1189, %v4543, 0
    %4547 = vmatprep.subr.mxu0 0.0
    %4548 = vmatpush1.msra.mxu0 %v3958
    %4549 = vmatprep.subr.mxu0 0.0
    %4550 = vmatpush1.msra.mxu0 0.0
    %4551 = vmatprep.subr.mxu0 0.0
    %4552 = vmatpush1.msra.mxu0 0.0
    %4553 = vmatprep.subr.mxu0 0.0
    %4554 = vmatpush1.msra.mxu0 0.0
    %4555 = vmatprep.subr.mxu0 0.0
    %4556 = vmatpush1.msra.mxu0 0.0
    %4557 = vmatprep.subr.mxu0 0.0
    %4558 = vmatpush1.msra.mxu0 0.0
    %4559 = vmatprep.subr.mxu0 0.0
    %4560 = vmatpush1.msra.mxu0 0.0
    %4561 = vmatprep.subr.mxu0 0.0
    %4562 = vmatpush1.msra.mxu0 0.0
    %4563 = vmatprep.subr.mxu0 0.0
    %4564 = vmatpush1.msra.mxu0 0.0
    %4565 = vmatprep.subr.mxu0 0.0
    %4566 = vmatpush1.msra.mxu0 0.0
    %4567 = vmatprep.subr.mxu0 0.0
    %4568 = vmatpush1.msra.mxu0 0.0
    %4569 = vmatprep.subr.mxu0 0.0
    %4570 = vmatpush1.msra.mxu0 0.0
    %4571 = vmatprep.subr.mxu0 0.0
    %4572 = vmatpush1.msra.mxu0 0.0
    %4573 = vmatprep.subr.mxu0 0.0
    %4574 = vmatpush1.msra.mxu0 0.0
    %4575 = vmatprep.subr.mxu0 0.0
    %4576 = vmatpush1.msra.mxu0 0.0
    %4577 = vmatprep.subr.mxu0 0.0
    %4578 = vmatpush1.msra.mxu0 0.0
    %4579 = vmatprep.subr.mxu0 0.0
    %4580 = vmatpush1.msra.mxu0 0.0
    %4581 = vmatprep.subr.mxu0 0.0
    %4582 = vmatpush1.msra.mxu0 0.0
    %4583 = vmatprep.subr.mxu0 0.0
    %4584 = vmatpush1.msra.mxu0 0.0
    %4585 = vmatprep.subr.mxu0 0.0
    %4586 = vmatpush1.msra.mxu0 0.0
    %4587 = vmatprep.subr.mxu0 0.0
    %4588 = vmatpush1.msra.mxu0 0.0
    %4589 = vmatprep.subr.mxu0 0.0
    %4590 = vmatpush1.msra.mxu0 0.0
    %4591 = vmatprep.subr.mxu0 0.0
    %4592 = vmatpush1.msra.mxu0 0.0
    %4593 = vmatprep.subr.mxu0 0.0
    %4594 = vmatpush1.msra.mxu0 0.0
    %4595 = vmatprep.subr.mxu0 0.0
    %4596 = vmatpush1.msra.mxu0 0.0
    %4597 = vmatprep.subr.mxu0 0.0
    %4598 = vmatpush1.msra.mxu0 0.0
    %4599 = vmatprep.subr.mxu0 0.0
    %4600 = vmatpush1.msra.mxu0 0.0
    %4601 = vmatprep.subr.mxu0 0.0
    %4602 = vmatpush1.msra.mxu0 0.0
    %4603 = vmatprep.subr.mxu0 0.0
    %4604 = vmatpush1.msra.mxu0 0.0
    %4605 = vmatprep.subr.mxu0 0.0
    %4606 = vmatpush1.msra.mxu0 0.0
    %4607 = vmatprep.subr.mxu0 0.0
    %4608 = vmatpush1.msra.mxu0 0.0
    %4609 = vmatprep.subr.mxu0 0.0
    %4610 = vmatpush1.msra.mxu0 0.0
    %4611 = vmatprep.mubr.f32.mxu0 0.0
    %4612 = vmatmul.mubr.f32.gmra.mrb[0].mxu0 %v4545
    %v4613 = vpop.f32.mrb[0].mxu0
    %v4614 = vadd.f32 0.0, %v4613
    %v4615 = vpop.f32.mrb[0].mxu0
    %4616 = vdwg.mxu0
    %4618 = vrot.lane.b32.xlu0 %v4614, 24
    %v4619 = vpop.permute.xlu0 %4618
    %4621 = vst.msk [vmem:[#allocation2] sm:$0xff] %vm1847, %v4619
    %v4623 = vsel %vm1189, %v2995, 0
    %v4626 = vsel %vm1189, %v3083, 0
    %4628 = vmatprep.subr.mxu0 0.0
    %4629 = vmatpush1.xpose.msra.mxu0 %v4626
    %4630 = vmatprep.subr.mxu0 0.0
    %4631 = vmatpush1.xpose.msra.mxu0 0.0
    %4632 = vmatprep.subr.mxu0 0.0
    %4633 = vmatpush1.xpose.msra.mxu0 0.0
    %4634 = vmatprep.subr.mxu0 0.0
    %4635 = vmatpush1.xpose.msra.mxu0 0.0
    %4636 = vmatprep.subr.mxu0 0.0
    %4637 = vmatpush1.xpose.msra.mxu0 0.0
    %4638 = vmatprep.subr.mxu0 0.0
    %4639 = vmatpush1.xpose.msra.mxu0 0.0
    %4640 = vmatprep.subr.mxu0 0.0
    %4641 = vmatpush1.xpose.msra.mxu0 0.0
    %4642 = vmatprep.subr.mxu0 0.0
    %4643 = vmatpush1.xpose.msra.mxu0 0.0
    %4644 = vmatprep.subr.mxu0 0.0
    %4645 = vmatpush1.xpose.msra.mxu0 0.0
    %4646 = vmatprep.subr.mxu0 0.0
    %4647 = vmatpush1.xpose.msra.mxu0 0.0
    %4648 = vmatprep.subr.mxu0 0.0
    %4649 = vmatpush1.xpose.msra.mxu0 0.0
    %4650 = vmatprep.subr.mxu0 0.0
    %4651 = vmatpush1.xpose.msra.mxu0 0.0
    %4652 = vmatprep.subr.mxu0 0.0
    %4653 = vmatpush1.xpose.msra.mxu0 0.0
    %4654 = vmatprep.subr.mxu0 0.0
    %4655 = vmatpush1.xpose.msra.mxu0 0.0
    %4656 = vmatprep.subr.mxu0 0.0
    %4657 = vmatpush1.xpose.msra.mxu0 0.0
    %4658 = vmatprep.subr.mxu0 0.0
    %4659 = vmatpush1.xpose.msra.mxu0 0.0
    %4660 = vmatprep.subr.mxu0 0.0
    %4661 = vmatpush1.xpose.msra.mxu0 0.0
    %4662 = vmatprep.subr.mxu0 0.0
    %4663 = vmatpush1.xpose.msra.mxu0 0.0
    %4664 = vmatprep.subr.mxu0 0.0
    %4665 = vmatpush1.xpose.msra.mxu0 0.0
    %4666 = vmatprep.subr.mxu0 0.0
    %4667 = vmatpush1.xpose.msra.mxu0 0.0
    %4668 = vmatprep.subr.mxu0 0.0
    %4669 = vmatpush1.xpose.msra.mxu0 0.0
    %4670 = vmatprep.subr.mxu0 0.0
    %4671 = vmatpush1.xpose.msra.mxu0 0.0
    %4672 = vmatprep.subr.mxu0 0.0
    %4673 = vmatpush1.xpose.msra.mxu0 0.0
    %4674 = vmatprep.subr.mxu0 0.0
    %4675 = vmatpush1.xpose.msra.mxu0 0.0
    %4676 = vmatprep.subr.mxu0 0.0
    %4677 = vmatpush1.xpose.msra.mxu0 0.0
    %4678 = vmatprep.subr.mxu0 0.0
    %4679 = vmatpush1.xpose.msra.mxu0 0.0
    %4680 = vmatprep.subr.mxu0 0.0
    %4681 = vmatpush1.xpose.msra.mxu0 0.0
    %4682 = vmatprep.subr.mxu0 0.0
    %4683 = vmatpush1.xpose.msra.mxu0 0.0
    %4684 = vmatprep.subr.mxu0 0.0
    %4685 = vmatpush1.xpose.msra.mxu0 0.0
    %4686 = vmatprep.subr.mxu0 0.0
    %4687 = vmatpush1.xpose.msra.mxu0 0.0
    %4688 = vmatprep.subr.mxu0 0.0
    %4689 = vmatpush1.xpose.msra.mxu0 0.0
    %4690 = vmatprep.subr.mxu0 0.0
    %4691 = vmatpush1.xpose.msra.mxu0 0.0
    %4692 = vmatprep.mubr.f32.mxu0 0.0
    %4693 = vmatmul.mubr.f32.gmra.mrb[0].mxu0 %v4623
    %v4694 = vpop.f32.mrb[0].mxu0
    %v4695 = vadd.f32 %v1853, %v4694
    %v4696 = vpop.f32.mrb[0].mxu0
    %4697 = vdwg.mxu0
    %v4698 = vsel %vm1189, %v4695, -inf
    %4699 = vmax.xlane.f32.xlu0 %v4698
    %v4700 = vpop.xlane.xlu0 %4699
    %v4701 = vsub.f32 %v4695, %v4700
    %v4702 = vmul.f32 %v4701, 1.442695
    %v4703 = vpow.pop %v4702
    %v4704 = vsel %vm1189, %v4703, 0.0
    %4705 = vadd.xlane.f32.xlu0 %v4704
    %v4706 = vpop.xlane.xlu0 %4705
    %v4707 = vrcp.pop %v4706
    %v4708 = vmul.f32 %v4703, %v4707
    %v4710 = vsel %vm1189, %v4708, 0
    %4712 = vmatprep.subr.mxu0 0.0
    %4713 = vmatpush1.msra.mxu0 %v3171
    %4714 = vmatprep.subr.mxu0 0.0
    %4715 = vmatpush1.msra.mxu0 0.0
    %4716 = vmatprep.subr.mxu0 0.0
    %4717 = vmatpush1.msra.mxu0 0.0
    %4718 = vmatprep.subr.mxu0 0.0
    %4719 = vmatpush1.msra.mxu0 0.0
    %4720 = vmatprep.subr.mxu0 0.0
    %4721 = vmatpush1.msra.mxu0 0.0
    %4722 = vmatprep.subr.mxu0 0.0
    %4723 = vmatpush1.msra.mxu0 0.0
    %4724 = vmatprep.subr.mxu0 0.0
    %4725 = vmatpush1.msra.mxu0 0.0
    %4726 = vmatprep.subr.mxu0 0.0
    %4727 = vmatpush1.msra.mxu0 0.0
    %4728 = vmatprep.subr.mxu0 0.0
    %4729 = vmatpush1.msra.mxu0 0.0
    %4730 = vmatprep.subr.mxu0 0.0
    %4731 = vmatpush1.msra.mxu0 0.0
    %4732 = vmatprep.subr.mxu0 0.0
    %4733 = vmatpush1.msra.mxu0 0.0
    %4734 = vmatprep.subr.mxu0 0.0
    %4735 = vmatpush1.msra.mxu0 0.0
    %4736 = vmatprep.subr.mxu0 0.0
    %4737 = vmatpush1.msra.mxu0 0.0
    %4738 = vmatprep.subr.mxu0 0.0
    %4739 = vmatpush1.msra.mxu0 0.0
    %4740 = vmatprep.subr.mxu0 0.0
    %4741 = vmatpush1.msra.mxu0 0.0
    %4742 = vmatprep.subr.mxu0 0.0
    %4743 = vmatpush1.msra.mxu0 0.0
    %4744 = vmatprep.subr.mxu0 0.0
    %4745 = vmatpush1.msra.mxu0 0.0
    %4746 = vmatprep.subr.mxu0 0.0
    %4747 = vmatpush1.msra.mxu0 0.0
    %4748 = vmatprep.subr.mxu0 0.0
    %4749 = vmatpush1.msra.mxu0 0.0
    %4750 = vmatprep.subr.mxu0 0.0
    %4751 = vmatpush1.msra.mxu0 0.0
    %4752 = vmatprep.subr.mxu0 0.0
    %4753 = vmatpush1.msra.mxu0 0.0
    %4754 = vmatprep.subr.mxu0 0.0
    %4755 = vmatpush1.msra.mxu0 0.0
    %4756 = vmatprep.subr.mxu0 0.0
    %4757 = vmatpush1.msra.mxu0 0.0
    %4758 = vmatprep.subr.mxu0 0.0
    %4759 = vmatpush1.msra.mxu0 0.0
    %4760 = vmatprep.subr.mxu0 0.0
    %4761 = vmatpush1.msra.mxu0 0.0
    %4762 = vmatprep.subr.mxu0 0.0
    %4763 = vmatpush1.msra.mxu0 0.0
    %4764 = vmatprep.subr.mxu0 0.0
    %4765 = vmatpush1.msra.mxu0 0.0
    %4766 = vmatprep.subr.mxu0 0.0
    %4767 = vmatpush1.msra.mxu0 0.0
    %4768 = vmatprep.subr.mxu0 0.0
    %4769 = vmatpush1.msra.mxu0 0.0
    %4770 = vmatprep.subr.mxu0 0.0
    %4771 = vmatpush1.msra.mxu0 0.0
    %4772 = vmatprep.subr.mxu0 0.0
    %4773 = vmatpush1.msra.mxu0 0.0
    %4774 = vmatprep.subr.mxu0 0.0
    %4775 = vmatpush1.msra.mxu0 0.0
    %4776 = vmatprep.mubr.f32.mxu0 0.0
    %4777 = vmatmul.mubr.f32.gmra.mrb[0].mxu0 %v4710
    %v4778 = vpop.f32.mrb[0].mxu0
    %v4779 = vadd.f32 0.0, %v4778
    %v4780 = vpop.f32.mrb[0].mxu0
    %4781 = vdwg.mxu0
    %4782 = vst.msk [vmem:[#allocation2 + $0x8] sm:$0xff] %vm1189, %v4779
    %v4784 = vsel %vm1189, %v3259, 0
    %v4787 = vsel %vm1189, %v3347, 0
    %4789 = vmatprep.subr.mxu0 0.0
    %4790 = vmatpush1.xpose.msra.mxu0 %v4787
    %4791 = vmatprep.subr.mxu0 0.0
    %4792 = vmatpush1.xpose.msra.mxu0 0.0
    %4793 = vmatprep.subr.mxu0 0.0
    %4794 = vmatpush1.xpose.msra.mxu0 0.0
    %4795 = vmatprep.subr.mxu0 0.0
    %4796 = vmatpush1.xpose.msra.mxu0 0.0
    %4797 = vmatprep.subr.mxu0 0.0
    %4798 = vmatpush1.xpose.msra.mxu0 0.0
    %4799 = vmatprep.subr.mxu0 0.0
    %4800 = vmatpush1.xpose.msra.mxu0 0.0
    %4801 = vmatprep.subr.mxu0 0.0
    %4802 = vmatpush1.xpose.msra.mxu0 0.0
    %4803 = vmatprep.subr.mxu0 0.0
    %4804 = vmatpush1.xpose.msra.mxu0 0.0
    %4805 = vmatprep.subr.mxu0 0.0
    %4806 = vmatpush1.xpose.msra.mxu0 0.0
    %4807 = vmatprep.subr.mxu0 0.0
    %4808 = vmatpush1.xpose.msra.mxu0 0.0
    %4809 = vmatprep.subr.mxu0 0.0
    %4810 = vmatpush1.xpose.msra.mxu0 0.0
    %4811 = vmatprep.subr.mxu0 0.0
    %4812 = vmatpush1.xpose.msra.mxu0 0.0
    %4813 = vmatprep.subr.mxu0 0.0
    %4814 = vmatpush1.xpose.msra.mxu0 0.0
    %4815 = vmatprep.subr.mxu0 0.0
    %4816 = vmatpush1.xpose.msra.mxu0 0.0
    %4817 = vmatprep.subr.mxu0 0.0
    %4818 = vmatpush1.xpose.msra.mxu0 0.0
    %4819 = vmatprep.subr.mxu0 0.0
    %4820 = vmatpush1.xpose.msra.mxu0 0.0
    %4821 = vmatprep.subr.mxu0 0.0
    %4822 = vmatpush1.xpose.msra.mxu0 0.0
    %4823 = vmatprep.subr.mxu0 0.0
    %4824 = vmatpush1.xpose.msra.mxu0 0.0
    %4825 = vmatprep.subr.mxu0 0.0
    %4826 = vmatpush1.xpose.msra.mxu0 0.0
    %4827 = vmatprep.subr.mxu0 0.0
    %4828 = vmatpush1.xpose.msra.mxu0 0.0
    %4829 = vmatprep.subr.mxu0 0.0
    %4830 = vmatpush1.xpose.msra.mxu0 0.0
    %4831 = vmatprep.subr.mxu0 0.0
    %4832 = vmatpush1.xpose.msra.mxu0 0.0
    %4833 = vmatprep.subr.mxu0 0.0
    %4834 = vmatpush1.xpose.msra.mxu0 0.0
    %4835 = vmatprep.subr.mxu0 0.0
    %4836 = vmatpush1.xpose.msra.mxu0 0.0
    %4837 = vmatprep.subr.mxu0 0.0
    %4838 = vmatpush1.xpose.msra.mxu0 0.0
    %4839 = vmatprep.subr.mxu0 0.0
    %4840 = vmatpush1.xpose.msra.mxu0 0.0
    %4841 = vmatprep.subr.mxu0 0.0
    %4842 = vmatpush1.xpose.msra.mxu0 0.0
    %4843 = vmatprep.subr.mxu0 0.0
    %4844 = vmatpush1.xpose.msra.mxu0 0.0
    %4845 = vmatprep.subr.mxu0 0.0
    %4846 = vmatpush1.xpose.msra.mxu0 0.0
    %4847 = vmatprep.subr.mxu0 0.0
    %4848 = vmatpush1.xpose.msra.mxu0 0.0
    %4849 = vmatprep.subr.mxu0 0.0
    %4850 = vmatpush1.xpose.msra.mxu0 0.0
    %4851 = vmatprep.subr.mxu0 0.0
    %4852 = vmatpush1.xpose.msra.mxu0 0.0
    %4853 = vmatprep.mubr.f32.mxu0 0.0
    %4854 = vmatmul.mubr.f32.gmra.mrb[0].mxu0 %v4784
    %v4855 = vpop.f32.mrb[0].mxu0
    %v4856 = vadd.f32 %v1853, %v4855
    %v4857 = vpop.f32.mrb[0].mxu0
    %4858 = vdwg.mxu0
    %v4859 = vsel %vm1189, %v4856, -inf
    %4860 = vmax.xlane.f32.xlu0 %v4859
    %v4861 = vpop.xlane.xlu0 %4860
    %v4862 = vsub.f32 %v4856, %v4861
    %v4863 = vmul.f32 %v4862, 1.442695
    %v4864 = vpow.pop %v4863
    %v4865 = vsel %vm1189, %v4864, 0.0
    %4866 = vadd.xlane.f32.xlu0 %v4865
    %v4867 = vpop.xlane.xlu0 %4866
    %v4868 = vrcp.pop %v4867
    %v4869 = vmul.f32 %v4864, %v4868
    %v4871 = vsel %vm1189, %v4869, 0
    %4873 = vmatprep.subr.mxu0 0.0
    %4874 = vmatpush1.msra.mxu0 %v3435
    %4875 = vmatprep.subr.mxu0 0.0
    %4876 = vmatpush1.msra.mxu0 0.0
    %4877 = vmatprep.subr.mxu0 0.0
    %4878 = vmatpush1.msra.mxu0 0.0
    %4879 = vmatprep.subr.mxu0 0.0
    %4880 = vmatpush1.msra.mxu0 0.0
    %4881 = vmatprep.subr.mxu0 0.0
    %4882 = vmatpush1.msra.mxu0 0.0
    %4883 = vmatprep.subr.mxu0 0.0
    %4884 = vmatpush1.msra.mxu0 0.0
    %4885 = vmatprep.subr.mxu0 0.0
    %4886 = vmatpush1.msra.mxu0 0.0
    %4887 = vmatprep.subr.mxu0 0.0
    %4888 = vmatpush1.msra.mxu0 0.0
    %4889 = vmatprep.subr.mxu0 0.0
    %4890 = vmatpush1.msra.mxu0 0.0
    %4891 = vmatprep.subr.mxu0 0.0
    %4892 = vmatpush1.msra.mxu0 0.0
    %4893 = vmatprep.subr.mxu0 0.0
    %4894 = vmatpush1.msra.mxu0 0.0
    %4895 = vmatprep.subr.mxu0 0.0
    %4896 = vmatpush1.msra.mxu0 0.0
    %4897 = vmatprep.subr.mxu0 0.0
    %4898 = vmatpush1.msra.mxu0 0.0
    %4899 = vmatprep.subr.mxu0 0.0
    %4900 = vmatpush1.msra.mxu0 0.0
    %4901 = vmatprep.subr.mxu0 0.0
    %4902 = vmatpush1.msra.mxu0 0.0
    %4903 = vmatprep.subr.mxu0 0.0
    %4904 = vmatpush1.msra.mxu0 0.0
    %4905 = vmatprep.subr.mxu0 0.0
    %4906 = vmatpush1.msra.mxu0 0.0
    %4907 = vmatprep.subr.mxu0 0.0
    %4908 = vmatpush1.msra.mxu0 0.0
    %4909 = vmatprep.subr.mxu0 0.0
    %4910 = vmatpush1.msra.mxu0 0.0
    %4911 = vmatprep.subr.mxu0 0.0
    %4912 = vmatpush1.msra.mxu0 0.0
    %4913 = vmatprep.subr.mxu0 0.0
    %4914 = vmatpush1.msra.mxu0 0.0
    %4915 = vmatprep.subr.mxu0 0.0
    %4916 = vmatpush1.msra.mxu0 0.0
    %4917 = vmatprep.subr.mxu0 0.0
    %4918 = vmatpush1.msra.mxu0 0.0
    %4919 = vmatprep.subr.mxu0 0.0
    %4920 = vmatpush1.msra.mxu0 0.0
    %4921 = vmatprep.subr.mxu0 0.0
    %4922 = vmatpush1.msra.mxu0 0.0
    %4923 = vmatprep.subr.mxu0 0.0
    %4924 = vmatpush1.msra.mxu0 0.0
    %4925 = vmatprep.subr.mxu0 0.0
    %4926 = vmatpush1.msra.mxu0 0.0
    %4927 = vmatprep.subr.mxu0 0.0
    %4928 = vmatpush1.msra.mxu0 0.0
    %4929 = vmatprep.subr.mxu0 0.0
    %4930 = vmatpush1.msra.mxu0 0.0
    %4931 = vmatprep.subr.mxu0 0.0
    %4932 = vmatpush1.msra.mxu0 0.0
    %4933 = vmatprep.subr.mxu0 0.0
    %4934 = vmatpush1.msra.mxu0 0.0
    %4935 = vmatprep.subr.mxu0 0.0
    %4936 = vmatpush1.msra.mxu0 0.0
    %4937 = vmatprep.mubr.f32.mxu0 0.0
    %4938 = vmatmul.mubr.f32.gmra.mrb[0].mxu0 %v4871
    %v4939 = vpop.f32.mrb[0].mxu0
    %v4940 = vadd.f32 0.0, %v4939
    %v4941 = vpop.f32.mrb[0].mxu0
    %4942 = vdwg.mxu0
    %4944 = vrot.lane.b32.xlu0 %v4940, 8
    %v4945 = vpop.permute.xlu0 %4944
    %4947 = vst.msk [vmem:[#allocation2 + $0x8] sm:$0xff] %vm1515, %v4945
    %v4949 = vsel %vm1189, %v3523, 0
    %v4952 = vsel %vm1189, %v3611, 0
    %4954 = vmatprep.subr.mxu0 0.0
    %4955 = vmatpush1.xpose.msra.mxu0 %v4952
    %4956 = vmatprep.subr.mxu0 0.0
    %4957 = vmatpush1.xpose.msra.mxu0 0.0
    %4958 = vmatprep.subr.mxu0 0.0
    %4959 = vmatpush1.xpose.msra.mxu0 0.0
    %4960 = vmatprep.subr.mxu0 0.0
    %4961 = vmatpush1.xpose.msra.mxu0 0.0
    %4962 = vmatprep.subr.mxu0 0.0
    %4963 = vmatpush1.xpose.msra.mxu0 0.0
    %4964 = vmatprep.subr.mxu0 0.0
    %4965 = vmatpush1.xpose.msra.mxu0 0.0
    %4966 = vmatprep.subr.mxu0 0.0
    %4967 = vmatpush1.xpose.msra.mxu0 0.0
    %4968 = vmatprep.subr.mxu0 0.0
    %4969 = vmatpush1.xpose.msra.mxu0 0.0
    %4970 = vmatprep.subr.mxu0 0.0
    %4971 = vmatpush1.xpose.msra.mxu0 0.0
    %4972 = vmatprep.subr.mxu0 0.0
    %4973 = vmatpush1.xpose.msra.mxu0 0.0
    %4974 = vmatprep.subr.mxu0 0.0
    %4975 = vmatpush1.xpose.msra.mxu0 0.0
    %4976 = vmatprep.subr.mxu0 0.0
    %4977 = vmatpush1.xpose.msra.mxu0 0.0
    %4978 = vmatprep.subr.mxu0 0.0
    %4979 = vmatpush1.xpose.msra.mxu0 0.0
    %4980 = vmatprep.subr.mxu0 0.0
    %4981 = vmatpush1.xpose.msra.mxu0 0.0
    %4982 = vmatprep.subr.mxu0 0.0
    %4983 = vmatpush1.xpose.msra.mxu0 0.0
    %4984 = vmatprep.subr.mxu0 0.0
    %4985 = vmatpush1.xpose.msra.mxu0 0.0
    %4986 = vmatprep.subr.mxu0 0.0
    %4987 = vmatpush1.xpose.msra.mxu0 0.0
    %4988 = vmatprep.subr.mxu0 0.0
    %4989 = vmatpush1.xpose.msra.mxu0 0.0
    %4990 = vmatprep.subr.mxu0 0.0
    %4991 = vmatpush1.xpose.msra.mxu0 0.0
    %4992 = vmatprep.subr.mxu0 0.0
    %4993 = vmatpush1.xpose.msra.mxu0 0.0
    %4994 = vmatprep.subr.mxu0 0.0
    %4995 = vmatpush1.xpose.msra.mxu0 0.0
    %4996 = vmatprep.subr.mxu0 0.0
    %4997 = vmatpush1.xpose.msra.mxu0 0.0
    %4998 = vmatprep.subr.mxu0 0.0
    %4999 = vmatpush1.xpose.msra.mxu0 0.0
    %5000 = vmatprep.subr.mxu0 0.0
    %5001 = vmatpush1.xpose.msra.mxu0 0.0
    %5002 = vmatprep.subr.mxu0 0.0
    %5003 = vmatpush1.xpose.msra.mxu0 0.0
    %5004 = vmatprep.subr.mxu0 0.0
    %5005 = vmatpush1.xpose.msra.mxu0 0.0
    %5006 = vmatprep.subr.mxu0 0.0
    %5007 = vmatpush1.xpose.msra.mxu0 0.0
    %5008 = vmatprep.subr.mxu0 0.0
    %5009 = vmatpush1.xpose.msra.mxu0 0.0
    %5010 = vmatprep.subr.mxu0 0.0
    %5011 = vmatpush1.xpose.msra.mxu0 0.0
    %5012 = vmatprep.subr.mxu0 0.0
    %5013 = vmatpush1.xpose.msra.mxu0 0.0
    %5014 = vmatprep.subr.mxu0 0.0
    %5015 = vmatpush1.xpose.msra.mxu0 0.0
    %5016 = vmatprep.subr.mxu0 0.0
    %5017 = vmatpush1.xpose.msra.mxu0 0.0
    %5018 = vmatprep.mubr.f32.mxu0 0.0
    %5019 = vmatmul.mubr.f32.gmra.mrb[0].mxu0 %v4949
    %v5020 = vpop.f32.mrb[0].mxu0
    %v5021 = vadd.f32 %v1853, %v5020
    %v5022 = vpop.f32.mrb[0].mxu0
    %5023 = vdwg.mxu0
    %v5024 = vsel %vm1189, %v5021, -inf
    %5025 = vmax.xlane.f32.xlu0 %v5024
    %v5026 = vpop.xlane.xlu0 %5025
    %v5027 = vsub.f32 %v5021, %v5026
    %v5028 = vmul.f32 %v5027, 1.442695
    %v5029 = vpow.pop %v5028
    %v5030 = vsel %vm1189, %v5029, 0.0
    %5031 = vadd.xlane.f32.xlu0 %v5030
    %v5032 = vpop.xlane.xlu0 %5031
    %v5033 = vrcp.pop %v5032
    %v5034 = vmul.f32 %v5029, %v5033
    %v5036 = vsel %vm1189, %v5034, 0
    %5038 = vmatprep.subr.mxu0 0.0
    %5039 = vmatpush1.msra.mxu0 %v3699
    %5040 = vmatprep.subr.mxu0 0.0
    %5041 = vmatpush1.msra.mxu0 0.0
    %5042 = vmatprep.subr.mxu0 0.0
    %5043 = vmatpush1.msra.mxu0 0.0
    %5044 = vmatprep.subr.mxu0 0.0
    %5045 = vmatpush1.msra.mxu0 0.0
    %5046 = vmatprep.subr.mxu0 0.0
    %5047 = vmatpush1.msra.mxu0 0.0
    %5048 = vmatprep.subr.mxu0 0.0
    %5049 = vmatpush1.msra.mxu0 0.0
    %5050 = vmatprep.subr.mxu0 0.0
    %5051 = vmatpush1.msra.mxu0 0.0
    %5052 = vmatprep.subr.mxu0 0.0
    %5053 = vmatpush1.msra.mxu0 0.0
    %5054 = vmatprep.subr.mxu0 0.0
    %5055 = vmatpush1.msra.mxu0 0.0
    %5056 = vmatprep.subr.mxu0 0.0
    %5057 = vmatpush1.msra.mxu0 0.0
    %5058 = vmatprep.subr.mxu0 0.0
    %5059 = vmatpush1.msra.mxu0 0.0
    %5060 = vmatprep.subr.mxu0 0.0
    %5061 = vmatpush1.msra.mxu0 0.0
    %5062 = vmatprep.subr.mxu0 0.0
    %5063 = vmatpush1.msra.mxu0 0.0
    %5064 = vmatprep.subr.mxu0 0.0
    %5065 = vmatpush1.msra.mxu0 0.0
    %5066 = vmatprep.subr.mxu0 0.0
    %5067 = vmatpush1.msra.mxu0 0.0
    %5068 = vmatprep.subr.mxu0 0.0
    %5069 = vmatpush1.msra.mxu0 0.0
    %5070 = vmatprep.subr.mxu0 0.0
    %5071 = vmatpush1.msra.mxu0 0.0
    %5072 = vmatprep.subr.mxu0 0.0
    %5073 = vmatpush1.msra.mxu0 0.0
    %5074 = vmatprep.subr.mxu0 0.0
    %5075 = vmatpush1.msra.mxu0 0.0
    %5076 = vmatprep.subr.mxu0 0.0
    %5077 = vmatpush1.msra.mxu0 0.0
    %5078 = vmatprep.subr.mxu0 0.0
    %5079 = vmatpush1.msra.mxu0 0.0
    %5080 = vmatprep.subr.mxu0 0.0
    %5081 = vmatpush1.msra.mxu0 0.0
    %5082 = vmatprep.subr.mxu0 0.0
    %5083 = vmatpush1.msra.mxu0 0.0
    %5084 = vmatprep.subr.mxu0 0.0
    %5085 = vmatpush1.msra.mxu0 0.0
    %5086 = vmatprep.subr.mxu0 0.0
    %5087 = vmatpush1.msra.mxu0 0.0
    %5088 = vmatprep.subr.mxu0 0.0
    %5089 = vmatpush1.msra.mxu0 0.0
    %5090 = vmatprep.subr.mxu0 0.0
    %5091 = vmatpush1.msra.mxu0 0.0
    %5092 = vmatprep.subr.mxu0 0.0
    %5093 = vmatpush1.msra.mxu0 0.0
    %5094 = vmatprep.subr.mxu0 0.0
    %5095 = vmatpush1.msra.mxu0 0.0
    %5096 = vmatprep.subr.mxu0 0.0
    %5097 = vmatpush1.msra.mxu0 0.0
    %5098 = vmatprep.subr.mxu0 0.0
    %5099 = vmatpush1.msra.mxu0 0.0
    %5100 = vmatprep.subr.mxu0 0.0
    %5101 = vmatpush1.msra.mxu0 0.0
    %5102 = vmatprep.mubr.f32.mxu0 0.0
    %5103 = vmatmul.mubr.f32.gmra.mrb[0].mxu0 %v5036
    %v5104 = vpop.f32.mrb[0].mxu0
    %v5105 = vadd.f32 0.0, %v5104
    %v5106 = vpop.f32.mrb[0].mxu0
    %5107 = vdwg.mxu0
    %5109 = vrot.lane.b32.xlu0 %v5105, 16
    %v5110 = vpop.permute.xlu0 %5109
    %5112 = vst.msk [vmem:[#allocation2 + $0x8] sm:$0xff] %vm1681, %v5110
    %v5114 = vsel %vm1189, %v3787, 0
    %v5117 = vsel %vm1189, %v3875, 0
    %5119 = vmatprep.subr.mxu0 0.0
    %5120 = vmatpush1.xpose.msra.mxu0 %v5117
    %5121 = vmatprep.subr.mxu0 0.0
    %5122 = vmatpush1.xpose.msra.mxu0 0.0
    %5123 = vmatprep.subr.mxu0 0.0
    %5124 = vmatpush1.xpose.msra.mxu0 0.0
    %5125 = vmatprep.subr.mxu0 0.0
    %5126 = vmatpush1.xpose.msra.mxu0 0.0
    %5127 = vmatprep.subr.mxu0 0.0
    %5128 = vmatpush1.xpose.msra.mxu0 0.0
    %5129 = vmatprep.subr.mxu0 0.0
    %5130 = vmatpush1.xpose.msra.mxu0 0.0
    %5131 = vmatprep.subr.mxu0 0.0
    %5132 = vmatpush1.xpose.msra.mxu0 0.0
    %5133 = vmatprep.subr.mxu0 0.0
    %5134 = vmatpush1.xpose.msra.mxu0 0.0
    %5135 = vmatprep.subr.mxu0 0.0
    %5136 = vmatpush1.xpose.msra.mxu0 0.0
    %5137 = vmatprep.subr.mxu0 0.0
    %5138 = vmatpush1.xpose.msra.mxu0 0.0
    %5139 = vmatprep.subr.mxu0 0.0
    %5140 = vmatpush1.xpose.msra.mxu0 0.0
    %5141 = vmatprep.subr.mxu0 0.0
    %5142 = vmatpush1.xpose.msra.mxu0 0.0
    %5143 = vmatprep.subr.mxu0 0.0
    %5144 = vmatpush1.xpose.msra.mxu0 0.0
    %5145 = vmatprep.subr.mxu0 0.0
    %5146 = vmatpush1.xpose.msra.mxu0 0.0
    %5147 = vmatprep.subr.mxu0 0.0
    %5148 = vmatpush1.xpose.msra.mxu0 0.0
    %5149 = vmatprep.subr.mxu0 0.0
    %5150 = vmatpush1.xpose.msra.mxu0 0.0
    %5151 = vmatprep.subr.mxu0 0.0
    %5152 = vmatpush1.xpose.msra.mxu0 0.0
    %5153 = vmatprep.subr.mxu0 0.0
    %5154 = vmatpush1.xpose.msra.mxu0 0.0
    %5155 = vmatprep.subr.mxu0 0.0
    %5156 = vmatpush1.xpose.msra.mxu0 0.0
    %5157 = vmatprep.subr.mxu0 0.0
    %5158 = vmatpush1.xpose.msra.mxu0 0.0
    %5159 = vmatprep.subr.mxu0 0.0
    %5160 = vmatpush1.xpose.msra.mxu0 0.0
    %5161 = vmatprep.subr.mxu0 0.0
    %5162 = vmatpush1.xpose.msra.mxu0 0.0
    %5163 = vmatprep.subr.mxu0 0.0
    %5164 = vmatpush1.xpose.msra.mxu0 0.0
    %5165 = vmatprep.subr.mxu0 0.0
    %5166 = vmatpush1.xpose.msra.mxu0 0.0
    %5167 = vmatprep.subr.mxu0 0.0
    %5168 = vmatpush1.xpose.msra.mxu0 0.0
    %5169 = vmatprep.subr.mxu0 0.0
    %5170 = vmatpush1.xpose.msra.mxu0 0.0
    %5171 = vmatprep.subr.mxu0 0.0
    %5172 = vmatpush1.xpose.msra.mxu0 0.0
    %5173 = vmatprep.subr.mxu0 0.0
    %5174 = vmatpush1.xpose.msra.mxu0 0.0
    %5175 = vmatprep.subr.mxu0 0.0
    %5176 = vmatpush1.xpose.msra.mxu0 0.0
    %5177 = vmatprep.subr.mxu0 0.0
    %5178 = vmatpush1.xpose.msra.mxu0 0.0
    %5179 = vmatprep.subr.mxu0 0.0
    %5180 = vmatpush1.xpose.msra.mxu0 0.0
    %5181 = vmatprep.subr.mxu0 0.0
    %5182 = vmatpush1.xpose.msra.mxu0 0.0
    %5183 = vmatprep.mubr.f32.mxu0 0.0
    %5184 = vmatmul.mubr.f32.gmra.mrb[0].mxu0 %v5114
    %v5185 = vpop.f32.mrb[0].mxu0
    %v5186 = vadd.f32 %v1853, %v5185
    %v5187 = vpop.f32.mrb[0].mxu0
    %5188 = vdwg.mxu0
    %v5189 = vsel %vm1189, %v5186, -inf
    %5190 = vmax.xlane.f32.xlu0 %v5189
    %v5191 = vpop.xlane.xlu0 %5190
    %v5192 = vsub.f32 %v5186, %v5191
    %v5193 = vmul.f32 %v5192, 1.442695
    %v5194 = vpow.pop %v5193
    %v5195 = vsel %vm1189, %v5194, 0.0
    %5196 = vadd.xlane.f32.xlu0 %v5195
    %v5197 = vpop.xlane.xlu0 %5196
    %v5198 = vrcp.pop %v5197
    %v5199 = vmul.f32 %v5194, %v5198
    %v5201 = vsel %vm1189, %v5199, 0
    %5203 = vmatprep.subr.mxu0 0.0
    %5204 = vmatpush1.msra.mxu0 %v3963
    %5205 = vmatprep.subr.mxu0 0.0
    %5206 = vmatpush1.msra.mxu0 0.0
    %5207 = vmatprep.subr.mxu0 0.0
    %5208 = vmatpush1.msra.mxu0 0.0
    %5209 = vmatprep.subr.mxu0 0.0
    %5210 = vmatpush1.msra.mxu0 0.0
    %5211 = vmatprep.subr.mxu0 0.0
    %5212 = vmatpush1.msra.mxu0 0.0
    %5213 = vmatprep.subr.mxu0 0.0
    %5214 = vmatpush1.msra.mxu0 0.0
    %5215 = vmatprep.subr.mxu0 0.0
    %5216 = vmatpush1.msra.mxu0 0.0
    %5217 = vmatprep.subr.mxu0 0.0
    %5218 = vmatpush1.msra.mxu0 0.0
    %5219 = vmatprep.subr.mxu0 0.0
    %5220 = vmatpush1.msra.mxu0 0.0
    %5221 = vmatprep.subr.mxu0 0.0
    %5222 = vmatpush1.msra.mxu0 0.0
    %5223 = vmatprep.subr.mxu0 0.0
    %5224 = vmatpush1.msra.mxu0 0.0
    %5225 = vmatprep.subr.mxu0 0.0
    %5226 = vmatpush1.msra.mxu0 0.0
    %5227 = vmatprep.subr.mxu0 0.0
    %5228 = vmatpush1.msra.mxu0 0.0
    %5229 = vmatprep.subr.mxu0 0.0
    %5230 = vmatpush1.msra.mxu0 0.0
    %5231 = vmatprep.subr.mxu0 0.0
    %5232 = vmatpush1.msra.mxu0 0.0
    %5233 = vmatprep.subr.mxu0 0.0
    %5234 = vmatpush1.msra.mxu0 0.0
    %5235 = vmatprep.subr.mxu0 0.0
    %5236 = vmatpush1.msra.mxu0 0.0
    %5237 = vmatprep.subr.mxu0 0.0
    %5238 = vmatpush1.msra.mxu0 0.0
    %5239 = vmatprep.subr.mxu0 0.0
    %5240 = vmatpush1.msra.mxu0 0.0
    %5241 = vmatprep.subr.mxu0 0.0
    %5242 = vmatpush1.msra.mxu0 0.0
    %5243 = vmatprep.subr.mxu0 0.0
    %5244 = vmatpush1.msra.mxu0 0.0
    %5245 = vmatprep.subr.mxu0 0.0
    %5246 = vmatpush1.msra.mxu0 0.0
    %5247 = vmatprep.subr.mxu0 0.0
    %5248 = vmatpush1.msra.mxu0 0.0
    %5249 = vmatprep.subr.mxu0 0.0
    %5250 = vmatpush1.msra.mxu0 0.0
    %5251 = vmatprep.subr.mxu0 0.0
    %5252 = vmatpush1.msra.mxu0 0.0
    %5253 = vmatprep.subr.mxu0 0.0
    %5254 = vmatpush1.msra.mxu0 0.0
    %5255 = vmatprep.subr.mxu0 0.0
    %5256 = vmatpush1.msra.mxu0 0.0
    %5257 = vmatprep.subr.mxu0 0.0
    %5258 = vmatpush1.msra.mxu0 0.0
    %5259 = vmatprep.subr.mxu0 0.0
    %5260 = vmatpush1.msra.mxu0 0.0
    %5261 = vmatprep.subr.mxu0 0.0
    %5262 = vmatpush1.msra.mxu0 0.0
    %5263 = vmatprep.subr.mxu0 0.0
    %5264 = vmatpush1.msra.mxu0 0.0
    %5265 = vmatprep.subr.mxu0 0.0
    %5266 = vmatpush1.msra.mxu0 0.0
    %5267 = vmatprep.mubr.f32.mxu0 0.0
    %5268 = vmatmul.mubr.f32.gmra.mrb[0].mxu0 %v5201
    %v5269 = vpop.f32.mrb[0].mxu0
    %v5270 = vadd.f32 0.0, %v5269
    %v5271 = vpop.f32.mrb[0].mxu0
    %5272 = vdwg.mxu0
    %5274 = vrot.lane.b32.xlu0 %v5270, 24
    %v5275 = vpop.permute.xlu0 %5274
    %5277 = vst.msk [vmem:[#allocation2 + $0x8] sm:$0xff] %vm1847, %v5275
    %v5278 = vld [vmem:[#allocation2] sm:$0xff]
    %v5279 = vld [vmem:[#allocation2 + $0x8] sm:$0xff]
    %s5280 = scalar_lea.vmem %s10, 32
    %v5281 = vld [vmem:[%s5280] sm:$0xff]
    %v5282 = vld [vmem:[%s5280 + $0x8] sm:$0xff]
    %v5283 = vld [vmem:[%s5280 + $0x10] sm:$0xff]
    %v5284 = vld [vmem:[%s5280 + $0x18] sm:$0xff]
    %s5285 = scalar_lea.vmem %s11, 1
    %v5286 = vld [vmem:[%s5285] sm:$0x1]
    %v5288 = vlaneseq
    %v5289 = vshrl.u32 %v5288, 7
    %v5290 = vsub.s32 0, %v5289
    %v5291 = vrot.slane %v5286, %v5290
    %v5294 = vsel %vm76, %v5278, 0
    %v5297 = vsel %vm76, %v5279, 0
    %5299 = vmatprep.subr.mxu0 0.0
    %5300 = vmatpush1.msra.mxu0 %v5281
    %5301 = vmatprep.subr.mxu0 0.0
    %5302 = vmatpush1.msra.mxu0 %v5282
    %5303 = vmatprep.subr.mxu0 0.0
    %5304 = vmatpush1.msra.mxu0 %v5283
    %5305 = vmatprep.subr.mxu0 0.0
    %5306 = vmatpush1.msra.mxu0 %v5284
    %5307 = vmatprep.subr.mxu0 0.0
    %5308 = vmatpush1.msra.mxu0 0.0
    %5309 = vmatprep.subr.mxu0 0.0
    %5310 = vmatpush1.msra.mxu0 0.0
    %5311 = vmatprep.subr.mxu0 0.0
    %5312 = vmatpush1.msra.mxu0 0.0
    %5313 = vmatprep.subr.mxu0 0.0
    %5314 = vmatpush1.msra.mxu0 0.0
    %5315 = vmatprep.subr.mxu0 0.0
    %5316 = vmatpush1.msra.mxu0 0.0
    %5317 = vmatprep.subr.mxu0 0.0
    %5318 = vmatpush1.msra.mxu0 0.0
    %5319 = vmatprep.subr.mxu0 0.0
    %5320 = vmatpush1.msra.mxu0 0.0
    %5321 = vmatprep.subr.mxu0 0.0
    %5322 = vmatpush1.msra.mxu0 0.0
    %5323 = vmatprep.subr.mxu0 0.0
    %5324 = vmatpush1.msra.mxu0 0.0
    %5325 = vmatprep.subr.mxu0 0.0
    %5326 = vmatpush1.msra.mxu0 0.0
    %5327 = vmatprep.subr.mxu0 0.0
    %5328 = vmatpush1.msra.mxu0 0.0
    %5329 = vmatprep.subr.mxu0 0.0
    %5330 = vmatpush1.msra.mxu0 0.0
    %5331 = vmatprep.subr.mxu0 0.0
    %5332 = vmatpush1.msra.mxu0 0.0
    %5333 = vmatprep.subr.mxu0 0.0
    %5334 = vmatpush1.msra.mxu0 0.0
    %5335 = vmatprep.subr.mxu0 0.0
    %5336 = vmatpush1.msra.mxu0 0.0
    %5337 = vmatprep.subr.mxu0 0.0
    %5338 = vmatpush1.msra.mxu0 0.0
    %5339 = vmatprep.subr.mxu0 0.0
    %5340 = vmatpush1.msra.mxu0 0.0
    %5341 = vmatprep.subr.mxu0 0.0
    %5342 = vmatpush1.msra.mxu0 0.0
    %5343 = vmatprep.subr.mxu0 0.0
    %5344 = vmatpush1.msra.mxu0 0.0
    %5345 = vmatprep.subr.mxu0 0.0
    %5346 = vmatpush1.msra.mxu0 0.0
    %5347 = vmatprep.subr.mxu0 0.0
    %5348 = vmatpush1.msra.mxu0 0.0
    %5349 = vmatprep.subr.mxu0 0.0
    %5350 = vmatpush1.msra.mxu0 0.0
    %5351 = vmatprep.subr.mxu0 0.0
    %5352 = vmatpush1.msra.mxu0 0.0
    %5353 = vmatprep.subr.mxu0 0.0
    %5354 = vmatpush1.msra.mxu0 0.0
    %5355 = vmatprep.subr.mxu0 0.0
    %5356 = vmatpush1.msra.mxu0 0.0
    %5357 = vmatprep.subr.mxu0 0.0
    %5358 = vmatpush1.msra.mxu0 0.0
    %5359 = vmatprep.subr.mxu0 0.0
    %5360 = vmatpush1.msra.mxu0 0.0
    %5361 = vmatprep.subr.mxu0 0.0
    %5362 = vmatpush1.msra.mxu0 0.0
    %5363 = vmatprep.mubr.f32.mxu0 0.0
    %5364 = vmatmul.mubr.f32.gmra.mrb[0].mxu0 %v5294
    %v5365 = vpop.f32.mrb[0].mxu0
    %v5366 = vadd.f32 %v5291, %v5365
    %v5367 = vpop.f32.mrb[0].mxu0
    %5368 = vmatprep.mubr.f32.mxu0 0.0
    %5369 = vmatmul.mubr.f32.gmra.mrb[0].mxu0 %v5297
    %v5370 = vpop.f32.mrb[0].mxu0
    %v5371 = vadd.f32 %v5291, %v5370
    %v5372 = vpop.f32.mrb[0].mxu0
    %5373 = vdwg.mxu0
    %v5374 = vadd.f32 %v2902, %v5366
    %v5375 = vadd.f32 %v2903, %v5371
    %s5376 = scalar_lea.vmem %s12, 1
    %v5377 = vld [vmem:[%s5376] sm:$0x1]
    %s5378 = scalar_lea.vmem %s13, 1
    %v5379 = vld [vmem:[%s5378] sm:$0x1]
    %v5380 = vsel %vm76, %v5374, 0.0
    %5381 = vadd.xlane.f32.xlu0 %v5380
    %v5382 = vpop.xlane.xlu0 %5381
    %v5383 = vsel %vm76, %v5375, 0.0
    %5384 = vadd.xlane.f32.xlu0 %v5383
    %v5385 = vpop.xlane.xlu0 %5384
    %v5386 = vmul.f32 %v5382, %v83
    %v5387 = vmul.f32 %v5385, %v83
    %v5388 = vsub.f32 %v5374, %v5386
    %v5389 = vsub.f32 %v5375, %v5387
    %v5390 = vmul.f32 %v5388, %v5388
    %v5391 = vmul.f32 %v5389, %v5389
    %v5392 = vsel %vm76, %v5390, 0.0
    %5393 = vadd.xlane.f32.xlu0 %v5392
    %v5394 = vpop.xlane.xlu0 %5393
    %v5395 = vsel %vm76, %v5391, 0.0
    %5396 = vadd.xlane.f32.xlu0 %v5395
    %v5397 = vpop.xlane.xlu0 %5396
    %v5398 = vmul.f32 %v5394, %v83
    %v5399 = vmul.f32 %v5397, %v83
    %v5400 = vadd.f32 %v5398, 1e-05
    %v5401 = vadd.f32 %v5399, 1e-05
    %v5402 = vrsqrt.pop %v5400
    %v5403 = vrsqrt.pop %v5401
    %v5404 = vmul.f32 %v5388, %v5402
    %v5405 = vmul.f32 %v5389, %v5403
    %v5407 = vlaneseq
    %v5408 = vshrl.u32 %v5407, 7
    %v5409 = vsub.s32 0, %v5408
    %v5410 = vrot.slane %v5377, %v5409
    %v5412 = vmul.f32 %v5404, %v5410
    %v5413 = vmul.f32 %v5405, %v5410
    %v5415 = vlaneseq
    %v5416 = vshrl.u32 %v5415, 7
    %v5417 = vsub.s32 0, %v5416
    %v5418 = vrot.slane %v5379, %v5417
    %v5420 = vadd.f32 %v5412, %v5418
    %v5421 = vadd.f32 %v5413, %v5418
    %s5422 = scalar_lea.vmem %s14, 32
    %v5423 = vld [vmem:[%s5422] sm:$0xff]
    %v5424 = vld [vmem:[%s5422 + $0x8] sm:$0xff]
    %v5425 = vld [vmem:[%s5422 + $0x10] sm:$0xff]
    %v5426 = vld [vmem:[%s5422 + $0x18] sm:$0xff]
    %s5427 = scalar_lea.vmem %s15, 1
    %v5428 = vld [vmem:[%s5427] sm:$0x1]
    %v5430 = vlaneseq
    %v5431 = vshrl.u32 %v5430, 7
    %v5432 = vsub.s32 0, %v5431
    %v5433 = vrot.slane %v5428, %v5432
    %v5436 = vsel %vm76, %v5420, 0
    %v5439 = vsel %vm76, %v5421, 0
    %5441 = vmatprep.subr.mxu0 0.0
    %5442 = vmatpush1.msra.mxu0 %v5423
    %5443 = vmatprep.subr.mxu0 0.0
    %5444 = vmatpush1.msra.mxu0 %v5424
    %5445 = vmatprep.subr.mxu0 0.0
    %5446 = vmatpush1.msra.mxu0 %v5425
    %5447 = vmatprep.subr.mxu0 0.0
    %5448 = vmatpush1.msra.mxu0 %v5426
    %5449 = vmatprep.subr.mxu0 0.0
    %5450 = vmatpush1.msra.mxu0 0.0
    %5451 = vmatprep.subr.mxu0 0.0
    %5452 = vmatpush1.msra.mxu0 0.0
    %5453 = vmatprep.subr.mxu0 0.0
    %5454 = vmatpush1.msra.mxu0 0.0
    %5455 = vmatprep.subr.mxu0 0.0
    %5456 = vmatpush1.msra.mxu0 0.0
    %5457 = vmatprep.subr.mxu0 0.0
    %5458 = vmatpush1.msra.mxu0 0.0
    %5459 = vmatprep.subr.mxu0 0.0
    %5460 = vmatpush1.msra.mxu0 0.0
    %5461 = vmatprep.subr.mxu0 0.0
    %5462 = vmatpush1.msra.mxu0 0.0
    %5463 = vmatprep.subr.mxu0 0.0
    %5464 = vmatpush1.msra.mxu0 0.0
    %5465 = vmatprep.subr.mxu0 0.0
    %5466 = vmatpush1.msra.mxu0 0.0
    %5467 = vmatprep.subr.mxu0 0.0
    %5468 = vmatpush1.msra.mxu0 0.0
    %5469 = vmatprep.subr.mxu0 0.0
    %5470 = vmatpush1.msra.mxu0 0.0
    %5471 = vmatprep.subr.mxu0 0.0
    %5472 = vmatpush1.msra.mxu0 0.0
    %5473 = vmatprep.subr.mxu0 0.0
    %5474 = vmatpush1.msra.mxu0 0.0
    %5475 = vmatprep.subr.mxu0 0.0
    %5476 = vmatpush1.msra.mxu0 0.0
    %5477 = vmatprep.subr.mxu0 0.0
    %5478 = vmatpush1.msra.mxu0 0.0
    %5479 = vmatprep.subr.mxu0 0.0
    %5480 = vmatpush1.msra.mxu0 0.0
    %5481 = vmatprep.subr.mxu0 0.0
    %5482 = vmatpush1.msra.mxu0 0.0
    %5483 = vmatprep.subr.mxu0 0.0
    %5484 = vmatpush1.msra.mxu0 0.0
    %5485 = vmatprep.subr.mxu0 0.0
    %5486 = vmatpush1.msra.mxu0 0.0
    %5487 = vmatprep.subr.mxu0 0.0
    %5488 = vmatpush1.msra.mxu0 0.0
    %5489 = vmatprep.subr.mxu0 0.0
    %5490 = vmatpush1.msra.mxu0 0.0
    %5491 = vmatprep.subr.mxu0 0.0
    %5492 = vmatpush1.msra.mxu0 0.0
    %5493 = vmatprep.subr.mxu0 0.0
    %5494 = vmatpush1.msra.mxu0 0.0
    %5495 = vmatprep.subr.mxu0 0.0
    %5496 = vmatpush1.msra.mxu0 0.0
    %5497 = vmatprep.subr.mxu0 0.0
    %5498 = vmatpush1.msra.mxu0 0.0
    %5499 = vmatprep.subr.mxu0 0.0
    %5500 = vmatpush1.msra.mxu0 0.0
    %5501 = vmatprep.subr.mxu0 0.0
    %5502 = vmatpush1.msra.mxu0 0.0
    %5503 = vmatprep.subr.mxu0 0.0
    %5504 = vmatpush1.msra.mxu0 0.0
    %5505 = vmatprep.mubr.f32.mxu0 0.0
    %5506 = vmatmul.mubr.f32.gmra.mrb[0].mxu0 %v5436
    %v5507 = vpop.f32.mrb[0].mxu0
    %v5508 = vadd.f32 %v5433, %v5507
    %v5509 = vpop.f32.mrb[0].mxu0
    %5510 = vmatprep.mubr.f32.mxu0 0.0
    %5511 = vmatmul.mubr.f32.gmra.mrb[0].mxu0 %v5439
    %v5512 = vpop.f32.mrb[0].mxu0
    %v5513 = vadd.f32 %v5433, %v5512
    %v5514 = vpop.f32.mrb[0].mxu0
    %5515 = vdwg.mxu0
    %v5516 = vmul.f32 %v5508, %v5508
    %v5517 = vmul.f32 %v5513, %v5513
    %v5518 = vmul.f32 %v5508, %v5516
    %v5519 = vmul.f32 %v5513, %v5517
    %v5520 = vmul.f32 %v5518, 0.044715
    %v5521 = vmul.f32 %v5519, 0.044715
    %v5522 = vadd.f32 %v5508, %v5520
    %v5523 = vadd.f32 %v5513, %v5521
    %v5524 = vmul.f32 %v5522, 0.7978846
    %v5525 = vmul.f32 %v5523, 0.7978846
    %v5526 = vtanh.pop %v5524
    %v5527 = vtanh.pop %v5525
    %v5528 = vadd.f32 %v5526, 1.0
    %v5529 = vadd.f32 %v5527, 1.0
    %v5530 = vmul.f32 %v5528, 0.5
    %v5531 = vmul.f32 %v5529, 0.5
    %v5532 = vmul.f32 %v5508, %v5530
    %v5533 = vmul.f32 %v5513, %v5531
    %s5534 = scalar_lea.vmem %s16, 64
    %v5535 = vld [vmem:[%s5534] sm:$0xff]
    %v5536 = vld [vmem:[%s5534 + $0x8] sm:$0xff]
    %v5537 = vld [vmem:[%s5534 + $0x10] sm:$0xff]
    %v5538 = vld [vmem:[%s5534 + $0x18] sm:$0xff]
    %v5539 = vld [vmem:[%s5534 + $0x20] sm:$0xff]
    %v5540 = vld [vmem:[%s5534 + $0x28] sm:$0xff]
    %v5541 = vld [vmem:[%s5534 + $0x30] sm:$0xff]
    %v5542 = vld [vmem:[%s5534 + $0x38] sm:$0xff]
    %s5543 = scalar_lea.vmem %s17, 1
    %v5544 = vld [vmem:[%s5543] sm:$0x1]
    %v5546 = vlaneseq
    %v5547 = vshrl.u32 %v5546, 7
    %v5548 = vsub.s32 0, %v5547
    %v5549 = vrot.slane %v5544, %v5548
    %v5552 = vsel %vm2776, %v5532, 0
    %v5555 = vsel %vm2776, %v5533, 0
    %5557 = vmatprep.subr.mxu0 0.0
    %5558 = vmatpush1.msra.mxu0 %v5535
    %5559 = vmatprep.subr.mxu0 0.0
    %5560 = vmatpush1.msra.mxu0 %v5536
    %5561 = vmatprep.subr.mxu0 0.0
    %5562 = vmatpush1.msra.mxu0 %v5537
    %5563 = vmatprep.subr.mxu0 0.0
    %5564 = vmatpush1.msra.mxu0 %v5538
    %5565 = vmatprep.subr.mxu0 0.0
    %5566 = vmatpush1.msra.mxu0 %v5539
    %5567 = vmatprep.subr.mxu0 0.0
    %5568 = vmatpush1.msra.mxu0 %v5540
    %5569 = vmatprep.subr.mxu0 0.0
    %5570 = vmatpush1.msra.mxu0 %v5541
    %5571 = vmatprep.subr.mxu0 0.0
    %5572 = vmatpush1.msra.mxu0 %v5542
    %5573 = vmatprep.subr.mxu0 0.0
    %5574 = vmatpush1.msra.mxu0 0.0
    %5575 = vmatprep.subr.mxu0 0.0
    %5576 = vmatpush1.msra.mxu0 0.0
    %5577 = vmatprep.subr.mxu0 0.0
    %5578 = vmatpush1.msra.mxu0 0.0
    %5579 = vmatprep.subr.mxu0 0.0
    %5580 = vmatpush1.msra.mxu0 0.0
    %5581 = vmatprep.subr.mxu0 0.0
    %5582 = vmatpush1.msra.mxu0 0.0
    %5583 = vmatprep.subr.mxu0 0.0
    %5584 = vmatpush1.msra.mxu0 0.0
    %5585 = vmatprep.subr.mxu0 0.0
    %5586 = vmatpush1.msra.mxu0 0.0
    %5587 = vmatprep.subr.mxu0 0.0
    %5588 = vmatpush1.msra.mxu0 0.0
    %5589 = vmatprep.subr.mxu0 0.0
    %5590 = vmatpush1.msra.mxu0 0.0
    %5591 = vmatprep.subr.mxu0 0.0
    %5592 = vmatpush1.msra.mxu0 0.0
    %5593 = vmatprep.subr.mxu0 0.0
    %5594 = vmatpush1.msra.mxu0 0.0
    %5595 = vmatprep.subr.mxu0 0.0
    %5596 = vmatpush1.msra.mxu0 0.0
    %5597 = vmatprep.subr.mxu0 0.0
    %5598 = vmatpush1.msra.mxu0 0.0
    %5599 = vmatprep.subr.mxu0 0.0
    %5600 = vmatpush1.msra.mxu0 0.0
    %5601 = vmatprep.subr.mxu0 0.0
    %5602 = vmatpush1.msra.mxu0 0.0
    %5603 = vmatprep.subr.mxu0 0.0
    %5604 = vmatpush1.msra.mxu0 0.0
    %5605 = vmatprep.subr.mxu0 0.0
    %5606 = vmatpush1.msra.mxu0 0.0
    %5607 = vmatprep.subr.mxu0 0.0
    %5608 = vmatpush1.msra.mxu0 0.0
    %5609 = vmatprep.subr.mxu0 0.0
    %5610 = vmatpush1.msra.mxu0 0.0
    %5611 = vmatprep.subr.mxu0 0.0
    %5612 = vmatpush1.msra.mxu0 0.0
    %5613 = vmatprep.subr.mxu0 0.0
    %5614 = vmatpush1.msra.mxu0 0.0
    %5615 = vmatprep.subr.mxu0 0.0
    %5616 = vmatpush1.msra.mxu0 0.0
    %5617 = vmatprep.subr.mxu0 0.0
    %5618 = vmatpush1.msra.mxu0 0.0
    %5619 = vmatprep.subr.mxu0 0.0
    %5620 = vmatpush1.msra.mxu0 0.0
    %5621 = vmatprep.mubr.f32.mxu0 0.0
    %5622 = vmatmul.mubr.f32.gmra.mrb[0].mxu0 %v5552
    %v5623 = vpop.f32.mrb[0].mxu0
    %v5624 = vadd.f32 %v5549, %v5623
    %v5625 = vpop.f32.mrb[0].mxu0
    %5626 = vmatprep.mubr.f32.mxu0 0.0
    %5627 = vmatmul.mubr.f32.gmra.mrb[0].mxu0 %v5555
    %v5628 = vpop.f32.mrb[0].mxu0
    %v5629 = vadd.f32 %v5549, %v5628
    %v5630 = vpop.f32.mrb[0].mxu0
    %5631 = vdwg.mxu0
    %v5632 = vadd.f32 %v5420, %v5624
    %v5633 = vadd.f32 %v5421, %v5629
    %s5634 = scalar_lea.vmem %s18, 1
    %v5635 = vld [vmem:[%s5634] sm:$0x1]
    %s5636 = scalar_lea.vmem %s19, 1
    %v5637 = vld [vmem:[%s5636] sm:$0x1]
    %v5638 = vsel %vm76, %v5632, 0.0
    %5639 = vadd.xlane.f32.xlu0 %v5638
    %v5640 = vpop.xlane.xlu0 %5639
    %v5641 = vsel %vm76, %v5633, 0.0
    %5642 = vadd.xlane.f32.xlu0 %v5641
    %v5643 = vpop.xlane.xlu0 %5642
    %v5644 = vmul.f32 %v5640, %v83
    %v5645 = vmul.f32 %v5643, %v83
    %v5646 = vsub.f32 %v5632, %v5644
    %v5647 = vsub.f32 %v5633, %v5645
    %v5648 = vmul.f32 %v5646, %v5646
    %v5649 = vmul.f32 %v5647, %v5647
    %v5650 = vsel %vm76, %v5648, 0.0
    %5651 = vadd.xlane.f32.xlu0 %v5650
    %v5652 = vpop.xlane.xlu0 %5651
    %v5653 = vsel %vm76, %v5649, 0.0
    %5654 = vadd.xlane.f32.xlu0 %v5653
    %v5655 = vpop.xlane.xlu0 %5654
    %v5656 = vmul.f32 %v5652, %v83
    %v5657 = vmul.f32 %v5655, %v83
    %v5658 = vadd.f32 %v5656, 1e-05
    %v5659 = vadd.f32 %v5657, 1e-05
    %v5660 = vrsqrt.pop %v5658
    %v5661 = vrsqrt.pop %v5659
    %v5662 = vmul.f32 %v5646, %v5660
    %v5663 = vmul.f32 %v5647, %v5661
    %v5665 = vlaneseq
    %v5666 = vshrl.u32 %v5665, 7
    %v5667 = vsub.s32 0, %v5666
    %v5668 = vrot.slane %v5635, %v5667
    %v5670 = vmul.f32 %v5662, %v5668
    %v5671 = vmul.f32 %v5663, %v5668
    %v5673 = vlaneseq
    %v5674 = vshrl.u32 %v5673, 7
    %v5675 = vsub.s32 0, %v5674
    %v5676 = vrot.slane %v5637, %v5675
    %v5678 = vadd.f32 %v5670, %v5676
    %v5679 = vadd.f32 %v5671, %v5676
    %v5680 = vsel %vm76, %v5678, 0.0
    %v5681 = vrot.slane %v5680, 4
    %v5682 = vadd.f32 %v5680, %v5681
    %v5683 = vrot.slane %v5682, 2
    %v5684 = vadd.f32 %v5682, %v5683
    %v5685 = vrot.slane %v5684, 1
    %v5686 = vadd.f32 %v5684, %v5685
    %v5687 = vrcp.pop 8.0
    %v5688 = vmul.f32 %v5686, %v5687
    %v5689 = vld [vmem:[%s20] sm:$0xff]
    %v5690 = vld [vmem:[%s20 + $0x8] sm:$0xff]
    %v5691 = vld [vmem:[%s20 + $0x10] sm:$0xff]
    %v5692 = vld [vmem:[%s20 + $0x18] sm:$0xff]
    %v5693 = vld [vmem:[%s21] sm:$0x1]
    %v5695 = vsel %vm76, %v5688, 0
    %5697 = vmatprep.subr.mxu0 0.0
    %5698 = vmatpush1.msra.mxu0 %v5689
    %5699 = vmatprep.subr.mxu0 0.0
    %5700 = vmatpush1.msra.mxu0 %v5690
    %5701 = vmatprep.subr.mxu0 0.0
    %5702 = vmatpush1.msra.mxu0 %v5691
    %5703 = vmatprep.subr.mxu0 0.0
    %5704 = vmatpush1.msra.mxu0 %v5692
    %5705 = vmatprep.subr.mxu0 0.0
    %5706 = vmatpush1.msra.mxu0 0.0
    %5707 = vmatprep.subr.mxu0 0.0
    %5708 = vmatpush1.msra.mxu0 0.0
    %5709 = vmatprep.subr.mxu0 0.0
    %5710 = vmatpush1.msra.mxu0 0.0
    %5711 = vmatprep.subr.mxu0 0.0
    %5712 = vmatpush1.msra.mxu0 0.0
    %5713 = vmatprep.subr.mxu0 0.0
    %5714 = vmatpush1.msra.mxu0 0.0
    %5715 = vmatprep.subr.mxu0 0.0
    %5716 = vmatpush1.msra.mxu0 0.0
    %5717 = vmatprep.subr.mxu0 0.0
    %5718 = vmatpush1.msra.mxu0 0.0
    %5719 = vmatprep.subr.mxu0 0.0
    %5720 = vmatpush1.msra.mxu0 0.0
    %5721 = vmatprep.subr.mxu0 0.0
    %5722 = vmatpush1.msra.mxu0 0.0
    %5723 = vmatprep.subr.mxu0 0.0
    %5724 = vmatpush1.msra.mxu0 0.0
    %5725 = vmatprep.subr.mxu0 0.0
    %5726 = vmatpush1.msra.mxu0 0.0
    %5727 = vmatprep.subr.mxu0 0.0
    %5728 = vmatpush1.msra.mxu0 0.0
    %5729 = vmatprep.subr.mxu0 0.0
    %5730 = vmatpush1.msra.mxu0 0.0
    %5731 = vmatprep.subr.mxu0 0.0
    %5732 = vmatpush1.msra.mxu0 0.0
    %5733 = vmatprep.subr.mxu0 0.0
    %5734 = vmatpush1.msra.mxu0 0.0
    %5735 = vmatprep.subr.mxu0 0.0
    %5736 = vmatpush1.msra.mxu0 0.0
    %5737 = vmatprep.subr.mxu0 0.0
    %5738 = vmatpush1.msra.mxu0 0.0
    %5739 = vmatprep.subr.mxu0 0.0
    %5740 = vmatpush1.msra.mxu0 0.0
    %5741 = vmatprep.subr.mxu0 0.0
    %5742 = vmatpush1.msra.mxu0 0.0
    %5743 = vmatprep.subr.mxu0 0.0
    %5744 = vmatpush1.msra.mxu0 0.0
    %5745 = vmatprep.subr.mxu0 0.0
    %5746 = vmatpush1.msra.mxu0 0.0
    %5747 = vmatprep.subr.mxu0 0.0
    %5748 = vmatpush1.msra.mxu0 0.0
    %5749 = vmatprep.subr.mxu0 0.0
    %5750 = vmatpush1.msra.mxu0 0.0
    %5751 = vmatprep.subr.mxu0 0.0
    %5752 = vmatpush1.msra.mxu0 0.0
    %5753 = vmatprep.subr.mxu0 0.0
    %5754 = vmatpush1.msra.mxu0 0.0
    %5755 = vmatprep.subr.mxu0 0.0
    %5756 = vmatpush1.msra.mxu0 0.0
    %5757 = vmatprep.subr.mxu0 0.0
    %5758 = vmatpush1.msra.mxu0 0.0
    %5759 = vmatprep.subr.mxu0 0.0
    %5760 = vmatpush1.msra.mxu0 0.0
    %5761 = vmatprep.mubr.f32.mxu0 0.0
    %5762 = vmatmul.mubr.f32.gmra.mrb[0].mxu0 %v5695
    %v5763 = vpop.f32.mrb[0].mxu0
    %v5764 = vadd.f32 %v5693, %v5763
    %v5765 = vpop.f32.mrb[0].mxu0
    %5766 = vdwg.mxu0
    %5767 = vst [vmem:[#allocation3] sm:$0x1] %v5764
    %v5768 = vsel %vm76, %v5679, 0.0
    %v5769 = vrot.slane %v5768, 4
    %v5770 = vadd.f32 %v5768, %v5769
    %v5771 = vrot.slane %v5770, 2
    %v5772 = vadd.f32 %v5770, %v5771
    %v5773 = vrot.slane %v5772, 1
    %v5774 = vadd.f32 %v5772, %v5773
    %v5775 = vmul.f32 %v5774, %v5687
    %v5776 = vld [vmem:[%s20] sm:$0xff]
    %v5777 = vld [vmem:[%s20 + $0x8] sm:$0xff]
    %v5778 = vld [vmem:[%s20 + $0x10] sm:$0xff]
    %v5779 = vld [vmem:[%s20 + $0x18] sm:$0xff]
    %v5780 = vld [vmem:[%s21] sm:$0x1]
    %v5782 = vsel %vm76, %v5775, 0
    %5784 = vmatprep.subr.mxu0 0.0
    %5785 = vmatpush1.msra.mxu0 %v5776
    %5786 = vmatprep.subr.mxu0 0.0
    %5787 = vmatpush1.msra.mxu0 %v5777
    %5788 = vmatprep.subr.mxu0 0.0
    %5789 = vmatpush1.msra.mxu0 %v5778
    %5790 = vmatprep.subr.mxu0 0.0
    %5791 = vmatpush1.msra.mxu0 %v5779
    %5792 = vmatprep.subr.mxu0 0.0
    %5793 = vmatpush1.msra.mxu0 0.0
    %5794 = vmatprep.subr.mxu0 0.0
    %5795 = vmatpush1.msra.mxu0 0.0
    %5796 = vmatprep.subr.mxu0 0.0
    %5797 = vmatpush1.msra.mxu0 0.0
    %5798 = vmatprep.subr.mxu0 0.0
    %5799 = vmatpush1.msra.mxu0 0.0
    %5800 = vmatprep.subr.mxu0 0.0
    %5801 = vmatpush1.msra.mxu0 0.0
    %5802 = vmatprep.subr.mxu0 0.0
    %5803 = vmatpush1.msra.mxu0 0.0
    %5804 = vmatprep.subr.mxu0 0.0
    %5805 = vmatpush1.msra.mxu0 0.0
    %5806 = vmatprep.subr.mxu0 0.0
    %5807 = vmatpush1.msra.mxu0 0.0
    %5808 = vmatprep.subr.mxu0 0.0
    %5809 = vmatpush1.msra.mxu0 0.0
    %5810 = vmatprep.subr.mxu0 0.0
    %5811 = vmatpush1.msra.mxu0 0.0
    %5812 = vmatprep.subr.mxu0 0.0
    %5813 = vmatpush1.msra.mxu0 0.0
    %5814 = vmatprep.subr.mxu0 0.0
    %5815 = vmatpush1.msra.mxu0 0.0
    %5816 = vmatprep.subr.mxu0 0.0
    %5817 = vmatpush1.msra.mxu0 0.0
    %5818 = vmatprep.subr.mxu0 0.0
    %5819 = vmatpush1.msra.mxu0 0.0
    %5820 = vmatprep.subr.mxu0 0.0
    %5821 = vmatpush1.msra.mxu0 0.0
    %5822 = vmatprep.subr.mxu0 0.0
    %5823 = vmatpush1.msra.mxu0 0.0
    %5824 = vmatprep.subr.mxu0 0.0
    %5825 = vmatpush1.msra.mxu0 0.0
    %5826 = vmatprep.subr.mxu0 0.0
    %5827 = vmatpush1.msra.mxu0 0.0
    %5828 = vmatprep.subr.mxu0 0.0
    %5829 = vmatpush1.msra.mxu0 0.0
    %5830 = vmatprep.subr.mxu0 0.0
    %5831 = vmatpush1.msra.mxu0 0.0
    %5832 = vmatprep.subr.mxu0 0.0
    %5833 = vmatpush1.msra.mxu0 0.0
    %5834 = vmatprep.subr.mxu0 0.0
    %5835 = vmatpush1.msra.mxu0 0.0
    %5836 = vmatprep.subr.mxu0 0.0
    %5837 = vmatpush1.msra.mxu0 0.0
    %5838 = vmatprep.subr.mxu0 0.0
    %5839 = vmatpush1.msra.mxu0 0.0
    %5840 = vmatprep.subr.mxu0 0.0
    %5841 = vmatpush1.msra.mxu0 0.0
    %5842 = vmatprep.subr.mxu0 0.0
    %5843 = vmatpush1.msra.mxu0 0.0
    %5844 = vmatprep.subr.mxu0 0.0
    %5845 = vmatpush1.msra.mxu0 0.0
    %5846 = vmatprep.subr.mxu0 0.0
    %5847 = vmatpush1.msra.mxu0 0.0
    %5848 = vmatprep.mubr.f32.mxu0 0.0
    %5849 = vmatmul.mubr.f32.gmra.mrb[0].mxu0 %v5782
    %v5850 = vpop.f32.mrb[0].mxu0
    %v5851 = vadd.f32 %v5780, %v5850
    %v5852 = vpop.f32.mrb[0].mxu0
    %5853 = vdwg.mxu0
    %s5854 = scalar_lea.vmem [#allocation3], 1
    %5855 = vst [vmem:[%s5854] sm:$0x1] %v5851
    // Predicated region
    $region90: #{single_bert_forward.1} parent=1 // pred_check
      _
    $region91: #{single_bert_forward.1} parent=1 // pred_check_branch
      %5857 = sbr.rel (0) target = $region93
    $region92: #{single_bert_forward.1} parent=1 // pred_region
      %s5859 = ssub.s32 32, 32
      %5860 = vsyncadd [#allocation4], %s5859
      %s5861 = sshll.u32 [#allocation3], 4
      %s5862 = int_to_ptr.vmem [resolvable:$true] %s5861
      %5867 = dma.vmem_to_hbm [thread:$0]  %s5862, 32, %s22, [#allocation4], 16, 16, 1
    $region93: #{single_bert_forward.1} parent=1 // pred_fallthru
      _
    // Predicated region
    $region94: #{single_bert_forward.1} parent=1 // pred_check
      _
    $region95: #{single_bert_forward.1} parent=1 // pred_check_branch
      %5869 = sbr.rel (0) target = $region97
    $region96: #{single_bert_forward.1} parent=1 // pred_region
      %5870 = dma.done [#allocation4], 32
    $region97: #{single_bert_forward.1} parent=1 // pred_fallthru
      _
    %5871 = vsyncpa [#allocation4], 1

</llo_original>
